<compile_context>
chip_gen: v5e
topology: v5e:2x2
jax: 0.10.0
libtpu: 0.0.40
codegen_flags: <defaults>
</compile_context>

<pallas_src>
import functools

import jax
import jax.numpy as jnp
from jax.experimental import pallas as pl
from jax.experimental.pallas import tpu as pltpu

IN_DIM = 784
H1_DIM = 1024
H2_DIM = 256
OUT_DIM = 1


def _leaky_relu(x, slope=0.2):
    return jnp.where(x > 0, x, slope * x)


def discriminator_kernel(x_ref, w1_ref, b1_ref, w2_ref, b2_ref, w3_ref, b3_ref,
                         o_ref):
    # x_ref: (tm, 784) fp32 straight from HBM; cast to bf16 in VMEM (no
    # wrapper-side pad/cast pass, no extra HBM traffic).
    x = x_ref[...].astype(jnp.bfloat16)

    # Layer 1 (784 -> 1024): bf16 MXU matmul, fp32 accumulation.  K=784 is
    # contracted directly; Mosaic masks the tail of the last 128-wide pass.
    acc1 = jnp.dot(x, w1_ref[...], preferred_element_type=jnp.float32)
    # Bias + LeakyReLU on the (tm, 1024) intermediate in bf16: one cast of the
    # accumulator, halves VPU/vreg traffic on v6e/v7x, and feeds the second
    # MXU matmul directly.  (v5e is MXU-bound, so its VALU has slack either way.)
    h1 = _leaky_relu(acc1.astype(jnp.bfloat16) + b1_ref[...])

    # Layer 2 (1024 -> 256): bf16 MXU matmul, fp32 accumulation + fp32 epilogue.
    acc2 = jnp.dot(h1, w2_ref[...], preferred_element_type=jnp.float32)
    h2 = _leaky_relu(acc2 + b2_ref[...])                       # (tm, 256) fp32

    # Layer 3 (256 -> 1): an N=1 MXU matmul wastes the systolic array; do a
    # VPU broadcast-multiply + XLU lane reduction instead.
    logit = jnp.sum(h2 * w3_ref[...], axis=-1, keepdims=True) + b3_ref[...]

    # (tm, 1) output block: the output array has a single column, so the HBM
    # writeback is contiguous and the masked vst cost is negligible.
    o_ref[...] = jax.nn.sigmoid(logit).astype(o_ref.dtype)


def _pick_batch_tile(batch, tm_max):
    """Pick the batch tile: as large as tm_max, but shrink so the grid has at
    least 2 steps when the batch allows it (v7x megacore shards the 'parallel'
    batch axis across its 2 TensorCores).  Always a multiple of 8 (sublanes)."""
    half = ((batch + 1) // 2 + 7) // 8 * 8
    return int(max(128, min(tm_max, half)))


@functools.partial(jax.jit, static_argnames=("tm",))
def discriminator_forward(x, w1, b1, w2, b2, w3_row, b3, *, tm=512):
    """x: (B, 784) fp32.  Weights/biases must come from `prepare_params`."""
    B = x.shape[0]
    tile_m = _pick_batch_tile(B, tm)
    grid_m = pl.cdiv(B, tile_m)

    flops = 2 * B * (IN_DIM * H1_DIM + H1_DIM * H2_DIM + H2_DIM * OUT_DIM)
    bytes_accessed = (B * IN_DIM * 4                               # x (fp32)
                      + (IN_DIM * H1_DIM + H1_DIM * H2_DIM) * 2    # bf16 weights
                      + (H1_DIM + 2 * H2_DIM + OUT_DIM) * 4        # biases + W3 row
                      + B * OUT_DIM * 4)                           # out

    in_specs = [
        pl.BlockSpec((tile_m, IN_DIM), lambda i: (i, 0)),      # x tile (fp32)
        pl.BlockSpec((IN_DIM, H1_DIM), lambda i: (0, 0)),      # W1 (constant)
        pl.BlockSpec((1, H1_DIM), lambda i: (0, 0)),           # b1 (bf16 row)
        pl.BlockSpec((H1_DIM, H2_DIM), lambda i: (0, 0)),      # W2 (constant)
        pl.BlockSpec((1, H2_DIM), lambda i: (0, 0)),           # b2 (fp32 row)
        pl.BlockSpec((1, H2_DIM), lambda i: (0, 0)),           # W3 row (fp32)
        pl.BlockSpec((1, OUT_DIM), lambda i: (0, 0)),          # b3
    ]
    out_specs = pl.BlockSpec((tile_m, OUT_DIM), lambda i: (i, 0))

    return pl.pallas_call(
        discriminator_kernel,
        out_shape=jax.ShapeDtypeStruct((B, OUT_DIM), jnp.float32),
        grid_spec=pltpu.PrefetchScalarGridSpec(
            num_scalar_prefetch=0,
            grid=(grid_m,),
            in_specs=in_specs,
            out_specs=out_specs,
        ),
        compiler_params=pltpu.CompilerParams(
            dimension_semantics=("parallel",),
            vmem_limit_bytes=32 * 1024 * 1024,
        ),
        cost_estimate=pl.CostEstimate(
            flops=flops, transcendentals=B, bytes_accessed=bytes_accessed),
    )(x, w1, b1, w2, b2, w3_row, b3)


def init_params(key):
    """Deterministic synthetic fp32 parameters matching nn.Linear shapes.

    PyTorch stores Linear weight as (out, in); we store the transpose
    (in, out) so the forward computes x @ W directly.
    """
    ks = jax.random.split(key, 6)

    def uniform_like_torch(k, fan_in, shape):
        bound = 1.0 / (fan_in ** 0.5)
        return jax.random.uniform(k, shape, jnp.float32, -bound, bound)

    w1 = uniform_like_torch(ks[0], IN_DIM, (IN_DIM, H1_DIM))
    b1 = uniform_like_torch(ks[1], IN_DIM, (H1_DIM,))
    w2 = uniform_like_torch(ks[2], H1_DIM, (H1_DIM, H2_DIM))
    b2 = uniform_like_torch(ks[3], H1_DIM, (H2_DIM,))
    w3 = uniform_like_torch(ks[4], H2_DIM, (H2_DIM, OUT_DIM))
    b3 = uniform_like_torch(ks[5], H2_DIM, (OUT_DIM,))
    return w1, b1, w2, b2, w3, b3


def prepare_params(w1, b1, w2, b2, w3, b3):
    """One-time conversion to kernel layout/dtypes (done once, outside the
    jitted forward, so the forward has zero wrapper-side preprocessing)."""
    assert w3.shape == (H2_DIM, OUT_DIM) and OUT_DIM == 1, w3.shape
    return (
        w1.astype(jnp.bfloat16),                              # (784, 1024)
        b1.reshape(1, H1_DIM).astype(jnp.bfloat16),           # bf16 (layer-1 epilogue is bf16)
        w2.astype(jnp.bfloat16),                              # (1024, 256)
        b2.reshape(1, H2_DIM).astype(jnp.float32),
        jnp.transpose(w3).astype(jnp.float32),                # (1, 256) row for VPU projection
        b3.reshape(1, OUT_DIM).astype(jnp.float32),
    )


def reference_forward(x, w1, b1, w2, b2, w3, b3):
    h1 = _leaky_relu(x @ w1 + b1)
    h2 = _leaky_relu(h1 @ w2 + b2)
    return jax.nn.sigmoid(h2 @ w3 + b3)


if __name__ == "__main__":
    key = jax.random.PRNGKey(0)
    k_params, k_x = jax.random.split(key)

    raw_params = init_params(k_params)
    params = prepare_params(*raw_params)

    # Small demo batch; deliberately not a multiple of the batch tile so the
    # multi-step grid + ragged-last-tile (masked writeback) paths are exercised.
    B = 200
    x = jax.random.normal(k_x, (B, IN_DIM), jnp.float32)

    out = discriminator_forward(x, *params)          # auto tile -> 128, grid of 2
    out = jax.block_until_ready(out)

    ref = reference_forward(x, *raw_params)
    assert out.shape == (B, OUT_DIM), out.shape
    # bf16 matmul operands + bf16 layer-1 epilogue (fp32 accumulation) -> use a
    # loosened tolerance vs the fp32 reference.
    max_err = float(jnp.max(jnp.abs(out - ref)))
    assert jnp.allclose(out, ref, atol=2e-2, rtol=2e-2), (
        f"mismatch vs reference, max abs err = {max_err}")

    print("KERNEL_OK")
</pallas_src>

<mosaic_0001>
module attributes {stable_mosaic.version = 11 : i64} {
  func.func @discriminator_kernel(%arg0: i32, %arg1: memref<128x784xf32, #tpu.memory_space<vmem>>, %arg2: memref<784x1024xbf16, #tpu.memory_space<vmem>>, %arg3: memref<1x1024xbf16, #tpu.memory_space<vmem>>, %arg4: memref<1024x256xbf16, #tpu.memory_space<vmem>>, %arg5: memref<1x256xf32, #tpu.memory_space<vmem>>, %arg6: memref<1x256xf32, #tpu.memory_space<vmem>>, %arg7: memref<1x1xf32, #tpu.memory_space<vmem>>, %arg8: memref<128x1xf32, #tpu.memory_space<vmem>>) attributes {dimension_semantics = [#tpu.dimension_semantics<parallel>], iteration_bounds = array<i64: 2>, scalar_prefetch = 0 : i64, scratch_operands = 0 : i64, tpu.core_type = #tpu.core_type<tc>, window_params = [{transform_indices = @transform_0, window_bounds = array<i64: 128, 784>}, {pipeline_mode = #tpu.pipeline_mode<synchronous>, transform_indices = @transform_1, window_bounds = array<i64: 784, 1024>}, {pipeline_mode = #tpu.pipeline_mode<synchronous>, transform_indices = @transform_2, window_bounds = array<i64: 1, 1024>}, {pipeline_mode = #tpu.pipeline_mode<synchronous>, transform_indices = @transform_3, window_bounds = array<i64: 1024, 256>}, {pipeline_mode = #tpu.pipeline_mode<synchronous>, transform_indices = @transform_4, window_bounds = array<i64: 1, 256>}, {pipeline_mode = #tpu.pipeline_mode<synchronous>, transform_indices = @transform_5, window_bounds = array<i64: 1, 256>}, {pipeline_mode = #tpu.pipeline_mode<synchronous>, transform_indices = @transform_6, window_bounds = array<i64: 1, 1>}, {transform_indices = @transform_7, window_bounds = array<i64: 128, 1>}]} {
    %c0 = arith.constant 0 : index
    %c0_0 = arith.constant 0 : index
    %0 = vector.load %arg1[%c0, %c0_0] : memref<128x784xf32, #tpu.memory_space<vmem>>, vector<128x784xf32>
    %1 = arith.truncf %0 : vector<128x784xf32> to vector<128x784xbf16>
    %c0_1 = arith.constant 0 : index
    %c0_2 = arith.constant 0 : index
    %2 = vector.load %arg2[%c0_1, %c0_2] : memref<784x1024xbf16, #tpu.memory_space<vmem>>, vector<784x1024xbf16>
    %cst = arith.constant dense<0.000000e+00> : vector<128x1024xf32>
    %3 = tpu.matmul %1, %2, %cst {dimension_numbers = #tpu.dot_dimension_numbers<[1], [0], [0], [1], [0, 0, 1, 1], [], []>} : vector<128x784xbf16>, vector<784x1024xbf16>, vector<128x1024xf32> -> vector<128x1024xf32>
    %4 = arith.truncf %3 : vector<128x1024xf32> to vector<128x1024xbf16>
    %c0_3 = arith.constant 0 : index
    %c0_4 = arith.constant 0 : index
    %5 = vector.load %arg3[%c0_3, %c0_4] : memref<1x1024xbf16, #tpu.memory_space<vmem>>, vector<1x1024xbf16>
    %6 = vector.broadcast %5 : vector<1x1024xbf16> to vector<128x1024xbf16>
    %7 = arith.addf %4, %6 : vector<128x1024xbf16>
    %cst_5 = arith.constant 0.000000e+00 : bf16
    %8 = vector.broadcast %cst_5 : bf16 to vector<128x1024xbf16>
    %9 = arith.cmpf ogt, %7, %8 : vector<128x1024xbf16>
    %cst_6 = arith.constant 2.001950e-01 : bf16
    %10 = vector.broadcast %cst_6 : bf16 to vector<128x1024xbf16>
    %11 = arith.mulf %10, %7 : vector<128x1024xbf16>
    %12 = arith.select %9, %7, %11 : vector<128x1024xi1>, vector<128x1024xbf16>
    %c0_7 = arith.constant 0 : index
    %c0_8 = arith.constant 0 : index
    %13 = vector.load %arg4[%c0_7, %c0_8] : memref<1024x256xbf16, #tpu.memory_space<vmem>>, vector<1024x256xbf16>
    %cst_9 = arith.constant dense<0.000000e+00> : vector<128x256xf32>
    %14 = tpu.matmul %12, %13, %cst_9 {dimension_numbers = #tpu.dot_dimension_numbers<[1], [0], [0], [1], [0, 0, 1, 1], [], []>} : vector<128x1024xbf16>, vector<1024x256xbf16>, vector<128x256xf32> -> vector<128x256xf32>
    %c0_10 = arith.constant 0 : index
    %c0_11 = arith.constant 0 : index
    %15 = vector.load %arg5[%c0_10, %c0_11] : memref<1x256xf32, #tpu.memory_space<vmem>>, vector<1x256xf32>
    %16 = vector.broadcast %15 : vector<1x256xf32> to vector<128x256xf32>
    %17 = arith.addf %14, %16 : vector<128x256xf32>
    %cst_12 = arith.constant 0.000000e+00 : f32
    %18 = vector.broadcast %cst_12 : f32 to vector<128x256xf32>
    %19 = arith.cmpf ogt, %17, %18 : vector<128x256xf32>
    %cst_13 = arith.constant 2.000000e-01 : f32
    %20 = vector.broadcast %cst_13 : f32 to vector<128x256xf32>
    %21 = arith.mulf %20, %17 : vector<128x256xf32>
    %22 = arith.select %19, %17, %21 : vector<128x256xi1>, vector<128x256xf32>
    %c0_14 = arith.constant 0 : index
    %c0_15 = arith.constant 0 : index
    %23 = vector.load %arg6[%c0_14, %c0_15] : memref<1x256xf32, #tpu.memory_space<vmem>>, vector<1x256xf32>
    %24 = vector.broadcast %23 : vector<1x256xf32> to vector<128x256xf32>
    %25 = arith.mulf %22, %24 : vector<128x256xf32>
    %cst_16 = arith.constant dense<0.000000e+00> : vector<128xf32>
    %26 = vector.multi_reduction <add>, %25, %cst_16 [1] : vector<128x256xf32> to vector<128xf32>
    %27 = vector.shape_cast %26 : vector<128xf32> to vector<128x1xf32>
    %c0_17 = arith.constant 0 : index
    %c0_18 = arith.constant 0 : index
    %28 = vector.load %arg7[%c0_17, %c0_18] : memref<1x1xf32, #tpu.memory_space<vmem>>, vector<1x1xf32>
    %29 = vector.broadcast %28 : vector<1x1xf32> to vector<128x1xf32>
    %30 = arith.addf %27, %29 : vector<128x1xf32>
    %31 = arith.negf %30 : vector<128x1xf32>
    %32 = math.exp %31 : vector<128x1xf32>
    %cst_19 = arith.constant 1.000000e+00 : f32
    %33 = vector.broadcast %cst_19 : f32 to vector<128x1xf32>
    %34 = arith.addf %33, %32 : vector<128x1xf32>
    %35 = arith.divf %33, %34 : vector<128x1xf32>
    %c0_20 = arith.constant 0 : index
    %c0_21 = arith.constant 0 : index
    %36 = vector.load %arg8[%c0_20, %c0_21] : memref<128x1xf32, #tpu.memory_space<vmem>>, vector<128x1xf32>
    tpu.vector_store %arg8[%c0_20, %c0_21], %35 {strides = array<i32>} : memref<128x1xf32, #tpu.memory_space<vmem>>, vector<128x1xf32>,
    return
  }
  func.func @transform_0(%arg0: i32) -> (i32, i32) {
    %c0_i32 = arith.constant 0 : i32
    %c0_i32_0 = arith.constant 0 : i32
    return %arg0, %c0_i32 : i32, i32
  }
  func.func @transform_1(%arg0: i32) -> (i32, i32) {
    %c0_i32 = arith.constant 0 : i32
    %c0_i32_0 = arith.constant 0 : i32
    %c0_i32_1 = arith.constant 0 : i32
    return %c0_i32, %c0_i32_0 : i32, i32
  }
  func.func @transform_2(%arg0: i32) -> (i32, i32) {
    %c0_i32 = arith.constant 0 : i32
    %c0_i32_0 = arith.constant 0 : i32
    %c0_i32_1 = arith.constant 0 : i32
    return %c0_i32, %c0_i32_0 : i32, i32
  }
  func.func @transform_3(%arg0: i32) -> (i32, i32) {
    %c0_i32 = arith.constant 0 : i32
    %c0_i32_0 = arith.constant 0 : i32
    %c0_i32_1 = arith.constant 0 : i32
    return %c0_i32, %c0_i32_0 : i32, i32
  }
  func.func @transform_4(%arg0: i32) -> (i32, i32) {
    %c0_i32 = arith.constant 0 : i32
    %c0_i32_0 = arith.constant 0 : i32
    %c0_i32_1 = arith.constant 0 : i32
    return %c0_i32, %c0_i32_0 : i32, i32
  }
  func.func @transform_5(%arg0: i32) -> (i32, i32) {
    %c0_i32 = arith.constant 0 : i32
    %c0_i32_0 = arith.constant 0 : i32
    %c0_i32_1 = arith.constant 0 : i32
    return %c0_i32, %c0_i32_0 : i32, i32
  }
  func.func @transform_6(%arg0: i32) -> (i32, i32) {
    %c0_i32 = arith.constant 0 : i32
    %c0_i32_0 = arith.constant 0 : i32
    %c0_i32_1 = arith.constant 0 : i32
    return %c0_i32, %c0_i32_0 : i32, i32
  }
  func.func @transform_7(%arg0: i32) -> (i32, i32) {
    %c0_i32 = arith.constant 0 : i32
    %c0_i32_0 = arith.constant 0 : i32
    return %arg0, %c0_i32 : i32, i32
  }
}

</mosaic_0001>

<llo_original>
// kernel: discriminator_forward.1
$region0: #{discriminator_forward.1}
  #allocation0 [shape = 'u32[]', space=smem, size = 0x4, offset = 0x4, fixed_abs, tag = 'smem constant byte address 0x4 - core index']
  #allocation1 [shape = 'u32[72,128]{1,0:T(1,128)}', space=vmem, size = 0x9000, scoped, tag = 'internal scratch']
  #allocation2 [shape = 'f32[1,1]{1,0:T(1,128)S(1)}', space=vmem, size = 0x200, scoped, tag = 'scoped memory for discriminator_forward.1']
  %s0 = inlined_call_operand.hbm [shape: f32[200,784], index: 0, kind: input, shape index: {}]
  %s1 = inlined_call_operand.hbm [shape: bf16[784,1024], index: 1, kind: input, shape index: {}]
  %s2 = inlined_call_operand.hbm [shape: bf16[1,1024], index: 2, kind: input, shape index: {}]
  %s3 = inlined_call_operand.hbm [shape: bf16[1024,256], index: 3, kind: input, shape index: {}]
  %s4 = inlined_call_operand.hbm [shape: f32[1,256], index: 4, kind: input, shape index: {}]
  %s5 = inlined_call_operand.hbm [shape: f32[1,256], index: 5, kind: input, shape index: {}]
  %s6 = inlined_call_operand.<no memory space> [shape: f32[1,1], index: 6, kind: input, shape index: {}]
  %s7 = inlined_call_operand.vmem [shape: f32[200,1], index: 7, kind: output, shape index: {}]
  %s8 = sld [smem:[#allocation0]]
  $region133: #{discriminator_forward.1} parent=0
    _
  %s10 = ssub.s32 1, %s8
  %s11 = scalar_select 0, %s10, %s8
  %v12 = vstv %s6
  %13 = vst [vmem:[#allocation2] sm:$0x1] %v12
  $region1: #{discriminator_forward.1} parent=0
    #allocation3 [shape = 'u8[917504]{0}', space=vmem, size = 0xe0000, scoped, tag = 'input window, operand 0']
    #allocation4 [shape = 's32[2]{0}', space=sflag, size = 0x8, scoped, tag = 'scoped memory for discriminator_forward.1']
    #allocation5 [shape = 'u8[1605632]{0}', space=vmem, size = 0x188000, scoped, tag = 'input window, operand 1, single buffered']
    #allocation6 [shape = 's32[1]{0}', space=sflag, size = 0x4, scoped, tag = 'scoped memory for discriminator_forward.1']
    #allocation7 [shape = 'u8[4096]{0}', space=vmem, size = 0x1000, scoped, tag = 'input window, operand 2, single buffered']
    #allocation8 [shape = 'u8[524288]{0}', space=vmem, size = 0x80000, scoped, tag = 'input window, operand 3, single buffered']
    #allocation9 [shape = 's32[1]{0}', space=sflag, size = 0x4, scoped, tag = 'scoped memory for discriminator_forward.1']
    #allocation10 [shape = 'u8[1024]{0}', space=vmem, size = 0x400, scoped, tag = 'input window, operand 4, single buffered']
    #allocation11 [shape = 'u8[1024]{0}', space=vmem, size = 0x400, scoped, tag = 'input window, operand 5, single buffered']
    #allocation12 [shape = 's32[1]{0}', space=sflag, size = 0x4, scoped, tag = 'scoped memory for discriminator_forward.1']
    #allocation13 [shape = 'u8[131072]{0}', space=vmem, size = 0x20000, scoped, tag = 'output window, operand 0']
    %14 = vsyncpa [#allocation4], 0
    %s15 = scalar_lea.sflag [#allocation4], 1
    %16 = vsyncpa %s15, 0
    %17 = vsyncpa [#allocation6], 0
    %18 = vsyncpa [#allocation9], 0
    %19 = vsyncpa [#allocation12], 0
    loop: start=0, step=1, limit=4
    $region2: #{discriminator_forward.1} parent=1 // loop_pre_header
      _
    $region3: #{discriminator_forward.1} parent=1 // loop_header
      %s21 = sphi 0, %s25
      %p22 = scmp.ge.s32.totalorder %s21, 4
      %s31 = sphi 0, %s33
      %s34 = sphi 0, %s31
      %s35 = sphi 0, %s34
      %s51 = sphi 0, %s35
      %s55 = sphi 0, %s55
      %s57 = sphi 0, %s55
      %s58 = sphi 0, %s57
      %s72 = sphi 0, %s58
      %s76 = sphi 0, %s76
      %s78 = sphi 0, %s76
      %s79 = sphi 0, %s78
      %s93 = sphi 0, %s79
      %s97 = sphi 0, %s97
      %s99 = sphi 0, %s97
      %s100 = sphi 0, %s99
      %s114 = sphi 0, %s100
      %s118 = sphi 0, %s118
      %s120 = sphi 0, %s118
      %s121 = sphi 0, %s120
      %s135 = sphi 0, %s121
      %s139 = sphi 0, %s139
      %s141 = sphi 0, %s139
      %s142 = sphi 0, %s141
      %s156 = sphi 0, %s142
      %s160 = sphi 0, %s160
      %s162 = sphi 0, %s160
      %s163 = sphi 0, %s162
      %s177 = sphi 0, %s163
      %s183 = sphi 0, %s185
      %s186 = sphi 0, %s183
      %s187 = sphi 0, %s186
      %s203 = sphi 0, %s187
    $region4: #{discriminator_forward.1} parent=1 // loop_header_branch
      %24 = sbr.rel (%p22) target = $region8
    $region5: #{discriminator_forward.1} parent=1 // loop_body
      %s26 = ssub.s32 %s21, 1
      %s27 = ssub.s32 %s21, 2
      %s28 = sadd.s32 %s21, 1
      %s29 = ssub.s32 %s21, %s28
      %p30 = scmp.eq.s32.totalorder %s29, 0
      %s32 = sadd.s32 %s31, 1
      %s33 = scalar_select %p30, %s31, %s32
      %p36 = pneg %p30
      %p37 = scmp.eq.s32.totalorder %s21, 1
      %p38 = por %p36, %p37
      %p39 = scmp.ne.s32.totalorder %s31, %s34
      %p40 = scmp.eq.s32.totalorder %s21, 0
      %p41 = por %p39, %p40
      %p42 = scmp.ne.s32.totalorder %s31, %s34
      %p43 = scmp.eq.s32.totalorder %s26, 1
      %p44 = por %p42, %p43
      %p45 = scmp.ne.s32.totalorder %s34, %s35
      %p46 = scmp.eq.s32.totalorder %s26, 0
      %p47 = por %p45, %p46
      %p48 = scmp.ne.s32.totalorder %s34, %s35
      %p49 = scmp.eq.s32.totalorder %s27, 1
      %p50 = por %p48, %p49
      %p52 = scmp.ne.s32.totalorder %s35, %s51
      %p53 = scmp.eq.s32.totalorder %s27, 0
      %p54 = por %p52, %p53
      %s56 = sadd.s32 %s55, 1
      %p59 = scmp.eq.s32.totalorder %s21, 1
      %p60 = scmp.ne.s32.totalorder %s55, %s57
      %p61 = scmp.eq.s32.totalorder %s21, 0
      %p62 = por %p60, %p61
      %p63 = scmp.ne.s32.totalorder %s55, %s57
      %p64 = scmp.eq.s32.totalorder %s26, 1
      %p65 = por %p63, %p64
      %p66 = scmp.ne.s32.totalorder %s57, %s58
      %p67 = scmp.eq.s32.totalorder %s26, 0
      %p68 = por %p66, %p67
      %p69 = scmp.ne.s32.totalorder %s57, %s58
      %p70 = scmp.eq.s32.totalorder %s27, 1
      %p71 = por %p69, %p70
      %p73 = scmp.ne.s32.totalorder %s58, %s72
      %p74 = scmp.eq.s32.totalorder %s27, 0
      %p75 = por %p73, %p74
      %s77 = sadd.s32 %s76, 1
      %p80 = scmp.eq.s32.totalorder %s21, 1
      %p81 = scmp.ne.s32.totalorder %s76, %s78
      %p82 = scmp.eq.s32.totalorder %s21, 0
      %p83 = por %p81, %p82
      %p84 = scmp.ne.s32.totalorder %s76, %s78
      %p85 = scmp.eq.s32.totalorder %s26, 1
      %p86 = por %p84, %p85
      %p87 = scmp.ne.s32.totalorder %s78, %s79
      %p88 = scmp.eq.s32.totalorder %s26, 0
      %p89 = por %p87, %p88
      %p90 = scmp.ne.s32.totalorder %s78, %s79
      %p91 = scmp.eq.s32.totalorder %s27, 1
      %p92 = por %p90, %p91
      %p94 = scmp.ne.s32.totalorder %s79, %s93
      %p95 = scmp.eq.s32.totalorder %s27, 0
      %p96 = por %p94, %p95
      %s98 = sadd.s32 %s97, 1
      %p101 = scmp.eq.s32.totalorder %s21, 1
      %p102 = scmp.ne.s32.totalorder %s97, %s99
      %p103 = scmp.eq.s32.totalorder %s21, 0
      %p104 = por %p102, %p103
      %p105 = scmp.ne.s32.totalorder %s97, %s99
      %p106 = scmp.eq.s32.totalorder %s26, 1
      %p107 = por %p105, %p106
      %p108 = scmp.ne.s32.totalorder %s99, %s100
      %p109 = scmp.eq.s32.totalorder %s26, 0
      %p110 = por %p108, %p109
      %p111 = scmp.ne.s32.totalorder %s99, %s100
      %p112 = scmp.eq.s32.totalorder %s27, 1
      %p113 = por %p111, %p112
      %p115 = scmp.ne.s32.totalorder %s100, %s114
      %p116 = scmp.eq.s32.totalorder %s27, 0
      %p117 = por %p115, %p116
      %s119 = sadd.s32 %s118, 1
      %p122 = scmp.eq.s32.totalorder %s21, 1
      %p123 = scmp.ne.s32.totalorder %s118, %s120
      %p124 = scmp.eq.s32.totalorder %s21, 0
      %p125 = por %p123, %p124
      %p126 = scmp.ne.s32.totalorder %s118, %s120
      %p127 = scmp.eq.s32.totalorder %s26, 1
      %p128 = por %p126, %p127
      %p129 = scmp.ne.s32.totalorder %s120, %s121
      %p130 = scmp.eq.s32.totalorder %s26, 0
      %p131 = por %p129, %p130
      %p132 = scmp.ne.s32.totalorder %s120, %s121
      %p133 = scmp.eq.s32.totalorder %s27, 1
      %p134 = por %p132, %p133
      %p136 = scmp.ne.s32.totalorder %s121, %s135
      %p137 = scmp.eq.s32.totalorder %s27, 0
      %p138 = por %p136, %p137
      %s140 = sadd.s32 %s139, 1
      %p143 = scmp.eq.s32.totalorder %s21, 1
      %p144 = scmp.ne.s32.totalorder %s139, %s141
      %p145 = scmp.eq.s32.totalorder %s21, 0
      %p146 = por %p144, %p145
      %p147 = scmp.ne.s32.totalorder %s139, %s141
      %p148 = scmp.eq.s32.totalorder %s26, 1
      %p149 = por %p147, %p148
      %p150 = scmp.ne.s32.totalorder %s141, %s142
      %p151 = scmp.eq.s32.totalorder %s26, 0
      %p152 = por %p150, %p151
      %p153 = scmp.ne.s32.totalorder %s141, %s142
      %p154 = scmp.eq.s32.totalorder %s27, 1
      %p155 = por %p153, %p154
      %p157 = scmp.ne.s32.totalorder %s142, %s156
      %p158 = scmp.eq.s32.totalorder %s27, 0
      %p159 = por %p157, %p158
      %s161 = sadd.s32 %s160, 1
      %p164 = scmp.eq.s32.totalorder %s21, 1
      %p165 = scmp.ne.s32.totalorder %s160, %s162
      %p166 = scmp.eq.s32.totalorder %s21, 0
      %p167 = por %p165, %p166
      %p168 = scmp.ne.s32.totalorder %s160, %s162
      %p169 = scmp.eq.s32.totalorder %s26, 1
      %p170 = por %p168, %p169
      %p171 = scmp.ne.s32.totalorder %s162, %s163
      %p172 = scmp.eq.s32.totalorder %s26, 0
      %p173 = por %p171, %p172
      %p174 = scmp.ne.s32.totalorder %s162, %s163
      %p175 = scmp.eq.s32.totalorder %s27, 1
      %p176 = por %p174, %p175
      %p178 = scmp.ne.s32.totalorder %s163, %s177
      %p179 = scmp.eq.s32.totalorder %s27, 0
      %p180 = por %p178, %p179
      %s181 = ssub.s32 %s21, %s28
      %p182 = scmp.eq.s32.totalorder %s181, 0
      %s184 = sadd.s32 %s183, 1
      %s185 = scalar_select %p182, %s183, %s184
      %p188 = pneg %p182
      %p189 = scmp.eq.s32.totalorder %s21, 1
      %p190 = por %p188, %p189
      %p191 = scmp.ne.s32.totalorder %s183, %s186
      %p192 = scmp.eq.s32.totalorder %s21, 0
      %p193 = por %p191, %p192
      %p194 = scmp.ne.s32.totalorder %s183, %s186
      %p195 = scmp.eq.s32.totalorder %s26, 1
      %p196 = por %p194, %p195
      %p197 = scmp.ne.s32.totalorder %s186, %s187
      %p198 = scmp.eq.s32.totalorder %s26, 0
      %p199 = por %p197, %p198
      %p200 = scmp.ne.s32.totalorder %s186, %s187
      %p201 = scmp.eq.s32.totalorder %s27, 1
      %p202 = por %p200, %p201
      %p204 = scmp.ne.s32.totalorder %s187, %s203
      %p205 = scmp.eq.s32.totalorder %s27, 0
      %p206 = por %p204, %p205
      %p207 = scmp.le.s32.totalorder 1, %s21
      %p208 = scmp.lt.s32.totalorder %s21, 3
      %p209 = pnand %p207, %p208
      %p210 = pneg %p209
      // Predicated region
      $region9: #{discriminator_forward.1} parent=5 // pred_check
        _
      $region10: #{discriminator_forward.1} parent=5 // pred_check_branch
        %212 = sbr.rel (%p209) target = $region12
      $region11: #{discriminator_forward.1} parent=5 // pred_region
        %s213 = ssub.s32 %s21, 1
        // Predicated region
        $region13: #{discriminator_forward.1} parent=11 // pred_check
          %p214 = pneg %p68
        $region14: #{discriminator_forward.1} parent=11 // pred_check_branch
          %216 = sbr.rel (%p214) target = $region16
        $region15: #{discriminator_forward.1} parent=11 // pred_region
          %218 = vsyncadd [#allocation6], 0
          %s219 = sshll.u32 %s1, 4
          %s220 = int_to_ptr.hbm [resolvable:$true] %s219
          %s221 = sshll.u32 [#allocation5], 4
          %s222 = int_to_ptr.vmem [resolvable:$true] %s221
          %227 = dma.hbm_to_vmem [thread:$0]  %s220, 50176, %s222, [#allocation6], 512, 512, 32
        $region16: #{discriminator_forward.1} parent=11 // pred_fallthru
          _
        // Predicated region
        $region17: #{discriminator_forward.1} parent=11 // pred_check
          %p228 = pneg %p89
        $region18: #{discriminator_forward.1} parent=11 // pred_check_branch
          %230 = sbr.rel (%p228) target = $region20
        $region19: #{discriminator_forward.1} parent=11 // pred_region
          %232 = vsyncadd [#allocation6], 0
          %s234 = sshll.u32 %s2, 4
          %s235 = int_to_ptr.hbm [resolvable:$true] %s234
          %s236 = sshll.u32 [#allocation7], 4
          %s237 = int_to_ptr.vmem [resolvable:$true] %s236
          %239 = dma.hbm_to_vmem [thread:$0]  %s235, 128, %s237, [#allocation6]
        $region20: #{discriminator_forward.1} parent=11 // pred_fallthru
          _
        // Predicated region
        $region21: #{discriminator_forward.1} parent=11 // pred_check
          %p240 = pneg %p110
        $region22: #{discriminator_forward.1} parent=11 // pred_check_branch
          %242 = sbr.rel (%p240) target = $region24
        $region23: #{discriminator_forward.1} parent=11 // pred_region
          %244 = vsyncadd [#allocation9], 0
          %s245 = sshll.u32 %s3, 4
          %s246 = int_to_ptr.hbm [resolvable:$true] %s245
          %s247 = sshll.u32 [#allocation8], 4
          %s248 = int_to_ptr.vmem [resolvable:$true] %s247
          %253 = dma.hbm_to_vmem [thread:$0]  %s246, 16384, %s248, [#allocation9], 128, 128, 8
        $region24: #{discriminator_forward.1} parent=11 // pred_fallthru
          _
        // Predicated region
        $region25: #{discriminator_forward.1} parent=11 // pred_check
          %p254 = pneg %p131
        $region26: #{discriminator_forward.1} parent=11 // pred_check_branch
          %256 = sbr.rel (%p254) target = $region28
        $region27: #{discriminator_forward.1} parent=11 // pred_region
          %258 = vsyncadd [#allocation9], 0
          %s260 = sshll.u32 %s4, 4
          %s261 = int_to_ptr.hbm [resolvable:$true] %s260
          %s262 = sshll.u32 [#allocation10], 4
          %s263 = int_to_ptr.vmem [resolvable:$true] %s262
          %265 = dma.hbm_to_vmem [thread:$0]  %s261, 32, %s263, [#allocation9]
        $region28: #{discriminator_forward.1} parent=11 // pred_fallthru
          _
        // Predicated region
        $region29: #{discriminator_forward.1} parent=11 // pred_check
          %p266 = pneg %p152
        $region30: #{discriminator_forward.1} parent=11 // pred_check_branch
          %268 = sbr.rel (%p266) target = $region32
        $region31: #{discriminator_forward.1} parent=11 // pred_region
          %270 = vsyncadd [#allocation12], 0
          %s272 = sshll.u32 %s5, 4
          %s273 = int_to_ptr.hbm [resolvable:$true] %s272
          %s274 = sshll.u32 [#allocation11], 4
          %s275 = int_to_ptr.vmem [resolvable:$true] %s274
          %277 = dma.hbm_to_vmem [thread:$0]  %s273, 32, %s275, [#allocation12]
        $region32: #{discriminator_forward.1} parent=11 // pred_fallthru
          _
        // Predicated region
        $region33: #{discriminator_forward.1} parent=11 // pred_check
          %p278 = pneg %p173
        $region34: #{discriminator_forward.1} parent=11 // pred_check_branch
          %280 = sbr.rel (%p278) target = $region36
        $region35: #{discriminator_forward.1} parent=11 // pred_region
          _
        $region36: #{discriminator_forward.1} parent=11 // pred_fallthru
          _
      $region12: #{discriminator_forward.1} parent=5 // pred_fallthru
        _
      %p281 = scmp.lt.s32.totalorder %s21, 2
      // Predicated region
      $region37: #{discriminator_forward.1} parent=5 // pred_check
        %p282 = pneg %p281
      $region38: #{discriminator_forward.1} parent=5 // pred_check_branch
        %284 = sbr.rel (%p282) target = $region40
      $region39: #{discriminator_forward.1} parent=5 // pred_region
        // Predicated region
        $region41: #{discriminator_forward.1} parent=39 // pred_check
          %p285 = pneg %p41
        $region42: #{discriminator_forward.1} parent=39 // pred_check_branch
          %287 = sbr.rel (%p285) target = $region44
        $region43: #{discriminator_forward.1} parent=39 // pred_region
          %s288 = sand.u32 %s31, 1
          %s289 = scalar_lea.sflag [#allocation4], %s288
          %s290 = sand.u32 %s31, 1
          %s291 = smul.addr %s290, 896
          %s292 = scalar_lea.vmem [#allocation3], %s291
          %s293 = smul.u32 16, %s21
          %s294 = ssub.s32 25, %s293
          %p295 = scmp.lt.s32.totalorder %s294, 16
          %s296 = scalar_select %p295, %s294, 16
          %s297 = smul.u32 8, %s296
          %s298 = smul.u32 %s297, 7
          %s299 = ssub.s32 896, %s298
          %s300 = sshll.u32 %s299, 4
          %301 = vsyncadd %s289, %s300
          %p302 = scmp.ne.s32.totalorder 0, %s298
          %s303 = smul.addr %s293, 7
          %s304 = smul.addr %s303, 8
          %s305 = scalar_lea.hbm %s0, %s304
          %s306 = smul.u32 56, %s296
          %s307 = sshll.u32 %s305, 4
          %s308 = int_to_ptr.hbm [resolvable:$true] %s307
          %s309 = sshll.u32 %s292, 4
          %s310 = int_to_ptr.vmem [resolvable:$true] %s309
          %s311 = sshll.u32 %s306, 4
          %315 = dma.hbm_to_vmem [thread:$0]  (%p302), %s308, %s311, %s310, %s289, 896, 896, 56
        $region44: #{discriminator_forward.1} parent=39 // pred_fallthru
          _
      $region40: #{discriminator_forward.1} parent=5 // pred_fallthru
        _
      %p316 = scmp.le.s32.totalorder 1, %s21
      %p317 = scmp.lt.s32.totalorder %s21, 3
      %p318 = pnand %p316, %p317
      %p319 = pneg %p318
      // Predicated region
      $region45: #{discriminator_forward.1} parent=5 // pred_check
        _
      $region46: #{discriminator_forward.1} parent=5 // pred_check_branch
        %321 = sbr.rel (%p318) target = $region48
      $region47: #{discriminator_forward.1} parent=5 // pred_region
        %s322 = ssub.s32 %s21, 1
        %s323 = sand.u32 %s34, 1
        %s324 = scalar_lea.sflag [#allocation4], %s323
        %s325 = sand.u32 %s34, 1
        %s326 = smul.addr %s325, 896
        %s327 = scalar_lea.vmem [#allocation3], %s326
        // Predicated region
        $region49: #{discriminator_forward.1} parent=47 // pred_check
          %p328 = pneg %p47
        $region50: #{discriminator_forward.1} parent=47 // pred_check_branch
          %330 = sbr.rel (%p328) target = $region52
        $region51: #{discriminator_forward.1} parent=47 // pred_region
          %332 = dma.done %s324, 14336
        $region52: #{discriminator_forward.1} parent=47 // pred_fallthru
          _
        // Predicated region
        $region53: #{discriminator_forward.1} parent=47 // pred_check
          %p333 = pneg %p68
        $region54: #{discriminator_forward.1} parent=47 // pred_check_branch
          %335 = sbr.rel (%p333) target = $region56
        $region55: #{discriminator_forward.1} parent=47 // pred_region
          %337 = dma.done [#allocation6], 50176
        $region56: #{discriminator_forward.1} parent=47 // pred_fallthru
          _
        // Predicated region
        $region57: #{discriminator_forward.1} parent=47 // pred_check
          %p338 = pneg %p89
        $region58: #{discriminator_forward.1} parent=47 // pred_check_branch
          %340 = sbr.rel (%p338) target = $region60
        $region59: #{discriminator_forward.1} parent=47 // pred_region
          %342 = dma.done [#allocation6], 128
        $region60: #{discriminator_forward.1} parent=47 // pred_fallthru
          _
        // Predicated region
        $region61: #{discriminator_forward.1} parent=47 // pred_check
          %p343 = pneg %p110
        $region62: #{discriminator_forward.1} parent=47 // pred_check_branch
          %345 = sbr.rel (%p343) target = $region64
        $region63: #{discriminator_forward.1} parent=47 // pred_region
          %347 = dma.done [#allocation9], 16384
        $region64: #{discriminator_forward.1} parent=47 // pred_fallthru
          _
        // Predicated region
        $region65: #{discriminator_forward.1} parent=47 // pred_check
          %p348 = pneg %p131
        $region66: #{discriminator_forward.1} parent=47 // pred_check_branch
          %350 = sbr.rel (%p348) target = $region68
        $region67: #{discriminator_forward.1} parent=47 // pred_region
          %352 = dma.done [#allocation9], 32
        $region68: #{discriminator_forward.1} parent=47 // pred_fallthru
          _
        // Predicated region
        $region69: #{discriminator_forward.1} parent=47 // pred_check
          %p353 = pneg %p152
        $region70: #{discriminator_forward.1} parent=47 // pred_check_branch
          %355 = sbr.rel (%p353) target = $region72
        $region71: #{discriminator_forward.1} parent=47 // pred_region
          %357 = dma.done [#allocation12], 32
        $region72: #{discriminator_forward.1} parent=47 // pred_fallthru
          _
        %s358 = sand.u32 %s34, 1
        %s359 = scalar_lea.sflag [#allocation4], %s358
        %s360 = sand.u32 %s34, 1
        %s361 = smul.addr %s360, 896
        %s362 = scalar_lea.vmem [#allocation3], %s361
        %p363 = pneg %p47
        %p364 = pneg %p44
        %p365 = pneg %p68
        %p366 = pneg %p65
        %p367 = pneg %p89
        %p368 = pneg %p86
        %p369 = pneg %p110
        %p370 = pneg %p107
        %p371 = pneg %p131
        %p372 = pneg %p128
        %p373 = pneg %p152
        %p374 = pneg %p149
        %p375 = pneg %p173
        %p376 = pneg %p170
        %p377 = pneg %p199
        %p378 = pneg %p196
        %s379 = sand.u32 %s186, 1
        %s380 = sand.u32 %s186, 1
        %s381 = smul.addr %s380, 128
        %s382 = scalar_lea.vmem [#allocation13], %s381
        %s383 = smul.u32 16, %s26
        %s384 = ssub.s32 25, %s383
        %p385 = scmp.lt.s32.totalorder %s384, 16
        %s386 = scalar_select %p385, %s384, 16
        %s387 = smul.u32 8, %s386
        %s388 = smul.u32 %s387, 7
        %s389 = smul.u32 16, %s26
        %s390 = ssub.s32 25, %s389
        %p391 = scmp.lt.s32.totalorder %s390, 16
        %s392 = scalar_select %p391, %s390, 16
        %s393 = smul.u32 8, %s392
        %v395 = vld [vmem:[%s327] sm:$0xff]
        %v396 = vld [vmem:[%s327 + $0x8] sm:$0xff]
        %v397 = vld [vmem:[%s327 + $0x10] sm:$0xff]
        %v398 = vld [vmem:[%s327 + $0x18] sm:$0xff]
        %v399 = vld [vmem:[%s327 + $0x20] sm:$0xff]
        %v400 = vld [vmem:[%s327 + $0x28] sm:$0xff]
        %v401 = vld [vmem:[%s327 + $0x30] sm:$0xff]
        %v402 = vld [vmem:[%s327 + $0x38] sm:$0xff]
        %v403 = vld [vmem:[%s327 + $0x40] sm:$0xff]
        %v404 = vld [vmem:[%s327 + $0x48] sm:$0xff]
        %v405 = vld [vmem:[%s327 + $0x50] sm:$0xff]
        %v406 = vld [vmem:[%s327 + $0x58] sm:$0xff]
        %v407 = vld [vmem:[%s327 + $0x60] sm:$0xff]
        %v408 = vld [vmem:[%s327 + $0x68] sm:$0xff]
        %v409 = vld [vmem:[%s327 + $0x70] sm:$0xff]
        %v410 = vld [vmem:[%s327 + $0x78] sm:$0xff]
        %v411 = vld [vmem:[%s327 + $0x80] sm:$0xff]
        %v412 = vld [vmem:[%s327 + $0x88] sm:$0xff]
        %v413 = vld [vmem:[%s327 + $0x90] sm:$0xff]
        %v414 = vld [vmem:[%s327 + $0x98] sm:$0xff]
        %v415 = vld [vmem:[%s327 + $0xa0] sm:$0xff]
        %v416 = vld [vmem:[%s327 + $0xa8] sm:$0xff]
        %v417 = vld [vmem:[%s327 + $0xb0] sm:$0xff]
        %v418 = vld [vmem:[%s327 + $0xb8] sm:$0xff]
        %v419 = vld [vmem:[%s327 + $0xc0] sm:$0xff]
        %v420 = vld [vmem:[%s327 + $0xc8] sm:$0xff]
        %v421 = vld [vmem:[%s327 + $0xd0] sm:$0xff]
        %v422 = vld [vmem:[%s327 + $0xd8] sm:$0xff]
        %v423 = vld [vmem:[%s327 + $0xe0] sm:$0xff]
        %v424 = vld [vmem:[%s327 + $0xe8] sm:$0xff]
        %v425 = vld [vmem:[%s327 + $0xf0] sm:$0xff]
        %v426 = vld [vmem:[%s327 + $0xf8] sm:$0xff]
        %v427 = vld [vmem:[%s327 + $0x100] sm:$0xff]
        %v428 = vld [vmem:[%s327 + $0x108] sm:$0xff]
        %v429 = vld [vmem:[%s327 + $0x110] sm:$0xff]
        %v430 = vld [vmem:[%s327 + $0x118] sm:$0xff]
        %v431 = vld [vmem:[%s327 + $0x120] sm:$0xff]
        %v432 = vld [vmem:[%s327 + $0x128] sm:$0xff]
        %v433 = vld [vmem:[%s327 + $0x130] sm:$0xff]
        %v434 = vld [vmem:[%s327 + $0x138] sm:$0xff]
        %v435 = vld [vmem:[%s327 + $0x140] sm:$0xff]
        %v436 = vld [vmem:[%s327 + $0x148] sm:$0xff]
        %v437 = vld [vmem:[%s327 + $0x150] sm:$0xff]
        %v438 = vld [vmem:[%s327 + $0x158] sm:$0xff]
        %v439 = vld [vmem:[%s327 + $0x160] sm:$0xff]
        %v440 = vld [vmem:[%s327 + $0x168] sm:$0xff]
        %v441 = vld [vmem:[%s327 + $0x170] sm:$0xff]
        %v442 = vld [vmem:[%s327 + $0x178] sm:$0xff]
        %v443 = vld [vmem:[%s327 + $0x180] sm:$0xff]
        %v444 = vld [vmem:[%s327 + $0x188] sm:$0xff]
        %v445 = vld [vmem:[%s327 + $0x190] sm:$0xff]
        %v446 = vld [vmem:[%s327 + $0x198] sm:$0xff]
        %v447 = vld [vmem:[%s327 + $0x1a0] sm:$0xff]
        %v448 = vld [vmem:[%s327 + $0x1a8] sm:$0xff]
        %v449 = vld [vmem:[%s327 + $0x1b0] sm:$0xff]
        %v450 = vld [vmem:[%s327 + $0x1b8] sm:$0xff]
        %v451 = vld [vmem:[%s327 + $0x1c0] sm:$0xff]
        %v452 = vld [vmem:[%s327 + $0x1c8] sm:$0xff]
        %v453 = vld [vmem:[%s327 + $0x1d0] sm:$0xff]
        %v454 = vld [vmem:[%s327 + $0x1d8] sm:$0xff]
        %v455 = vld [vmem:[%s327 + $0x1e0] sm:$0xff]
        %v456 = vld [vmem:[%s327 + $0x1e8] sm:$0xff]
        %v457 = vld [vmem:[%s327 + $0x1f0] sm:$0xff]
        %v458 = vld [vmem:[%s327 + $0x1f8] sm:$0xff]
        %v459 = vld [vmem:[%s327 + $0x200] sm:$0xff]
        %v460 = vld [vmem:[%s327 + $0x208] sm:$0xff]
        %v461 = vld [vmem:[%s327 + $0x210] sm:$0xff]
        %v462 = vld [vmem:[%s327 + $0x218] sm:$0xff]
        %v463 = vld [vmem:[%s327 + $0x220] sm:$0xff]
        %v464 = vld [vmem:[%s327 + $0x228] sm:$0xff]
        %v465 = vld [vmem:[%s327 + $0x230] sm:$0xff]
        %v466 = vld [vmem:[%s327 + $0x238] sm:$0xff]
        %v467 = vld [vmem:[%s327 + $0x240] sm:$0xff]
        %v468 = vld [vmem:[%s327 + $0x248] sm:$0xff]
        %v469 = vld [vmem:[%s327 + $0x250] sm:$0xff]
        %v470 = vld [vmem:[%s327 + $0x258] sm:$0xff]
        %v471 = vld [vmem:[%s327 + $0x260] sm:$0xff]
        %v472 = vld [vmem:[%s327 + $0x268] sm:$0xff]
        %v473 = vld [vmem:[%s327 + $0x270] sm:$0xff]
        %v474 = vld [vmem:[%s327 + $0x278] sm:$0xff]
        %v475 = vld [vmem:[%s327 + $0x280] sm:$0xff]
        %v476 = vld [vmem:[%s327 + $0x288] sm:$0xff]
        %v477 = vld [vmem:[%s327 + $0x290] sm:$0xff]
        %v478 = vld [vmem:[%s327 + $0x298] sm:$0xff]
        %v479 = vld [vmem:[%s327 + $0x2a0] sm:$0xff]
        %v480 = vld [vmem:[%s327 + $0x2a8] sm:$0xff]
        %v481 = vld [vmem:[%s327 + $0x2b0] sm:$0xff]
        %v482 = vld [vmem:[%s327 + $0x2b8] sm:$0xff]
        %v483 = vld [vmem:[%s327 + $0x2c0] sm:$0xff]
        %v484 = vld [vmem:[%s327 + $0x2c8] sm:$0xff]
        %v485 = vld [vmem:[%s327 + $0x2d0] sm:$0xff]
        %v486 = vld [vmem:[%s327 + $0x2d8] sm:$0xff]
        %v487 = vld [vmem:[%s327 + $0x2e0] sm:$0xff]
        %v488 = vld [vmem:[%s327 + $0x2e8] sm:$0xff]
        %v489 = vld [vmem:[%s327 + $0x2f0] sm:$0xff]
        %v490 = vld [vmem:[%s327 + $0x2f8] sm:$0xff]
        %v491 = vld [vmem:[%s327 + $0x300] sm:$0xff]
        %v492 = vld [vmem:[%s327 + $0x308] sm:$0xff]
        %v493 = vld [vmem:[%s327 + $0x310] sm:$0xff]
        %v494 = vld [vmem:[%s327 + $0x318] sm:$0xff]
        %v495 = vld [vmem:[%s327 + $0x320] sm:$0xff]
        %v496 = vld [vmem:[%s327 + $0x328] sm:$0xff]
        %v497 = vld [vmem:[%s327 + $0x330] sm:$0xff]
        %v498 = vld [vmem:[%s327 + $0x338] sm:$0xff]
        %v499 = vld [vmem:[%s327 + $0x340] sm:$0xff]
        %v500 = vld [vmem:[%s327 + $0x348] sm:$0xff]
        %v501 = vld [vmem:[%s327 + $0x350] sm:$0xff]
        %v502 = vld [vmem:[%s327 + $0x358] sm:$0xff]
        %v503 = vld [vmem:[%s327 + $0x360] sm:$0xff]
        %v504 = vld [vmem:[%s327 + $0x368] sm:$0xff]
        %v505 = vld [vmem:[%s327 + $0x370] sm:$0xff]
        %v506 = vld [vmem:[%s327 + $0x378] sm:$0xff]
        %v507 = vpack.c.bf16 %v402, %v395
        %v508 = vpack.c.bf16 %v403, %v396
        %v509 = vpack.c.bf16 %v404, %v397
        %v510 = vpack.c.bf16 %v405, %v398
        %v511 = vpack.c.bf16 %v406, %v399
        %v512 = vpack.c.bf16 %v407, %v400
        %v513 = vpack.c.bf16 %v408, %v401
        %v514 = vpack.c.bf16 %v416, %v409
        %v515 = vpack.c.bf16 %v417, %v410
        %v516 = vpack.c.bf16 %v418, %v411
        %v517 = vpack.c.bf16 %v419, %v412
        %v518 = vpack.c.bf16 %v420, %v413
        %v519 = vpack.c.bf16 %v421, %v414
        %v520 = vpack.c.bf16 %v422, %v415
        %v521 = vpack.c.bf16 %v430, %v423
        %v522 = vpack.c.bf16 %v431, %v424
        %v523 = vpack.c.bf16 %v432, %v425
        %v524 = vpack.c.bf16 %v433, %v426
        %v525 = vpack.c.bf16 %v434, %v427
        %v526 = vpack.c.bf16 %v435, %v428
        %v527 = vpack.c.bf16 %v436, %v429
        %v528 = vpack.c.bf16 %v444, %v437
        %v529 = vpack.c.bf16 %v445, %v438
        %v530 = vpack.c.bf16 %v446, %v439
        %v531 = vpack.c.bf16 %v447, %v440
        %v532 = vpack.c.bf16 %v448, %v441
        %v533 = vpack.c.bf16 %v449, %v442
        %v534 = vpack.c.bf16 %v450, %v443
        %v535 = vpack.c.bf16 %v458, %v451
        %v536 = vpack.c.bf16 %v459, %v452
        %v537 = vpack.c.bf16 %v460, %v453
        %v538 = vpack.c.bf16 %v461, %v454
        %v539 = vpack.c.bf16 %v462, %v455
        %v540 = vpack.c.bf16 %v463, %v456
        %v541 = vpack.c.bf16 %v464, %v457
        %v542 = vpack.c.bf16 %v472, %v465
        %v543 = vpack.c.bf16 %v473, %v466
        %v544 = vpack.c.bf16 %v474, %v467
        %v545 = vpack.c.bf16 %v475, %v468
        %v546 = vpack.c.bf16 %v476, %v469
        %v547 = vpack.c.bf16 %v477, %v470
        %v548 = vpack.c.bf16 %v478, %v471
        %v549 = vpack.c.bf16 %v486, %v479
        %v550 = vpack.c.bf16 %v487, %v480
        %v551 = vpack.c.bf16 %v488, %v481
        %v552 = vpack.c.bf16 %v489, %v482
        %v553 = vpack.c.bf16 %v490, %v483
        %v554 = vpack.c.bf16 %v491, %v484
        %v555 = vpack.c.bf16 %v492, %v485
        %v556 = vpack.c.bf16 %v500, %v493
        %v557 = vpack.c.bf16 %v501, %v494
        %v558 = vpack.c.bf16 %v502, %v495
        %v559 = vpack.c.bf16 %v503, %v496
        %v560 = vpack.c.bf16 %v504, %v497
        %v561 = vpack.c.bf16 %v505, %v498
        %v562 = vpack.c.bf16 %v506, %v499
        %v563 = vld [vmem:[#allocation5] sm:$0xff]
        %v564 = vld [vmem:[#allocation5 + $0x8] sm:$0xff]
        %v565 = vld [vmem:[#allocation5 + $0x10] sm:$0xff]
        %v566 = vld [vmem:[#allocation5 + $0x18] sm:$0xff]
        %v567 = vld [vmem:[#allocation5 + $0x20] sm:$0xff]
        %v568 = vld [vmem:[#allocation5 + $0x28] sm:$0xff]
        %v569 = vld [vmem:[#allocation5 + $0x30] sm:$0xff]
        %v570 = vld [vmem:[#allocation5 + $0x38] sm:$0xff]
        %v571 = vld [vmem:[#allocation5 + $0x40] sm:$0xff]
        %v572 = vld [vmem:[#allocation5 + $0x48] sm:$0xff]
        %v573 = vld [vmem:[#allocation5 + $0x50] sm:$0xff]
        %v574 = vld [vmem:[#allocation5 + $0x58] sm:$0xff]
        %v575 = vld [vmem:[#allocation5 + $0x60] sm:$0xff]
        %v576 = vld [vmem:[#allocation5 + $0x68] sm:$0xff]
        %v577 = vld [vmem:[#allocation5 + $0x70] sm:$0xff]
        %v578 = vld [vmem:[#allocation5 + $0x78] sm:$0xff]
        %v579 = vld [vmem:[#allocation5 + $0x80] sm:$0xff]
        %v580 = vld [vmem:[#allocation5 + $0x88] sm:$0xff]
        %v581 = vld [vmem:[#allocation5 + $0x90] sm:$0xff]
        %v582 = vld [vmem:[#allocation5 + $0x98] sm:$0xff]
        %v583 = vld [vmem:[#allocation5 + $0xa0] sm:$0xff]
        %v584 = vld [vmem:[#allocation5 + $0xa8] sm:$0xff]
        %v585 = vld [vmem:[#allocation5 + $0xb0] sm:$0xff]
        %v586 = vld [vmem:[#allocation5 + $0xb8] sm:$0xff]
        %v587 = vld [vmem:[#allocation5 + $0xc0] sm:$0xff]
        %v588 = vld [vmem:[#allocation5 + $0xc8] sm:$0xff]
        %v589 = vld [vmem:[#allocation5 + $0xd0] sm:$0xff]
        %v590 = vld [vmem:[#allocation5 + $0xd8] sm:$0xff]
        %v591 = vld [vmem:[#allocation5 + $0xe0] sm:$0xff]
        %v592 = vld [vmem:[#allocation5 + $0xe8] sm:$0xff]
        %v593 = vld [vmem:[#allocation5 + $0xf0] sm:$0xff]
        %v594 = vld [vmem:[#allocation5 + $0xf8] sm:$0xff]
        %v595 = vld [vmem:[#allocation5 + $0x100] sm:$0xff]
        %v596 = vld [vmem:[#allocation5 + $0x108] sm:$0xff]
        %v597 = vld [vmem:[#allocation5 + $0x110] sm:$0xff]
        %v598 = vld [vmem:[#allocation5 + $0x118] sm:$0xff]
        %v599 = vld [vmem:[#allocation5 + $0x120] sm:$0xff]
        %v600 = vld [vmem:[#allocation5 + $0x128] sm:$0xff]
        %v601 = vld [vmem:[#allocation5 + $0x130] sm:$0xff]
        %v602 = vld [vmem:[#allocation5 + $0x138] sm:$0xff]
        %v603 = vld [vmem:[#allocation5 + $0x140] sm:$0xff]
        %v604 = vld [vmem:[#allocation5 + $0x148] sm:$0xff]
        %v605 = vld [vmem:[#allocation5 + $0x150] sm:$0xff]
        %v606 = vld [vmem:[#allocation5 + $0x158] sm:$0xff]
        %v607 = vld [vmem:[#allocation5 + $0x160] sm:$0xff]
        %v608 = vld [vmem:[#allocation5 + $0x168] sm:$0xff]
        %v609 = vld [vmem:[#allocation5 + $0x170] sm:$0xff]
        %v610 = vld [vmem:[#allocation5 + $0x178] sm:$0xff]
        %v611 = vld [vmem:[#allocation5 + $0x180] sm:$0xff]
        %v612 = vld [vmem:[#allocation5 + $0x188] sm:$0xff]
        %v613 = vld [vmem:[#allocation5 + $0x190] sm:$0xff]
        %v614 = vld [vmem:[#allocation5 + $0x198] sm:$0xff]
        %v615 = vld [vmem:[#allocation5 + $0x1a0] sm:$0xff]
        %v616 = vld [vmem:[#allocation5 + $0x1a8] sm:$0xff]
        %v617 = vld [vmem:[#allocation5 + $0x1b0] sm:$0xff]
        %v618 = vld [vmem:[#allocation5 + $0x1b8] sm:$0xff]
        %v619 = vld [vmem:[#allocation5 + $0x1c0] sm:$0xff]
        %v620 = vld [vmem:[#allocation5 + $0x1c8] sm:$0xff]
        %v621 = vld [vmem:[#allocation5 + $0x1d0] sm:$0xff]
        %v622 = vld [vmem:[#allocation5 + $0x1d8] sm:$0xff]
        %v623 = vld [vmem:[#allocation5 + $0x1e0] sm:$0xff]
        %v624 = vld [vmem:[#allocation5 + $0x1e8] sm:$0xff]
        %v625 = vld [vmem:[#allocation5 + $0x1f0] sm:$0xff]
        %v626 = vld [vmem:[#allocation5 + $0x1f8] sm:$0xff]
        %v627 = vld [vmem:[#allocation5 + $0x200] sm:$0xff]
        %v628 = vld [vmem:[#allocation5 + $0x208] sm:$0xff]
        %v629 = vld [vmem:[#allocation5 + $0x210] sm:$0xff]
        %v630 = vld [vmem:[#allocation5 + $0x218] sm:$0xff]
        %v631 = vld [vmem:[#allocation5 + $0x220] sm:$0xff]
        %v632 = vld [vmem:[#allocation5 + $0x228] sm:$0xff]
        %v633 = vld [vmem:[#allocation5 + $0x230] sm:$0xff]
        %v634 = vld [vmem:[#allocation5 + $0x238] sm:$0xff]
        %v635 = vld [vmem:[#allocation5 + $0x240] sm:$0xff]
        %v636 = vld [vmem:[#allocation5 + $0x248] sm:$0xff]
        %v637 = vld [vmem:[#allocation5 + $0x250] sm:$0xff]
        %v638 = vld [vmem:[#allocation5 + $0x258] sm:$0xff]
        %v639 = vld [vmem:[#allocation5 + $0x260] sm:$0xff]
        %v640 = vld [vmem:[#allocation5 + $0x268] sm:$0xff]
        %v641 = vld [vmem:[#allocation5 + $0x270] sm:$0xff]
        %v642 = vld [vmem:[#allocation5 + $0x278] sm:$0xff]
        %v643 = vld [vmem:[#allocation5 + $0x280] sm:$0xff]
        %v644 = vld [vmem:[#allocation5 + $0x288] sm:$0xff]
        %v645 = vld [vmem:[#allocation5 + $0x290] sm:$0xff]
        %v646 = vld [vmem:[#allocation5 + $0x298] sm:$0xff]
        %v647 = vld [vmem:[#allocation5 + $0x2a0] sm:$0xff]
        %v648 = vld [vmem:[#allocation5 + $0x2a8] sm:$0xff]
        %v649 = vld [vmem:[#allocation5 + $0x2b0] sm:$0xff]
        %v650 = vld [vmem:[#allocation5 + $0x2b8] sm:$0xff]
        %v651 = vld [vmem:[#allocation5 + $0x2c0] sm:$0xff]
        %v652 = vld [vmem:[#allocation5 + $0x2c8] sm:$0xff]
        %v653 = vld [vmem:[#allocation5 + $0x2d0] sm:$0xff]
        %v654 = vld [vmem:[#allocation5 + $0x2d8] sm:$0xff]
        %v655 = vld [vmem:[#allocation5 + $0x2e0] sm:$0xff]
        %v656 = vld [vmem:[#allocation5 + $0x2e8] sm:$0xff]
        %v657 = vld [vmem:[#allocation5 + $0x2f0] sm:$0xff]
        %v658 = vld [vmem:[#allocation5 + $0x2f8] sm:$0xff]
        %v659 = vld [vmem:[#allocation5 + $0x300] sm:$0xff]
        %v660 = vld [vmem:[#allocation5 + $0x308] sm:$0xff]
        %v661 = vld [vmem:[#allocation5 + $0x310] sm:$0xff]
        %v662 = vld [vmem:[#allocation5 + $0x318] sm:$0xff]
        %v663 = vld [vmem:[#allocation5 + $0x320] sm:$0xff]
        %v664 = vld [vmem:[#allocation5 + $0x328] sm:$0xff]
        %v665 = vld [vmem:[#allocation5 + $0x330] sm:$0xff]
        %v666 = vld [vmem:[#allocation5 + $0x338] sm:$0xff]
        %v667 = vld [vmem:[#allocation5 + $0x340] sm:$0xff]
        %v668 = vld [vmem:[#allocation5 + $0x348] sm:$0xff]
        %v669 = vld [vmem:[#allocation5 + $0x350] sm:$0xff]
        %v670 = vld [vmem:[#allocation5 + $0x358] sm:$0xff]
        %v671 = vld [vmem:[#allocation5 + $0x360] sm:$0xff]
        %v672 = vld [vmem:[#allocation5 + $0x368] sm:$0xff]
        %v673 = vld [vmem:[#allocation5 + $0x370] sm:$0xff]
        %v674 = vld [vmem:[#allocation5 + $0x378] sm:$0xff]
        %v675 = vld [vmem:[#allocation5 + $0x380] sm:$0xff]
        %v676 = vld [vmem:[#allocation5 + $0x388] sm:$0xff]
        %v677 = vld [vmem:[#allocation5 + $0x390] sm:$0xff]
        %v678 = vld [vmem:[#allocation5 + $0x398] sm:$0xff]
        %v679 = vld [vmem:[#allocation5 + $0x3a0] sm:$0xff]
        %v680 = vld [vmem:[#allocation5 + $0x3a8] sm:$0xff]
        %v681 = vld [vmem:[#allocation5 + $0x3b0] sm:$0xff]
        %v682 = vld [vmem:[#allocation5 + $0x3b8] sm:$0xff]
        %v683 = vld [vmem:[#allocation5 + $0x3c0] sm:$0xff]
        %v684 = vld [vmem:[#allocation5 + $0x3c8] sm:$0xff]
        %v685 = vld [vmem:[#allocation5 + $0x3d0] sm:$0xff]
        %v686 = vld [vmem:[#allocation5 + $0x3d8] sm:$0xff]
        %v687 = vld [vmem:[#allocation5 + $0x3e0] sm:$0xff]
        %v688 = vld [vmem:[#allocation5 + $0x3e8] sm:$0xff]
        %v689 = vld [vmem:[#allocation5 + $0x3f0] sm:$0xff]
        %v690 = vld [vmem:[#allocation5 + $0x3f8] sm:$0xff]
        %v691 = vld [vmem:[#allocation5 + $0x400] sm:$0xff]
        %v692 = vld [vmem:[#allocation5 + $0x408] sm:$0xff]
        %v693 = vld [vmem:[#allocation5 + $0x410] sm:$0xff]
        %v694 = vld [vmem:[#allocation5 + $0x418] sm:$0xff]
        %v695 = vld [vmem:[#allocation5 + $0x420] sm:$0xff]
        %v696 = vld [vmem:[#allocation5 + $0x428] sm:$0xff]
        %v697 = vld [vmem:[#allocation5 + $0x430] sm:$0xff]
        %v698 = vld [vmem:[#allocation5 + $0x438] sm:$0xff]
        %v699 = vld [vmem:[#allocation5 + $0x440] sm:$0xff]
        %v700 = vld [vmem:[#allocation5 + $0x448] sm:$0xff]
        %v701 = vld [vmem:[#allocation5 + $0x450] sm:$0xff]
        %v702 = vld [vmem:[#allocation5 + $0x458] sm:$0xff]
        %v703 = vld [vmem:[#allocation5 + $0x460] sm:$0xff]
        %v704 = vld [vmem:[#allocation5 + $0x468] sm:$0xff]
        %v705 = vld [vmem:[#allocation5 + $0x470] sm:$0xff]
        %v706 = vld [vmem:[#allocation5 + $0x478] sm:$0xff]
        %v707 = vld [vmem:[#allocation5 + $0x480] sm:$0xff]
        %v708 = vld [vmem:[#allocation5 + $0x488] sm:$0xff]
        %v709 = vld [vmem:[#allocation5 + $0x490] sm:$0xff]
        %v710 = vld [vmem:[#allocation5 + $0x498] sm:$0xff]
        %v711 = vld [vmem:[#allocation5 + $0x4a0] sm:$0xff]
        %v712 = vld [vmem:[#allocation5 + $0x4a8] sm:$0xff]
        %v713 = vld [vmem:[#allocation5 + $0x4b0] sm:$0xff]
        %v714 = vld [vmem:[#allocation5 + $0x4b8] sm:$0xff]
        %v715 = vld [vmem:[#allocation5 + $0x4c0] sm:$0xff]
        %v716 = vld [vmem:[#allocation5 + $0x4c8] sm:$0xff]
        %v717 = vld [vmem:[#allocation5 + $0x4d0] sm:$0xff]
        %v718 = vld [vmem:[#allocation5 + $0x4d8] sm:$0xff]
        %v719 = vld [vmem:[#allocation5 + $0x4e0] sm:$0xff]
        %v720 = vld [vmem:[#allocation5 + $0x4e8] sm:$0xff]
        %v721 = vld [vmem:[#allocation5 + $0x4f0] sm:$0xff]
        %v722 = vld [vmem:[#allocation5 + $0x4f8] sm:$0xff]
        %v723 = vld [vmem:[#allocation5 + $0x500] sm:$0xff]
        %v724 = vld [vmem:[#allocation5 + $0x508] sm:$0xff]
        %v725 = vld [vmem:[#allocation5 + $0x510] sm:$0xff]
        %v726 = vld [vmem:[#allocation5 + $0x518] sm:$0xff]
        %v727 = vld [vmem:[#allocation5 + $0x520] sm:$0xff]
        %v728 = vld [vmem:[#allocation5 + $0x528] sm:$0xff]
        %v729 = vld [vmem:[#allocation5 + $0x530] sm:$0xff]
        %v730 = vld [vmem:[#allocation5 + $0x538] sm:$0xff]
        %v731 = vld [vmem:[#allocation5 + $0x540] sm:$0xff]
        %v732 = vld [vmem:[#allocation5 + $0x548] sm:$0xff]
        %v733 = vld [vmem:[#allocation5 + $0x550] sm:$0xff]
        %v734 = vld [vmem:[#allocation5 + $0x558] sm:$0xff]
        %v735 = vld [vmem:[#allocation5 + $0x560] sm:$0xff]
        %v736 = vld [vmem:[#allocation5 + $0x568] sm:$0xff]
        %v737 = vld [vmem:[#allocation5 + $0x570] sm:$0xff]
        %v738 = vld [vmem:[#allocation5 + $0x578] sm:$0xff]
        %v739 = vld [vmem:[#allocation5 + $0x580] sm:$0xff]
        %v740 = vld [vmem:[#allocation5 + $0x588] sm:$0xff]
        %v741 = vld [vmem:[#allocation5 + $0x590] sm:$0xff]
        %v742 = vld [vmem:[#allocation5 + $0x598] sm:$0xff]
        %v743 = vld [vmem:[#allocation5 + $0x5a0] sm:$0xff]
        %v744 = vld [vmem:[#allocation5 + $0x5a8] sm:$0xff]
        %v745 = vld [vmem:[#allocation5 + $0x5b0] sm:$0xff]
        %v746 = vld [vmem:[#allocation5 + $0x5b8] sm:$0xff]
        %v747 = vld [vmem:[#allocation5 + $0x5c0] sm:$0xff]
        %v748 = vld [vmem:[#allocation5 + $0x5c8] sm:$0xff]
        %v749 = vld [vmem:[#allocation5 + $0x5d0] sm:$0xff]
        %v750 = vld [vmem:[#allocation5 + $0x5d8] sm:$0xff]
        %v751 = vld [vmem:[#allocation5 + $0x5e0] sm:$0xff]
        %v752 = vld [vmem:[#allocation5 + $0x5e8] sm:$0xff]
        %v753 = vld [vmem:[#allocation5 + $0x5f0] sm:$0xff]
        %v754 = vld [vmem:[#allocation5 + $0x5f8] sm:$0xff]
        %v755 = vld [vmem:[#allocation5 + $0x600] sm:$0xff]
        %v756 = vld [vmem:[#allocation5 + $0x608] sm:$0xff]
        %v757 = vld [vmem:[#allocation5 + $0x610] sm:$0xff]
        %v758 = vld [vmem:[#allocation5 + $0x618] sm:$0xff]
        %v759 = vld [vmem:[#allocation5 + $0x620] sm:$0xff]
        %v760 = vld [vmem:[#allocation5 + $0x628] sm:$0xff]
        %v761 = vld [vmem:[#allocation5 + $0x630] sm:$0xff]
        %v762 = vld [vmem:[#allocation5 + $0x638] sm:$0xff]
        %v763 = vld [vmem:[#allocation5 + $0x640] sm:$0xff]
        %v764 = vld [vmem:[#allocation5 + $0x648] sm:$0xff]
        %v765 = vld [vmem:[#allocation5 + $0x650] sm:$0xff]
        %v766 = vld [vmem:[#allocation5 + $0x658] sm:$0xff]
        %v767 = vld [vmem:[#allocation5 + $0x660] sm:$0xff]
        %v768 = vld [vmem:[#allocation5 + $0x668] sm:$0xff]
        %v769 = vld [vmem:[#allocation5 + $0x670] sm:$0xff]
        %v770 = vld [vmem:[#allocation5 + $0x678] sm:$0xff]
        %v771 = vld [vmem:[#allocation5 + $0x680] sm:$0xff]
        %v772 = vld [vmem:[#allocation5 + $0x688] sm:$0xff]
        %v773 = vld [vmem:[#allocation5 + $0x690] sm:$0xff]
        %v774 = vld [vmem:[#allocation5 + $0x698] sm:$0xff]
        %v775 = vld [vmem:[#allocation5 + $0x6a0] sm:$0xff]
        %v776 = vld [vmem:[#allocation5 + $0x6a8] sm:$0xff]
        %v777 = vld [vmem:[#allocation5 + $0x6b0] sm:$0xff]
        %v778 = vld [vmem:[#allocation5 + $0x6b8] sm:$0xff]
        %v779 = vld [vmem:[#allocation5 + $0x6c0] sm:$0xff]
        %v780 = vld [vmem:[#allocation5 + $0x6c8] sm:$0xff]
        %v781 = vld [vmem:[#allocation5 + $0x6d0] sm:$0xff]
        %v782 = vld [vmem:[#allocation5 + $0x6d8] sm:$0xff]
        %v783 = vld [vmem:[#allocation5 + $0x6e0] sm:$0xff]
        %v784 = vld [vmem:[#allocation5 + $0x6e8] sm:$0xff]
        %v785 = vld [vmem:[#allocation5 + $0x6f0] sm:$0xff]
        %v786 = vld [vmem:[#allocation5 + $0x6f8] sm:$0xff]
        %v787 = vld [vmem:[#allocation5 + $0x700] sm:$0xff]
        %v788 = vld [vmem:[#allocation5 + $0x708] sm:$0xff]
        %v789 = vld [vmem:[#allocation5 + $0x710] sm:$0xff]
        %v790 = vld [vmem:[#allocation5 + $0x718] sm:$0xff]
        %v791 = vld [vmem:[#allocation5 + $0x720] sm:$0xff]
        %v792 = vld [vmem:[#allocation5 + $0x728] sm:$0xff]
        %v793 = vld [vmem:[#allocation5 + $0x730] sm:$0xff]
        %v794 = vld [vmem:[#allocation5 + $0x738] sm:$0xff]
        %v795 = vld [vmem:[#allocation5 + $0x740] sm:$0xff]
        %v796 = vld [vmem:[#allocation5 + $0x748] sm:$0xff]
        %v797 = vld [vmem:[#allocation5 + $0x750] sm:$0xff]
        %v798 = vld [vmem:[#allocation5 + $0x758] sm:$0xff]
        %v799 = vld [vmem:[#allocation5 + $0x760] sm:$0xff]
        %v800 = vld [vmem:[#allocation5 + $0x768] sm:$0xff]
        %v801 = vld [vmem:[#allocation5 + $0x770] sm:$0xff]
        %v802 = vld [vmem:[#allocation5 + $0x778] sm:$0xff]
        %v803 = vld [vmem:[#allocation5 + $0x780] sm:$0xff]
        %v804 = vld [vmem:[#allocation5 + $0x788] sm:$0xff]
        %v805 = vld [vmem:[#allocation5 + $0x790] sm:$0xff]
        %v806 = vld [vmem:[#allocation5 + $0x798] sm:$0xff]
        %v807 = vld [vmem:[#allocation5 + $0x7a0] sm:$0xff]
        %v808 = vld [vmem:[#allocation5 + $0x7a8] sm:$0xff]
        %v809 = vld [vmem:[#allocation5 + $0x7b0] sm:$0xff]
        %v810 = vld [vmem:[#allocation5 + $0x7b8] sm:$0xff]
        %v811 = vld [vmem:[#allocation5 + $0x7c0] sm:$0xff]
        %v812 = vld [vmem:[#allocation5 + $0x7c8] sm:$0xff]
        %v813 = vld [vmem:[#allocation5 + $0x7d0] sm:$0xff]
        %v814 = vld [vmem:[#allocation5 + $0x7d8] sm:$0xff]
        %v815 = vld [vmem:[#allocation5 + $0x7e0] sm:$0xff]
        %v816 = vld [vmem:[#allocation5 + $0x7e8] sm:$0xff]
        %v817 = vld [vmem:[#allocation5 + $0x7f0] sm:$0xff]
        %v818 = vld [vmem:[#allocation5 + $0x7f8] sm:$0xff]
        %v819 = vld [vmem:[#allocation5 + $0x800] sm:$0xff]
        %v820 = vld [vmem:[#allocation5 + $0x808] sm:$0xff]
        %v821 = vld [vmem:[#allocation5 + $0x810] sm:$0xff]
        %v822 = vld [vmem:[#allocation5 + $0x818] sm:$0xff]
        %v823 = vld [vmem:[#allocation5 + $0x820] sm:$0xff]
        %v824 = vld [vmem:[#allocation5 + $0x828] sm:$0xff]
        %v825 = vld [vmem:[#allocation5 + $0x830] sm:$0xff]
        %v826 = vld [vmem:[#allocation5 + $0x838] sm:$0xff]
        %v827 = vld [vmem:[#allocation5 + $0x840] sm:$0xff]
        %v828 = vld [vmem:[#allocation5 + $0x848] sm:$0xff]
        %v829 = vld [vmem:[#allocation5 + $0x850] sm:$0xff]
        %v830 = vld [vmem:[#allocation5 + $0x858] sm:$0xff]
        %v831 = vld [vmem:[#allocation5 + $0x860] sm:$0xff]
        %v832 = vld [vmem:[#allocation5 + $0x868] sm:$0xff]
        %v833 = vld [vmem:[#allocation5 + $0x870] sm:$0xff]
        %v834 = vld [vmem:[#allocation5 + $0x878] sm:$0xff]
        %v835 = vld [vmem:[#allocation5 + $0x880] sm:$0xff]
        %v836 = vld [vmem:[#allocation5 + $0x888] sm:$0xff]
        %v837 = vld [vmem:[#allocation5 + $0x890] sm:$0xff]
        %v838 = vld [vmem:[#allocation5 + $0x898] sm:$0xff]
        %v839 = vld [vmem:[#allocation5 + $0x8a0] sm:$0xff]
        %v840 = vld [vmem:[#allocation5 + $0x8a8] sm:$0xff]
        %v841 = vld [vmem:[#allocation5 + $0x8b0] sm:$0xff]
        %v842 = vld [vmem:[#allocation5 + $0x8b8] sm:$0xff]
        %v843 = vld [vmem:[#allocation5 + $0x8c0] sm:$0xff]
        %v844 = vld [vmem:[#allocation5 + $0x8c8] sm:$0xff]
        %v845 = vld [vmem:[#allocation5 + $0x8d0] sm:$0xff]
        %v846 = vld [vmem:[#allocation5 + $0x8d8] sm:$0xff]
        %v847 = vld [vmem:[#allocation5 + $0x8e0] sm:$0xff]
        %v848 = vld [vmem:[#allocation5 + $0x8e8] sm:$0xff]
        %v849 = vld [vmem:[#allocation5 + $0x8f0] sm:$0xff]
        %v850 = vld [vmem:[#allocation5 + $0x8f8] sm:$0xff]
        %v851 = vld [vmem:[#allocation5 + $0x900] sm:$0xff]
        %v852 = vld [vmem:[#allocation5 + $0x908] sm:$0xff]
        %v853 = vld [vmem:[#allocation5 + $0x910] sm:$0xff]
        %v854 = vld [vmem:[#allocation5 + $0x918] sm:$0xff]
        %v855 = vld [vmem:[#allocation5 + $0x920] sm:$0xff]
        %v856 = vld [vmem:[#allocation5 + $0x928] sm:$0xff]
        %v857 = vld [vmem:[#allocation5 + $0x930] sm:$0xff]
        %v858 = vld [vmem:[#allocation5 + $0x938] sm:$0xff]
        %v859 = vld [vmem:[#allocation5 + $0x940] sm:$0xff]
        %v860 = vld [vmem:[#allocation5 + $0x948] sm:$0xff]
        %v861 = vld [vmem:[#allocation5 + $0x950] sm:$0xff]
        %v862 = vld [vmem:[#allocation5 + $0x958] sm:$0xff]
        %v863 = vld [vmem:[#allocation5 + $0x960] sm:$0xff]
        %v864 = vld [vmem:[#allocation5 + $0x968] sm:$0xff]
        %v865 = vld [vmem:[#allocation5 + $0x970] sm:$0xff]
        %v866 = vld [vmem:[#allocation5 + $0x978] sm:$0xff]
        %v867 = vld [vmem:[#allocation5 + $0x980] sm:$0xff]
        %v868 = vld [vmem:[#allocation5 + $0x988] sm:$0xff]
        %v869 = vld [vmem:[#allocation5 + $0x990] sm:$0xff]
        %v870 = vld [vmem:[#allocation5 + $0x998] sm:$0xff]
        %v871 = vld [vmem:[#allocation5 + $0x9a0] sm:$0xff]
        %v872 = vld [vmem:[#allocation5 + $0x9a8] sm:$0xff]
        %v873 = vld [vmem:[#allocation5 + $0x9b0] sm:$0xff]
        %v874 = vld [vmem:[#allocation5 + $0x9b8] sm:$0xff]
        %v875 = vld [vmem:[#allocation5 + $0x9c0] sm:$0xff]
        %v876 = vld [vmem:[#allocation5 + $0x9c8] sm:$0xff]
        %v877 = vld [vmem:[#allocation5 + $0x9d0] sm:$0xff]
        %v878 = vld [vmem:[#allocation5 + $0x9d8] sm:$0xff]
        %v879 = vld [vmem:[#allocation5 + $0x9e0] sm:$0xff]
        %v880 = vld [vmem:[#allocation5 + $0x9e8] sm:$0xff]
        %v881 = vld [vmem:[#allocation5 + $0x9f0] sm:$0xff]
        %v882 = vld [vmem:[#allocation5 + $0x9f8] sm:$0xff]
        %v883 = vld [vmem:[#allocation5 + $0xa00] sm:$0xff]
        %v884 = vld [vmem:[#allocation5 + $0xa08] sm:$0xff]
        %v885 = vld [vmem:[#allocation5 + $0xa10] sm:$0xff]
        %v886 = vld [vmem:[#allocation5 + $0xa18] sm:$0xff]
        %v887 = vld [vmem:[#allocation5 + $0xa20] sm:$0xff]
        %v888 = vld [vmem:[#allocation5 + $0xa28] sm:$0xff]
        %v889 = vld [vmem:[#allocation5 + $0xa30] sm:$0xff]
        %v890 = vld [vmem:[#allocation5 + $0xa38] sm:$0xff]
        %v891 = vld [vmem:[#allocation5 + $0xa40] sm:$0xff]
        %v892 = vld [vmem:[#allocation5 + $0xa48] sm:$0xff]
        %v893 = vld [vmem:[#allocation5 + $0xa50] sm:$0xff]
        %v894 = vld [vmem:[#allocation5 + $0xa58] sm:$0xff]
        %v895 = vld [vmem:[#allocation5 + $0xa60] sm:$0xff]
        %v896 = vld [vmem:[#allocation5 + $0xa68] sm:$0xff]
        %v897 = vld [vmem:[#allocation5 + $0xa70] sm:$0xff]
        %v898 = vld [vmem:[#allocation5 + $0xa78] sm:$0xff]
        %v899 = vld [vmem:[#allocation5 + $0xa80] sm:$0xff]
        %v900 = vld [vmem:[#allocation5 + $0xa88] sm:$0xff]
        %v901 = vld [vmem:[#allocation5 + $0xa90] sm:$0xff]
        %v902 = vld [vmem:[#allocation5 + $0xa98] sm:$0xff]
        %v903 = vld [vmem:[#allocation5 + $0xaa0] sm:$0xff]
        %v904 = vld [vmem:[#allocation5 + $0xaa8] sm:$0xff]
        %v905 = vld [vmem:[#allocation5 + $0xab0] sm:$0xff]
        %v906 = vld [vmem:[#allocation5 + $0xab8] sm:$0xff]
        %v907 = vld [vmem:[#allocation5 + $0xac0] sm:$0xff]
        %v908 = vld [vmem:[#allocation5 + $0xac8] sm:$0xff]
        %v909 = vld [vmem:[#allocation5 + $0xad0] sm:$0xff]
        %v910 = vld [vmem:[#allocation5 + $0xad8] sm:$0xff]
        %v911 = vld [vmem:[#allocation5 + $0xae0] sm:$0xff]
        %v912 = vld [vmem:[#allocation5 + $0xae8] sm:$0xff]
        %v913 = vld [vmem:[#allocation5 + $0xaf0] sm:$0xff]
        %v914 = vld [vmem:[#allocation5 + $0xaf8] sm:$0xff]
        %v915 = vld [vmem:[#allocation5 + $0xb00] sm:$0xff]
        %v916 = vld [vmem:[#allocation5 + $0xb08] sm:$0xff]
        %v917 = vld [vmem:[#allocation5 + $0xb10] sm:$0xff]
        %v918 = vld [vmem:[#allocation5 + $0xb18] sm:$0xff]
        %v919 = vld [vmem:[#allocation5 + $0xb20] sm:$0xff]
        %v920 = vld [vmem:[#allocation5 + $0xb28] sm:$0xff]
        %v921 = vld [vmem:[#allocation5 + $0xb30] sm:$0xff]
        %v922 = vld [vmem:[#allocation5 + $0xb38] sm:$0xff]
        %v923 = vld [vmem:[#allocation5 + $0xb40] sm:$0xff]
        %v924 = vld [vmem:[#allocation5 + $0xb48] sm:$0xff]
        %v925 = vld [vmem:[#allocation5 + $0xb50] sm:$0xff]
        %v926 = vld [vmem:[#allocation5 + $0xb58] sm:$0xff]
        %v927 = vld [vmem:[#allocation5 + $0xb60] sm:$0xff]
        %v928 = vld [vmem:[#allocation5 + $0xb68] sm:$0xff]
        %v929 = vld [vmem:[#allocation5 + $0xb70] sm:$0xff]
        %v930 = vld [vmem:[#allocation5 + $0xb78] sm:$0xff]
        %v931 = vld [vmem:[#allocation5 + $0xb80] sm:$0xff]
        %v932 = vld [vmem:[#allocation5 + $0xb88] sm:$0xff]
        %v933 = vld [vmem:[#allocation5 + $0xb90] sm:$0xff]
        %v934 = vld [vmem:[#allocation5 + $0xb98] sm:$0xff]
        %v935 = vld [vmem:[#allocation5 + $0xba0] sm:$0xff]
        %v936 = vld [vmem:[#allocation5 + $0xba8] sm:$0xff]
        %v937 = vld [vmem:[#allocation5 + $0xbb0] sm:$0xff]
        %v938 = vld [vmem:[#allocation5 + $0xbb8] sm:$0xff]
        %v939 = vld [vmem:[#allocation5 + $0xbc0] sm:$0xff]
        %v940 = vld [vmem:[#allocation5 + $0xbc8] sm:$0xff]
        %v941 = vld [vmem:[#allocation5 + $0xbd0] sm:$0xff]
        %v942 = vld [vmem:[#allocation5 + $0xbd8] sm:$0xff]
        %v943 = vld [vmem:[#allocation5 + $0xbe0] sm:$0xff]
        %v944 = vld [vmem:[#allocation5 + $0xbe8] sm:$0xff]
        %v945 = vld [vmem:[#allocation5 + $0xbf0] sm:$0xff]
        %v946 = vld [vmem:[#allocation5 + $0xbf8] sm:$0xff]
        %v947 = vld [vmem:[#allocation5 + $0xc00] sm:$0xff]
        %v948 = vld [vmem:[#allocation5 + $0xc08] sm:$0xff]
        %v949 = vld [vmem:[#allocation5 + $0xc10] sm:$0xff]
        %v950 = vld [vmem:[#allocation5 + $0xc18] sm:$0xff]
        %v951 = vld [vmem:[#allocation5 + $0xc20] sm:$0xff]
        %v952 = vld [vmem:[#allocation5 + $0xc28] sm:$0xff]
        %v953 = vld [vmem:[#allocation5 + $0xc30] sm:$0xff]
        %v954 = vld [vmem:[#allocation5 + $0xc38] sm:$0xff]
        %v1347 = vunpack.c.l.b16 %v563
        %v1348 = vunpack.c.h.b16 %v563
        %v1349 = vunpack.c.l.b16 %v564
        %v1350 = vunpack.c.h.b16 %v564
        %v1351 = vunpack.c.l.b16 %v565
        %v1352 = vunpack.c.h.b16 %v565
        %v1353 = vunpack.c.l.b16 %v566
        %v1354 = vunpack.c.h.b16 %v566
        %v1355 = vunpack.c.l.b16 %v567
        %v1356 = vunpack.c.h.b16 %v567
        %v1357 = vunpack.c.l.b16 %v568
        %v1358 = vunpack.c.h.b16 %v568
        %v1359 = vunpack.c.l.b16 %v569
        %v1360 = vunpack.c.h.b16 %v569
        %v1361 = vunpack.c.l.b16 %v570
        %v1362 = vunpack.c.h.b16 %v570
        %v1363 = vunpack.c.l.b16 %v571
        %v1364 = vunpack.c.h.b16 %v571
        %v1365 = vunpack.c.l.b16 %v572
        %v1366 = vunpack.c.h.b16 %v572
        %v1367 = vunpack.c.l.b16 %v573
        %v1368 = vunpack.c.h.b16 %v573
        %v1369 = vunpack.c.l.b16 %v574
        %v1370 = vunpack.c.h.b16 %v574
        %v1371 = vunpack.c.l.b16 %v575
        %v1372 = vunpack.c.h.b16 %v575
        %v1373 = vunpack.c.l.b16 %v576
        %v1374 = vunpack.c.h.b16 %v576
        %v1375 = vunpack.c.l.b16 %v577
        %v1376 = vunpack.c.h.b16 %v577
        %v1377 = vunpack.c.l.b16 %v578
        %v1378 = vunpack.c.h.b16 %v578
        %v1379 = vunpack.c.l.b16 %v579
        %v1380 = vunpack.c.h.b16 %v579
        %v1381 = vunpack.c.l.b16 %v580
        %v1382 = vunpack.c.h.b16 %v580
        %v1383 = vunpack.c.l.b16 %v581
        %v1384 = vunpack.c.h.b16 %v581
        %v1385 = vunpack.c.l.b16 %v582
        %v1386 = vunpack.c.h.b16 %v582
        %v1387 = vunpack.c.l.b16 %v583
        %v1388 = vunpack.c.h.b16 %v583
        %v1389 = vunpack.c.l.b16 %v584
        %v1390 = vunpack.c.h.b16 %v584
        %v1391 = vunpack.c.l.b16 %v585
        %v1392 = vunpack.c.h.b16 %v585
        %v1393 = vunpack.c.l.b16 %v586
        %v1394 = vunpack.c.h.b16 %v586
        %v1395 = vunpack.c.l.b16 %v587
        %v1396 = vunpack.c.h.b16 %v587
        %v1397 = vunpack.c.l.b16 %v588
        %v1398 = vunpack.c.h.b16 %v588
        %v1399 = vunpack.c.l.b16 %v589
        %v1400 = vunpack.c.h.b16 %v589
        %v1401 = vunpack.c.l.b16 %v590
        %v1402 = vunpack.c.h.b16 %v590
        %v1403 = vunpack.c.l.b16 %v591
        %v1404 = vunpack.c.h.b16 %v591
        %v1405 = vunpack.c.l.b16 %v592
        %v1406 = vunpack.c.h.b16 %v592
        %v1407 = vunpack.c.l.b16 %v593
        %v1408 = vunpack.c.h.b16 %v593
        %v1409 = vunpack.c.l.b16 %v594
        %v1410 = vunpack.c.h.b16 %v594
        %v1411 = vunpack.c.l.b16 %v595
        %v1412 = vunpack.c.h.b16 %v595
        %v1413 = vunpack.c.l.b16 %v596
        %v1414 = vunpack.c.h.b16 %v596
        %v1415 = vunpack.c.l.b16 %v597
        %v1416 = vunpack.c.h.b16 %v597
        %v1417 = vunpack.c.l.b16 %v598
        %v1418 = vunpack.c.h.b16 %v598
        %v1419 = vunpack.c.l.b16 %v599
        %v1420 = vunpack.c.h.b16 %v599
        %v1421 = vunpack.c.l.b16 %v600
        %v1422 = vunpack.c.h.b16 %v600
        %v1423 = vunpack.c.l.b16 %v601
        %v1424 = vunpack.c.h.b16 %v601
        %v1425 = vunpack.c.l.b16 %v602
        %v1426 = vunpack.c.h.b16 %v602
        %v1427 = vunpack.c.l.b16 %v603
        %v1428 = vunpack.c.h.b16 %v603
        %v1429 = vunpack.c.l.b16 %v604
        %v1430 = vunpack.c.h.b16 %v604
        %v1431 = vunpack.c.l.b16 %v605
        %v1432 = vunpack.c.h.b16 %v605
        %v1433 = vunpack.c.l.b16 %v606
        %v1434 = vunpack.c.h.b16 %v606
        %v1435 = vunpack.c.l.b16 %v607
        %v1436 = vunpack.c.h.b16 %v607
        %v1437 = vunpack.c.l.b16 %v608
        %v1438 = vunpack.c.h.b16 %v608
        %v1439 = vunpack.c.l.b16 %v609
        %v1440 = vunpack.c.h.b16 %v609
        %v1441 = vunpack.c.l.b16 %v610
        %v1442 = vunpack.c.h.b16 %v610
        %v1443 = vunpack.c.l.b16 %v611
        %v1444 = vunpack.c.h.b16 %v611
        %v1445 = vunpack.c.l.b16 %v612
        %v1446 = vunpack.c.h.b16 %v612
        %v1447 = vunpack.c.l.b16 %v613
        %v1448 = vunpack.c.h.b16 %v613
        %v1449 = vunpack.c.l.b16 %v614
        %v1450 = vunpack.c.h.b16 %v614
        %v1451 = vunpack.c.l.b16 %v615
        %v1452 = vunpack.c.h.b16 %v615
        %v1453 = vunpack.c.l.b16 %v616
        %v1454 = vunpack.c.h.b16 %v616
        %v1455 = vunpack.c.l.b16 %v617
        %v1456 = vunpack.c.h.b16 %v617
        %v1457 = vunpack.c.l.b16 %v618
        %v1458 = vunpack.c.h.b16 %v618
        %v1459 = vunpack.c.l.b16 %v619
        %v1460 = vunpack.c.h.b16 %v619
        %v1461 = vunpack.c.l.b16 %v620
        %v1462 = vunpack.c.h.b16 %v620
        %v1463 = vunpack.c.l.b16 %v621
        %v1464 = vunpack.c.h.b16 %v621
        %v1465 = vunpack.c.l.b16 %v622
        %v1466 = vunpack.c.h.b16 %v622
        %v1467 = vunpack.c.l.b16 %v623
        %v1468 = vunpack.c.h.b16 %v623
        %v1469 = vunpack.c.l.b16 %v624
        %v1470 = vunpack.c.h.b16 %v624
        %v1471 = vunpack.c.l.b16 %v625
        %v1472 = vunpack.c.h.b16 %v625
        %v1473 = vunpack.c.l.b16 %v626
        %v1474 = vunpack.c.h.b16 %v626
        %v1475 = vunpack.c.l.b16 %v627
        %v1476 = vunpack.c.h.b16 %v627
        %v1477 = vunpack.c.l.b16 %v628
        %v1478 = vunpack.c.h.b16 %v628
        %v1479 = vunpack.c.l.b16 %v629
        %v1480 = vunpack.c.h.b16 %v629
        %v1481 = vunpack.c.l.b16 %v630
        %v1482 = vunpack.c.h.b16 %v630
        %v1483 = vunpack.c.l.b16 %v631
        %v1484 = vunpack.c.h.b16 %v631
        %v1485 = vunpack.c.l.b16 %v632
        %v1486 = vunpack.c.h.b16 %v632
        %v1487 = vunpack.c.l.b16 %v633
        %v1488 = vunpack.c.h.b16 %v633
        %v1489 = vunpack.c.l.b16 %v634
        %v1490 = vunpack.c.h.b16 %v634
        %v1491 = vunpack.c.l.b16 %v635
        %v1492 = vunpack.c.h.b16 %v635
        %v1493 = vunpack.c.l.b16 %v636
        %v1494 = vunpack.c.h.b16 %v636
        %v1495 = vunpack.c.l.b16 %v637
        %v1496 = vunpack.c.h.b16 %v637
        %v1497 = vunpack.c.l.b16 %v638
        %v1498 = vunpack.c.h.b16 %v638
        %v1499 = vunpack.c.l.b16 %v639
        %v1500 = vunpack.c.h.b16 %v639
        %v1501 = vunpack.c.l.b16 %v640
        %v1502 = vunpack.c.h.b16 %v640
        %v1503 = vunpack.c.l.b16 %v641
        %v1504 = vunpack.c.h.b16 %v641
        %v1505 = vunpack.c.l.b16 %v642
        %v1506 = vunpack.c.h.b16 %v642
        %v1507 = vunpack.c.l.b16 %v643
        %v1508 = vunpack.c.h.b16 %v643
        %v1509 = vunpack.c.l.b16 %v644
        %v1510 = vunpack.c.h.b16 %v644
        %v1511 = vunpack.c.l.b16 %v645
        %v1512 = vunpack.c.h.b16 %v645
        %v1513 = vunpack.c.l.b16 %v646
        %v1514 = vunpack.c.h.b16 %v646
        %v1515 = vunpack.c.l.b16 %v647
        %v1516 = vunpack.c.h.b16 %v647
        %v1517 = vunpack.c.l.b16 %v648
        %v1518 = vunpack.c.h.b16 %v648
        %v1519 = vunpack.c.l.b16 %v649
        %v1520 = vunpack.c.h.b16 %v649
        %v1521 = vunpack.c.l.b16 %v650
        %v1522 = vunpack.c.h.b16 %v650
        %v1523 = vunpack.c.l.b16 %v651
        %v1524 = vunpack.c.h.b16 %v651
        %v1525 = vunpack.c.l.b16 %v652
        %v1526 = vunpack.c.h.b16 %v652
        %v1527 = vunpack.c.l.b16 %v653
        %v1528 = vunpack.c.h.b16 %v653
        %v1529 = vunpack.c.l.b16 %v654
        %v1530 = vunpack.c.h.b16 %v654
        %v1531 = vunpack.c.l.b16 %v655
        %v1532 = vunpack.c.h.b16 %v655
        %v1533 = vunpack.c.l.b16 %v656
        %v1534 = vunpack.c.h.b16 %v656
        %v1535 = vunpack.c.l.b16 %v657
        %v1536 = vunpack.c.h.b16 %v657
        %v1537 = vunpack.c.l.b16 %v658
        %v1538 = vunpack.c.h.b16 %v658
        %v1539 = vunpack.c.l.b16 %v659
        %v1540 = vunpack.c.h.b16 %v659
        %v1541 = vunpack.c.l.b16 %v660
        %v1542 = vunpack.c.h.b16 %v660
        %v1543 = vunpack.c.l.b16 %v661
        %v1544 = vunpack.c.h.b16 %v661
        %v1545 = vunpack.c.l.b16 %v662
        %v1546 = vunpack.c.h.b16 %v662
        %v1547 = vunpack.c.l.b16 %v663
        %v1548 = vunpack.c.h.b16 %v663
        %v1549 = vunpack.c.l.b16 %v664
        %v1550 = vunpack.c.h.b16 %v664
        %v1551 = vunpack.c.l.b16 %v665
        %v1552 = vunpack.c.h.b16 %v665
        %v1553 = vunpack.c.l.b16 %v666
        %v1554 = vunpack.c.h.b16 %v666
        %v1555 = vunpack.c.l.b16 %v667
        %v1556 = vunpack.c.h.b16 %v667
        %v1557 = vunpack.c.l.b16 %v668
        %v1558 = vunpack.c.h.b16 %v668
        %v1559 = vunpack.c.l.b16 %v669
        %v1560 = vunpack.c.h.b16 %v669
        %v1561 = vunpack.c.l.b16 %v670
        %v1562 = vunpack.c.h.b16 %v670
        %v1563 = vunpack.c.l.b16 %v671
        %v1564 = vunpack.c.h.b16 %v671
        %v1565 = vunpack.c.l.b16 %v672
        %v1566 = vunpack.c.h.b16 %v672
        %v1567 = vunpack.c.l.b16 %v673
        %v1568 = vunpack.c.h.b16 %v673
        %v1569 = vunpack.c.l.b16 %v674
        %v1570 = vunpack.c.h.b16 %v674
        %v1571 = vunpack.c.l.b16 %v675
        %v1572 = vunpack.c.h.b16 %v675
        %v1573 = vunpack.c.l.b16 %v676
        %v1574 = vunpack.c.h.b16 %v676
        %v1575 = vunpack.c.l.b16 %v677
        %v1576 = vunpack.c.h.b16 %v677
        %v1577 = vunpack.c.l.b16 %v678
        %v1578 = vunpack.c.h.b16 %v678
        %v1579 = vunpack.c.l.b16 %v679
        %v1580 = vunpack.c.h.b16 %v679
        %v1581 = vunpack.c.l.b16 %v680
        %v1582 = vunpack.c.h.b16 %v680
        %v1583 = vunpack.c.l.b16 %v681
        %v1584 = vunpack.c.h.b16 %v681
        %v1585 = vunpack.c.l.b16 %v682
        %v1586 = vunpack.c.h.b16 %v682
        %v1587 = vunpack.c.l.b16 %v683
        %v1588 = vunpack.c.h.b16 %v683
        %v1589 = vunpack.c.l.b16 %v684
        %v1590 = vunpack.c.h.b16 %v684
        %v1591 = vunpack.c.l.b16 %v685
        %v1592 = vunpack.c.h.b16 %v685
        %v1593 = vunpack.c.l.b16 %v686
        %v1594 = vunpack.c.h.b16 %v686
        %v1595 = vunpack.c.l.b16 %v687
        %v1596 = vunpack.c.h.b16 %v687
        %v1597 = vunpack.c.l.b16 %v688
        %v1598 = vunpack.c.h.b16 %v688
        %v1599 = vunpack.c.l.b16 %v689
        %v1600 = vunpack.c.h.b16 %v689
        %v1601 = vunpack.c.l.b16 %v690
        %v1602 = vunpack.c.h.b16 %v690
        %v1603 = vunpack.c.l.b16 %v691
        %v1604 = vunpack.c.h.b16 %v691
        %v1605 = vunpack.c.l.b16 %v692
        %v1606 = vunpack.c.h.b16 %v692
        %v1607 = vunpack.c.l.b16 %v693
        %v1608 = vunpack.c.h.b16 %v693
        %v1609 = vunpack.c.l.b16 %v694
        %v1610 = vunpack.c.h.b16 %v694
        %v1611 = vunpack.c.l.b16 %v695
        %v1612 = vunpack.c.h.b16 %v695
        %v1613 = vunpack.c.l.b16 %v696
        %v1614 = vunpack.c.h.b16 %v696
        %v1615 = vunpack.c.l.b16 %v697
        %v1616 = vunpack.c.h.b16 %v697
        %v1617 = vunpack.c.l.b16 %v698
        %v1618 = vunpack.c.h.b16 %v698
        %v1619 = vunpack.c.l.b16 %v699
        %v1620 = vunpack.c.h.b16 %v699
        %v1621 = vunpack.c.l.b16 %v700
        %v1622 = vunpack.c.h.b16 %v700
        %v1623 = vunpack.c.l.b16 %v701
        %v1624 = vunpack.c.h.b16 %v701
        %v1625 = vunpack.c.l.b16 %v702
        %v1626 = vunpack.c.h.b16 %v702
        %v1627 = vunpack.c.l.b16 %v703
        %v1628 = vunpack.c.h.b16 %v703
        %v1629 = vunpack.c.l.b16 %v704
        %v1630 = vunpack.c.h.b16 %v704
        %v1631 = vunpack.c.l.b16 %v705
        %v1632 = vunpack.c.h.b16 %v705
        %v1633 = vunpack.c.l.b16 %v706
        %v1634 = vunpack.c.h.b16 %v706
        %v1635 = vunpack.c.l.b16 %v707
        %v1636 = vunpack.c.h.b16 %v707
        %v1637 = vunpack.c.l.b16 %v708
        %v1638 = vunpack.c.h.b16 %v708
        %v1639 = vunpack.c.l.b16 %v709
        %v1640 = vunpack.c.h.b16 %v709
        %v1641 = vunpack.c.l.b16 %v710
        %v1642 = vunpack.c.h.b16 %v710
        %v1643 = vunpack.c.l.b16 %v711
        %v1644 = vunpack.c.h.b16 %v711
        %v1645 = vunpack.c.l.b16 %v712
        %v1646 = vunpack.c.h.b16 %v712
        %v1647 = vunpack.c.l.b16 %v713
        %v1648 = vunpack.c.h.b16 %v713
        %v1649 = vunpack.c.l.b16 %v714
        %v1650 = vunpack.c.h.b16 %v714
        %v1651 = vunpack.c.l.b16 %v715
        %v1652 = vunpack.c.h.b16 %v715
        %v1653 = vunpack.c.l.b16 %v716
        %v1654 = vunpack.c.h.b16 %v716
        %v1655 = vunpack.c.l.b16 %v717
        %v1656 = vunpack.c.h.b16 %v717
        %v1657 = vunpack.c.l.b16 %v718
        %v1658 = vunpack.c.h.b16 %v718
        %v1659 = vunpack.c.l.b16 %v719
        %v1660 = vunpack.c.h.b16 %v719
        %v1661 = vunpack.c.l.b16 %v720
        %v1662 = vunpack.c.h.b16 %v720
        %v1663 = vunpack.c.l.b16 %v721
        %v1664 = vunpack.c.h.b16 %v721
        %v1665 = vunpack.c.l.b16 %v722
        %v1666 = vunpack.c.h.b16 %v722
        %v1667 = vunpack.c.l.b16 %v723
        %v1668 = vunpack.c.h.b16 %v723
        %v1669 = vunpack.c.l.b16 %v724
        %v1670 = vunpack.c.h.b16 %v724
        %v1671 = vunpack.c.l.b16 %v725
        %v1672 = vunpack.c.h.b16 %v725
        %v1673 = vunpack.c.l.b16 %v726
        %v1674 = vunpack.c.h.b16 %v726
        %v1675 = vunpack.c.l.b16 %v727
        %v1676 = vunpack.c.h.b16 %v727
        %v1677 = vunpack.c.l.b16 %v728
        %v1678 = vunpack.c.h.b16 %v728
        %v1679 = vunpack.c.l.b16 %v729
        %v1680 = vunpack.c.h.b16 %v729
        %v1681 = vunpack.c.l.b16 %v730
        %v1682 = vunpack.c.h.b16 %v730
        %v1683 = vunpack.c.l.b16 %v731
        %v1684 = vunpack.c.h.b16 %v731
        %v1685 = vunpack.c.l.b16 %v732
        %v1686 = vunpack.c.h.b16 %v732
        %v1687 = vunpack.c.l.b16 %v733
        %v1688 = vunpack.c.h.b16 %v733
        %v1689 = vunpack.c.l.b16 %v734
        %v1690 = vunpack.c.h.b16 %v734
        %v1691 = vunpack.c.l.b16 %v735
        %v1692 = vunpack.c.h.b16 %v735
        %v1693 = vunpack.c.l.b16 %v736
        %v1694 = vunpack.c.h.b16 %v736
        %v1695 = vunpack.c.l.b16 %v737
        %v1696 = vunpack.c.h.b16 %v737
        %v1697 = vunpack.c.l.b16 %v738
        %v1698 = vunpack.c.h.b16 %v738
        %v1699 = vunpack.c.l.b16 %v739
        %v1700 = vunpack.c.h.b16 %v739
        %v1701 = vunpack.c.l.b16 %v740
        %v1702 = vunpack.c.h.b16 %v740
        %v1703 = vunpack.c.l.b16 %v741
        %v1704 = vunpack.c.h.b16 %v741
        %v1705 = vunpack.c.l.b16 %v742
        %v1706 = vunpack.c.h.b16 %v742
        %v1707 = vunpack.c.l.b16 %v743
        %v1708 = vunpack.c.h.b16 %v743
        %v1709 = vunpack.c.l.b16 %v744
        %v1710 = vunpack.c.h.b16 %v744
        %v1711 = vunpack.c.l.b16 %v745
        %v1712 = vunpack.c.h.b16 %v745
        %v1713 = vunpack.c.l.b16 %v746
        %v1714 = vunpack.c.h.b16 %v746
        %v1715 = vunpack.c.l.b16 %v747
        %v1716 = vunpack.c.h.b16 %v747
        %v1717 = vunpack.c.l.b16 %v748
        %v1718 = vunpack.c.h.b16 %v748
        %v1719 = vunpack.c.l.b16 %v749
        %v1720 = vunpack.c.h.b16 %v749
        %v1721 = vunpack.c.l.b16 %v750
        %v1722 = vunpack.c.h.b16 %v750
        %v1723 = vunpack.c.l.b16 %v751
        %v1724 = vunpack.c.h.b16 %v751
        %v1725 = vunpack.c.l.b16 %v752
        %v1726 = vunpack.c.h.b16 %v752
        %v1727 = vunpack.c.l.b16 %v753
        %v1728 = vunpack.c.h.b16 %v753
        %v1729 = vunpack.c.l.b16 %v754
        %v1730 = vunpack.c.h.b16 %v754
        %v1731 = vunpack.c.l.b16 %v755
        %v1732 = vunpack.c.h.b16 %v755
        %v1733 = vunpack.c.l.b16 %v756
        %v1734 = vunpack.c.h.b16 %v756
        %v1735 = vunpack.c.l.b16 %v757
        %v1736 = vunpack.c.h.b16 %v757
        %v1737 = vunpack.c.l.b16 %v758
        %v1738 = vunpack.c.h.b16 %v758
        %v1739 = vunpack.c.l.b16 %v759
        %v1740 = vunpack.c.h.b16 %v759
        %v1741 = vunpack.c.l.b16 %v760
        %v1742 = vunpack.c.h.b16 %v760
        %v1743 = vunpack.c.l.b16 %v761
        %v1744 = vunpack.c.h.b16 %v761
        %v1745 = vunpack.c.l.b16 %v762
        %v1746 = vunpack.c.h.b16 %v762
        %v1747 = vunpack.c.l.b16 %v763
        %v1748 = vunpack.c.h.b16 %v763
        %v1749 = vunpack.c.l.b16 %v764
        %v1750 = vunpack.c.h.b16 %v764
        %v1751 = vunpack.c.l.b16 %v765
        %v1752 = vunpack.c.h.b16 %v765
        %v1753 = vunpack.c.l.b16 %v766
        %v1754 = vunpack.c.h.b16 %v766
        %v1755 = vunpack.c.l.b16 %v767
        %v1756 = vunpack.c.h.b16 %v767
        %v1757 = vunpack.c.l.b16 %v768
        %v1758 = vunpack.c.h.b16 %v768
        %v1759 = vunpack.c.l.b16 %v769
        %v1760 = vunpack.c.h.b16 %v769
        %v1761 = vunpack.c.l.b16 %v770
        %v1762 = vunpack.c.h.b16 %v770
        %v1763 = vunpack.c.l.b16 %v771
        %v1764 = vunpack.c.h.b16 %v771
        %v1765 = vunpack.c.l.b16 %v772
        %v1766 = vunpack.c.h.b16 %v772
        %v1767 = vunpack.c.l.b16 %v773
        %v1768 = vunpack.c.h.b16 %v773
        %v1769 = vunpack.c.l.b16 %v774
        %v1770 = vunpack.c.h.b16 %v774
        %v1771 = vunpack.c.l.b16 %v775
        %v1772 = vunpack.c.h.b16 %v775
        %v1773 = vunpack.c.l.b16 %v776
        %v1774 = vunpack.c.h.b16 %v776
        %v1775 = vunpack.c.l.b16 %v777
        %v1776 = vunpack.c.h.b16 %v777
        %v1777 = vunpack.c.l.b16 %v778
        %v1778 = vunpack.c.h.b16 %v778
        %v1779 = vunpack.c.l.b16 %v779
        %v1780 = vunpack.c.h.b16 %v779
        %v1781 = vunpack.c.l.b16 %v780
        %v1782 = vunpack.c.h.b16 %v780
        %v1783 = vunpack.c.l.b16 %v781
        %v1784 = vunpack.c.h.b16 %v781
        %v1785 = vunpack.c.l.b16 %v782
        %v1786 = vunpack.c.h.b16 %v782
        %v1787 = vunpack.c.l.b16 %v783
        %v1788 = vunpack.c.h.b16 %v783
        %v1789 = vunpack.c.l.b16 %v784
        %v1790 = vunpack.c.h.b16 %v784
        %v1791 = vunpack.c.l.b16 %v785
        %v1792 = vunpack.c.h.b16 %v785
        %v1793 = vunpack.c.l.b16 %v786
        %v1794 = vunpack.c.h.b16 %v786
        %v1795 = vunpack.c.l.b16 %v787
        %v1796 = vunpack.c.h.b16 %v787
        %v1797 = vunpack.c.l.b16 %v788
        %v1798 = vunpack.c.h.b16 %v788
        %v1799 = vunpack.c.l.b16 %v789
        %v1800 = vunpack.c.h.b16 %v789
        %v1801 = vunpack.c.l.b16 %v790
        %v1802 = vunpack.c.h.b16 %v790
        %v1803 = vunpack.c.l.b16 %v791
        %v1804 = vunpack.c.h.b16 %v791
        %v1805 = vunpack.c.l.b16 %v792
        %v1806 = vunpack.c.h.b16 %v792
        %v1807 = vunpack.c.l.b16 %v793
        %v1808 = vunpack.c.h.b16 %v793
        %v1809 = vunpack.c.l.b16 %v794
        %v1810 = vunpack.c.h.b16 %v794
        %v1811 = vunpack.c.l.b16 %v795
        %v1812 = vunpack.c.h.b16 %v795
        %v1813 = vunpack.c.l.b16 %v796
        %v1814 = vunpack.c.h.b16 %v796
        %v1815 = vunpack.c.l.b16 %v797
        %v1816 = vunpack.c.h.b16 %v797
        %v1817 = vunpack.c.l.b16 %v798
        %v1818 = vunpack.c.h.b16 %v798
        %v1819 = vunpack.c.l.b16 %v799
        %v1820 = vunpack.c.h.b16 %v799
        %v1821 = vunpack.c.l.b16 %v800
        %v1822 = vunpack.c.h.b16 %v800
        %v1823 = vunpack.c.l.b16 %v801
        %v1824 = vunpack.c.h.b16 %v801
        %v1825 = vunpack.c.l.b16 %v802
        %v1826 = vunpack.c.h.b16 %v802
        %v1827 = vunpack.c.l.b16 %v803
        %v1828 = vunpack.c.h.b16 %v803
        %v1829 = vunpack.c.l.b16 %v804
        %v1830 = vunpack.c.h.b16 %v804
        %v1831 = vunpack.c.l.b16 %v805
        %v1832 = vunpack.c.h.b16 %v805
        %v1833 = vunpack.c.l.b16 %v806
        %v1834 = vunpack.c.h.b16 %v806
        %v1835 = vunpack.c.l.b16 %v807
        %v1836 = vunpack.c.h.b16 %v807
        %v1837 = vunpack.c.l.b16 %v808
        %v1838 = vunpack.c.h.b16 %v808
        %v1839 = vunpack.c.l.b16 %v809
        %v1840 = vunpack.c.h.b16 %v809
        %v1841 = vunpack.c.l.b16 %v810
        %v1842 = vunpack.c.h.b16 %v810
        %v1843 = vunpack.c.l.b16 %v811
        %v1844 = vunpack.c.h.b16 %v811
        %v1845 = vunpack.c.l.b16 %v812
        %v1846 = vunpack.c.h.b16 %v812
        %v1847 = vunpack.c.l.b16 %v813
        %v1848 = vunpack.c.h.b16 %v813
        %v1849 = vunpack.c.l.b16 %v814
        %v1850 = vunpack.c.h.b16 %v814
        %v1851 = vunpack.c.l.b16 %v815
        %v1852 = vunpack.c.h.b16 %v815
        %v1853 = vunpack.c.l.b16 %v816
        %v1854 = vunpack.c.h.b16 %v816
        %v1855 = vunpack.c.l.b16 %v817
        %v1856 = vunpack.c.h.b16 %v817
        %v1857 = vunpack.c.l.b16 %v818
        %v1858 = vunpack.c.h.b16 %v818
        %v1859 = vunpack.c.l.b16 %v819
        %v1860 = vunpack.c.h.b16 %v819
        %v1861 = vunpack.c.l.b16 %v820
        %v1862 = vunpack.c.h.b16 %v820
        %v1863 = vunpack.c.l.b16 %v821
        %v1864 = vunpack.c.h.b16 %v821
        %v1865 = vunpack.c.l.b16 %v822
        %v1866 = vunpack.c.h.b16 %v822
        %v1867 = vunpack.c.l.b16 %v823
        %v1868 = vunpack.c.h.b16 %v823
        %v1869 = vunpack.c.l.b16 %v824
        %v1870 = vunpack.c.h.b16 %v824
        %v1871 = vunpack.c.l.b16 %v825
        %v1872 = vunpack.c.h.b16 %v825
        %v1873 = vunpack.c.l.b16 %v826
        %v1874 = vunpack.c.h.b16 %v826
        %v1875 = vunpack.c.l.b16 %v827
        %v1876 = vunpack.c.h.b16 %v827
        %v1877 = vunpack.c.l.b16 %v828
        %v1878 = vunpack.c.h.b16 %v828
        %v1879 = vunpack.c.l.b16 %v829
        %v1880 = vunpack.c.h.b16 %v829
        %v1881 = vunpack.c.l.b16 %v830
        %v1882 = vunpack.c.h.b16 %v830
        %v1883 = vunpack.c.l.b16 %v831
        %v1884 = vunpack.c.h.b16 %v831
        %v1885 = vunpack.c.l.b16 %v832
        %v1886 = vunpack.c.h.b16 %v832
        %v1887 = vunpack.c.l.b16 %v833
        %v1888 = vunpack.c.h.b16 %v833
        %v1889 = vunpack.c.l.b16 %v834
        %v1890 = vunpack.c.h.b16 %v834
        %v1891 = vunpack.c.l.b16 %v835
        %v1892 = vunpack.c.h.b16 %v835
        %v1893 = vunpack.c.l.b16 %v836
        %v1894 = vunpack.c.h.b16 %v836
        %v1895 = vunpack.c.l.b16 %v837
        %v1896 = vunpack.c.h.b16 %v837
        %v1897 = vunpack.c.l.b16 %v838
        %v1898 = vunpack.c.h.b16 %v838
        %v1899 = vunpack.c.l.b16 %v839
        %v1900 = vunpack.c.h.b16 %v839
        %v1901 = vunpack.c.l.b16 %v840
        %v1902 = vunpack.c.h.b16 %v840
        %v1903 = vunpack.c.l.b16 %v841
        %v1904 = vunpack.c.h.b16 %v841
        %v1905 = vunpack.c.l.b16 %v842
        %v1906 = vunpack.c.h.b16 %v842
        %v1907 = vunpack.c.l.b16 %v843
        %v1908 = vunpack.c.h.b16 %v843
        %v1909 = vunpack.c.l.b16 %v844
        %v1910 = vunpack.c.h.b16 %v844
        %v1911 = vunpack.c.l.b16 %v845
        %v1912 = vunpack.c.h.b16 %v845
        %v1913 = vunpack.c.l.b16 %v846
        %v1914 = vunpack.c.h.b16 %v846
        %v1915 = vunpack.c.l.b16 %v847
        %v1916 = vunpack.c.h.b16 %v847
        %v1917 = vunpack.c.l.b16 %v848
        %v1918 = vunpack.c.h.b16 %v848
        %v1919 = vunpack.c.l.b16 %v849
        %v1920 = vunpack.c.h.b16 %v849
        %v1921 = vunpack.c.l.b16 %v850
        %v1922 = vunpack.c.h.b16 %v850
        %v1923 = vunpack.c.l.b16 %v851
        %v1924 = vunpack.c.h.b16 %v851
        %v1925 = vunpack.c.l.b16 %v852
        %v1926 = vunpack.c.h.b16 %v852
        %v1927 = vunpack.c.l.b16 %v853
        %v1928 = vunpack.c.h.b16 %v853
        %v1929 = vunpack.c.l.b16 %v854
        %v1930 = vunpack.c.h.b16 %v854
        %v1931 = vunpack.c.l.b16 %v855
        %v1932 = vunpack.c.h.b16 %v855
        %v1933 = vunpack.c.l.b16 %v856
        %v1934 = vunpack.c.h.b16 %v856
        %v1935 = vunpack.c.l.b16 %v857
        %v1936 = vunpack.c.h.b16 %v857
        %v1937 = vunpack.c.l.b16 %v858
        %v1938 = vunpack.c.h.b16 %v858
        %v1939 = vunpack.c.l.b16 %v859
        %v1940 = vunpack.c.h.b16 %v859
        %v1941 = vunpack.c.l.b16 %v860
        %v1942 = vunpack.c.h.b16 %v860
        %v1943 = vunpack.c.l.b16 %v861
        %v1944 = vunpack.c.h.b16 %v861
        %v1945 = vunpack.c.l.b16 %v862
        %v1946 = vunpack.c.h.b16 %v862
        %v1947 = vunpack.c.l.b16 %v863
        %v1948 = vunpack.c.h.b16 %v863
        %v1949 = vunpack.c.l.b16 %v864
        %v1950 = vunpack.c.h.b16 %v864
        %v1951 = vunpack.c.l.b16 %v865
        %v1952 = vunpack.c.h.b16 %v865
        %v1953 = vunpack.c.l.b16 %v866
        %v1954 = vunpack.c.h.b16 %v866
        %v1955 = vunpack.c.l.b16 %v867
        %v1956 = vunpack.c.h.b16 %v867
        %v1957 = vunpack.c.l.b16 %v868
        %v1958 = vunpack.c.h.b16 %v868
        %v1959 = vunpack.c.l.b16 %v869
        %v1960 = vunpack.c.h.b16 %v869
        %v1961 = vunpack.c.l.b16 %v870
        %v1962 = vunpack.c.h.b16 %v870
        %v1963 = vunpack.c.l.b16 %v871
        %v1964 = vunpack.c.h.b16 %v871
        %v1965 = vunpack.c.l.b16 %v872
        %v1966 = vunpack.c.h.b16 %v872
        %v1967 = vunpack.c.l.b16 %v873
        %v1968 = vunpack.c.h.b16 %v873
        %v1969 = vunpack.c.l.b16 %v874
        %v1970 = vunpack.c.h.b16 %v874
        %v1971 = vunpack.c.l.b16 %v875
        %v1972 = vunpack.c.h.b16 %v875
        %v1973 = vunpack.c.l.b16 %v876
        %v1974 = vunpack.c.h.b16 %v876
        %v1975 = vunpack.c.l.b16 %v877
        %v1976 = vunpack.c.h.b16 %v877
        %v1977 = vunpack.c.l.b16 %v878
        %v1978 = vunpack.c.h.b16 %v878
        %v1979 = vunpack.c.l.b16 %v879
        %v1980 = vunpack.c.h.b16 %v879
        %v1981 = vunpack.c.l.b16 %v880
        %v1982 = vunpack.c.h.b16 %v880
        %v1983 = vunpack.c.l.b16 %v881
        %v1984 = vunpack.c.h.b16 %v881
        %v1985 = vunpack.c.l.b16 %v882
        %v1986 = vunpack.c.h.b16 %v882
        %v1987 = vunpack.c.l.b16 %v883
        %v1988 = vunpack.c.h.b16 %v883
        %v1989 = vunpack.c.l.b16 %v884
        %v1990 = vunpack.c.h.b16 %v884
        %v1991 = vunpack.c.l.b16 %v885
        %v1992 = vunpack.c.h.b16 %v885
        %v1993 = vunpack.c.l.b16 %v886
        %v1994 = vunpack.c.h.b16 %v886
        %v1995 = vunpack.c.l.b16 %v887
        %v1996 = vunpack.c.h.b16 %v887
        %v1997 = vunpack.c.l.b16 %v888
        %v1998 = vunpack.c.h.b16 %v888
        %v1999 = vunpack.c.l.b16 %v889
        %v2000 = vunpack.c.h.b16 %v889
        %v2001 = vunpack.c.l.b16 %v890
        %v2002 = vunpack.c.h.b16 %v890
        %v2003 = vunpack.c.l.b16 %v891
        %v2004 = vunpack.c.h.b16 %v891
        %v2005 = vunpack.c.l.b16 %v892
        %v2006 = vunpack.c.h.b16 %v892
        %v2007 = vunpack.c.l.b16 %v893
        %v2008 = vunpack.c.h.b16 %v893
        %v2009 = vunpack.c.l.b16 %v894
        %v2010 = vunpack.c.h.b16 %v894
        %v2011 = vunpack.c.l.b16 %v895
        %v2012 = vunpack.c.h.b16 %v895
        %v2013 = vunpack.c.l.b16 %v896
        %v2014 = vunpack.c.h.b16 %v896
        %v2015 = vunpack.c.l.b16 %v897
        %v2016 = vunpack.c.h.b16 %v897
        %v2017 = vunpack.c.l.b16 %v898
        %v2018 = vunpack.c.h.b16 %v898
        %v2019 = vunpack.c.l.b16 %v899
        %v2020 = vunpack.c.h.b16 %v899
        %v2021 = vunpack.c.l.b16 %v900
        %v2022 = vunpack.c.h.b16 %v900
        %v2023 = vunpack.c.l.b16 %v901
        %v2024 = vunpack.c.h.b16 %v901
        %v2025 = vunpack.c.l.b16 %v902
        %v2026 = vunpack.c.h.b16 %v902
        %v2027 = vunpack.c.l.b16 %v903
        %v2028 = vunpack.c.h.b16 %v903
        %v2029 = vunpack.c.l.b16 %v904
        %v2030 = vunpack.c.h.b16 %v904
        %v2031 = vunpack.c.l.b16 %v905
        %v2032 = vunpack.c.h.b16 %v905
        %v2033 = vunpack.c.l.b16 %v906
        %v2034 = vunpack.c.h.b16 %v906
        %v2035 = vunpack.c.l.b16 %v907
        %v2036 = vunpack.c.h.b16 %v907
        %v2037 = vunpack.c.l.b16 %v908
        %v2038 = vunpack.c.h.b16 %v908
        %v2039 = vunpack.c.l.b16 %v909
        %v2040 = vunpack.c.h.b16 %v909
        %v2041 = vunpack.c.l.b16 %v910
        %v2042 = vunpack.c.h.b16 %v910
        %v2043 = vunpack.c.l.b16 %v911
        %v2044 = vunpack.c.h.b16 %v911
        %v2045 = vunpack.c.l.b16 %v912
        %v2046 = vunpack.c.h.b16 %v912
        %v2047 = vunpack.c.l.b16 %v913
        %v2048 = vunpack.c.h.b16 %v913
        %v2049 = vunpack.c.l.b16 %v914
        %v2050 = vunpack.c.h.b16 %v914
        %v2051 = vunpack.c.l.b16 %v915
        %v2052 = vunpack.c.h.b16 %v915
        %v2053 = vunpack.c.l.b16 %v916
        %v2054 = vunpack.c.h.b16 %v916
        %v2055 = vunpack.c.l.b16 %v917
        %v2056 = vunpack.c.h.b16 %v917
        %v2057 = vunpack.c.l.b16 %v918
        %v2058 = vunpack.c.h.b16 %v918
        %v2059 = vunpack.c.l.b16 %v919
        %v2060 = vunpack.c.h.b16 %v919
        %v2061 = vunpack.c.l.b16 %v920
        %v2062 = vunpack.c.h.b16 %v920
        %v2063 = vunpack.c.l.b16 %v921
        %v2064 = vunpack.c.h.b16 %v921
        %v2065 = vunpack.c.l.b16 %v922
        %v2066 = vunpack.c.h.b16 %v922
        %v2067 = vunpack.c.l.b16 %v923
        %v2068 = vunpack.c.h.b16 %v923
        %v2069 = vunpack.c.l.b16 %v924
        %v2070 = vunpack.c.h.b16 %v924
        %v2071 = vunpack.c.l.b16 %v925
        %v2072 = vunpack.c.h.b16 %v925
        %v2073 = vunpack.c.l.b16 %v926
        %v2074 = vunpack.c.h.b16 %v926
        %v2075 = vunpack.c.l.b16 %v927
        %v2076 = vunpack.c.h.b16 %v927
        %v2077 = vunpack.c.l.b16 %v928
        %v2078 = vunpack.c.h.b16 %v928
        %v2079 = vunpack.c.l.b16 %v929
        %v2080 = vunpack.c.h.b16 %v929
        %v2081 = vunpack.c.l.b16 %v930
        %v2082 = vunpack.c.h.b16 %v930
        %v2083 = vunpack.c.l.b16 %v931
        %v2084 = vunpack.c.h.b16 %v931
        %v2085 = vunpack.c.l.b16 %v932
        %v2086 = vunpack.c.h.b16 %v932
        %v2087 = vunpack.c.l.b16 %v933
        %v2088 = vunpack.c.h.b16 %v933
        %v2089 = vunpack.c.l.b16 %v934
        %v2090 = vunpack.c.h.b16 %v934
        %v2091 = vunpack.c.l.b16 %v935
        %v2092 = vunpack.c.h.b16 %v935
        %v2093 = vunpack.c.l.b16 %v936
        %v2094 = vunpack.c.h.b16 %v936
        %v2095 = vunpack.c.l.b16 %v937
        %v2096 = vunpack.c.h.b16 %v937
        %v2097 = vunpack.c.l.b16 %v938
        %v2098 = vunpack.c.h.b16 %v938
        %v2099 = vunpack.c.l.b16 %v939
        %v2100 = vunpack.c.h.b16 %v939
        %v2101 = vunpack.c.l.b16 %v940
        %v2102 = vunpack.c.h.b16 %v940
        %v2103 = vunpack.c.l.b16 %v941
        %v2104 = vunpack.c.h.b16 %v941
        %v2105 = vunpack.c.l.b16 %v942
        %v2106 = vunpack.c.h.b16 %v942
        %v2107 = vunpack.c.l.b16 %v943
        %v2108 = vunpack.c.h.b16 %v943
        %v2109 = vunpack.c.l.b16 %v944
        %v2110 = vunpack.c.h.b16 %v944
        %v2111 = vunpack.c.l.b16 %v945
        %v2112 = vunpack.c.h.b16 %v945
        %v2113 = vunpack.c.l.b16 %v946
        %v2114 = vunpack.c.h.b16 %v946
        %v2115 = vunpack.c.l.b16 %v947
        %v2116 = vunpack.c.h.b16 %v947
        %v2117 = vunpack.c.l.b16 %v948
        %v2118 = vunpack.c.h.b16 %v948
        %v2119 = vunpack.c.l.b16 %v949
        %v2120 = vunpack.c.h.b16 %v949
        %v2121 = vunpack.c.l.b16 %v950
        %v2122 = vunpack.c.h.b16 %v950
        %v2123 = vunpack.c.l.b16 %v951
        %v2124 = vunpack.c.h.b16 %v951
        %v2125 = vunpack.c.l.b16 %v952
        %v2126 = vunpack.c.h.b16 %v952
        %v2127 = vunpack.c.l.b16 %v953
        %v2128 = vunpack.c.h.b16 %v953
        %v2129 = vunpack.c.l.b16 %v954
        %v2130 = vunpack.c.h.b16 %v954
        %v2131 = vpack.c.b16 %v1355, %v1347
        %v2132 = vpack.c.b16 %v1356, %v1348
        %v2133 = vpack.c.b16 %v1357, %v1349
        %v2134 = vpack.c.b16 %v1358, %v1350
        %v2135 = vpack.c.b16 %v1359, %v1351
        %v2136 = vpack.c.b16 %v1360, %v1352
        %v2137 = vpack.c.b16 %v1361, %v1353
        %v2138 = vpack.c.b16 %v1362, %v1354
        %v2139 = vpack.c.b16 %v1371, %v1363
        %v2140 = vpack.c.b16 %v1372, %v1364
        %v2141 = vpack.c.b16 %v1373, %v1365
        %v2142 = vpack.c.b16 %v1374, %v1366
        %v2143 = vpack.c.b16 %v1375, %v1367
        %v2144 = vpack.c.b16 %v1376, %v1368
        %v2145 = vpack.c.b16 %v1377, %v1369
        %v2146 = vpack.c.b16 %v1378, %v1370
        %v2147 = vpack.c.b16 %v1387, %v1379
        %v2148 = vpack.c.b16 %v1388, %v1380
        %v2149 = vpack.c.b16 %v1389, %v1381
        %v2150 = vpack.c.b16 %v1390, %v1382
        %v2151 = vpack.c.b16 %v1391, %v1383
        %v2152 = vpack.c.b16 %v1392, %v1384
        %v2153 = vpack.c.b16 %v1393, %v1385
        %v2154 = vpack.c.b16 %v1394, %v1386
        %v2155 = vpack.c.b16 %v1403, %v1395
        %v2156 = vpack.c.b16 %v1404, %v1396
        %v2157 = vpack.c.b16 %v1405, %v1397
        %v2158 = vpack.c.b16 %v1406, %v1398
        %v2159 = vpack.c.b16 %v1407, %v1399
        %v2160 = vpack.c.b16 %v1408, %v1400
        %v2161 = vpack.c.b16 %v1409, %v1401
        %v2162 = vpack.c.b16 %v1410, %v1402
        %v2163 = vpack.c.b16 %v1419, %v1411
        %v2164 = vpack.c.b16 %v1420, %v1412
        %v2165 = vpack.c.b16 %v1421, %v1413
        %v2166 = vpack.c.b16 %v1422, %v1414
        %v2167 = vpack.c.b16 %v1423, %v1415
        %v2168 = vpack.c.b16 %v1424, %v1416
        %v2169 = vpack.c.b16 %v1425, %v1417
        %v2170 = vpack.c.b16 %v1426, %v1418
        %v2171 = vpack.c.b16 %v1435, %v1427
        %v2172 = vpack.c.b16 %v1436, %v1428
        %v2173 = vpack.c.b16 %v1437, %v1429
        %v2174 = vpack.c.b16 %v1438, %v1430
        %v2175 = vpack.c.b16 %v1439, %v1431
        %v2176 = vpack.c.b16 %v1440, %v1432
        %v2177 = vpack.c.b16 %v1441, %v1433
        %v2178 = vpack.c.b16 %v1442, %v1434
        %v2179 = vpack.c.b16 %v1451, %v1443
        %v2180 = vpack.c.b16 %v1452, %v1444
        %v2181 = vpack.c.b16 %v1453, %v1445
        %v2182 = vpack.c.b16 %v1454, %v1446
        %v2183 = vpack.c.b16 %v1455, %v1447
        %v2184 = vpack.c.b16 %v1456, %v1448
        %v2185 = vpack.c.b16 %v1457, %v1449
        %v2186 = vpack.c.b16 %v1458, %v1450
        %v2187 = vpack.c.b16 %v1467, %v1459
        %v2188 = vpack.c.b16 %v1468, %v1460
        %v2189 = vpack.c.b16 %v1469, %v1461
        %v2190 = vpack.c.b16 %v1470, %v1462
        %v2191 = vpack.c.b16 %v1471, %v1463
        %v2192 = vpack.c.b16 %v1472, %v1464
        %v2193 = vpack.c.b16 %v1473, %v1465
        %v2194 = vpack.c.b16 %v1474, %v1466
        %v2195 = vpack.c.b16 %v1483, %v1475
        %v2196 = vpack.c.b16 %v1484, %v1476
        %v2197 = vpack.c.b16 %v1485, %v1477
        %v2198 = vpack.c.b16 %v1486, %v1478
        %v2199 = vpack.c.b16 %v1487, %v1479
        %v2200 = vpack.c.b16 %v1488, %v1480
        %v2201 = vpack.c.b16 %v1489, %v1481
        %v2202 = vpack.c.b16 %v1490, %v1482
        %v2203 = vpack.c.b16 %v1499, %v1491
        %v2204 = vpack.c.b16 %v1500, %v1492
        %v2205 = vpack.c.b16 %v1501, %v1493
        %v2206 = vpack.c.b16 %v1502, %v1494
        %v2207 = vpack.c.b16 %v1503, %v1495
        %v2208 = vpack.c.b16 %v1504, %v1496
        %v2209 = vpack.c.b16 %v1505, %v1497
        %v2210 = vpack.c.b16 %v1506, %v1498
        %v2211 = vpack.c.b16 %v1515, %v1507
        %v2212 = vpack.c.b16 %v1516, %v1508
        %v2213 = vpack.c.b16 %v1517, %v1509
        %v2214 = vpack.c.b16 %v1518, %v1510
        %v2215 = vpack.c.b16 %v1519, %v1511
        %v2216 = vpack.c.b16 %v1520, %v1512
        %v2217 = vpack.c.b16 %v1521, %v1513
        %v2218 = vpack.c.b16 %v1522, %v1514
        %v2219 = vpack.c.b16 %v1531, %v1523
        %v2220 = vpack.c.b16 %v1532, %v1524
        %v2221 = vpack.c.b16 %v1533, %v1525
        %v2222 = vpack.c.b16 %v1534, %v1526
        %v2223 = vpack.c.b16 %v1535, %v1527
        %v2224 = vpack.c.b16 %v1536, %v1528
        %v2225 = vpack.c.b16 %v1537, %v1529
        %v2226 = vpack.c.b16 %v1538, %v1530
        %v2227 = vpack.c.b16 %v1547, %v1539
        %v2228 = vpack.c.b16 %v1548, %v1540
        %v2229 = vpack.c.b16 %v1549, %v1541
        %v2230 = vpack.c.b16 %v1550, %v1542
        %v2231 = vpack.c.b16 %v1551, %v1543
        %v2232 = vpack.c.b16 %v1552, %v1544
        %v2233 = vpack.c.b16 %v1553, %v1545
        %v2234 = vpack.c.b16 %v1554, %v1546
        %v2235 = vpack.c.b16 %v1563, %v1555
        %v2236 = vpack.c.b16 %v1564, %v1556
        %v2237 = vpack.c.b16 %v1565, %v1557
        %v2238 = vpack.c.b16 %v1566, %v1558
        %v2239 = vpack.c.b16 %v1567, %v1559
        %v2240 = vpack.c.b16 %v1568, %v1560
        %v2241 = vpack.c.b16 %v1569, %v1561
        %v2242 = vpack.c.b16 %v1570, %v1562
        %v2243 = vpack.c.b16 %v1579, %v1571
        %v2244 = vpack.c.b16 %v1580, %v1572
        %v2245 = vpack.c.b16 %v1581, %v1573
        %v2246 = vpack.c.b16 %v1582, %v1574
        %v2247 = vpack.c.b16 %v1583, %v1575
        %v2248 = vpack.c.b16 %v1584, %v1576
        %v2249 = vpack.c.b16 %v1585, %v1577
        %v2250 = vpack.c.b16 %v1586, %v1578
        %v2251 = vpack.c.b16 %v1595, %v1587
        %v2252 = vpack.c.b16 %v1596, %v1588
        %v2253 = vpack.c.b16 %v1597, %v1589
        %v2254 = vpack.c.b16 %v1598, %v1590
        %v2255 = vpack.c.b16 %v1599, %v1591
        %v2256 = vpack.c.b16 %v1600, %v1592
        %v2257 = vpack.c.b16 %v1601, %v1593
        %v2258 = vpack.c.b16 %v1602, %v1594
        %v2259 = vpack.c.b16 %v1611, %v1603
        %v2260 = vpack.c.b16 %v1612, %v1604
        %v2261 = vpack.c.b16 %v1613, %v1605
        %v2262 = vpack.c.b16 %v1614, %v1606
        %v2263 = vpack.c.b16 %v1615, %v1607
        %v2264 = vpack.c.b16 %v1616, %v1608
        %v2265 = vpack.c.b16 %v1617, %v1609
        %v2266 = vpack.c.b16 %v1618, %v1610
        %v2267 = vpack.c.b16 %v1627, %v1619
        %v2268 = vpack.c.b16 %v1628, %v1620
        %v2269 = vpack.c.b16 %v1629, %v1621
        %v2270 = vpack.c.b16 %v1630, %v1622
        %v2271 = vpack.c.b16 %v1631, %v1623
        %v2272 = vpack.c.b16 %v1632, %v1624
        %v2273 = vpack.c.b16 %v1633, %v1625
        %v2274 = vpack.c.b16 %v1634, %v1626
        %v2275 = vpack.c.b16 %v1643, %v1635
        %v2276 = vpack.c.b16 %v1644, %v1636
        %v2277 = vpack.c.b16 %v1645, %v1637
        %v2278 = vpack.c.b16 %v1646, %v1638
        %v2279 = vpack.c.b16 %v1647, %v1639
        %v2280 = vpack.c.b16 %v1648, %v1640
        %v2281 = vpack.c.b16 %v1649, %v1641
        %v2282 = vpack.c.b16 %v1650, %v1642
        %v2283 = vpack.c.b16 %v1659, %v1651
        %v2284 = vpack.c.b16 %v1660, %v1652
        %v2285 = vpack.c.b16 %v1661, %v1653
        %v2286 = vpack.c.b16 %v1662, %v1654
        %v2287 = vpack.c.b16 %v1663, %v1655
        %v2288 = vpack.c.b16 %v1664, %v1656
        %v2289 = vpack.c.b16 %v1665, %v1657
        %v2290 = vpack.c.b16 %v1666, %v1658
        %v2291 = vpack.c.b16 %v1675, %v1667
        %v2292 = vpack.c.b16 %v1676, %v1668
        %v2293 = vpack.c.b16 %v1677, %v1669
        %v2294 = vpack.c.b16 %v1678, %v1670
        %v2295 = vpack.c.b16 %v1679, %v1671
        %v2296 = vpack.c.b16 %v1680, %v1672
        %v2297 = vpack.c.b16 %v1681, %v1673
        %v2298 = vpack.c.b16 %v1682, %v1674
        %v2299 = vpack.c.b16 %v1691, %v1683
        %v2300 = vpack.c.b16 %v1692, %v1684
        %v2301 = vpack.c.b16 %v1693, %v1685
        %v2302 = vpack.c.b16 %v1694, %v1686
        %v2303 = vpack.c.b16 %v1695, %v1687
        %v2304 = vpack.c.b16 %v1696, %v1688
        %v2305 = vpack.c.b16 %v1697, %v1689
        %v2306 = vpack.c.b16 %v1698, %v1690
        %v2307 = vpack.c.b16 %v1707, %v1699
        %v2308 = vpack.c.b16 %v1708, %v1700
        %v2309 = vpack.c.b16 %v1709, %v1701
        %v2310 = vpack.c.b16 %v1710, %v1702
        %v2311 = vpack.c.b16 %v1711, %v1703
        %v2312 = vpack.c.b16 %v1712, %v1704
        %v2313 = vpack.c.b16 %v1713, %v1705
        %v2314 = vpack.c.b16 %v1714, %v1706
        %v2315 = vpack.c.b16 %v1723, %v1715
        %v2316 = vpack.c.b16 %v1724, %v1716
        %v2317 = vpack.c.b16 %v1725, %v1717
        %v2318 = vpack.c.b16 %v1726, %v1718
        %v2319 = vpack.c.b16 %v1727, %v1719
        %v2320 = vpack.c.b16 %v1728, %v1720
        %v2321 = vpack.c.b16 %v1729, %v1721
        %v2322 = vpack.c.b16 %v1730, %v1722
        %v2323 = vpack.c.b16 %v1739, %v1731
        %v2324 = vpack.c.b16 %v1740, %v1732
        %v2325 = vpack.c.b16 %v1741, %v1733
        %v2326 = vpack.c.b16 %v1742, %v1734
        %v2327 = vpack.c.b16 %v1743, %v1735
        %v2328 = vpack.c.b16 %v1744, %v1736
        %v2329 = vpack.c.b16 %v1745, %v1737
        %v2330 = vpack.c.b16 %v1746, %v1738
        %v2331 = vpack.c.b16 %v1755, %v1747
        %v2332 = vpack.c.b16 %v1756, %v1748
        %v2333 = vpack.c.b16 %v1757, %v1749
        %v2334 = vpack.c.b16 %v1758, %v1750
        %v2335 = vpack.c.b16 %v1759, %v1751
        %v2336 = vpack.c.b16 %v1760, %v1752
        %v2337 = vpack.c.b16 %v1761, %v1753
        %v2338 = vpack.c.b16 %v1762, %v1754
        %v2339 = vpack.c.b16 %v1771, %v1763
        %v2340 = vpack.c.b16 %v1772, %v1764
        %v2341 = vpack.c.b16 %v1773, %v1765
        %v2342 = vpack.c.b16 %v1774, %v1766
        %v2343 = vpack.c.b16 %v1775, %v1767
        %v2344 = vpack.c.b16 %v1776, %v1768
        %v2345 = vpack.c.b16 %v1777, %v1769
        %v2346 = vpack.c.b16 %v1778, %v1770
        %v2347 = vpack.c.b16 %v1787, %v1779
        %v2348 = vpack.c.b16 %v1788, %v1780
        %v2349 = vpack.c.b16 %v1789, %v1781
        %v2350 = vpack.c.b16 %v1790, %v1782
        %v2351 = vpack.c.b16 %v1791, %v1783
        %v2352 = vpack.c.b16 %v1792, %v1784
        %v2353 = vpack.c.b16 %v1793, %v1785
        %v2354 = vpack.c.b16 %v1794, %v1786
        %v2355 = vpack.c.b16 %v1803, %v1795
        %v2356 = vpack.c.b16 %v1804, %v1796
        %v2357 = vpack.c.b16 %v1805, %v1797
        %v2358 = vpack.c.b16 %v1806, %v1798
        %v2359 = vpack.c.b16 %v1807, %v1799
        %v2360 = vpack.c.b16 %v1808, %v1800
        %v2361 = vpack.c.b16 %v1809, %v1801
        %v2362 = vpack.c.b16 %v1810, %v1802
        %v2363 = vpack.c.b16 %v1819, %v1811
        %v2364 = vpack.c.b16 %v1820, %v1812
        %v2365 = vpack.c.b16 %v1821, %v1813
        %v2366 = vpack.c.b16 %v1822, %v1814
        %v2367 = vpack.c.b16 %v1823, %v1815
        %v2368 = vpack.c.b16 %v1824, %v1816
        %v2369 = vpack.c.b16 %v1825, %v1817
        %v2370 = vpack.c.b16 %v1826, %v1818
        %v2371 = vpack.c.b16 %v1835, %v1827
        %v2372 = vpack.c.b16 %v1836, %v1828
        %v2373 = vpack.c.b16 %v1837, %v1829
        %v2374 = vpack.c.b16 %v1838, %v1830
        %v2375 = vpack.c.b16 %v1839, %v1831
        %v2376 = vpack.c.b16 %v1840, %v1832
        %v2377 = vpack.c.b16 %v1841, %v1833
        %v2378 = vpack.c.b16 %v1842, %v1834
        %v2379 = vpack.c.b16 %v1851, %v1843
        %v2380 = vpack.c.b16 %v1852, %v1844
        %v2381 = vpack.c.b16 %v1853, %v1845
        %v2382 = vpack.c.b16 %v1854, %v1846
        %v2383 = vpack.c.b16 %v1855, %v1847
        %v2384 = vpack.c.b16 %v1856, %v1848
        %v2385 = vpack.c.b16 %v1857, %v1849
        %v2386 = vpack.c.b16 %v1858, %v1850
        %v2387 = vpack.c.b16 %v1867, %v1859
        %v2388 = vpack.c.b16 %v1868, %v1860
        %v2389 = vpack.c.b16 %v1869, %v1861
        %v2390 = vpack.c.b16 %v1870, %v1862
        %v2391 = vpack.c.b16 %v1871, %v1863
        %v2392 = vpack.c.b16 %v1872, %v1864
        %v2393 = vpack.c.b16 %v1873, %v1865
        %v2394 = vpack.c.b16 %v1874, %v1866
        %v2395 = vpack.c.b16 %v1883, %v1875
        %v2396 = vpack.c.b16 %v1884, %v1876
        %v2397 = vpack.c.b16 %v1885, %v1877
        %v2398 = vpack.c.b16 %v1886, %v1878
        %v2399 = vpack.c.b16 %v1887, %v1879
        %v2400 = vpack.c.b16 %v1888, %v1880
        %v2401 = vpack.c.b16 %v1889, %v1881
        %v2402 = vpack.c.b16 %v1890, %v1882
        %v2403 = vpack.c.b16 %v1899, %v1891
        %v2404 = vpack.c.b16 %v1900, %v1892
        %v2405 = vpack.c.b16 %v1901, %v1893
        %v2406 = vpack.c.b16 %v1902, %v1894
        %v2407 = vpack.c.b16 %v1903, %v1895
        %v2408 = vpack.c.b16 %v1904, %v1896
        %v2409 = vpack.c.b16 %v1905, %v1897
        %v2410 = vpack.c.b16 %v1906, %v1898
        %v2411 = vpack.c.b16 %v1915, %v1907
        %v2412 = vpack.c.b16 %v1916, %v1908
        %v2413 = vpack.c.b16 %v1917, %v1909
        %v2414 = vpack.c.b16 %v1918, %v1910
        %v2415 = vpack.c.b16 %v1919, %v1911
        %v2416 = vpack.c.b16 %v1920, %v1912
        %v2417 = vpack.c.b16 %v1921, %v1913
        %v2418 = vpack.c.b16 %v1922, %v1914
        %v2419 = vpack.c.b16 %v1931, %v1923
        %v2420 = vpack.c.b16 %v1932, %v1924
        %v2421 = vpack.c.b16 %v1933, %v1925
        %v2422 = vpack.c.b16 %v1934, %v1926
        %v2423 = vpack.c.b16 %v1935, %v1927
        %v2424 = vpack.c.b16 %v1936, %v1928
        %v2425 = vpack.c.b16 %v1937, %v1929
        %v2426 = vpack.c.b16 %v1938, %v1930
        %v2427 = vpack.c.b16 %v1947, %v1939
        %v2428 = vpack.c.b16 %v1948, %v1940
        %v2429 = vpack.c.b16 %v1949, %v1941
        %v2430 = vpack.c.b16 %v1950, %v1942
        %v2431 = vpack.c.b16 %v1951, %v1943
        %v2432 = vpack.c.b16 %v1952, %v1944
        %v2433 = vpack.c.b16 %v1953, %v1945
        %v2434 = vpack.c.b16 %v1954, %v1946
        %v2435 = vpack.c.b16 %v1963, %v1955
        %v2436 = vpack.c.b16 %v1964, %v1956
        %v2437 = vpack.c.b16 %v1965, %v1957
        %v2438 = vpack.c.b16 %v1966, %v1958
        %v2439 = vpack.c.b16 %v1967, %v1959
        %v2440 = vpack.c.b16 %v1968, %v1960
        %v2441 = vpack.c.b16 %v1969, %v1961
        %v2442 = vpack.c.b16 %v1970, %v1962
        %v2443 = vpack.c.b16 %v1979, %v1971
        %v2444 = vpack.c.b16 %v1980, %v1972
        %v2445 = vpack.c.b16 %v1981, %v1973
        %v2446 = vpack.c.b16 %v1982, %v1974
        %v2447 = vpack.c.b16 %v1983, %v1975
        %v2448 = vpack.c.b16 %v1984, %v1976
        %v2449 = vpack.c.b16 %v1985, %v1977
        %v2450 = vpack.c.b16 %v1986, %v1978
        %v2451 = vpack.c.b16 %v1995, %v1987
        %v2452 = vpack.c.b16 %v1996, %v1988
        %v2453 = vpack.c.b16 %v1997, %v1989
        %v2454 = vpack.c.b16 %v1998, %v1990
        %v2455 = vpack.c.b16 %v1999, %v1991
        %v2456 = vpack.c.b16 %v2000, %v1992
        %v2457 = vpack.c.b16 %v2001, %v1993
        %v2458 = vpack.c.b16 %v2002, %v1994
        %v2459 = vpack.c.b16 %v2011, %v2003
        %v2460 = vpack.c.b16 %v2012, %v2004
        %v2461 = vpack.c.b16 %v2013, %v2005
        %v2462 = vpack.c.b16 %v2014, %v2006
        %v2463 = vpack.c.b16 %v2015, %v2007
        %v2464 = vpack.c.b16 %v2016, %v2008
        %v2465 = vpack.c.b16 %v2017, %v2009
        %v2466 = vpack.c.b16 %v2018, %v2010
        %v2467 = vpack.c.b16 %v2027, %v2019
        %v2468 = vpack.c.b16 %v2028, %v2020
        %v2469 = vpack.c.b16 %v2029, %v2021
        %v2470 = vpack.c.b16 %v2030, %v2022
        %v2471 = vpack.c.b16 %v2031, %v2023
        %v2472 = vpack.c.b16 %v2032, %v2024
        %v2473 = vpack.c.b16 %v2033, %v2025
        %v2474 = vpack.c.b16 %v2034, %v2026
        %v2475 = vpack.c.b16 %v2043, %v2035
        %v2476 = vpack.c.b16 %v2044, %v2036
        %v2477 = vpack.c.b16 %v2045, %v2037
        %v2478 = vpack.c.b16 %v2046, %v2038
        %v2479 = vpack.c.b16 %v2047, %v2039
        %v2480 = vpack.c.b16 %v2048, %v2040
        %v2481 = vpack.c.b16 %v2049, %v2041
        %v2482 = vpack.c.b16 %v2050, %v2042
        %v2483 = vpack.c.b16 %v2059, %v2051
        %v2484 = vpack.c.b16 %v2060, %v2052
        %v2485 = vpack.c.b16 %v2061, %v2053
        %v2486 = vpack.c.b16 %v2062, %v2054
        %v2487 = vpack.c.b16 %v2063, %v2055
        %v2488 = vpack.c.b16 %v2064, %v2056
        %v2489 = vpack.c.b16 %v2065, %v2057
        %v2490 = vpack.c.b16 %v2066, %v2058
        %v2491 = vpack.c.b16 %v2075, %v2067
        %v2492 = vpack.c.b16 %v2076, %v2068
        %v2493 = vpack.c.b16 %v2077, %v2069
        %v2494 = vpack.c.b16 %v2078, %v2070
        %v2495 = vpack.c.b16 %v2079, %v2071
        %v2496 = vpack.c.b16 %v2080, %v2072
        %v2497 = vpack.c.b16 %v2081, %v2073
        %v2498 = vpack.c.b16 %v2082, %v2074
        %v2499 = vpack.c.b16 %v2091, %v2083
        %v2500 = vpack.c.b16 %v2092, %v2084
        %v2501 = vpack.c.b16 %v2093, %v2085
        %v2502 = vpack.c.b16 %v2094, %v2086
        %v2503 = vpack.c.b16 %v2095, %v2087
        %v2504 = vpack.c.b16 %v2096, %v2088
        %v2505 = vpack.c.b16 %v2097, %v2089
        %v2506 = vpack.c.b16 %v2098, %v2090
        %v2507 = vpack.c.b16 %v2107, %v2099
        %v2508 = vpack.c.b16 %v2108, %v2100
        %v2509 = vpack.c.b16 %v2109, %v2101
        %v2510 = vpack.c.b16 %v2110, %v2102
        %v2511 = vpack.c.b16 %v2111, %v2103
        %v2512 = vpack.c.b16 %v2112, %v2104
        %v2513 = vpack.c.b16 %v2113, %v2105
        %v2514 = vpack.c.b16 %v2114, %v2106
        %v2515 = vpack.c.b16 %v2123, %v2115
        %v2516 = vpack.c.b16 %v2124, %v2116
        %v2517 = vpack.c.b16 %v2125, %v2117
        %v2518 = vpack.c.b16 %v2126, %v2118
        %v2519 = vpack.c.b16 %v2127, %v2119
        %v2520 = vpack.c.b16 %v2128, %v2120
        %v2521 = vpack.c.b16 %v2129, %v2121
        %v2522 = vpack.c.b16 %v2130, %v2122
        %vm2915 = vcmask 130048
        %v2917 = vsel %vm2915, %v513, 0
        %v2920 = vsel %vm2915, %v520, 0
        %v2923 = vsel %vm2915, %v527, 0
        %v2926 = vsel %vm2915, %v534, 0
        %v2929 = vsel %vm2915, %v541, 0
        %v2932 = vsel %vm2915, %v548, 0
        %v2935 = vsel %vm2915, %v555, 0
        %v2938 = vsel %vm2915, %v562, 0
        %2940 = vmatpush.bf16.msra.mxu0 %v2187
        %2941 = vmatpush.bf16.msra.mxu0 %v2179
        %2942 = vmatpush.bf16.msra.mxu0 %v2171
        %2943 = vmatpush.bf16.msra.mxu0 %v2163
        %2944 = vmatpush.bf16.msra.mxu0 %v2155
        %2945 = vmatpush.bf16.msra.mxu0 %v2147
        %2946 = vmatpush.bf16.msra.mxu0 %v2139
        %2947 = vmatpush.bf16.msra.mxu0 %v2131
        %2948 = vmatmul.bf16.gmra.mxu0 %v507
        %v2949 = vpop.f32.mrf.mxu0
        %v2950 = vadd.f32 0.0, %v2949
        %v2951 = vpop.f32.mrf.mxu0
        %v2952 = vadd.f32 0.0, %v2951
        %2953 = vmatmul.bf16.gmra.mxu0 %v514
        %v2954 = vpop.f32.mrf.mxu0
        %v2955 = vadd.f32 0.0, %v2954
        %v2956 = vpop.f32.mrf.mxu0
        %v2957 = vadd.f32 0.0, %v2956
        %2958 = vmatmul.bf16.gmra.mxu0 %v521
        %v2959 = vpop.f32.mrf.mxu0
        %v2960 = vadd.f32 0.0, %v2959
        %v2961 = vpop.f32.mrf.mxu0
        %v2962 = vadd.f32 0.0, %v2961
        %2963 = vmatmul.bf16.gmra.mxu0 %v528
        %v2964 = vpop.f32.mrf.mxu0
        %v2965 = vadd.f32 0.0, %v2964
        %v2966 = vpop.f32.mrf.mxu0
        %v2967 = vadd.f32 0.0, %v2966
        %2968 = vmatmul.bf16.gmra.mxu0 %v535
        %v2969 = vpop.f32.mrf.mxu0
        %v2970 = vadd.f32 0.0, %v2969
        %v2971 = vpop.f32.mrf.mxu0
        %v2972 = vadd.f32 0.0, %v2971
        %2973 = vmatmul.bf16.gmra.mxu0 %v542
        %v2974 = vpop.f32.mrf.mxu0
        %v2975 = vadd.f32 0.0, %v2974
        %v2976 = vpop.f32.mrf.mxu0
        %v2977 = vadd.f32 0.0, %v2976
        %2978 = vmatmul.bf16.gmra.mxu0 %v549
        %v2979 = vpop.f32.mrf.mxu0
        %v2980 = vadd.f32 0.0, %v2979
        %v2981 = vpop.f32.mrf.mxu0
        %v2982 = vadd.f32 0.0, %v2981
        %2983 = vmatmul.bf16.gmra.mxu0 %v556
        %v2984 = vpop.f32.mrf.mxu0
        %v2985 = vadd.f32 0.0, %v2984
        %v2986 = vpop.f32.mrf.mxu0
        %v2987 = vadd.f32 0.0, %v2986
        %2988 = vdwg.mxu0
        %2989 = vmatpush.bf16.msra.mxu0 %v2251
        %2990 = vmatpush.bf16.msra.mxu0 %v2243
        %2991 = vmatpush.bf16.msra.mxu0 %v2235
        %2992 = vmatpush.bf16.msra.mxu0 %v2227
        %2993 = vmatpush.bf16.msra.mxu0 %v2219
        %2994 = vmatpush.bf16.msra.mxu0 %v2211
        %2995 = vmatpush.bf16.msra.mxu0 %v2203
        %2996 = vmatpush.bf16.msra.mxu0 %v2195
        %2997 = vmatmul.bf16.gmra.mxu0 %v508
        %v2998 = vpop.f32.mrf.mxu0
        %v2999 = vadd.f32 %v2950, %v2998
        %v3000 = vpop.f32.mrf.mxu0
        %v3001 = vadd.f32 %v2952, %v3000
        %3002 = vmatmul.bf16.gmra.mxu0 %v515
        %v3003 = vpop.f32.mrf.mxu0
        %v3004 = vadd.f32 %v2955, %v3003
        %v3005 = vpop.f32.mrf.mxu0
        %v3006 = vadd.f32 %v2957, %v3005
        %3007 = vmatmul.bf16.gmra.mxu0 %v522
        %v3008 = vpop.f32.mrf.mxu0
        %v3009 = vadd.f32 %v2960, %v3008
        %v3010 = vpop.f32.mrf.mxu0
        %v3011 = vadd.f32 %v2962, %v3010
        %3012 = vmatmul.bf16.gmra.mxu0 %v529
        %v3013 = vpop.f32.mrf.mxu0
        %v3014 = vadd.f32 %v2965, %v3013
        %v3015 = vpop.f32.mrf.mxu0
        %v3016 = vadd.f32 %v2967, %v3015
        %3017 = vmatmul.bf16.gmra.mxu0 %v536
        %v3018 = vpop.f32.mrf.mxu0
        %v3019 = vadd.f32 %v2970, %v3018
        %v3020 = vpop.f32.mrf.mxu0
        %v3021 = vadd.f32 %v2972, %v3020
        %3022 = vmatmul.bf16.gmra.mxu0 %v543
        %v3023 = vpop.f32.mrf.mxu0
        %v3024 = vadd.f32 %v2975, %v3023
        %v3025 = vpop.f32.mrf.mxu0
        %v3026 = vadd.f32 %v2977, %v3025
        %3027 = vmatmul.bf16.gmra.mxu0 %v550
        %v3028 = vpop.f32.mrf.mxu0
        %v3029 = vadd.f32 %v2980, %v3028
        %v3030 = vpop.f32.mrf.mxu0
        %v3031 = vadd.f32 %v2982, %v3030
        %3032 = vmatmul.bf16.gmra.mxu0 %v557
        %v3033 = vpop.f32.mrf.mxu0
        %v3034 = vadd.f32 %v2985, %v3033
        %v3035 = vpop.f32.mrf.mxu0
        %v3036 = vadd.f32 %v2987, %v3035
        %3037 = vdwg.mxu0
        %3038 = vmatpush.bf16.msra.mxu0 %v2315
        %3039 = vmatpush.bf16.msra.mxu0 %v2307
        %3040 = vmatpush.bf16.msra.mxu0 %v2299
        %3041 = vmatpush.bf16.msra.mxu0 %v2291
        %3042 = vmatpush.bf16.msra.mxu0 %v2283
        %3043 = vmatpush.bf16.msra.mxu0 %v2275
        %3044 = vmatpush.bf16.msra.mxu0 %v2267
        %3045 = vmatpush.bf16.msra.mxu0 %v2259
        %3046 = vmatmul.bf16.gmra.mxu0 %v509
        %v3047 = vpop.f32.mrf.mxu0
        %v3048 = vadd.f32 %v2999, %v3047
        %v3049 = vpop.f32.mrf.mxu0
        %v3050 = vadd.f32 %v3001, %v3049
        %3051 = vmatmul.bf16.gmra.mxu0 %v516
        %v3052 = vpop.f32.mrf.mxu0
        %v3053 = vadd.f32 %v3004, %v3052
        %v3054 = vpop.f32.mrf.mxu0
        %v3055 = vadd.f32 %v3006, %v3054
        %3056 = vmatmul.bf16.gmra.mxu0 %v523
        %v3057 = vpop.f32.mrf.mxu0
        %v3058 = vadd.f32 %v3009, %v3057
        %v3059 = vpop.f32.mrf.mxu0
        %v3060 = vadd.f32 %v3011, %v3059
        %3061 = vmatmul.bf16.gmra.mxu0 %v530
        %v3062 = vpop.f32.mrf.mxu0
        %v3063 = vadd.f32 %v3014, %v3062
        %v3064 = vpop.f32.mrf.mxu0
        %v3065 = vadd.f32 %v3016, %v3064
        %3066 = vmatmul.bf16.gmra.mxu0 %v537
        %v3067 = vpop.f32.mrf.mxu0
        %v3068 = vadd.f32 %v3019, %v3067
        %v3069 = vpop.f32.mrf.mxu0
        %v3070 = vadd.f32 %v3021, %v3069
        %3071 = vmatmul.bf16.gmra.mxu0 %v544
        %v3072 = vpop.f32.mrf.mxu0
        %v3073 = vadd.f32 %v3024, %v3072
        %v3074 = vpop.f32.mrf.mxu0
        %v3075 = vadd.f32 %v3026, %v3074
        %3076 = vmatmul.bf16.gmra.mxu0 %v551
        %v3077 = vpop.f32.mrf.mxu0
        %v3078 = vadd.f32 %v3029, %v3077
        %v3079 = vpop.f32.mrf.mxu0
        %v3080 = vadd.f32 %v3031, %v3079
        %3081 = vmatmul.bf16.gmra.mxu0 %v558
        %v3082 = vpop.f32.mrf.mxu0
        %v3083 = vadd.f32 %v3034, %v3082
        %v3084 = vpop.f32.mrf.mxu0
        %v3085 = vadd.f32 %v3036, %v3084
        %3086 = vdwg.mxu0
        %3087 = vmatpush.bf16.msra.mxu0 %v2379
        %3088 = vmatpush.bf16.msra.mxu0 %v2371
        %3089 = vmatpush.bf16.msra.mxu0 %v2363
        %3090 = vmatpush.bf16.msra.mxu0 %v2355
        %3091 = vmatpush.bf16.msra.mxu0 %v2347
        %3092 = vmatpush.bf16.msra.mxu0 %v2339
        %3093 = vmatpush.bf16.msra.mxu0 %v2331
        %3094 = vmatpush.bf16.msra.mxu0 %v2323
        %3095 = vmatmul.bf16.gmra.mxu0 %v510
        %v3096 = vpop.f32.mrf.mxu0
        %v3097 = vadd.f32 %v3048, %v3096
        %v3098 = vpop.f32.mrf.mxu0
        %v3099 = vadd.f32 %v3050, %v3098
        %3100 = vmatmul.bf16.gmra.mxu0 %v517
        %v3101 = vpop.f32.mrf.mxu0
        %v3102 = vadd.f32 %v3053, %v3101
        %v3103 = vpop.f32.mrf.mxu0
        %v3104 = vadd.f32 %v3055, %v3103
        %3105 = vmatmul.bf16.gmra.mxu0 %v524
        %v3106 = vpop.f32.mrf.mxu0
        %v3107 = vadd.f32 %v3058, %v3106
        %v3108 = vpop.f32.mrf.mxu0
        %v3109 = vadd.f32 %v3060, %v3108
        %3110 = vmatmul.bf16.gmra.mxu0 %v531
        %v3111 = vpop.f32.mrf.mxu0
        %v3112 = vadd.f32 %v3063, %v3111
        %v3113 = vpop.f32.mrf.mxu0
        %v3114 = vadd.f32 %v3065, %v3113
        %3115 = vmatmul.bf16.gmra.mxu0 %v538
        %v3116 = vpop.f32.mrf.mxu0
        %v3117 = vadd.f32 %v3068, %v3116
        %v3118 = vpop.f32.mrf.mxu0
        %v3119 = vadd.f32 %v3070, %v3118
        %3120 = vmatmul.bf16.gmra.mxu0 %v545
        %v3121 = vpop.f32.mrf.mxu0
        %v3122 = vadd.f32 %v3073, %v3121
        %v3123 = vpop.f32.mrf.mxu0
        %v3124 = vadd.f32 %v3075, %v3123
        %3125 = vmatmul.bf16.gmra.mxu0 %v552
        %v3126 = vpop.f32.mrf.mxu0
        %v3127 = vadd.f32 %v3078, %v3126
        %v3128 = vpop.f32.mrf.mxu0
        %v3129 = vadd.f32 %v3080, %v3128
        %3130 = vmatmul.bf16.gmra.mxu0 %v559
        %v3131 = vpop.f32.mrf.mxu0
        %v3132 = vadd.f32 %v3083, %v3131
        %v3133 = vpop.f32.mrf.mxu0
        %v3134 = vadd.f32 %v3085, %v3133
        %3135 = vdwg.mxu0
        %3136 = vmatpush.bf16.msra.mxu0 %v2443
        %3137 = vmatpush.bf16.msra.mxu0 %v2435
        %3138 = vmatpush.bf16.msra.mxu0 %v2427
        %3139 = vmatpush.bf16.msra.mxu0 %v2419
        %3140 = vmatpush.bf16.msra.mxu0 %v2411
        %3141 = vmatpush.bf16.msra.mxu0 %v2403
        %3142 = vmatpush.bf16.msra.mxu0 %v2395
        %3143 = vmatpush.bf16.msra.mxu0 %v2387
        %3144 = vmatmul.bf16.gmra.mxu0 %v511
        %v3145 = vpop.f32.mrf.mxu0
        %v3146 = vadd.f32 %v3097, %v3145
        %v3147 = vpop.f32.mrf.mxu0
        %v3148 = vadd.f32 %v3099, %v3147
        %3149 = vmatmul.bf16.gmra.mxu0 %v518
        %v3150 = vpop.f32.mrf.mxu0
        %v3151 = vadd.f32 %v3102, %v3150
        %v3152 = vpop.f32.mrf.mxu0
        %v3153 = vadd.f32 %v3104, %v3152
        %3154 = vmatmul.bf16.gmra.mxu0 %v525
        %v3155 = vpop.f32.mrf.mxu0
        %v3156 = vadd.f32 %v3107, %v3155
        %v3157 = vpop.f32.mrf.mxu0
        %v3158 = vadd.f32 %v3109, %v3157
        %3159 = vmatmul.bf16.gmra.mxu0 %v532
        %v3160 = vpop.f32.mrf.mxu0
        %v3161 = vadd.f32 %v3112, %v3160
        %v3162 = vpop.f32.mrf.mxu0
        %v3163 = vadd.f32 %v3114, %v3162
        %3164 = vmatmul.bf16.gmra.mxu0 %v539
        %v3165 = vpop.f32.mrf.mxu0
        %v3166 = vadd.f32 %v3117, %v3165
        %v3167 = vpop.f32.mrf.mxu0
        %v3168 = vadd.f32 %v3119, %v3167
        %3169 = vmatmul.bf16.gmra.mxu0 %v546
        %v3170 = vpop.f32.mrf.mxu0
        %v3171 = vadd.f32 %v3122, %v3170
        %v3172 = vpop.f32.mrf.mxu0
        %v3173 = vadd.f32 %v3124, %v3172
        %3174 = vmatmul.bf16.gmra.mxu0 %v553
        %v3175 = vpop.f32.mrf.mxu0
        %v3176 = vadd.f32 %v3127, %v3175
        %v3177 = vpop.f32.mrf.mxu0
        %v3178 = vadd.f32 %v3129, %v3177
        %3179 = vmatmul.bf16.gmra.mxu0 %v560
        %v3180 = vpop.f32.mrf.mxu0
        %v3181 = vadd.f32 %v3132, %v3180
        %v3182 = vpop.f32.mrf.mxu0
        %v3183 = vadd.f32 %v3134, %v3182
        %3184 = vdwg.mxu0
        %3185 = vmatpush.bf16.msra.mxu0 %v2507
        %3186 = vmatpush.bf16.msra.mxu0 %v2499
        %3187 = vmatpush.bf16.msra.mxu0 %v2491
        %3188 = vmatpush.bf16.msra.mxu0 %v2483
        %3189 = vmatpush.bf16.msra.mxu0 %v2475
        %3190 = vmatpush.bf16.msra.mxu0 %v2467
        %3191 = vmatpush.bf16.msra.mxu0 %v2459
        %3192 = vmatpush.bf16.msra.mxu0 %v2451
        %3193 = vmatmul.bf16.gmra.mxu0 %v512
        %v3194 = vpop.f32.mrf.mxu0
        %v3195 = vadd.f32 %v3146, %v3194
        %v3196 = vpop.f32.mrf.mxu0
        %v3197 = vadd.f32 %v3148, %v3196
        %3198 = vmatmul.bf16.gmra.mxu0 %v519
        %v3199 = vpop.f32.mrf.mxu0
        %v3200 = vadd.f32 %v3151, %v3199
        %v3201 = vpop.f32.mrf.mxu0
        %v3202 = vadd.f32 %v3153, %v3201
        %3203 = vmatmul.bf16.gmra.mxu0 %v526
        %v3204 = vpop.f32.mrf.mxu0
        %v3205 = vadd.f32 %v3156, %v3204
        %v3206 = vpop.f32.mrf.mxu0
        %v3207 = vadd.f32 %v3158, %v3206
        %3208 = vmatmul.bf16.gmra.mxu0 %v533
        %v3209 = vpop.f32.mrf.mxu0
        %v3210 = vadd.f32 %v3161, %v3209
        %v3211 = vpop.f32.mrf.mxu0
        %v3212 = vadd.f32 %v3163, %v3211
        %3213 = vmatmul.bf16.gmra.mxu0 %v540
        %v3214 = vpop.f32.mrf.mxu0
        %v3215 = vadd.f32 %v3166, %v3214
        %v3216 = vpop.f32.mrf.mxu0
        %v3217 = vadd.f32 %v3168, %v3216
        %3218 = vmatmul.bf16.gmra.mxu0 %v547
        %v3219 = vpop.f32.mrf.mxu0
        %v3220 = vadd.f32 %v3171, %v3219
        %v3221 = vpop.f32.mrf.mxu0
        %v3222 = vadd.f32 %v3173, %v3221
        %3223 = vmatmul.bf16.gmra.mxu0 %v554
        %v3224 = vpop.f32.mrf.mxu0
        %v3225 = vadd.f32 %v3176, %v3224
        %v3226 = vpop.f32.mrf.mxu0
        %v3227 = vadd.f32 %v3178, %v3226
        %3228 = vmatmul.bf16.gmra.mxu0 %v561
        %v3229 = vpop.f32.mrf.mxu0
        %v3230 = vadd.f32 %v3181, %v3229
        %v3231 = vpop.f32.mrf.mxu0
        %v3232 = vadd.f32 %v3183, %v3231
        %3233 = vdwg.mxu0
        %3234 = vmatpush.bf16.msra.mxu0 0
        %3235 = vmatpush.bf16.msra.mxu0 0
        %3236 = vmatpush.bf16.msra.mxu0 0
        %3237 = vmatpush.bf16.msra.mxu0 0
        %3238 = vmatpush.bf16.msra.mxu0 0
        %3239 = vmatpush.bf16.msra.mxu0 0
        %3240 = vmatpush.bf16.msra.mxu0 0
        %3241 = vmatpush.bf16.msra.mxu0 %v2515
        %3242 = vmatmul.bf16.gmra.mxu0 %v2917
        %v3243 = vpop.f32.mrf.mxu0
        %v3244 = vadd.f32 %v3195, %v3243
        %v3245 = vpop.f32.mrf.mxu0
        %v3246 = vadd.f32 %v3197, %v3245
        %3247 = vmatmul.bf16.gmra.mxu0 %v2920
        %v3248 = vpop.f32.mrf.mxu0
        %v3249 = vadd.f32 %v3200, %v3248
        %v3250 = vpop.f32.mrf.mxu0
        %v3251 = vadd.f32 %v3202, %v3250
        %3252 = vmatmul.bf16.gmra.mxu0 %v2923
        %v3253 = vpop.f32.mrf.mxu0
        %v3254 = vadd.f32 %v3205, %v3253
        %v3255 = vpop.f32.mrf.mxu0
        %v3256 = vadd.f32 %v3207, %v3255
        %3257 = vmatmul.bf16.gmra.mxu0 %v2926
        %v3258 = vpop.f32.mrf.mxu0
        %v3259 = vadd.f32 %v3210, %v3258
        %v3260 = vpop.f32.mrf.mxu0
        %v3261 = vadd.f32 %v3212, %v3260
        %3262 = vmatmul.bf16.gmra.mxu0 %v2929
        %v3263 = vpop.f32.mrf.mxu0
        %v3264 = vadd.f32 %v3215, %v3263
        %v3265 = vpop.f32.mrf.mxu0
        %v3266 = vadd.f32 %v3217, %v3265
        %3267 = vmatmul.bf16.gmra.mxu0 %v2932
        %v3268 = vpop.f32.mrf.mxu0
        %v3269 = vadd.f32 %v3220, %v3268
        %v3270 = vpop.f32.mrf.mxu0
        %v3271 = vadd.f32 %v3222, %v3270
        %3272 = vmatmul.bf16.gmra.mxu0 %v2935
        %v3273 = vpop.f32.mrf.mxu0
        %v3274 = vadd.f32 %v3225, %v3273
        %v3275 = vpop.f32.mrf.mxu0
        %v3276 = vadd.f32 %v3227, %v3275
        %3277 = vmatmul.bf16.gmra.mxu0 %v2938
        %v3278 = vpop.f32.mrf.mxu0
        %v3279 = vadd.f32 %v3230, %v3278
        %v3280 = vpop.f32.mrf.mxu0
        %v3281 = vadd.f32 %v3232, %v3280
        %3282 = vdwg.mxu0
        %3283 = vmatpush.bf16.msra.mxu0 %v2188
        %3284 = vmatpush.bf16.msra.mxu0 %v2180
        %3285 = vmatpush.bf16.msra.mxu0 %v2172
        %3286 = vmatpush.bf16.msra.mxu0 %v2164
        %3287 = vmatpush.bf16.msra.mxu0 %v2156
        %3288 = vmatpush.bf16.msra.mxu0 %v2148
        %3289 = vmatpush.bf16.msra.mxu0 %v2140
        %3290 = vmatpush.bf16.msra.mxu0 %v2132
        %3291 = vmatmul.bf16.gmra.mxu0 %v507
        %v3292 = vpop.f32.mrf.mxu0
        %v3293 = vadd.f32 0.0, %v3292
        %v3294 = vpop.f32.mrf.mxu0
        %v3295 = vadd.f32 0.0, %v3294
        %3296 = vmatmul.bf16.gmra.mxu0 %v514
        %v3297 = vpop.f32.mrf.mxu0
        %v3298 = vadd.f32 0.0, %v3297
        %v3299 = vpop.f32.mrf.mxu0
        %v3300 = vadd.f32 0.0, %v3299
        %3301 = vmatmul.bf16.gmra.mxu0 %v521
        %v3302 = vpop.f32.mrf.mxu0
        %v3303 = vadd.f32 0.0, %v3302
        %v3304 = vpop.f32.mrf.mxu0
        %v3305 = vadd.f32 0.0, %v3304
        %3306 = vmatmul.bf16.gmra.mxu0 %v528
        %v3307 = vpop.f32.mrf.mxu0
        %v3308 = vadd.f32 0.0, %v3307
        %v3309 = vpop.f32.mrf.mxu0
        %v3310 = vadd.f32 0.0, %v3309
        %3311 = vmatmul.bf16.gmra.mxu0 %v535
        %v3312 = vpop.f32.mrf.mxu0
        %v3313 = vadd.f32 0.0, %v3312
        %v3314 = vpop.f32.mrf.mxu0
        %v3315 = vadd.f32 0.0, %v3314
        %3316 = vmatmul.bf16.gmra.mxu0 %v542
        %v3317 = vpop.f32.mrf.mxu0
        %v3318 = vadd.f32 0.0, %v3317
        %v3319 = vpop.f32.mrf.mxu0
        %v3320 = vadd.f32 0.0, %v3319
        %3321 = vmatmul.bf16.gmra.mxu0 %v549
        %v3322 = vpop.f32.mrf.mxu0
        %v3323 = vadd.f32 0.0, %v3322
        %v3324 = vpop.f32.mrf.mxu0
        %v3325 = vadd.f32 0.0, %v3324
        %3326 = vmatmul.bf16.gmra.mxu0 %v556
        %v3327 = vpop.f32.mrf.mxu0
        %v3328 = vadd.f32 0.0, %v3327
        %v3329 = vpop.f32.mrf.mxu0
        %v3330 = vadd.f32 0.0, %v3329
        %3331 = vdwg.mxu0
        %3332 = vmatpush.bf16.msra.mxu0 %v2252
        %3333 = vmatpush.bf16.msra.mxu0 %v2244
        %3334 = vmatpush.bf16.msra.mxu0 %v2236
        %3335 = vmatpush.bf16.msra.mxu0 %v2228
        %3336 = vmatpush.bf16.msra.mxu0 %v2220
        %3337 = vmatpush.bf16.msra.mxu0 %v2212
        %3338 = vmatpush.bf16.msra.mxu0 %v2204
        %3339 = vmatpush.bf16.msra.mxu0 %v2196
        %3340 = vmatmul.bf16.gmra.mxu0 %v508
        %v3341 = vpop.f32.mrf.mxu0
        %v3342 = vadd.f32 %v3293, %v3341
        %v3343 = vpop.f32.mrf.mxu0
        %v3344 = vadd.f32 %v3295, %v3343
        %3345 = vmatmul.bf16.gmra.mxu0 %v515
        %v3346 = vpop.f32.mrf.mxu0
        %v3347 = vadd.f32 %v3298, %v3346
        %v3348 = vpop.f32.mrf.mxu0
        %v3349 = vadd.f32 %v3300, %v3348
        %3350 = vmatmul.bf16.gmra.mxu0 %v522
        %v3351 = vpop.f32.mrf.mxu0
        %v3352 = vadd.f32 %v3303, %v3351
        %v3353 = vpop.f32.mrf.mxu0
        %v3354 = vadd.f32 %v3305, %v3353
        %3355 = vmatmul.bf16.gmra.mxu0 %v529
        %v3356 = vpop.f32.mrf.mxu0
        %v3357 = vadd.f32 %v3308, %v3356
        %v3358 = vpop.f32.mrf.mxu0
        %v3359 = vadd.f32 %v3310, %v3358
        %3360 = vmatmul.bf16.gmra.mxu0 %v536
        %v3361 = vpop.f32.mrf.mxu0
        %v3362 = vadd.f32 %v3313, %v3361
        %v3363 = vpop.f32.mrf.mxu0
        %v3364 = vadd.f32 %v3315, %v3363
        %3365 = vmatmul.bf16.gmra.mxu0 %v543
        %v3366 = vpop.f32.mrf.mxu0
        %v3367 = vadd.f32 %v3318, %v3366
        %v3368 = vpop.f32.mrf.mxu0
        %v3369 = vadd.f32 %v3320, %v3368
        %3370 = vmatmul.bf16.gmra.mxu0 %v550
        %v3371 = vpop.f32.mrf.mxu0
        %v3372 = vadd.f32 %v3323, %v3371
        %v3373 = vpop.f32.mrf.mxu0
        %v3374 = vadd.f32 %v3325, %v3373
        %3375 = vmatmul.bf16.gmra.mxu0 %v557
        %v3376 = vpop.f32.mrf.mxu0
        %v3377 = vadd.f32 %v3328, %v3376
        %v3378 = vpop.f32.mrf.mxu0
        %v3379 = vadd.f32 %v3330, %v3378
        %3380 = vdwg.mxu0
        %3381 = vmatpush.bf16.msra.mxu0 %v2316
        %3382 = vmatpush.bf16.msra.mxu0 %v2308
        %3383 = vmatpush.bf16.msra.mxu0 %v2300
        %3384 = vmatpush.bf16.msra.mxu0 %v2292
        %3385 = vmatpush.bf16.msra.mxu0 %v2284
        %3386 = vmatpush.bf16.msra.mxu0 %v2276
        %3387 = vmatpush.bf16.msra.mxu0 %v2268
        %3388 = vmatpush.bf16.msra.mxu0 %v2260
        %3389 = vmatmul.bf16.gmra.mxu0 %v509
        %v3390 = vpop.f32.mrf.mxu0
        %v3391 = vadd.f32 %v3342, %v3390
        %v3392 = vpop.f32.mrf.mxu0
        %v3393 = vadd.f32 %v3344, %v3392
        %3394 = vmatmul.bf16.gmra.mxu0 %v516
        %v3395 = vpop.f32.mrf.mxu0
        %v3396 = vadd.f32 %v3347, %v3395
        %v3397 = vpop.f32.mrf.mxu0
        %v3398 = vadd.f32 %v3349, %v3397
        %3399 = vmatmul.bf16.gmra.mxu0 %v523
        %v3400 = vpop.f32.mrf.mxu0
        %v3401 = vadd.f32 %v3352, %v3400
        %v3402 = vpop.f32.mrf.mxu0
        %v3403 = vadd.f32 %v3354, %v3402
        %3404 = vmatmul.bf16.gmra.mxu0 %v530
        %v3405 = vpop.f32.mrf.mxu0
        %v3406 = vadd.f32 %v3357, %v3405
        %v3407 = vpop.f32.mrf.mxu0
        %v3408 = vadd.f32 %v3359, %v3407
        %3409 = vmatmul.bf16.gmra.mxu0 %v537
        %v3410 = vpop.f32.mrf.mxu0
        %v3411 = vadd.f32 %v3362, %v3410
        %v3412 = vpop.f32.mrf.mxu0
        %v3413 = vadd.f32 %v3364, %v3412
        %3414 = vmatmul.bf16.gmra.mxu0 %v544
        %v3415 = vpop.f32.mrf.mxu0
        %v3416 = vadd.f32 %v3367, %v3415
        %v3417 = vpop.f32.mrf.mxu0
        %v3418 = vadd.f32 %v3369, %v3417
        %3419 = vmatmul.bf16.gmra.mxu0 %v551
        %v3420 = vpop.f32.mrf.mxu0
        %v3421 = vadd.f32 %v3372, %v3420
        %v3422 = vpop.f32.mrf.mxu0
        %v3423 = vadd.f32 %v3374, %v3422
        %3424 = vmatmul.bf16.gmra.mxu0 %v558
        %v3425 = vpop.f32.mrf.mxu0
        %v3426 = vadd.f32 %v3377, %v3425
        %v3427 = vpop.f32.mrf.mxu0
        %v3428 = vadd.f32 %v3379, %v3427
        %3429 = vdwg.mxu0
        %3430 = vmatpush.bf16.msra.mxu0 %v2380
        %3431 = vmatpush.bf16.msra.mxu0 %v2372
        %3432 = vmatpush.bf16.msra.mxu0 %v2364
        %3433 = vmatpush.bf16.msra.mxu0 %v2356
        %3434 = vmatpush.bf16.msra.mxu0 %v2348
        %3435 = vmatpush.bf16.msra.mxu0 %v2340
        %3436 = vmatpush.bf16.msra.mxu0 %v2332
        %3437 = vmatpush.bf16.msra.mxu0 %v2324
        %3438 = vmatmul.bf16.gmra.mxu0 %v510
        %v3439 = vpop.f32.mrf.mxu0
        %v3440 = vadd.f32 %v3391, %v3439
        %v3441 = vpop.f32.mrf.mxu0
        %v3442 = vadd.f32 %v3393, %v3441
        %3443 = vmatmul.bf16.gmra.mxu0 %v517
        %v3444 = vpop.f32.mrf.mxu0
        %v3445 = vadd.f32 %v3396, %v3444
        %v3446 = vpop.f32.mrf.mxu0
        %v3447 = vadd.f32 %v3398, %v3446
        %3448 = vmatmul.bf16.gmra.mxu0 %v524
        %v3449 = vpop.f32.mrf.mxu0
        %v3450 = vadd.f32 %v3401, %v3449
        %v3451 = vpop.f32.mrf.mxu0
        %v3452 = vadd.f32 %v3403, %v3451
        %3453 = vmatmul.bf16.gmra.mxu0 %v531
        %v3454 = vpop.f32.mrf.mxu0
        %v3455 = vadd.f32 %v3406, %v3454
        %v3456 = vpop.f32.mrf.mxu0
        %v3457 = vadd.f32 %v3408, %v3456
        %3458 = vmatmul.bf16.gmra.mxu0 %v538
        %v3459 = vpop.f32.mrf.mxu0
        %v3460 = vadd.f32 %v3411, %v3459
        %v3461 = vpop.f32.mrf.mxu0
        %v3462 = vadd.f32 %v3413, %v3461
        %3463 = vmatmul.bf16.gmra.mxu0 %v545
        %v3464 = vpop.f32.mrf.mxu0
        %v3465 = vadd.f32 %v3416, %v3464
        %v3466 = vpop.f32.mrf.mxu0
        %v3467 = vadd.f32 %v3418, %v3466
        %3468 = vmatmul.bf16.gmra.mxu0 %v552
        %v3469 = vpop.f32.mrf.mxu0
        %v3470 = vadd.f32 %v3421, %v3469
        %v3471 = vpop.f32.mrf.mxu0
        %v3472 = vadd.f32 %v3423, %v3471
        %3473 = vmatmul.bf16.gmra.mxu0 %v559
        %v3474 = vpop.f32.mrf.mxu0
        %v3475 = vadd.f32 %v3426, %v3474
        %v3476 = vpop.f32.mrf.mxu0
        %v3477 = vadd.f32 %v3428, %v3476
        %3478 = vdwg.mxu0
        %3479 = vmatpush.bf16.msra.mxu0 %v2444
        %3480 = vmatpush.bf16.msra.mxu0 %v2436
        %3481 = vmatpush.bf16.msra.mxu0 %v2428
        %3482 = vmatpush.bf16.msra.mxu0 %v2420
        %3483 = vmatpush.bf16.msra.mxu0 %v2412
        %3484 = vmatpush.bf16.msra.mxu0 %v2404
        %3485 = vmatpush.bf16.msra.mxu0 %v2396
        %3486 = vmatpush.bf16.msra.mxu0 %v2388
        %3487 = vmatmul.bf16.gmra.mxu0 %v511
        %v3488 = vpop.f32.mrf.mxu0
        %v3489 = vadd.f32 %v3440, %v3488
        %v3490 = vpop.f32.mrf.mxu0
        %v3491 = vadd.f32 %v3442, %v3490
        %3492 = vmatmul.bf16.gmra.mxu0 %v518
        %v3493 = vpop.f32.mrf.mxu0
        %v3494 = vadd.f32 %v3445, %v3493
        %v3495 = vpop.f32.mrf.mxu0
        %v3496 = vadd.f32 %v3447, %v3495
        %3497 = vmatmul.bf16.gmra.mxu0 %v525
        %v3498 = vpop.f32.mrf.mxu0
        %v3499 = vadd.f32 %v3450, %v3498
        %v3500 = vpop.f32.mrf.mxu0
        %v3501 = vadd.f32 %v3452, %v3500
        %3502 = vmatmul.bf16.gmra.mxu0 %v532
        %v3503 = vpop.f32.mrf.mxu0
        %v3504 = vadd.f32 %v3455, %v3503
        %v3505 = vpop.f32.mrf.mxu0
        %v3506 = vadd.f32 %v3457, %v3505
        %3507 = vmatmul.bf16.gmra.mxu0 %v539
        %v3508 = vpop.f32.mrf.mxu0
        %v3509 = vadd.f32 %v3460, %v3508
        %v3510 = vpop.f32.mrf.mxu0
        %v3511 = vadd.f32 %v3462, %v3510
        %3512 = vmatmul.bf16.gmra.mxu0 %v546
        %v3513 = vpop.f32.mrf.mxu0
        %v3514 = vadd.f32 %v3465, %v3513
        %v3515 = vpop.f32.mrf.mxu0
        %v3516 = vadd.f32 %v3467, %v3515
        %3517 = vmatmul.bf16.gmra.mxu0 %v553
        %v3518 = vpop.f32.mrf.mxu0
        %v3519 = vadd.f32 %v3470, %v3518
        %v3520 = vpop.f32.mrf.mxu0
        %v3521 = vadd.f32 %v3472, %v3520
        %3522 = vmatmul.bf16.gmra.mxu0 %v560
        %v3523 = vpop.f32.mrf.mxu0
        %v3524 = vadd.f32 %v3475, %v3523
        %v3525 = vpop.f32.mrf.mxu0
        %v3526 = vadd.f32 %v3477, %v3525
        %3527 = vdwg.mxu0
        %3528 = vmatpush.bf16.msra.mxu0 %v2508
        %3529 = vmatpush.bf16.msra.mxu0 %v2500
        %3530 = vmatpush.bf16.msra.mxu0 %v2492
        %3531 = vmatpush.bf16.msra.mxu0 %v2484
        %3532 = vmatpush.bf16.msra.mxu0 %v2476
        %3533 = vmatpush.bf16.msra.mxu0 %v2468
        %3534 = vmatpush.bf16.msra.mxu0 %v2460
        %3535 = vmatpush.bf16.msra.mxu0 %v2452
        %3536 = vmatmul.bf16.gmra.mxu0 %v512
        %v3537 = vpop.f32.mrf.mxu0
        %v3538 = vadd.f32 %v3489, %v3537
        %v3539 = vpop.f32.mrf.mxu0
        %v3540 = vadd.f32 %v3491, %v3539
        %3541 = vmatmul.bf16.gmra.mxu0 %v519
        %v3542 = vpop.f32.mrf.mxu0
        %v3543 = vadd.f32 %v3494, %v3542
        %v3544 = vpop.f32.mrf.mxu0
        %v3545 = vadd.f32 %v3496, %v3544
        %3546 = vmatmul.bf16.gmra.mxu0 %v526
        %v3547 = vpop.f32.mrf.mxu0
        %v3548 = vadd.f32 %v3499, %v3547
        %v3549 = vpop.f32.mrf.mxu0
        %v3550 = vadd.f32 %v3501, %v3549
        %3551 = vmatmul.bf16.gmra.mxu0 %v533
        %v3552 = vpop.f32.mrf.mxu0
        %v3553 = vadd.f32 %v3504, %v3552
        %v3554 = vpop.f32.mrf.mxu0
        %v3555 = vadd.f32 %v3506, %v3554
        %3556 = vmatmul.bf16.gmra.mxu0 %v540
        %v3557 = vpop.f32.mrf.mxu0
        %v3558 = vadd.f32 %v3509, %v3557
        %v3559 = vpop.f32.mrf.mxu0
        %v3560 = vadd.f32 %v3511, %v3559
        %3561 = vmatmul.bf16.gmra.mxu0 %v547
        %v3562 = vpop.f32.mrf.mxu0
        %v3563 = vadd.f32 %v3514, %v3562
        %v3564 = vpop.f32.mrf.mxu0
        %v3565 = vadd.f32 %v3516, %v3564
        %3566 = vmatmul.bf16.gmra.mxu0 %v554
        %v3567 = vpop.f32.mrf.mxu0
        %v3568 = vadd.f32 %v3519, %v3567
        %v3569 = vpop.f32.mrf.mxu0
        %v3570 = vadd.f32 %v3521, %v3569
        %3571 = vmatmul.bf16.gmra.mxu0 %v561
        %v3572 = vpop.f32.mrf.mxu0
        %v3573 = vadd.f32 %v3524, %v3572
        %v3574 = vpop.f32.mrf.mxu0
        %v3575 = vadd.f32 %v3526, %v3574
        %3576 = vdwg.mxu0
        %3577 = vmatpush.bf16.msra.mxu0 0
        %3578 = vmatpush.bf16.msra.mxu0 0
        %3579 = vmatpush.bf16.msra.mxu0 0
        %3580 = vmatpush.bf16.msra.mxu0 0
        %3581 = vmatpush.bf16.msra.mxu0 0
        %3582 = vmatpush.bf16.msra.mxu0 0
        %3583 = vmatpush.bf16.msra.mxu0 0
        %3584 = vmatpush.bf16.msra.mxu0 %v2516
        %3585 = vmatmul.bf16.gmra.mxu0 %v2917
        %v3586 = vpop.f32.mrf.mxu0
        %v3587 = vadd.f32 %v3538, %v3586
        %v3588 = vpop.f32.mrf.mxu0
        %v3589 = vadd.f32 %v3540, %v3588
        %3590 = vmatmul.bf16.gmra.mxu0 %v2920
        %v3591 = vpop.f32.mrf.mxu0
        %v3592 = vadd.f32 %v3543, %v3591
        %v3593 = vpop.f32.mrf.mxu0
        %v3594 = vadd.f32 %v3545, %v3593
        %3595 = vmatmul.bf16.gmra.mxu0 %v2923
        %v3596 = vpop.f32.mrf.mxu0
        %v3597 = vadd.f32 %v3548, %v3596
        %v3598 = vpop.f32.mrf.mxu0
        %v3599 = vadd.f32 %v3550, %v3598
        %3600 = vmatmul.bf16.gmra.mxu0 %v2926
        %v3601 = vpop.f32.mrf.mxu0
        %v3602 = vadd.f32 %v3553, %v3601
        %v3603 = vpop.f32.mrf.mxu0
        %v3604 = vadd.f32 %v3555, %v3603
        %3605 = vmatmul.bf16.gmra.mxu0 %v2929
        %v3606 = vpop.f32.mrf.mxu0
        %v3607 = vadd.f32 %v3558, %v3606
        %v3608 = vpop.f32.mrf.mxu0
        %v3609 = vadd.f32 %v3560, %v3608
        %3610 = vmatmul.bf16.gmra.mxu0 %v2932
        %v3611 = vpop.f32.mrf.mxu0
        %v3612 = vadd.f32 %v3563, %v3611
        %v3613 = vpop.f32.mrf.mxu0
        %v3614 = vadd.f32 %v3565, %v3613
        %3615 = vmatmul.bf16.gmra.mxu0 %v2935
        %v3616 = vpop.f32.mrf.mxu0
        %v3617 = vadd.f32 %v3568, %v3616
        %v3618 = vpop.f32.mrf.mxu0
        %v3619 = vadd.f32 %v3570, %v3618
        %3620 = vmatmul.bf16.gmra.mxu0 %v2938
        %v3621 = vpop.f32.mrf.mxu0
        %v3622 = vadd.f32 %v3573, %v3621
        %v3623 = vpop.f32.mrf.mxu0
        %v3624 = vadd.f32 %v3575, %v3623
        %3625 = vdwg.mxu0
        %3626 = vmatpush.bf16.msra.mxu0 %v2189
        %3627 = vmatpush.bf16.msra.mxu0 %v2181
        %3628 = vmatpush.bf16.msra.mxu0 %v2173
        %3629 = vmatpush.bf16.msra.mxu0 %v2165
        %3630 = vmatpush.bf16.msra.mxu0 %v2157
        %3631 = vmatpush.bf16.msra.mxu0 %v2149
        %3632 = vmatpush.bf16.msra.mxu0 %v2141
        %3633 = vmatpush.bf16.msra.mxu0 %v2133
        %3634 = vmatmul.bf16.gmra.mxu0 %v507
        %v3635 = vpop.f32.mrf.mxu0
        %v3636 = vadd.f32 0.0, %v3635
        %v3637 = vpop.f32.mrf.mxu0
        %v3638 = vadd.f32 0.0, %v3637
        %3639 = vmatmul.bf16.gmra.mxu0 %v514
        %v3640 = vpop.f32.mrf.mxu0
        %v3641 = vadd.f32 0.0, %v3640
        %v3642 = vpop.f32.mrf.mxu0
        %v3643 = vadd.f32 0.0, %v3642
        %3644 = vmatmul.bf16.gmra.mxu0 %v521
        %v3645 = vpop.f32.mrf.mxu0
        %v3646 = vadd.f32 0.0, %v3645
        %v3647 = vpop.f32.mrf.mxu0
        %v3648 = vadd.f32 0.0, %v3647
        %3649 = vmatmul.bf16.gmra.mxu0 %v528
        %v3650 = vpop.f32.mrf.mxu0
        %v3651 = vadd.f32 0.0, %v3650
        %v3652 = vpop.f32.mrf.mxu0
        %v3653 = vadd.f32 0.0, %v3652
        %3654 = vmatmul.bf16.gmra.mxu0 %v535
        %v3655 = vpop.f32.mrf.mxu0
        %v3656 = vadd.f32 0.0, %v3655
        %v3657 = vpop.f32.mrf.mxu0
        %v3658 = vadd.f32 0.0, %v3657
        %3659 = vmatmul.bf16.gmra.mxu0 %v542
        %v3660 = vpop.f32.mrf.mxu0
        %v3661 = vadd.f32 0.0, %v3660
        %v3662 = vpop.f32.mrf.mxu0
        %v3663 = vadd.f32 0.0, %v3662
        %3664 = vmatmul.bf16.gmra.mxu0 %v549
        %v3665 = vpop.f32.mrf.mxu0
        %v3666 = vadd.f32 0.0, %v3665
        %v3667 = vpop.f32.mrf.mxu0
        %v3668 = vadd.f32 0.0, %v3667
        %3669 = vmatmul.bf16.gmra.mxu0 %v556
        %v3670 = vpop.f32.mrf.mxu0
        %v3671 = vadd.f32 0.0, %v3670
        %v3672 = vpop.f32.mrf.mxu0
        %v3673 = vadd.f32 0.0, %v3672
        %3674 = vdwg.mxu0
        %3675 = vmatpush.bf16.msra.mxu0 %v2253
        %3676 = vmatpush.bf16.msra.mxu0 %v2245
        %3677 = vmatpush.bf16.msra.mxu0 %v2237
        %3678 = vmatpush.bf16.msra.mxu0 %v2229
        %3679 = vmatpush.bf16.msra.mxu0 %v2221
        %3680 = vmatpush.bf16.msra.mxu0 %v2213
        %3681 = vmatpush.bf16.msra.mxu0 %v2205
        %3682 = vmatpush.bf16.msra.mxu0 %v2197
        %3683 = vmatmul.bf16.gmra.mxu0 %v508
        %v3684 = vpop.f32.mrf.mxu0
        %v3685 = vadd.f32 %v3636, %v3684
        %v3686 = vpop.f32.mrf.mxu0
        %v3687 = vadd.f32 %v3638, %v3686
        %3688 = vmatmul.bf16.gmra.mxu0 %v515
        %v3689 = vpop.f32.mrf.mxu0
        %v3690 = vadd.f32 %v3641, %v3689
        %v3691 = vpop.f32.mrf.mxu0
        %v3692 = vadd.f32 %v3643, %v3691
        %3693 = vmatmul.bf16.gmra.mxu0 %v522
        %v3694 = vpop.f32.mrf.mxu0
        %v3695 = vadd.f32 %v3646, %v3694
        %v3696 = vpop.f32.mrf.mxu0
        %v3697 = vadd.f32 %v3648, %v3696
        %3698 = vmatmul.bf16.gmra.mxu0 %v529
        %v3699 = vpop.f32.mrf.mxu0
        %v3700 = vadd.f32 %v3651, %v3699
        %v3701 = vpop.f32.mrf.mxu0
        %v3702 = vadd.f32 %v3653, %v3701
        %3703 = vmatmul.bf16.gmra.mxu0 %v536
        %v3704 = vpop.f32.mrf.mxu0
        %v3705 = vadd.f32 %v3656, %v3704
        %v3706 = vpop.f32.mrf.mxu0
        %v3707 = vadd.f32 %v3658, %v3706
        %3708 = vmatmul.bf16.gmra.mxu0 %v543
        %v3709 = vpop.f32.mrf.mxu0
        %v3710 = vadd.f32 %v3661, %v3709
        %v3711 = vpop.f32.mrf.mxu0
        %v3712 = vadd.f32 %v3663, %v3711
        %3713 = vmatmul.bf16.gmra.mxu0 %v550
        %v3714 = vpop.f32.mrf.mxu0
        %v3715 = vadd.f32 %v3666, %v3714
        %v3716 = vpop.f32.mrf.mxu0
        %v3717 = vadd.f32 %v3668, %v3716
        %3718 = vmatmul.bf16.gmra.mxu0 %v557
        %v3719 = vpop.f32.mrf.mxu0
        %v3720 = vadd.f32 %v3671, %v3719
        %v3721 = vpop.f32.mrf.mxu0
        %v3722 = vadd.f32 %v3673, %v3721
        %3723 = vdwg.mxu0
        %3724 = vmatpush.bf16.msra.mxu0 %v2317
        %3725 = vmatpush.bf16.msra.mxu0 %v2309
        %3726 = vmatpush.bf16.msra.mxu0 %v2301
        %3727 = vmatpush.bf16.msra.mxu0 %v2293
        %3728 = vmatpush.bf16.msra.mxu0 %v2285
        %3729 = vmatpush.bf16.msra.mxu0 %v2277
        %3730 = vmatpush.bf16.msra.mxu0 %v2269
        %3731 = vmatpush.bf16.msra.mxu0 %v2261
        %3732 = vmatmul.bf16.gmra.mxu0 %v509
        %v3733 = vpop.f32.mrf.mxu0
        %v3734 = vadd.f32 %v3685, %v3733
        %v3735 = vpop.f32.mrf.mxu0
        %v3736 = vadd.f32 %v3687, %v3735
        %3737 = vmatmul.bf16.gmra.mxu0 %v516
        %v3738 = vpop.f32.mrf.mxu0
        %v3739 = vadd.f32 %v3690, %v3738
        %v3740 = vpop.f32.mrf.mxu0
        %v3741 = vadd.f32 %v3692, %v3740
        %3742 = vmatmul.bf16.gmra.mxu0 %v523
        %v3743 = vpop.f32.mrf.mxu0
        %v3744 = vadd.f32 %v3695, %v3743
        %v3745 = vpop.f32.mrf.mxu0
        %v3746 = vadd.f32 %v3697, %v3745
        %3747 = vmatmul.bf16.gmra.mxu0 %v530
        %v3748 = vpop.f32.mrf.mxu0
        %v3749 = vadd.f32 %v3700, %v3748
        %v3750 = vpop.f32.mrf.mxu0
        %v3751 = vadd.f32 %v3702, %v3750
        %3752 = vmatmul.bf16.gmra.mxu0 %v537
        %v3753 = vpop.f32.mrf.mxu0
        %v3754 = vadd.f32 %v3705, %v3753
        %v3755 = vpop.f32.mrf.mxu0
        %v3756 = vadd.f32 %v3707, %v3755
        %3757 = vmatmul.bf16.gmra.mxu0 %v544
        %v3758 = vpop.f32.mrf.mxu0
        %v3759 = vadd.f32 %v3710, %v3758
        %v3760 = vpop.f32.mrf.mxu0
        %v3761 = vadd.f32 %v3712, %v3760
        %3762 = vmatmul.bf16.gmra.mxu0 %v551
        %v3763 = vpop.f32.mrf.mxu0
        %v3764 = vadd.f32 %v3715, %v3763
        %v3765 = vpop.f32.mrf.mxu0
        %v3766 = vadd.f32 %v3717, %v3765
        %3767 = vmatmul.bf16.gmra.mxu0 %v558
        %v3768 = vpop.f32.mrf.mxu0
        %v3769 = vadd.f32 %v3720, %v3768
        %v3770 = vpop.f32.mrf.mxu0
        %v3771 = vadd.f32 %v3722, %v3770
        %3772 = vdwg.mxu0
        %3773 = vmatpush.bf16.msra.mxu0 %v2381
        %3774 = vmatpush.bf16.msra.mxu0 %v2373
        %3775 = vmatpush.bf16.msra.mxu0 %v2365
        %3776 = vmatpush.bf16.msra.mxu0 %v2357
        %3777 = vmatpush.bf16.msra.mxu0 %v2349
        %3778 = vmatpush.bf16.msra.mxu0 %v2341
        %3779 = vmatpush.bf16.msra.mxu0 %v2333
        %3780 = vmatpush.bf16.msra.mxu0 %v2325
        %3781 = vmatmul.bf16.gmra.mxu0 %v510
        %v3782 = vpop.f32.mrf.mxu0
        %v3783 = vadd.f32 %v3734, %v3782
        %v3784 = vpop.f32.mrf.mxu0
        %v3785 = vadd.f32 %v3736, %v3784
        %3786 = vmatmul.bf16.gmra.mxu0 %v517
        %v3787 = vpop.f32.mrf.mxu0
        %v3788 = vadd.f32 %v3739, %v3787
        %v3789 = vpop.f32.mrf.mxu0
        %v3790 = vadd.f32 %v3741, %v3789
        %3791 = vmatmul.bf16.gmra.mxu0 %v524
        %v3792 = vpop.f32.mrf.mxu0
        %v3793 = vadd.f32 %v3744, %v3792
        %v3794 = vpop.f32.mrf.mxu0
        %v3795 = vadd.f32 %v3746, %v3794
        %3796 = vmatmul.bf16.gmra.mxu0 %v531
        %v3797 = vpop.f32.mrf.mxu0
        %v3798 = vadd.f32 %v3749, %v3797
        %v3799 = vpop.f32.mrf.mxu0
        %v3800 = vadd.f32 %v3751, %v3799
        %3801 = vmatmul.bf16.gmra.mxu0 %v538
        %v3802 = vpop.f32.mrf.mxu0
        %v3803 = vadd.f32 %v3754, %v3802
        %v3804 = vpop.f32.mrf.mxu0
        %v3805 = vadd.f32 %v3756, %v3804
        %3806 = vmatmul.bf16.gmra.mxu0 %v545
        %v3807 = vpop.f32.mrf.mxu0
        %v3808 = vadd.f32 %v3759, %v3807
        %v3809 = vpop.f32.mrf.mxu0
        %v3810 = vadd.f32 %v3761, %v3809
        %3811 = vmatmul.bf16.gmra.mxu0 %v552
        %v3812 = vpop.f32.mrf.mxu0
        %v3813 = vadd.f32 %v3764, %v3812
        %v3814 = vpop.f32.mrf.mxu0
        %v3815 = vadd.f32 %v3766, %v3814
        %3816 = vmatmul.bf16.gmra.mxu0 %v559
        %v3817 = vpop.f32.mrf.mxu0
        %v3818 = vadd.f32 %v3769, %v3817
        %v3819 = vpop.f32.mrf.mxu0
        %v3820 = vadd.f32 %v3771, %v3819
        %3821 = vdwg.mxu0
        %3822 = vmatpush.bf16.msra.mxu0 %v2445
        %3823 = vmatpush.bf16.msra.mxu0 %v2437
        %3824 = vmatpush.bf16.msra.mxu0 %v2429
        %3825 = vmatpush.bf16.msra.mxu0 %v2421
        %3826 = vmatpush.bf16.msra.mxu0 %v2413
        %3827 = vmatpush.bf16.msra.mxu0 %v2405
        %3828 = vmatpush.bf16.msra.mxu0 %v2397
        %3829 = vmatpush.bf16.msra.mxu0 %v2389
        %3830 = vmatmul.bf16.gmra.mxu0 %v511
        %v3831 = vpop.f32.mrf.mxu0
        %v3832 = vadd.f32 %v3783, %v3831
        %v3833 = vpop.f32.mrf.mxu0
        %v3834 = vadd.f32 %v3785, %v3833
        %3835 = vmatmul.bf16.gmra.mxu0 %v518
        %v3836 = vpop.f32.mrf.mxu0
        %v3837 = vadd.f32 %v3788, %v3836
        %v3838 = vpop.f32.mrf.mxu0
        %v3839 = vadd.f32 %v3790, %v3838
        %3840 = vmatmul.bf16.gmra.mxu0 %v525
        %v3841 = vpop.f32.mrf.mxu0
        %v3842 = vadd.f32 %v3793, %v3841
        %v3843 = vpop.f32.mrf.mxu0
        %v3844 = vadd.f32 %v3795, %v3843
        %3845 = vmatmul.bf16.gmra.mxu0 %v532
        %v3846 = vpop.f32.mrf.mxu0
        %v3847 = vadd.f32 %v3798, %v3846
        %v3848 = vpop.f32.mrf.mxu0
        %v3849 = vadd.f32 %v3800, %v3848
        %3850 = vmatmul.bf16.gmra.mxu0 %v539
        %v3851 = vpop.f32.mrf.mxu0
        %v3852 = vadd.f32 %v3803, %v3851
        %v3853 = vpop.f32.mrf.mxu0
        %v3854 = vadd.f32 %v3805, %v3853
        %3855 = vmatmul.bf16.gmra.mxu0 %v546
        %v3856 = vpop.f32.mrf.mxu0
        %v3857 = vadd.f32 %v3808, %v3856
        %v3858 = vpop.f32.mrf.mxu0
        %v3859 = vadd.f32 %v3810, %v3858
        %3860 = vmatmul.bf16.gmra.mxu0 %v553
        %v3861 = vpop.f32.mrf.mxu0
        %v3862 = vadd.f32 %v3813, %v3861
        %v3863 = vpop.f32.mrf.mxu0
        %v3864 = vadd.f32 %v3815, %v3863
        %3865 = vmatmul.bf16.gmra.mxu0 %v560
        %v3866 = vpop.f32.mrf.mxu0
        %v3867 = vadd.f32 %v3818, %v3866
        %v3868 = vpop.f32.mrf.mxu0
        %v3869 = vadd.f32 %v3820, %v3868
        %3870 = vdwg.mxu0
        %3871 = vmatpush.bf16.msra.mxu0 %v2509
        %3872 = vmatpush.bf16.msra.mxu0 %v2501
        %3873 = vmatpush.bf16.msra.mxu0 %v2493
        %3874 = vmatpush.bf16.msra.mxu0 %v2485
        %3875 = vmatpush.bf16.msra.mxu0 %v2477
        %3876 = vmatpush.bf16.msra.mxu0 %v2469
        %3877 = vmatpush.bf16.msra.mxu0 %v2461
        %3878 = vmatpush.bf16.msra.mxu0 %v2453
        %3879 = vmatmul.bf16.gmra.mxu0 %v512
        %v3880 = vpop.f32.mrf.mxu0
        %v3881 = vadd.f32 %v3832, %v3880
        %v3882 = vpop.f32.mrf.mxu0
        %v3883 = vadd.f32 %v3834, %v3882
        %3884 = vmatmul.bf16.gmra.mxu0 %v519
        %v3885 = vpop.f32.mrf.mxu0
        %v3886 = vadd.f32 %v3837, %v3885
        %v3887 = vpop.f32.mrf.mxu0
        %v3888 = vadd.f32 %v3839, %v3887
        %3889 = vmatmul.bf16.gmra.mxu0 %v526
        %v3890 = vpop.f32.mrf.mxu0
        %v3891 = vadd.f32 %v3842, %v3890
        %v3892 = vpop.f32.mrf.mxu0
        %v3893 = vadd.f32 %v3844, %v3892
        %3894 = vmatmul.bf16.gmra.mxu0 %v533
        %v3895 = vpop.f32.mrf.mxu0
        %v3896 = vadd.f32 %v3847, %v3895
        %v3897 = vpop.f32.mrf.mxu0
        %v3898 = vadd.f32 %v3849, %v3897
        %3899 = vmatmul.bf16.gmra.mxu0 %v540
        %v3900 = vpop.f32.mrf.mxu0
        %v3901 = vadd.f32 %v3852, %v3900
        %v3902 = vpop.f32.mrf.mxu0
        %v3903 = vadd.f32 %v3854, %v3902
        %3904 = vmatmul.bf16.gmra.mxu0 %v547
        %v3905 = vpop.f32.mrf.mxu0
        %v3906 = vadd.f32 %v3857, %v3905
        %v3907 = vpop.f32.mrf.mxu0
        %v3908 = vadd.f32 %v3859, %v3907
        %3909 = vmatmul.bf16.gmra.mxu0 %v554
        %v3910 = vpop.f32.mrf.mxu0
        %v3911 = vadd.f32 %v3862, %v3910
        %v3912 = vpop.f32.mrf.mxu0
        %v3913 = vadd.f32 %v3864, %v3912
        %3914 = vmatmul.bf16.gmra.mxu0 %v561
        %v3915 = vpop.f32.mrf.mxu0
        %v3916 = vadd.f32 %v3867, %v3915
        %v3917 = vpop.f32.mrf.mxu0
        %v3918 = vadd.f32 %v3869, %v3917
        %3919 = vdwg.mxu0
        %3920 = vmatpush.bf16.msra.mxu0 0
        %3921 = vmatpush.bf16.msra.mxu0 0
        %3922 = vmatpush.bf16.msra.mxu0 0
        %3923 = vmatpush.bf16.msra.mxu0 0
        %3924 = vmatpush.bf16.msra.mxu0 0
        %3925 = vmatpush.bf16.msra.mxu0 0
        %3926 = vmatpush.bf16.msra.mxu0 0
        %3927 = vmatpush.bf16.msra.mxu0 %v2517
        %3928 = vmatmul.bf16.gmra.mxu0 %v2917
        %v3929 = vpop.f32.mrf.mxu0
        %v3930 = vadd.f32 %v3881, %v3929
        %v3931 = vpop.f32.mrf.mxu0
        %v3932 = vadd.f32 %v3883, %v3931
        %3933 = vmatmul.bf16.gmra.mxu0 %v2920
        %v3934 = vpop.f32.mrf.mxu0
        %v3935 = vadd.f32 %v3886, %v3934
        %v3936 = vpop.f32.mrf.mxu0
        %v3937 = vadd.f32 %v3888, %v3936
        %3938 = vmatmul.bf16.gmra.mxu0 %v2923
        %v3939 = vpop.f32.mrf.mxu0
        %v3940 = vadd.f32 %v3891, %v3939
        %v3941 = vpop.f32.mrf.mxu0
        %v3942 = vadd.f32 %v3893, %v3941
        %3943 = vmatmul.bf16.gmra.mxu0 %v2926
        %v3944 = vpop.f32.mrf.mxu0
        %v3945 = vadd.f32 %v3896, %v3944
        %v3946 = vpop.f32.mrf.mxu0
        %v3947 = vadd.f32 %v3898, %v3946
        %3948 = vmatmul.bf16.gmra.mxu0 %v2929
        %v3949 = vpop.f32.mrf.mxu0
        %v3950 = vadd.f32 %v3901, %v3949
        %v3951 = vpop.f32.mrf.mxu0
        %v3952 = vadd.f32 %v3903, %v3951
        %3953 = vmatmul.bf16.gmra.mxu0 %v2932
        %v3954 = vpop.f32.mrf.mxu0
        %v3955 = vadd.f32 %v3906, %v3954
        %v3956 = vpop.f32.mrf.mxu0
        %v3957 = vadd.f32 %v3908, %v3956
        %3958 = vmatmul.bf16.gmra.mxu0 %v2935
        %v3959 = vpop.f32.mrf.mxu0
        %v3960 = vadd.f32 %v3911, %v3959
        %v3961 = vpop.f32.mrf.mxu0
        %v3962 = vadd.f32 %v3913, %v3961
        %3963 = vmatmul.bf16.gmra.mxu0 %v2938
        %v3964 = vpop.f32.mrf.mxu0
        %v3965 = vadd.f32 %v3916, %v3964
        %v3966 = vpop.f32.mrf.mxu0
        %v3967 = vadd.f32 %v3918, %v3966
        %3968 = vdwg.mxu0
        %3969 = vmatpush.bf16.msra.mxu0 %v2190
        %3970 = vmatpush.bf16.msra.mxu0 %v2182
        %3971 = vmatpush.bf16.msra.mxu0 %v2174
        %3972 = vmatpush.bf16.msra.mxu0 %v2166
        %3973 = vmatpush.bf16.msra.mxu0 %v2158
        %3974 = vmatpush.bf16.msra.mxu0 %v2150
        %3975 = vmatpush.bf16.msra.mxu0 %v2142
        %3976 = vmatpush.bf16.msra.mxu0 %v2134
        %3977 = vmatmul.bf16.gmra.mxu0 %v507
        %v3978 = vpop.f32.mrf.mxu0
        %v3979 = vadd.f32 0.0, %v3978
        %v3980 = vpop.f32.mrf.mxu0
        %v3981 = vadd.f32 0.0, %v3980
        %3982 = vmatmul.bf16.gmra.mxu0 %v514
        %v3983 = vpop.f32.mrf.mxu0
        %v3984 = vadd.f32 0.0, %v3983
        %v3985 = vpop.f32.mrf.mxu0
        %v3986 = vadd.f32 0.0, %v3985
        %3987 = vmatmul.bf16.gmra.mxu0 %v521
        %v3988 = vpop.f32.mrf.mxu0
        %v3989 = vadd.f32 0.0, %v3988
        %v3990 = vpop.f32.mrf.mxu0
        %v3991 = vadd.f32 0.0, %v3990
        %3992 = vmatmul.bf16.gmra.mxu0 %v528
        %v3993 = vpop.f32.mrf.mxu0
        %v3994 = vadd.f32 0.0, %v3993
        %v3995 = vpop.f32.mrf.mxu0
        %v3996 = vadd.f32 0.0, %v3995
        %3997 = vmatmul.bf16.gmra.mxu0 %v535
        %v3998 = vpop.f32.mrf.mxu0
        %v3999 = vadd.f32 0.0, %v3998
        %v4000 = vpop.f32.mrf.mxu0
        %v4001 = vadd.f32 0.0, %v4000
        %4002 = vmatmul.bf16.gmra.mxu0 %v542
        %v4003 = vpop.f32.mrf.mxu0
        %v4004 = vadd.f32 0.0, %v4003
        %v4005 = vpop.f32.mrf.mxu0
        %v4006 = vadd.f32 0.0, %v4005
        %4007 = vmatmul.bf16.gmra.mxu0 %v549
        %v4008 = vpop.f32.mrf.mxu0
        %v4009 = vadd.f32 0.0, %v4008
        %v4010 = vpop.f32.mrf.mxu0
        %v4011 = vadd.f32 0.0, %v4010
        %4012 = vmatmul.bf16.gmra.mxu0 %v556
        %v4013 = vpop.f32.mrf.mxu0
        %v4014 = vadd.f32 0.0, %v4013
        %v4015 = vpop.f32.mrf.mxu0
        %v4016 = vadd.f32 0.0, %v4015
        %4017 = vdwg.mxu0
        %4018 = vmatpush.bf16.msra.mxu0 %v2254
        %4019 = vmatpush.bf16.msra.mxu0 %v2246
        %4020 = vmatpush.bf16.msra.mxu0 %v2238
        %4021 = vmatpush.bf16.msra.mxu0 %v2230
        %4022 = vmatpush.bf16.msra.mxu0 %v2222
        %4023 = vmatpush.bf16.msra.mxu0 %v2214
        %4024 = vmatpush.bf16.msra.mxu0 %v2206
        %4025 = vmatpush.bf16.msra.mxu0 %v2198
        %4026 = vmatmul.bf16.gmra.mxu0 %v508
        %v4027 = vpop.f32.mrf.mxu0
        %v4028 = vadd.f32 %v3979, %v4027
        %v4029 = vpop.f32.mrf.mxu0
        %v4030 = vadd.f32 %v3981, %v4029
        %4031 = vmatmul.bf16.gmra.mxu0 %v515
        %v4032 = vpop.f32.mrf.mxu0
        %v4033 = vadd.f32 %v3984, %v4032
        %v4034 = vpop.f32.mrf.mxu0
        %v4035 = vadd.f32 %v3986, %v4034
        %4036 = vmatmul.bf16.gmra.mxu0 %v522
        %v4037 = vpop.f32.mrf.mxu0
        %v4038 = vadd.f32 %v3989, %v4037
        %v4039 = vpop.f32.mrf.mxu0
        %v4040 = vadd.f32 %v3991, %v4039
        %4041 = vmatmul.bf16.gmra.mxu0 %v529
        %v4042 = vpop.f32.mrf.mxu0
        %v4043 = vadd.f32 %v3994, %v4042
        %v4044 = vpop.f32.mrf.mxu0
        %v4045 = vadd.f32 %v3996, %v4044
        %4046 = vmatmul.bf16.gmra.mxu0 %v536
        %v4047 = vpop.f32.mrf.mxu0
        %v4048 = vadd.f32 %v3999, %v4047
        %v4049 = vpop.f32.mrf.mxu0
        %v4050 = vadd.f32 %v4001, %v4049
        %4051 = vmatmul.bf16.gmra.mxu0 %v543
        %v4052 = vpop.f32.mrf.mxu0
        %v4053 = vadd.f32 %v4004, %v4052
        %v4054 = vpop.f32.mrf.mxu0
        %v4055 = vadd.f32 %v4006, %v4054
        %4056 = vmatmul.bf16.gmra.mxu0 %v550
        %v4057 = vpop.f32.mrf.mxu0
        %v4058 = vadd.f32 %v4009, %v4057
        %v4059 = vpop.f32.mrf.mxu0
        %v4060 = vadd.f32 %v4011, %v4059
        %4061 = vmatmul.bf16.gmra.mxu0 %v557
        %v4062 = vpop.f32.mrf.mxu0
        %v4063 = vadd.f32 %v4014, %v4062
        %v4064 = vpop.f32.mrf.mxu0
        %v4065 = vadd.f32 %v4016, %v4064
        %4066 = vdwg.mxu0
        %4067 = vmatpush.bf16.msra.mxu0 %v2318
        %4068 = vmatpush.bf16.msra.mxu0 %v2310
        %4069 = vmatpush.bf16.msra.mxu0 %v2302
        %4070 = vmatpush.bf16.msra.mxu0 %v2294
        %4071 = vmatpush.bf16.msra.mxu0 %v2286
        %4072 = vmatpush.bf16.msra.mxu0 %v2278
        %4073 = vmatpush.bf16.msra.mxu0 %v2270
        %4074 = vmatpush.bf16.msra.mxu0 %v2262
        %4075 = vmatmul.bf16.gmra.mxu0 %v509
        %v4076 = vpop.f32.mrf.mxu0
        %v4077 = vadd.f32 %v4028, %v4076
        %v4078 = vpop.f32.mrf.mxu0
        %v4079 = vadd.f32 %v4030, %v4078
        %4080 = vmatmul.bf16.gmra.mxu0 %v516
        %v4081 = vpop.f32.mrf.mxu0
        %v4082 = vadd.f32 %v4033, %v4081
        %v4083 = vpop.f32.mrf.mxu0
        %v4084 = vadd.f32 %v4035, %v4083
        %4085 = vmatmul.bf16.gmra.mxu0 %v523
        %v4086 = vpop.f32.mrf.mxu0
        %v4087 = vadd.f32 %v4038, %v4086
        %v4088 = vpop.f32.mrf.mxu0
        %v4089 = vadd.f32 %v4040, %v4088
        %4090 = vmatmul.bf16.gmra.mxu0 %v530
        %v4091 = vpop.f32.mrf.mxu0
        %v4092 = vadd.f32 %v4043, %v4091
        %v4093 = vpop.f32.mrf.mxu0
        %v4094 = vadd.f32 %v4045, %v4093
        %4095 = vmatmul.bf16.gmra.mxu0 %v537
        %v4096 = vpop.f32.mrf.mxu0
        %v4097 = vadd.f32 %v4048, %v4096
        %v4098 = vpop.f32.mrf.mxu0
        %v4099 = vadd.f32 %v4050, %v4098
        %4100 = vmatmul.bf16.gmra.mxu0 %v544
        %v4101 = vpop.f32.mrf.mxu0
        %v4102 = vadd.f32 %v4053, %v4101
        %v4103 = vpop.f32.mrf.mxu0
        %v4104 = vadd.f32 %v4055, %v4103
        %4105 = vmatmul.bf16.gmra.mxu0 %v551
        %v4106 = vpop.f32.mrf.mxu0
        %v4107 = vadd.f32 %v4058, %v4106
        %v4108 = vpop.f32.mrf.mxu0
        %v4109 = vadd.f32 %v4060, %v4108
        %4110 = vmatmul.bf16.gmra.mxu0 %v558
        %v4111 = vpop.f32.mrf.mxu0
        %v4112 = vadd.f32 %v4063, %v4111
        %v4113 = vpop.f32.mrf.mxu0
        %v4114 = vadd.f32 %v4065, %v4113
        %4115 = vdwg.mxu0
        %4116 = vmatpush.bf16.msra.mxu0 %v2382
        %4117 = vmatpush.bf16.msra.mxu0 %v2374
        %4118 = vmatpush.bf16.msra.mxu0 %v2366
        %4119 = vmatpush.bf16.msra.mxu0 %v2358
        %4120 = vmatpush.bf16.msra.mxu0 %v2350
        %4121 = vmatpush.bf16.msra.mxu0 %v2342
        %4122 = vmatpush.bf16.msra.mxu0 %v2334
        %4123 = vmatpush.bf16.msra.mxu0 %v2326
        %4124 = vmatmul.bf16.gmra.mxu0 %v510
        %v4125 = vpop.f32.mrf.mxu0
        %v4126 = vadd.f32 %v4077, %v4125
        %v4127 = vpop.f32.mrf.mxu0
        %v4128 = vadd.f32 %v4079, %v4127
        %4129 = vmatmul.bf16.gmra.mxu0 %v517
        %v4130 = vpop.f32.mrf.mxu0
        %v4131 = vadd.f32 %v4082, %v4130
        %v4132 = vpop.f32.mrf.mxu0
        %v4133 = vadd.f32 %v4084, %v4132
        %4134 = vmatmul.bf16.gmra.mxu0 %v524
        %v4135 = vpop.f32.mrf.mxu0
        %v4136 = vadd.f32 %v4087, %v4135
        %v4137 = vpop.f32.mrf.mxu0
        %v4138 = vadd.f32 %v4089, %v4137
        %4139 = vmatmul.bf16.gmra.mxu0 %v531
        %v4140 = vpop.f32.mrf.mxu0
        %v4141 = vadd.f32 %v4092, %v4140
        %v4142 = vpop.f32.mrf.mxu0
        %v4143 = vadd.f32 %v4094, %v4142
        %4144 = vmatmul.bf16.gmra.mxu0 %v538
        %v4145 = vpop.f32.mrf.mxu0
        %v4146 = vadd.f32 %v4097, %v4145
        %v4147 = vpop.f32.mrf.mxu0
        %v4148 = vadd.f32 %v4099, %v4147
        %4149 = vmatmul.bf16.gmra.mxu0 %v545
        %v4150 = vpop.f32.mrf.mxu0
        %v4151 = vadd.f32 %v4102, %v4150
        %v4152 = vpop.f32.mrf.mxu0
        %v4153 = vadd.f32 %v4104, %v4152
        %4154 = vmatmul.bf16.gmra.mxu0 %v552
        %v4155 = vpop.f32.mrf.mxu0
        %v4156 = vadd.f32 %v4107, %v4155
        %v4157 = vpop.f32.mrf.mxu0
        %v4158 = vadd.f32 %v4109, %v4157
        %4159 = vmatmul.bf16.gmra.mxu0 %v559
        %v4160 = vpop.f32.mrf.mxu0
        %v4161 = vadd.f32 %v4112, %v4160
        %v4162 = vpop.f32.mrf.mxu0
        %v4163 = vadd.f32 %v4114, %v4162
        %4164 = vdwg.mxu0
        %4165 = vmatpush.bf16.msra.mxu0 %v2446
        %4166 = vmatpush.bf16.msra.mxu0 %v2438
        %4167 = vmatpush.bf16.msra.mxu0 %v2430
        %4168 = vmatpush.bf16.msra.mxu0 %v2422
        %4169 = vmatpush.bf16.msra.mxu0 %v2414
        %4170 = vmatpush.bf16.msra.mxu0 %v2406
        %4171 = vmatpush.bf16.msra.mxu0 %v2398
        %4172 = vmatpush.bf16.msra.mxu0 %v2390
        %4173 = vmatmul.bf16.gmra.mxu0 %v511
        %v4174 = vpop.f32.mrf.mxu0
        %v4175 = vadd.f32 %v4126, %v4174
        %v4176 = vpop.f32.mrf.mxu0
        %v4177 = vadd.f32 %v4128, %v4176
        %4178 = vmatmul.bf16.gmra.mxu0 %v518
        %v4179 = vpop.f32.mrf.mxu0
        %v4180 = vadd.f32 %v4131, %v4179
        %v4181 = vpop.f32.mrf.mxu0
        %v4182 = vadd.f32 %v4133, %v4181
        %4183 = vmatmul.bf16.gmra.mxu0 %v525
        %v4184 = vpop.f32.mrf.mxu0
        %v4185 = vadd.f32 %v4136, %v4184
        %v4186 = vpop.f32.mrf.mxu0
        %v4187 = vadd.f32 %v4138, %v4186
        %4188 = vmatmul.bf16.gmra.mxu0 %v532
        %v4189 = vpop.f32.mrf.mxu0
        %v4190 = vadd.f32 %v4141, %v4189
        %v4191 = vpop.f32.mrf.mxu0
        %v4192 = vadd.f32 %v4143, %v4191
        %4193 = vmatmul.bf16.gmra.mxu0 %v539
        %v4194 = vpop.f32.mrf.mxu0
        %v4195 = vadd.f32 %v4146, %v4194
        %v4196 = vpop.f32.mrf.mxu0
        %v4197 = vadd.f32 %v4148, %v4196
        %4198 = vmatmul.bf16.gmra.mxu0 %v546
        %v4199 = vpop.f32.mrf.mxu0
        %v4200 = vadd.f32 %v4151, %v4199
        %v4201 = vpop.f32.mrf.mxu0
        %v4202 = vadd.f32 %v4153, %v4201
        %4203 = vmatmul.bf16.gmra.mxu0 %v553
        %v4204 = vpop.f32.mrf.mxu0
        %v4205 = vadd.f32 %v4156, %v4204
        %v4206 = vpop.f32.mrf.mxu0
        %v4207 = vadd.f32 %v4158, %v4206
        %4208 = vmatmul.bf16.gmra.mxu0 %v560
        %v4209 = vpop.f32.mrf.mxu0
        %v4210 = vadd.f32 %v4161, %v4209
        %v4211 = vpop.f32.mrf.mxu0
        %v4212 = vadd.f32 %v4163, %v4211
        %4213 = vdwg.mxu0
        %4214 = vmatpush.bf16.msra.mxu0 %v2510
        %4215 = vmatpush.bf16.msra.mxu0 %v2502
        %4216 = vmatpush.bf16.msra.mxu0 %v2494
        %4217 = vmatpush.bf16.msra.mxu0 %v2486
        %4218 = vmatpush.bf16.msra.mxu0 %v2478
        %4219 = vmatpush.bf16.msra.mxu0 %v2470
        %4220 = vmatpush.bf16.msra.mxu0 %v2462
        %4221 = vmatpush.bf16.msra.mxu0 %v2454
        %4222 = vmatmul.bf16.gmra.mxu0 %v512
        %v4223 = vpop.f32.mrf.mxu0
        %v4224 = vadd.f32 %v4175, %v4223
        %v4225 = vpop.f32.mrf.mxu0
        %v4226 = vadd.f32 %v4177, %v4225
        %4227 = vmatmul.bf16.gmra.mxu0 %v519
        %v4228 = vpop.f32.mrf.mxu0
        %v4229 = vadd.f32 %v4180, %v4228
        %v4230 = vpop.f32.mrf.mxu0
        %v4231 = vadd.f32 %v4182, %v4230
        %4232 = vmatmul.bf16.gmra.mxu0 %v526
        %v4233 = vpop.f32.mrf.mxu0
        %v4234 = vadd.f32 %v4185, %v4233
        %v4235 = vpop.f32.mrf.mxu0
        %v4236 = vadd.f32 %v4187, %v4235
        %4237 = vmatmul.bf16.gmra.mxu0 %v533
        %v4238 = vpop.f32.mrf.mxu0
        %v4239 = vadd.f32 %v4190, %v4238
        %v4240 = vpop.f32.mrf.mxu0
        %v4241 = vadd.f32 %v4192, %v4240
        %4242 = vmatmul.bf16.gmra.mxu0 %v540
        %v4243 = vpop.f32.mrf.mxu0
        %v4244 = vadd.f32 %v4195, %v4243
        %v4245 = vpop.f32.mrf.mxu0
        %v4246 = vadd.f32 %v4197, %v4245
        %4247 = vmatmul.bf16.gmra.mxu0 %v547
        %v4248 = vpop.f32.mrf.mxu0
        %v4249 = vadd.f32 %v4200, %v4248
        %v4250 = vpop.f32.mrf.mxu0
        %v4251 = vadd.f32 %v4202, %v4250
        %4252 = vmatmul.bf16.gmra.mxu0 %v554
        %v4253 = vpop.f32.mrf.mxu0
        %v4254 = vadd.f32 %v4205, %v4253
        %v4255 = vpop.f32.mrf.mxu0
        %v4256 = vadd.f32 %v4207, %v4255
        %4257 = vmatmul.bf16.gmra.mxu0 %v561
        %v4258 = vpop.f32.mrf.mxu0
        %v4259 = vadd.f32 %v4210, %v4258
        %v4260 = vpop.f32.mrf.mxu0
        %v4261 = vadd.f32 %v4212, %v4260
        %4262 = vdwg.mxu0
        %4263 = vmatpush.bf16.msra.mxu0 0
        %4264 = vmatpush.bf16.msra.mxu0 0
        %4265 = vmatpush.bf16.msra.mxu0 0
        %4266 = vmatpush.bf16.msra.mxu0 0
        %4267 = vmatpush.bf16.msra.mxu0 0
        %4268 = vmatpush.bf16.msra.mxu0 0
        %4269 = vmatpush.bf16.msra.mxu0 0
        %4270 = vmatpush.bf16.msra.mxu0 %v2518
        %4271 = vmatmul.bf16.gmra.mxu0 %v2917
        %v4272 = vpop.f32.mrf.mxu0
        %v4273 = vadd.f32 %v4224, %v4272
        %v4274 = vpop.f32.mrf.mxu0
        %v4275 = vadd.f32 %v4226, %v4274
        %4276 = vmatmul.bf16.gmra.mxu0 %v2920
        %v4277 = vpop.f32.mrf.mxu0
        %v4278 = vadd.f32 %v4229, %v4277
        %v4279 = vpop.f32.mrf.mxu0
        %v4280 = vadd.f32 %v4231, %v4279
        %4281 = vmatmul.bf16.gmra.mxu0 %v2923
        %v4282 = vpop.f32.mrf.mxu0
        %v4283 = vadd.f32 %v4234, %v4282
        %v4284 = vpop.f32.mrf.mxu0
        %v4285 = vadd.f32 %v4236, %v4284
        %4286 = vmatmul.bf16.gmra.mxu0 %v2926
        %v4287 = vpop.f32.mrf.mxu0
        %v4288 = vadd.f32 %v4239, %v4287
        %v4289 = vpop.f32.mrf.mxu0
        %v4290 = vadd.f32 %v4241, %v4289
        %4291 = vmatmul.bf16.gmra.mxu0 %v2929
        %v4292 = vpop.f32.mrf.mxu0
        %v4293 = vadd.f32 %v4244, %v4292
        %v4294 = vpop.f32.mrf.mxu0
        %v4295 = vadd.f32 %v4246, %v4294
        %4296 = vmatmul.bf16.gmra.mxu0 %v2932
        %v4297 = vpop.f32.mrf.mxu0
        %v4298 = vadd.f32 %v4249, %v4297
        %v4299 = vpop.f32.mrf.mxu0
        %v4300 = vadd.f32 %v4251, %v4299
        %4301 = vmatmul.bf16.gmra.mxu0 %v2935
        %v4302 = vpop.f32.mrf.mxu0
        %v4303 = vadd.f32 %v4254, %v4302
        %v4304 = vpop.f32.mrf.mxu0
        %v4305 = vadd.f32 %v4256, %v4304
        %4306 = vmatmul.bf16.gmra.mxu0 %v2938
        %v4307 = vpop.f32.mrf.mxu0
        %v4308 = vadd.f32 %v4259, %v4307
        %v4309 = vpop.f32.mrf.mxu0
        %v4310 = vadd.f32 %v4261, %v4309
        %4311 = vdwg.mxu0
        %4312 = vmatpush.bf16.msra.mxu0 %v2191
        %4313 = vmatpush.bf16.msra.mxu0 %v2183
        %4314 = vmatpush.bf16.msra.mxu0 %v2175
        %4315 = vmatpush.bf16.msra.mxu0 %v2167
        %4316 = vmatpush.bf16.msra.mxu0 %v2159
        %4317 = vmatpush.bf16.msra.mxu0 %v2151
        %4318 = vmatpush.bf16.msra.mxu0 %v2143
        %4319 = vmatpush.bf16.msra.mxu0 %v2135
        %4320 = vmatmul.bf16.gmra.mxu0 %v507
        %v4321 = vpop.f32.mrf.mxu0
        %v4322 = vadd.f32 0.0, %v4321
        %v4323 = vpop.f32.mrf.mxu0
        %v4324 = vadd.f32 0.0, %v4323
        %4325 = vmatmul.bf16.gmra.mxu0 %v514
        %v4326 = vpop.f32.mrf.mxu0
        %v4327 = vadd.f32 0.0, %v4326
        %v4328 = vpop.f32.mrf.mxu0
        %v4329 = vadd.f32 0.0, %v4328
        %4330 = vmatmul.bf16.gmra.mxu0 %v521
        %v4331 = vpop.f32.mrf.mxu0
        %v4332 = vadd.f32 0.0, %v4331
        %v4333 = vpop.f32.mrf.mxu0
        %v4334 = vadd.f32 0.0, %v4333
        %4335 = vmatmul.bf16.gmra.mxu0 %v528
        %v4336 = vpop.f32.mrf.mxu0
        %v4337 = vadd.f32 0.0, %v4336
        %v4338 = vpop.f32.mrf.mxu0
        %v4339 = vadd.f32 0.0, %v4338
        %4340 = vmatmul.bf16.gmra.mxu0 %v535
        %v4341 = vpop.f32.mrf.mxu0
        %v4342 = vadd.f32 0.0, %v4341
        %v4343 = vpop.f32.mrf.mxu0
        %v4344 = vadd.f32 0.0, %v4343
        %4345 = vmatmul.bf16.gmra.mxu0 %v542
        %v4346 = vpop.f32.mrf.mxu0
        %v4347 = vadd.f32 0.0, %v4346
        %v4348 = vpop.f32.mrf.mxu0
        %v4349 = vadd.f32 0.0, %v4348
        %4350 = vmatmul.bf16.gmra.mxu0 %v549
        %v4351 = vpop.f32.mrf.mxu0
        %v4352 = vadd.f32 0.0, %v4351
        %v4353 = vpop.f32.mrf.mxu0
        %v4354 = vadd.f32 0.0, %v4353
        %4355 = vmatmul.bf16.gmra.mxu0 %v556
        %v4356 = vpop.f32.mrf.mxu0
        %v4357 = vadd.f32 0.0, %v4356
        %v4358 = vpop.f32.mrf.mxu0
        %v4359 = vadd.f32 0.0, %v4358
        %4360 = vdwg.mxu0
        %4361 = vmatpush.bf16.msra.mxu0 %v2255
        %4362 = vmatpush.bf16.msra.mxu0 %v2247
        %4363 = vmatpush.bf16.msra.mxu0 %v2239
        %4364 = vmatpush.bf16.msra.mxu0 %v2231
        %4365 = vmatpush.bf16.msra.mxu0 %v2223
        %4366 = vmatpush.bf16.msra.mxu0 %v2215
        %4367 = vmatpush.bf16.msra.mxu0 %v2207
        %4368 = vmatpush.bf16.msra.mxu0 %v2199
        %4369 = vmatmul.bf16.gmra.mxu0 %v508
        %v4370 = vpop.f32.mrf.mxu0
        %v4371 = vadd.f32 %v4322, %v4370
        %v4372 = vpop.f32.mrf.mxu0
        %v4373 = vadd.f32 %v4324, %v4372
        %4374 = vmatmul.bf16.gmra.mxu0 %v515
        %v4375 = vpop.f32.mrf.mxu0
        %v4376 = vadd.f32 %v4327, %v4375
        %v4377 = vpop.f32.mrf.mxu0
        %v4378 = vadd.f32 %v4329, %v4377
        %4379 = vmatmul.bf16.gmra.mxu0 %v522
        %v4380 = vpop.f32.mrf.mxu0
        %v4381 = vadd.f32 %v4332, %v4380
        %v4382 = vpop.f32.mrf.mxu0
        %v4383 = vadd.f32 %v4334, %v4382
        %4384 = vmatmul.bf16.gmra.mxu0 %v529
        %v4385 = vpop.f32.mrf.mxu0
        %v4386 = vadd.f32 %v4337, %v4385
        %v4387 = vpop.f32.mrf.mxu0
        %v4388 = vadd.f32 %v4339, %v4387
        %4389 = vmatmul.bf16.gmra.mxu0 %v536
        %v4390 = vpop.f32.mrf.mxu0
        %v4391 = vadd.f32 %v4342, %v4390
        %v4392 = vpop.f32.mrf.mxu0
        %v4393 = vadd.f32 %v4344, %v4392
        %4394 = vmatmul.bf16.gmra.mxu0 %v543
        %v4395 = vpop.f32.mrf.mxu0
        %v4396 = vadd.f32 %v4347, %v4395
        %v4397 = vpop.f32.mrf.mxu0
        %v4398 = vadd.f32 %v4349, %v4397
        %4399 = vmatmul.bf16.gmra.mxu0 %v550
        %v4400 = vpop.f32.mrf.mxu0
        %v4401 = vadd.f32 %v4352, %v4400
        %v4402 = vpop.f32.mrf.mxu0
        %v4403 = vadd.f32 %v4354, %v4402
        %4404 = vmatmul.bf16.gmra.mxu0 %v557
        %v4405 = vpop.f32.mrf.mxu0
        %v4406 = vadd.f32 %v4357, %v4405
        %v4407 = vpop.f32.mrf.mxu0
        %v4408 = vadd.f32 %v4359, %v4407
        %4409 = vdwg.mxu0
        %4410 = vmatpush.bf16.msra.mxu0 %v2319
        %4411 = vmatpush.bf16.msra.mxu0 %v2311
        %4412 = vmatpush.bf16.msra.mxu0 %v2303
        %4413 = vmatpush.bf16.msra.mxu0 %v2295
        %4414 = vmatpush.bf16.msra.mxu0 %v2287
        %4415 = vmatpush.bf16.msra.mxu0 %v2279
        %4416 = vmatpush.bf16.msra.mxu0 %v2271
        %4417 = vmatpush.bf16.msra.mxu0 %v2263
        %4418 = vmatmul.bf16.gmra.mxu0 %v509
        %v4419 = vpop.f32.mrf.mxu0
        %v4420 = vadd.f32 %v4371, %v4419
        %v4421 = vpop.f32.mrf.mxu0
        %v4422 = vadd.f32 %v4373, %v4421
        %4423 = vmatmul.bf16.gmra.mxu0 %v516
        %v4424 = vpop.f32.mrf.mxu0
        %v4425 = vadd.f32 %v4376, %v4424
        %v4426 = vpop.f32.mrf.mxu0
        %v4427 = vadd.f32 %v4378, %v4426
        %4428 = vmatmul.bf16.gmra.mxu0 %v523
        %v4429 = vpop.f32.mrf.mxu0
        %v4430 = vadd.f32 %v4381, %v4429
        %v4431 = vpop.f32.mrf.mxu0
        %v4432 = vadd.f32 %v4383, %v4431
        %4433 = vmatmul.bf16.gmra.mxu0 %v530
        %v4434 = vpop.f32.mrf.mxu0
        %v4435 = vadd.f32 %v4386, %v4434
        %v4436 = vpop.f32.mrf.mxu0
        %v4437 = vadd.f32 %v4388, %v4436
        %4438 = vmatmul.bf16.gmra.mxu0 %v537
        %v4439 = vpop.f32.mrf.mxu0
        %v4440 = vadd.f32 %v4391, %v4439
        %v4441 = vpop.f32.mrf.mxu0
        %v4442 = vadd.f32 %v4393, %v4441
        %4443 = vmatmul.bf16.gmra.mxu0 %v544
        %v4444 = vpop.f32.mrf.mxu0
        %v4445 = vadd.f32 %v4396, %v4444
        %v4446 = vpop.f32.mrf.mxu0
        %v4447 = vadd.f32 %v4398, %v4446
        %4448 = vmatmul.bf16.gmra.mxu0 %v551
        %v4449 = vpop.f32.mrf.mxu0
        %v4450 = vadd.f32 %v4401, %v4449
        %v4451 = vpop.f32.mrf.mxu0
        %v4452 = vadd.f32 %v4403, %v4451
        %4453 = vmatmul.bf16.gmra.mxu0 %v558
        %v4454 = vpop.f32.mrf.mxu0
        %v4455 = vadd.f32 %v4406, %v4454
        %v4456 = vpop.f32.mrf.mxu0
        %v4457 = vadd.f32 %v4408, %v4456
        %4458 = vdwg.mxu0
        %4459 = vmatpush.bf16.msra.mxu0 %v2383
        %4460 = vmatpush.bf16.msra.mxu0 %v2375
        %4461 = vmatpush.bf16.msra.mxu0 %v2367
        %4462 = vmatpush.bf16.msra.mxu0 %v2359
        %4463 = vmatpush.bf16.msra.mxu0 %v2351
        %4464 = vmatpush.bf16.msra.mxu0 %v2343
        %4465 = vmatpush.bf16.msra.mxu0 %v2335
        %4466 = vmatpush.bf16.msra.mxu0 %v2327
        %4467 = vmatmul.bf16.gmra.mxu0 %v510
        %v4468 = vpop.f32.mrf.mxu0
        %v4469 = vadd.f32 %v4420, %v4468
        %v4470 = vpop.f32.mrf.mxu0
        %v4471 = vadd.f32 %v4422, %v4470
        %4472 = vmatmul.bf16.gmra.mxu0 %v517
        %v4473 = vpop.f32.mrf.mxu0
        %v4474 = vadd.f32 %v4425, %v4473
        %v4475 = vpop.f32.mrf.mxu0
        %v4476 = vadd.f32 %v4427, %v4475
        %4477 = vmatmul.bf16.gmra.mxu0 %v524
        %v4478 = vpop.f32.mrf.mxu0
        %v4479 = vadd.f32 %v4430, %v4478
        %v4480 = vpop.f32.mrf.mxu0
        %v4481 = vadd.f32 %v4432, %v4480
        %4482 = vmatmul.bf16.gmra.mxu0 %v531
        %v4483 = vpop.f32.mrf.mxu0
        %v4484 = vadd.f32 %v4435, %v4483
        %v4485 = vpop.f32.mrf.mxu0
        %v4486 = vadd.f32 %v4437, %v4485
        %4487 = vmatmul.bf16.gmra.mxu0 %v538
        %v4488 = vpop.f32.mrf.mxu0
        %v4489 = vadd.f32 %v4440, %v4488
        %v4490 = vpop.f32.mrf.mxu0
        %v4491 = vadd.f32 %v4442, %v4490
        %4492 = vmatmul.bf16.gmra.mxu0 %v545
        %v4493 = vpop.f32.mrf.mxu0
        %v4494 = vadd.f32 %v4445, %v4493
        %v4495 = vpop.f32.mrf.mxu0
        %v4496 = vadd.f32 %v4447, %v4495
        %4497 = vmatmul.bf16.gmra.mxu0 %v552
        %v4498 = vpop.f32.mrf.mxu0
        %v4499 = vadd.f32 %v4450, %v4498
        %v4500 = vpop.f32.mrf.mxu0
        %v4501 = vadd.f32 %v4452, %v4500
        %4502 = vmatmul.bf16.gmra.mxu0 %v559
        %v4503 = vpop.f32.mrf.mxu0
        %v4504 = vadd.f32 %v4455, %v4503
        %v4505 = vpop.f32.mrf.mxu0
        %v4506 = vadd.f32 %v4457, %v4505
        %4507 = vdwg.mxu0
        %4508 = vmatpush.bf16.msra.mxu0 %v2447
        %4509 = vmatpush.bf16.msra.mxu0 %v2439
        %4510 = vmatpush.bf16.msra.mxu0 %v2431
        %4511 = vmatpush.bf16.msra.mxu0 %v2423
        %4512 = vmatpush.bf16.msra.mxu0 %v2415
        %4513 = vmatpush.bf16.msra.mxu0 %v2407
        %4514 = vmatpush.bf16.msra.mxu0 %v2399
        %4515 = vmatpush.bf16.msra.mxu0 %v2391
        %4516 = vmatmul.bf16.gmra.mxu0 %v511
        %v4517 = vpop.f32.mrf.mxu0
        %v4518 = vadd.f32 %v4469, %v4517
        %v4519 = vpop.f32.mrf.mxu0
        %v4520 = vadd.f32 %v4471, %v4519
        %4521 = vmatmul.bf16.gmra.mxu0 %v518
        %v4522 = vpop.f32.mrf.mxu0
        %v4523 = vadd.f32 %v4474, %v4522
        %v4524 = vpop.f32.mrf.mxu0
        %v4525 = vadd.f32 %v4476, %v4524
        %4526 = vmatmul.bf16.gmra.mxu0 %v525
        %v4527 = vpop.f32.mrf.mxu0
        %v4528 = vadd.f32 %v4479, %v4527
        %v4529 = vpop.f32.mrf.mxu0
        %v4530 = vadd.f32 %v4481, %v4529
        %4531 = vmatmul.bf16.gmra.mxu0 %v532
        %v4532 = vpop.f32.mrf.mxu0
        %v4533 = vadd.f32 %v4484, %v4532
        %v4534 = vpop.f32.mrf.mxu0
        %v4535 = vadd.f32 %v4486, %v4534
        %4536 = vmatmul.bf16.gmra.mxu0 %v539
        %v4537 = vpop.f32.mrf.mxu0
        %v4538 = vadd.f32 %v4489, %v4537
        %v4539 = vpop.f32.mrf.mxu0
        %v4540 = vadd.f32 %v4491, %v4539
        %4541 = vmatmul.bf16.gmra.mxu0 %v546
        %v4542 = vpop.f32.mrf.mxu0
        %v4543 = vadd.f32 %v4494, %v4542
        %v4544 = vpop.f32.mrf.mxu0
        %v4545 = vadd.f32 %v4496, %v4544
        %4546 = vmatmul.bf16.gmra.mxu0 %v553
        %v4547 = vpop.f32.mrf.mxu0
        %v4548 = vadd.f32 %v4499, %v4547
        %v4549 = vpop.f32.mrf.mxu0
        %v4550 = vadd.f32 %v4501, %v4549
        %4551 = vmatmul.bf16.gmra.mxu0 %v560
        %v4552 = vpop.f32.mrf.mxu0
        %v4553 = vadd.f32 %v4504, %v4552
        %v4554 = vpop.f32.mrf.mxu0
        %v4555 = vadd.f32 %v4506, %v4554
        %4556 = vdwg.mxu0
        %4557 = vmatpush.bf16.msra.mxu0 %v2511
        %4558 = vmatpush.bf16.msra.mxu0 %v2503
        %4559 = vmatpush.bf16.msra.mxu0 %v2495
        %4560 = vmatpush.bf16.msra.mxu0 %v2487
        %4561 = vmatpush.bf16.msra.mxu0 %v2479
        %4562 = vmatpush.bf16.msra.mxu0 %v2471
        %4563 = vmatpush.bf16.msra.mxu0 %v2463
        %4564 = vmatpush.bf16.msra.mxu0 %v2455
        %4565 = vmatmul.bf16.gmra.mxu0 %v512
        %v4566 = vpop.f32.mrf.mxu0
        %v4567 = vadd.f32 %v4518, %v4566
        %v4568 = vpop.f32.mrf.mxu0
        %v4569 = vadd.f32 %v4520, %v4568
        %4570 = vmatmul.bf16.gmra.mxu0 %v519
        %v4571 = vpop.f32.mrf.mxu0
        %v4572 = vadd.f32 %v4523, %v4571
        %v4573 = vpop.f32.mrf.mxu0
        %v4574 = vadd.f32 %v4525, %v4573
        %4575 = vmatmul.bf16.gmra.mxu0 %v526
        %v4576 = vpop.f32.mrf.mxu0
        %v4577 = vadd.f32 %v4528, %v4576
        %v4578 = vpop.f32.mrf.mxu0
        %v4579 = vadd.f32 %v4530, %v4578
        %4580 = vmatmul.bf16.gmra.mxu0 %v533
        %v4581 = vpop.f32.mrf.mxu0
        %v4582 = vadd.f32 %v4533, %v4581
        %v4583 = vpop.f32.mrf.mxu0
        %v4584 = vadd.f32 %v4535, %v4583
        %4585 = vmatmul.bf16.gmra.mxu0 %v540
        %v4586 = vpop.f32.mrf.mxu0
        %v4587 = vadd.f32 %v4538, %v4586
        %v4588 = vpop.f32.mrf.mxu0
        %v4589 = vadd.f32 %v4540, %v4588
        %4590 = vmatmul.bf16.gmra.mxu0 %v547
        %v4591 = vpop.f32.mrf.mxu0
        %v4592 = vadd.f32 %v4543, %v4591
        %v4593 = vpop.f32.mrf.mxu0
        %v4594 = vadd.f32 %v4545, %v4593
        %4595 = vmatmul.bf16.gmra.mxu0 %v554
        %v4596 = vpop.f32.mrf.mxu0
        %v4597 = vadd.f32 %v4548, %v4596
        %v4598 = vpop.f32.mrf.mxu0
        %v4599 = vadd.f32 %v4550, %v4598
        %4600 = vmatmul.bf16.gmra.mxu0 %v561
        %v4601 = vpop.f32.mrf.mxu0
        %v4602 = vadd.f32 %v4553, %v4601
        %v4603 = vpop.f32.mrf.mxu0
        %v4604 = vadd.f32 %v4555, %v4603
        %4605 = vdwg.mxu0
        %4606 = vmatpush.bf16.msra.mxu0 0
        %4607 = vmatpush.bf16.msra.mxu0 0
        %4608 = vmatpush.bf16.msra.mxu0 0
        %4609 = vmatpush.bf16.msra.mxu0 0
        %4610 = vmatpush.bf16.msra.mxu0 0
        %4611 = vmatpush.bf16.msra.mxu0 0
        %4612 = vmatpush.bf16.msra.mxu0 0
        %4613 = vmatpush.bf16.msra.mxu0 %v2519
        %4614 = vmatmul.bf16.gmra.mxu0 %v2917
        %v4615 = vpop.f32.mrf.mxu0
        %v4616 = vadd.f32 %v4567, %v4615
        %v4617 = vpop.f32.mrf.mxu0
        %v4618 = vadd.f32 %v4569, %v4617
        %4619 = vmatmul.bf16.gmra.mxu0 %v2920
        %v4620 = vpop.f32.mrf.mxu0
        %v4621 = vadd.f32 %v4572, %v4620
        %v4622 = vpop.f32.mrf.mxu0
        %v4623 = vadd.f32 %v4574, %v4622
        %4624 = vmatmul.bf16.gmra.mxu0 %v2923
        %v4625 = vpop.f32.mrf.mxu0
        %v4626 = vadd.f32 %v4577, %v4625
        %v4627 = vpop.f32.mrf.mxu0
        %v4628 = vadd.f32 %v4579, %v4627
        %4629 = vmatmul.bf16.gmra.mxu0 %v2926
        %v4630 = vpop.f32.mrf.mxu0
        %v4631 = vadd.f32 %v4582, %v4630
        %v4632 = vpop.f32.mrf.mxu0
        %v4633 = vadd.f32 %v4584, %v4632
        %4634 = vmatmul.bf16.gmra.mxu0 %v2929
        %v4635 = vpop.f32.mrf.mxu0
        %v4636 = vadd.f32 %v4587, %v4635
        %v4637 = vpop.f32.mrf.mxu0
        %v4638 = vadd.f32 %v4589, %v4637
        %4639 = vmatmul.bf16.gmra.mxu0 %v2932
        %v4640 = vpop.f32.mrf.mxu0
        %v4641 = vadd.f32 %v4592, %v4640
        %v4642 = vpop.f32.mrf.mxu0
        %v4643 = vadd.f32 %v4594, %v4642
        %4644 = vmatmul.bf16.gmra.mxu0 %v2935
        %v4645 = vpop.f32.mrf.mxu0
        %v4646 = vadd.f32 %v4597, %v4645
        %v4647 = vpop.f32.mrf.mxu0
        %v4648 = vadd.f32 %v4599, %v4647
        %4649 = vmatmul.bf16.gmra.mxu0 %v2938
        %v4650 = vpop.f32.mrf.mxu0
        %v4651 = vadd.f32 %v4602, %v4650
        %v4652 = vpop.f32.mrf.mxu0
        %v4653 = vadd.f32 %v4604, %v4652
        %4654 = vdwg.mxu0
        %4655 = vmatpush.bf16.msra.mxu0 %v2192
        %4656 = vmatpush.bf16.msra.mxu0 %v2184
        %4657 = vmatpush.bf16.msra.mxu0 %v2176
        %4658 = vmatpush.bf16.msra.mxu0 %v2168
        %4659 = vmatpush.bf16.msra.mxu0 %v2160
        %4660 = vmatpush.bf16.msra.mxu0 %v2152
        %4661 = vmatpush.bf16.msra.mxu0 %v2144
        %4662 = vmatpush.bf16.msra.mxu0 %v2136
        %4663 = vmatmul.bf16.gmra.mxu0 %v507
        %v4664 = vpop.f32.mrf.mxu0
        %v4665 = vadd.f32 0.0, %v4664
        %v4666 = vpop.f32.mrf.mxu0
        %v4667 = vadd.f32 0.0, %v4666
        %4668 = vmatmul.bf16.gmra.mxu0 %v514
        %v4669 = vpop.f32.mrf.mxu0
        %v4670 = vadd.f32 0.0, %v4669
        %v4671 = vpop.f32.mrf.mxu0
        %v4672 = vadd.f32 0.0, %v4671
        %4673 = vmatmul.bf16.gmra.mxu0 %v521
        %v4674 = vpop.f32.mrf.mxu0
        %v4675 = vadd.f32 0.0, %v4674
        %v4676 = vpop.f32.mrf.mxu0
        %v4677 = vadd.f32 0.0, %v4676
        %4678 = vmatmul.bf16.gmra.mxu0 %v528
        %v4679 = vpop.f32.mrf.mxu0
        %v4680 = vadd.f32 0.0, %v4679
        %v4681 = vpop.f32.mrf.mxu0
        %v4682 = vadd.f32 0.0, %v4681
        %4683 = vmatmul.bf16.gmra.mxu0 %v535
        %v4684 = vpop.f32.mrf.mxu0
        %v4685 = vadd.f32 0.0, %v4684
        %v4686 = vpop.f32.mrf.mxu0
        %v4687 = vadd.f32 0.0, %v4686
        %4688 = vmatmul.bf16.gmra.mxu0 %v542
        %v4689 = vpop.f32.mrf.mxu0
        %v4690 = vadd.f32 0.0, %v4689
        %v4691 = vpop.f32.mrf.mxu0
        %v4692 = vadd.f32 0.0, %v4691
        %4693 = vmatmul.bf16.gmra.mxu0 %v549
        %v4694 = vpop.f32.mrf.mxu0
        %v4695 = vadd.f32 0.0, %v4694
        %v4696 = vpop.f32.mrf.mxu0
        %v4697 = vadd.f32 0.0, %v4696
        %4698 = vmatmul.bf16.gmra.mxu0 %v556
        %v4699 = vpop.f32.mrf.mxu0
        %v4700 = vadd.f32 0.0, %v4699
        %v4701 = vpop.f32.mrf.mxu0
        %v4702 = vadd.f32 0.0, %v4701
        %4703 = vdwg.mxu0
        %4704 = vmatpush.bf16.msra.mxu0 %v2256
        %4705 = vmatpush.bf16.msra.mxu0 %v2248
        %4706 = vmatpush.bf16.msra.mxu0 %v2240
        %4707 = vmatpush.bf16.msra.mxu0 %v2232
        %4708 = vmatpush.bf16.msra.mxu0 %v2224
        %4709 = vmatpush.bf16.msra.mxu0 %v2216
        %4710 = vmatpush.bf16.msra.mxu0 %v2208
        %4711 = vmatpush.bf16.msra.mxu0 %v2200
        %4712 = vmatmul.bf16.gmra.mxu0 %v508
        %v4713 = vpop.f32.mrf.mxu0
        %v4714 = vadd.f32 %v4665, %v4713
        %v4715 = vpop.f32.mrf.mxu0
        %v4716 = vadd.f32 %v4667, %v4715
        %4717 = vmatmul.bf16.gmra.mxu0 %v515
        %v4718 = vpop.f32.mrf.mxu0
        %v4719 = vadd.f32 %v4670, %v4718
        %v4720 = vpop.f32.mrf.mxu0
        %v4721 = vadd.f32 %v4672, %v4720
        %4722 = vmatmul.bf16.gmra.mxu0 %v522
        %v4723 = vpop.f32.mrf.mxu0
        %v4724 = vadd.f32 %v4675, %v4723
        %v4725 = vpop.f32.mrf.mxu0
        %v4726 = vadd.f32 %v4677, %v4725
        %4727 = vmatmul.bf16.gmra.mxu0 %v529
        %v4728 = vpop.f32.mrf.mxu0
        %v4729 = vadd.f32 %v4680, %v4728
        %v4730 = vpop.f32.mrf.mxu0
        %v4731 = vadd.f32 %v4682, %v4730
        %4732 = vmatmul.bf16.gmra.mxu0 %v536
        %v4733 = vpop.f32.mrf.mxu0
        %v4734 = vadd.f32 %v4685, %v4733
        %v4735 = vpop.f32.mrf.mxu0
        %v4736 = vadd.f32 %v4687, %v4735
        %4737 = vmatmul.bf16.gmra.mxu0 %v543
        %v4738 = vpop.f32.mrf.mxu0
        %v4739 = vadd.f32 %v4690, %v4738
        %v4740 = vpop.f32.mrf.mxu0
        %v4741 = vadd.f32 %v4692, %v4740
        %4742 = vmatmul.bf16.gmra.mxu0 %v550
        %v4743 = vpop.f32.mrf.mxu0
        %v4744 = vadd.f32 %v4695, %v4743
        %v4745 = vpop.f32.mrf.mxu0
        %v4746 = vadd.f32 %v4697, %v4745
        %4747 = vmatmul.bf16.gmra.mxu0 %v557
        %v4748 = vpop.f32.mrf.mxu0
        %v4749 = vadd.f32 %v4700, %v4748
        %v4750 = vpop.f32.mrf.mxu0
        %v4751 = vadd.f32 %v4702, %v4750
        %4752 = vdwg.mxu0
        %4753 = vmatpush.bf16.msra.mxu0 %v2320
        %4754 = vmatpush.bf16.msra.mxu0 %v2312
        %4755 = vmatpush.bf16.msra.mxu0 %v2304
        %4756 = vmatpush.bf16.msra.mxu0 %v2296
        %4757 = vmatpush.bf16.msra.mxu0 %v2288
        %4758 = vmatpush.bf16.msra.mxu0 %v2280
        %4759 = vmatpush.bf16.msra.mxu0 %v2272
        %4760 = vmatpush.bf16.msra.mxu0 %v2264
        %4761 = vmatmul.bf16.gmra.mxu0 %v509
        %v4762 = vpop.f32.mrf.mxu0
        %v4763 = vadd.f32 %v4714, %v4762
        %v4764 = vpop.f32.mrf.mxu0
        %v4765 = vadd.f32 %v4716, %v4764
        %4766 = vmatmul.bf16.gmra.mxu0 %v516
        %v4767 = vpop.f32.mrf.mxu0
        %v4768 = vadd.f32 %v4719, %v4767
        %v4769 = vpop.f32.mrf.mxu0
        %v4770 = vadd.f32 %v4721, %v4769
        %4771 = vmatmul.bf16.gmra.mxu0 %v523
        %v4772 = vpop.f32.mrf.mxu0
        %v4773 = vadd.f32 %v4724, %v4772
        %v4774 = vpop.f32.mrf.mxu0
        %v4775 = vadd.f32 %v4726, %v4774
        %4776 = vmatmul.bf16.gmra.mxu0 %v530
        %v4777 = vpop.f32.mrf.mxu0
        %v4778 = vadd.f32 %v4729, %v4777
        %v4779 = vpop.f32.mrf.mxu0
        %v4780 = vadd.f32 %v4731, %v4779
        %4781 = vmatmul.bf16.gmra.mxu0 %v537
        %v4782 = vpop.f32.mrf.mxu0
        %v4783 = vadd.f32 %v4734, %v4782
        %v4784 = vpop.f32.mrf.mxu0
        %v4785 = vadd.f32 %v4736, %v4784
        %4786 = vmatmul.bf16.gmra.mxu0 %v544
        %v4787 = vpop.f32.mrf.mxu0
        %v4788 = vadd.f32 %v4739, %v4787
        %v4789 = vpop.f32.mrf.mxu0
        %v4790 = vadd.f32 %v4741, %v4789
        %4791 = vmatmul.bf16.gmra.mxu0 %v551
        %v4792 = vpop.f32.mrf.mxu0
        %v4793 = vadd.f32 %v4744, %v4792
        %v4794 = vpop.f32.mrf.mxu0
        %v4795 = vadd.f32 %v4746, %v4794
        %4796 = vmatmul.bf16.gmra.mxu0 %v558
        %v4797 = vpop.f32.mrf.mxu0
        %v4798 = vadd.f32 %v4749, %v4797
        %v4799 = vpop.f32.mrf.mxu0
        %v4800 = vadd.f32 %v4751, %v4799
        %4801 = vdwg.mxu0
        %4802 = vmatpush.bf16.msra.mxu0 %v2384
        %4803 = vmatpush.bf16.msra.mxu0 %v2376
        %4804 = vmatpush.bf16.msra.mxu0 %v2368
        %4805 = vmatpush.bf16.msra.mxu0 %v2360
        %4806 = vmatpush.bf16.msra.mxu0 %v2352
        %4807 = vmatpush.bf16.msra.mxu0 %v2344
        %4808 = vmatpush.bf16.msra.mxu0 %v2336
        %4809 = vmatpush.bf16.msra.mxu0 %v2328
        %4810 = vmatmul.bf16.gmra.mxu0 %v510
        %v4811 = vpop.f32.mrf.mxu0
        %v4812 = vadd.f32 %v4763, %v4811
        %v4813 = vpop.f32.mrf.mxu0
        %v4814 = vadd.f32 %v4765, %v4813
        %4815 = vmatmul.bf16.gmra.mxu0 %v517
        %v4816 = vpop.f32.mrf.mxu0
        %v4817 = vadd.f32 %v4768, %v4816
        %v4818 = vpop.f32.mrf.mxu0
        %v4819 = vadd.f32 %v4770, %v4818
        %4820 = vmatmul.bf16.gmra.mxu0 %v524
        %v4821 = vpop.f32.mrf.mxu0
        %v4822 = vadd.f32 %v4773, %v4821
        %v4823 = vpop.f32.mrf.mxu0
        %v4824 = vadd.f32 %v4775, %v4823
        %4825 = vmatmul.bf16.gmra.mxu0 %v531
        %v4826 = vpop.f32.mrf.mxu0
        %v4827 = vadd.f32 %v4778, %v4826
        %v4828 = vpop.f32.mrf.mxu0
        %v4829 = vadd.f32 %v4780, %v4828
        %4830 = vmatmul.bf16.gmra.mxu0 %v538
        %v4831 = vpop.f32.mrf.mxu0
        %v4832 = vadd.f32 %v4783, %v4831
        %v4833 = vpop.f32.mrf.mxu0
        %v4834 = vadd.f32 %v4785, %v4833
        %4835 = vmatmul.bf16.gmra.mxu0 %v545
        %v4836 = vpop.f32.mrf.mxu0
        %v4837 = vadd.f32 %v4788, %v4836
        %v4838 = vpop.f32.mrf.mxu0
        %v4839 = vadd.f32 %v4790, %v4838
        %4840 = vmatmul.bf16.gmra.mxu0 %v552
        %v4841 = vpop.f32.mrf.mxu0
        %v4842 = vadd.f32 %v4793, %v4841
        %v4843 = vpop.f32.mrf.mxu0
        %v4844 = vadd.f32 %v4795, %v4843
        %4845 = vmatmul.bf16.gmra.mxu0 %v559
        %v4846 = vpop.f32.mrf.mxu0
        %v4847 = vadd.f32 %v4798, %v4846
        %v4848 = vpop.f32.mrf.mxu0
        %v4849 = vadd.f32 %v4800, %v4848
        %4850 = vdwg.mxu0
        %4851 = vmatpush.bf16.msra.mxu0 %v2448
        %4852 = vmatpush.bf16.msra.mxu0 %v2440
        %4853 = vmatpush.bf16.msra.mxu0 %v2432
        %4854 = vmatpush.bf16.msra.mxu0 %v2424
        %4855 = vmatpush.bf16.msra.mxu0 %v2416
        %4856 = vmatpush.bf16.msra.mxu0 %v2408
        %4857 = vmatpush.bf16.msra.mxu0 %v2400
        %4858 = vmatpush.bf16.msra.mxu0 %v2392
        %4859 = vmatmul.bf16.gmra.mxu0 %v511
        %v4860 = vpop.f32.mrf.mxu0
        %v4861 = vadd.f32 %v4812, %v4860
        %v4862 = vpop.f32.mrf.mxu0
        %v4863 = vadd.f32 %v4814, %v4862
        %4864 = vmatmul.bf16.gmra.mxu0 %v518
        %v4865 = vpop.f32.mrf.mxu0
        %v4866 = vadd.f32 %v4817, %v4865
        %v4867 = vpop.f32.mrf.mxu0
        %v4868 = vadd.f32 %v4819, %v4867
        %4869 = vmatmul.bf16.gmra.mxu0 %v525
        %v4870 = vpop.f32.mrf.mxu0
        %v4871 = vadd.f32 %v4822, %v4870
        %v4872 = vpop.f32.mrf.mxu0
        %v4873 = vadd.f32 %v4824, %v4872
        %4874 = vmatmul.bf16.gmra.mxu0 %v532
        %v4875 = vpop.f32.mrf.mxu0
        %v4876 = vadd.f32 %v4827, %v4875
        %v4877 = vpop.f32.mrf.mxu0
        %v4878 = vadd.f32 %v4829, %v4877
        %4879 = vmatmul.bf16.gmra.mxu0 %v539
        %v4880 = vpop.f32.mrf.mxu0
        %v4881 = vadd.f32 %v4832, %v4880
        %v4882 = vpop.f32.mrf.mxu0
        %v4883 = vadd.f32 %v4834, %v4882
        %4884 = vmatmul.bf16.gmra.mxu0 %v546
        %v4885 = vpop.f32.mrf.mxu0
        %v4886 = vadd.f32 %v4837, %v4885
        %v4887 = vpop.f32.mrf.mxu0
        %v4888 = vadd.f32 %v4839, %v4887
        %4889 = vmatmul.bf16.gmra.mxu0 %v553
        %v4890 = vpop.f32.mrf.mxu0
        %v4891 = vadd.f32 %v4842, %v4890
        %v4892 = vpop.f32.mrf.mxu0
        %v4893 = vadd.f32 %v4844, %v4892
        %4894 = vmatmul.bf16.gmra.mxu0 %v560
        %v4895 = vpop.f32.mrf.mxu0
        %v4896 = vadd.f32 %v4847, %v4895
        %v4897 = vpop.f32.mrf.mxu0
        %v4898 = vadd.f32 %v4849, %v4897
        %4899 = vdwg.mxu0
        %4900 = vmatpush.bf16.msra.mxu0 %v2512
        %4901 = vmatpush.bf16.msra.mxu0 %v2504
        %4902 = vmatpush.bf16.msra.mxu0 %v2496
        %4903 = vmatpush.bf16.msra.mxu0 %v2488
        %4904 = vmatpush.bf16.msra.mxu0 %v2480
        %4905 = vmatpush.bf16.msra.mxu0 %v2472
        %4906 = vmatpush.bf16.msra.mxu0 %v2464
        %4907 = vmatpush.bf16.msra.mxu0 %v2456
        %4908 = vmatmul.bf16.gmra.mxu0 %v512
        %v4909 = vpop.f32.mrf.mxu0
        %v4910 = vadd.f32 %v4861, %v4909
        %v4911 = vpop.f32.mrf.mxu0
        %v4912 = vadd.f32 %v4863, %v4911
        %4913 = vmatmul.bf16.gmra.mxu0 %v519
        %v4914 = vpop.f32.mrf.mxu0
        %v4915 = vadd.f32 %v4866, %v4914
        %v4916 = vpop.f32.mrf.mxu0
        %v4917 = vadd.f32 %v4868, %v4916
        %4918 = vmatmul.bf16.gmra.mxu0 %v526
        %v4919 = vpop.f32.mrf.mxu0
        %v4920 = vadd.f32 %v4871, %v4919
        %v4921 = vpop.f32.mrf.mxu0
        %v4922 = vadd.f32 %v4873, %v4921
        %4923 = vmatmul.bf16.gmra.mxu0 %v533
        %v4924 = vpop.f32.mrf.mxu0
        %v4925 = vadd.f32 %v4876, %v4924
        %v4926 = vpop.f32.mrf.mxu0
        %v4927 = vadd.f32 %v4878, %v4926
        %4928 = vmatmul.bf16.gmra.mxu0 %v540
        %v4929 = vpop.f32.mrf.mxu0
        %v4930 = vadd.f32 %v4881, %v4929
        %v4931 = vpop.f32.mrf.mxu0
        %v4932 = vadd.f32 %v4883, %v4931
        %4933 = vmatmul.bf16.gmra.mxu0 %v547
        %v4934 = vpop.f32.mrf.mxu0
        %v4935 = vadd.f32 %v4886, %v4934
        %v4936 = vpop.f32.mrf.mxu0
        %v4937 = vadd.f32 %v4888, %v4936
        %4938 = vmatmul.bf16.gmra.mxu0 %v554
        %v4939 = vpop.f32.mrf.mxu0
        %v4940 = vadd.f32 %v4891, %v4939
        %v4941 = vpop.f32.mrf.mxu0
        %v4942 = vadd.f32 %v4893, %v4941
        %4943 = vmatmul.bf16.gmra.mxu0 %v561
        %v4944 = vpop.f32.mrf.mxu0
        %v4945 = vadd.f32 %v4896, %v4944
        %v4946 = vpop.f32.mrf.mxu0
        %v4947 = vadd.f32 %v4898, %v4946
        %4948 = vdwg.mxu0
        %4949 = vmatpush.bf16.msra.mxu0 0
        %4950 = vmatpush.bf16.msra.mxu0 0
        %4951 = vmatpush.bf16.msra.mxu0 0
        %4952 = vmatpush.bf16.msra.mxu0 0
        %4953 = vmatpush.bf16.msra.mxu0 0
        %4954 = vmatpush.bf16.msra.mxu0 0
        %4955 = vmatpush.bf16.msra.mxu0 0
        %4956 = vmatpush.bf16.msra.mxu0 %v2520
        %4957 = vmatmul.bf16.gmra.mxu0 %v2917
        %v4958 = vpop.f32.mrf.mxu0
        %v4959 = vadd.f32 %v4910, %v4958
        %v4960 = vpop.f32.mrf.mxu0
        %v4961 = vadd.f32 %v4912, %v4960
        %4962 = vmatmul.bf16.gmra.mxu0 %v2920
        %v4963 = vpop.f32.mrf.mxu0
        %v4964 = vadd.f32 %v4915, %v4963
        %v4965 = vpop.f32.mrf.mxu0
        %v4966 = vadd.f32 %v4917, %v4965
        %4967 = vmatmul.bf16.gmra.mxu0 %v2923
        %v4968 = vpop.f32.mrf.mxu0
        %v4969 = vadd.f32 %v4920, %v4968
        %v4970 = vpop.f32.mrf.mxu0
        %v4971 = vadd.f32 %v4922, %v4970
        %4972 = vmatmul.bf16.gmra.mxu0 %v2926
        %v4973 = vpop.f32.mrf.mxu0
        %v4974 = vadd.f32 %v4925, %v4973
        %v4975 = vpop.f32.mrf.mxu0
        %v4976 = vadd.f32 %v4927, %v4975
        %4977 = vmatmul.bf16.gmra.mxu0 %v2929
        %v4978 = vpop.f32.mrf.mxu0
        %v4979 = vadd.f32 %v4930, %v4978
        %v4980 = vpop.f32.mrf.mxu0
        %v4981 = vadd.f32 %v4932, %v4980
        %4982 = vmatmul.bf16.gmra.mxu0 %v2932
        %v4983 = vpop.f32.mrf.mxu0
        %v4984 = vadd.f32 %v4935, %v4983
        %v4985 = vpop.f32.mrf.mxu0
        %v4986 = vadd.f32 %v4937, %v4985
        %4987 = vmatmul.bf16.gmra.mxu0 %v2935
        %v4988 = vpop.f32.mrf.mxu0
        %v4989 = vadd.f32 %v4940, %v4988
        %v4990 = vpop.f32.mrf.mxu0
        %v4991 = vadd.f32 %v4942, %v4990
        %4992 = vmatmul.bf16.gmra.mxu0 %v2938
        %v4993 = vpop.f32.mrf.mxu0
        %v4994 = vadd.f32 %v4945, %v4993
        %v4995 = vpop.f32.mrf.mxu0
        %v4996 = vadd.f32 %v4947, %v4995
        %4997 = vdwg.mxu0
        %4998 = vmatpush.bf16.msra.mxu0 %v2193
        %4999 = vmatpush.bf16.msra.mxu0 %v2185
        %5000 = vmatpush.bf16.msra.mxu0 %v2177
        %5001 = vmatpush.bf16.msra.mxu0 %v2169
        %5002 = vmatpush.bf16.msra.mxu0 %v2161
        %5003 = vmatpush.bf16.msra.mxu0 %v2153
        %5004 = vmatpush.bf16.msra.mxu0 %v2145
        %5005 = vmatpush.bf16.msra.mxu0 %v2137
        %5006 = vmatmul.bf16.gmra.mxu0 %v507
        %v5007 = vpop.f32.mrf.mxu0
        %v5008 = vadd.f32 0.0, %v5007
        %v5009 = vpop.f32.mrf.mxu0
        %v5010 = vadd.f32 0.0, %v5009
        %5011 = vmatmul.bf16.gmra.mxu0 %v514
        %v5012 = vpop.f32.mrf.mxu0
        %v5013 = vadd.f32 0.0, %v5012
        %v5014 = vpop.f32.mrf.mxu0
        %v5015 = vadd.f32 0.0, %v5014
        %5016 = vmatmul.bf16.gmra.mxu0 %v521
        %v5017 = vpop.f32.mrf.mxu0
        %v5018 = vadd.f32 0.0, %v5017
        %v5019 = vpop.f32.mrf.mxu0
        %v5020 = vadd.f32 0.0, %v5019
        %5021 = vmatmul.bf16.gmra.mxu0 %v528
        %v5022 = vpop.f32.mrf.mxu0
        %v5023 = vadd.f32 0.0, %v5022
        %v5024 = vpop.f32.mrf.mxu0
        %v5025 = vadd.f32 0.0, %v5024
        %5026 = vmatmul.bf16.gmra.mxu0 %v535
        %v5027 = vpop.f32.mrf.mxu0
        %v5028 = vadd.f32 0.0, %v5027
        %v5029 = vpop.f32.mrf.mxu0
        %v5030 = vadd.f32 0.0, %v5029
        %5031 = vmatmul.bf16.gmra.mxu0 %v542
        %v5032 = vpop.f32.mrf.mxu0
        %v5033 = vadd.f32 0.0, %v5032
        %v5034 = vpop.f32.mrf.mxu0
        %v5035 = vadd.f32 0.0, %v5034
        %5036 = vmatmul.bf16.gmra.mxu0 %v549
        %v5037 = vpop.f32.mrf.mxu0
        %v5038 = vadd.f32 0.0, %v5037
        %v5039 = vpop.f32.mrf.mxu0
        %v5040 = vadd.f32 0.0, %v5039
        %5041 = vmatmul.bf16.gmra.mxu0 %v556
        %v5042 = vpop.f32.mrf.mxu0
        %v5043 = vadd.f32 0.0, %v5042
        %v5044 = vpop.f32.mrf.mxu0
        %v5045 = vadd.f32 0.0, %v5044
        %5046 = vdwg.mxu0
        %5047 = vmatpush.bf16.msra.mxu0 %v2257
        %5048 = vmatpush.bf16.msra.mxu0 %v2249
        %5049 = vmatpush.bf16.msra.mxu0 %v2241
        %5050 = vmatpush.bf16.msra.mxu0 %v2233
        %5051 = vmatpush.bf16.msra.mxu0 %v2225
        %5052 = vmatpush.bf16.msra.mxu0 %v2217
        %5053 = vmatpush.bf16.msra.mxu0 %v2209
        %5054 = vmatpush.bf16.msra.mxu0 %v2201
        %5055 = vmatmul.bf16.gmra.mxu0 %v508
        %v5056 = vpop.f32.mrf.mxu0
        %v5057 = vadd.f32 %v5008, %v5056
        %v5058 = vpop.f32.mrf.mxu0
        %v5059 = vadd.f32 %v5010, %v5058
        %5060 = vmatmul.bf16.gmra.mxu0 %v515
        %v5061 = vpop.f32.mrf.mxu0
        %v5062 = vadd.f32 %v5013, %v5061
        %v5063 = vpop.f32.mrf.mxu0
        %v5064 = vadd.f32 %v5015, %v5063
        %5065 = vmatmul.bf16.gmra.mxu0 %v522
        %v5066 = vpop.f32.mrf.mxu0
        %v5067 = vadd.f32 %v5018, %v5066
        %v5068 = vpop.f32.mrf.mxu0
        %v5069 = vadd.f32 %v5020, %v5068
        %5070 = vmatmul.bf16.gmra.mxu0 %v529
        %v5071 = vpop.f32.mrf.mxu0
        %v5072 = vadd.f32 %v5023, %v5071
        %v5073 = vpop.f32.mrf.mxu0
        %v5074 = vadd.f32 %v5025, %v5073
        %5075 = vmatmul.bf16.gmra.mxu0 %v536
        %v5076 = vpop.f32.mrf.mxu0
        %v5077 = vadd.f32 %v5028, %v5076
        %v5078 = vpop.f32.mrf.mxu0
        %v5079 = vadd.f32 %v5030, %v5078
        %5080 = vmatmul.bf16.gmra.mxu0 %v543
        %v5081 = vpop.f32.mrf.mxu0
        %v5082 = vadd.f32 %v5033, %v5081
        %v5083 = vpop.f32.mrf.mxu0
        %v5084 = vadd.f32 %v5035, %v5083
        %5085 = vmatmul.bf16.gmra.mxu0 %v550
        %v5086 = vpop.f32.mrf.mxu0
        %v5087 = vadd.f32 %v5038, %v5086
        %v5088 = vpop.f32.mrf.mxu0
        %v5089 = vadd.f32 %v5040, %v5088
        %5090 = vmatmul.bf16.gmra.mxu0 %v557
        %v5091 = vpop.f32.mrf.mxu0
        %v5092 = vadd.f32 %v5043, %v5091
        %v5093 = vpop.f32.mrf.mxu0
        %v5094 = vadd.f32 %v5045, %v5093
        %5095 = vdwg.mxu0
        %5096 = vmatpush.bf16.msra.mxu0 %v2321
        %5097 = vmatpush.bf16.msra.mxu0 %v2313
        %5098 = vmatpush.bf16.msra.mxu0 %v2305
        %5099 = vmatpush.bf16.msra.mxu0 %v2297
        %5100 = vmatpush.bf16.msra.mxu0 %v2289
        %5101 = vmatpush.bf16.msra.mxu0 %v2281
        %5102 = vmatpush.bf16.msra.mxu0 %v2273
        %5103 = vmatpush.bf16.msra.mxu0 %v2265
        %5104 = vmatmul.bf16.gmra.mxu0 %v509
        %v5105 = vpop.f32.mrf.mxu0
        %v5106 = vadd.f32 %v5057, %v5105
        %v5107 = vpop.f32.mrf.mxu0
        %v5108 = vadd.f32 %v5059, %v5107
        %5109 = vmatmul.bf16.gmra.mxu0 %v516
        %v5110 = vpop.f32.mrf.mxu0
        %v5111 = vadd.f32 %v5062, %v5110
        %v5112 = vpop.f32.mrf.mxu0
        %v5113 = vadd.f32 %v5064, %v5112
        %5114 = vmatmul.bf16.gmra.mxu0 %v523
        %v5115 = vpop.f32.mrf.mxu0
        %v5116 = vadd.f32 %v5067, %v5115
        %v5117 = vpop.f32.mrf.mxu0
        %v5118 = vadd.f32 %v5069, %v5117
        %5119 = vmatmul.bf16.gmra.mxu0 %v530
        %v5120 = vpop.f32.mrf.mxu0
        %v5121 = vadd.f32 %v5072, %v5120
        %v5122 = vpop.f32.mrf.mxu0
        %v5123 = vadd.f32 %v5074, %v5122
        %5124 = vmatmul.bf16.gmra.mxu0 %v537
        %v5125 = vpop.f32.mrf.mxu0
        %v5126 = vadd.f32 %v5077, %v5125
        %v5127 = vpop.f32.mrf.mxu0
        %v5128 = vadd.f32 %v5079, %v5127
        %5129 = vmatmul.bf16.gmra.mxu0 %v544
        %v5130 = vpop.f32.mrf.mxu0
        %v5131 = vadd.f32 %v5082, %v5130
        %v5132 = vpop.f32.mrf.mxu0
        %v5133 = vadd.f32 %v5084, %v5132
        %5134 = vmatmul.bf16.gmra.mxu0 %v551
        %v5135 = vpop.f32.mrf.mxu0
        %v5136 = vadd.f32 %v5087, %v5135
        %v5137 = vpop.f32.mrf.mxu0
        %v5138 = vadd.f32 %v5089, %v5137
        %5139 = vmatmul.bf16.gmra.mxu0 %v558
        %v5140 = vpop.f32.mrf.mxu0
        %v5141 = vadd.f32 %v5092, %v5140
        %v5142 = vpop.f32.mrf.mxu0
        %v5143 = vadd.f32 %v5094, %v5142
        %5144 = vdwg.mxu0
        %5145 = vmatpush.bf16.msra.mxu0 %v2385
        %5146 = vmatpush.bf16.msra.mxu0 %v2377
        %5147 = vmatpush.bf16.msra.mxu0 %v2369
        %5148 = vmatpush.bf16.msra.mxu0 %v2361
        %5149 = vmatpush.bf16.msra.mxu0 %v2353
        %5150 = vmatpush.bf16.msra.mxu0 %v2345
        %5151 = vmatpush.bf16.msra.mxu0 %v2337
        %5152 = vmatpush.bf16.msra.mxu0 %v2329
        %5153 = vmatmul.bf16.gmra.mxu0 %v510
        %v5154 = vpop.f32.mrf.mxu0
        %v5155 = vadd.f32 %v5106, %v5154
        %v5156 = vpop.f32.mrf.mxu0
        %v5157 = vadd.f32 %v5108, %v5156
        %5158 = vmatmul.bf16.gmra.mxu0 %v517
        %v5159 = vpop.f32.mrf.mxu0
        %v5160 = vadd.f32 %v5111, %v5159
        %v5161 = vpop.f32.mrf.mxu0
        %v5162 = vadd.f32 %v5113, %v5161
        %5163 = vmatmul.bf16.gmra.mxu0 %v524
        %v5164 = vpop.f32.mrf.mxu0
        %v5165 = vadd.f32 %v5116, %v5164
        %v5166 = vpop.f32.mrf.mxu0
        %v5167 = vadd.f32 %v5118, %v5166
        %5168 = vmatmul.bf16.gmra.mxu0 %v531
        %v5169 = vpop.f32.mrf.mxu0
        %v5170 = vadd.f32 %v5121, %v5169
        %v5171 = vpop.f32.mrf.mxu0
        %v5172 = vadd.f32 %v5123, %v5171
        %5173 = vmatmul.bf16.gmra.mxu0 %v538
        %v5174 = vpop.f32.mrf.mxu0
        %v5175 = vadd.f32 %v5126, %v5174
        %v5176 = vpop.f32.mrf.mxu0
        %v5177 = vadd.f32 %v5128, %v5176
        %5178 = vmatmul.bf16.gmra.mxu0 %v545
        %v5179 = vpop.f32.mrf.mxu0
        %v5180 = vadd.f32 %v5131, %v5179
        %v5181 = vpop.f32.mrf.mxu0
        %v5182 = vadd.f32 %v5133, %v5181
        %5183 = vmatmul.bf16.gmra.mxu0 %v552
        %v5184 = vpop.f32.mrf.mxu0
        %v5185 = vadd.f32 %v5136, %v5184
        %v5186 = vpop.f32.mrf.mxu0
        %v5187 = vadd.f32 %v5138, %v5186
        %5188 = vmatmul.bf16.gmra.mxu0 %v559
        %v5189 = vpop.f32.mrf.mxu0
        %v5190 = vadd.f32 %v5141, %v5189
        %v5191 = vpop.f32.mrf.mxu0
        %v5192 = vadd.f32 %v5143, %v5191
        %5193 = vdwg.mxu0
        %5194 = vmatpush.bf16.msra.mxu0 %v2449
        %5195 = vmatpush.bf16.msra.mxu0 %v2441
        %5196 = vmatpush.bf16.msra.mxu0 %v2433
        %5197 = vmatpush.bf16.msra.mxu0 %v2425
        %5198 = vmatpush.bf16.msra.mxu0 %v2417
        %5199 = vmatpush.bf16.msra.mxu0 %v2409
        %5200 = vmatpush.bf16.msra.mxu0 %v2401
        %5201 = vmatpush.bf16.msra.mxu0 %v2393
        %5202 = vmatmul.bf16.gmra.mxu0 %v511
        %v5203 = vpop.f32.mrf.mxu0
        %v5204 = vadd.f32 %v5155, %v5203
        %v5205 = vpop.f32.mrf.mxu0
        %v5206 = vadd.f32 %v5157, %v5205
        %5207 = vmatmul.bf16.gmra.mxu0 %v518
        %v5208 = vpop.f32.mrf.mxu0
        %v5209 = vadd.f32 %v5160, %v5208
        %v5210 = vpop.f32.mrf.mxu0
        %v5211 = vadd.f32 %v5162, %v5210
        %5212 = vmatmul.bf16.gmra.mxu0 %v525
        %v5213 = vpop.f32.mrf.mxu0
        %v5214 = vadd.f32 %v5165, %v5213
        %v5215 = vpop.f32.mrf.mxu0
        %v5216 = vadd.f32 %v5167, %v5215
        %5217 = vmatmul.bf16.gmra.mxu0 %v532
        %v5218 = vpop.f32.mrf.mxu0
        %v5219 = vadd.f32 %v5170, %v5218
        %v5220 = vpop.f32.mrf.mxu0
        %v5221 = vadd.f32 %v5172, %v5220
        %5222 = vmatmul.bf16.gmra.mxu0 %v539
        %v5223 = vpop.f32.mrf.mxu0
        %v5224 = vadd.f32 %v5175, %v5223
        %v5225 = vpop.f32.mrf.mxu0
        %v5226 = vadd.f32 %v5177, %v5225
        %5227 = vmatmul.bf16.gmra.mxu0 %v546
        %v5228 = vpop.f32.mrf.mxu0
        %v5229 = vadd.f32 %v5180, %v5228
        %v5230 = vpop.f32.mrf.mxu0
        %v5231 = vadd.f32 %v5182, %v5230
        %5232 = vmatmul.bf16.gmra.mxu0 %v553
        %v5233 = vpop.f32.mrf.mxu0
        %v5234 = vadd.f32 %v5185, %v5233
        %v5235 = vpop.f32.mrf.mxu0
        %v5236 = vadd.f32 %v5187, %v5235
        %5237 = vmatmul.bf16.gmra.mxu0 %v560
        %v5238 = vpop.f32.mrf.mxu0
        %v5239 = vadd.f32 %v5190, %v5238
        %v5240 = vpop.f32.mrf.mxu0
        %v5241 = vadd.f32 %v5192, %v5240
        %5242 = vdwg.mxu0
        %5243 = vmatpush.bf16.msra.mxu0 %v2513
        %5244 = vmatpush.bf16.msra.mxu0 %v2505
        %5245 = vmatpush.bf16.msra.mxu0 %v2497
        %5246 = vmatpush.bf16.msra.mxu0 %v2489
        %5247 = vmatpush.bf16.msra.mxu0 %v2481
        %5248 = vmatpush.bf16.msra.mxu0 %v2473
        %5249 = vmatpush.bf16.msra.mxu0 %v2465
        %5250 = vmatpush.bf16.msra.mxu0 %v2457
        %5251 = vmatmul.bf16.gmra.mxu0 %v512
        %v5252 = vpop.f32.mrf.mxu0
        %v5253 = vadd.f32 %v5204, %v5252
        %v5254 = vpop.f32.mrf.mxu0
        %v5255 = vadd.f32 %v5206, %v5254
        %5256 = vmatmul.bf16.gmra.mxu0 %v519
        %v5257 = vpop.f32.mrf.mxu0
        %v5258 = vadd.f32 %v5209, %v5257
        %v5259 = vpop.f32.mrf.mxu0
        %v5260 = vadd.f32 %v5211, %v5259
        %5261 = vmatmul.bf16.gmra.mxu0 %v526
        %v5262 = vpop.f32.mrf.mxu0
        %v5263 = vadd.f32 %v5214, %v5262
        %v5264 = vpop.f32.mrf.mxu0
        %v5265 = vadd.f32 %v5216, %v5264
        %5266 = vmatmul.bf16.gmra.mxu0 %v533
        %v5267 = vpop.f32.mrf.mxu0
        %v5268 = vadd.f32 %v5219, %v5267
        %v5269 = vpop.f32.mrf.mxu0
        %v5270 = vadd.f32 %v5221, %v5269
        %5271 = vmatmul.bf16.gmra.mxu0 %v540
        %v5272 = vpop.f32.mrf.mxu0
        %v5273 = vadd.f32 %v5224, %v5272
        %v5274 = vpop.f32.mrf.mxu0
        %v5275 = vadd.f32 %v5226, %v5274
        %5276 = vmatmul.bf16.gmra.mxu0 %v547
        %v5277 = vpop.f32.mrf.mxu0
        %v5278 = vadd.f32 %v5229, %v5277
        %v5279 = vpop.f32.mrf.mxu0
        %v5280 = vadd.f32 %v5231, %v5279
        %5281 = vmatmul.bf16.gmra.mxu0 %v554
        %v5282 = vpop.f32.mrf.mxu0
        %v5283 = vadd.f32 %v5234, %v5282
        %v5284 = vpop.f32.mrf.mxu0
        %v5285 = vadd.f32 %v5236, %v5284
        %5286 = vmatmul.bf16.gmra.mxu0 %v561
        %v5287 = vpop.f32.mrf.mxu0
        %v5288 = vadd.f32 %v5239, %v5287
        %v5289 = vpop.f32.mrf.mxu0
        %v5290 = vadd.f32 %v5241, %v5289
        %5291 = vdwg.mxu0
        %5292 = vmatpush.bf16.msra.mxu0 0
        %5293 = vmatpush.bf16.msra.mxu0 0
        %5294 = vmatpush.bf16.msra.mxu0 0
        %5295 = vmatpush.bf16.msra.mxu0 0
        %5296 = vmatpush.bf16.msra.mxu0 0
        %5297 = vmatpush.bf16.msra.mxu0 0
        %5298 = vmatpush.bf16.msra.mxu0 0
        %5299 = vmatpush.bf16.msra.mxu0 %v2521
        %5300 = vmatmul.bf16.gmra.mxu0 %v2917
        %v5301 = vpop.f32.mrf.mxu0
        %v5302 = vadd.f32 %v5253, %v5301
        %v5303 = vpop.f32.mrf.mxu0
        %v5304 = vadd.f32 %v5255, %v5303
        %5305 = vmatmul.bf16.gmra.mxu0 %v2920
        %v5306 = vpop.f32.mrf.mxu0
        %v5307 = vadd.f32 %v5258, %v5306
        %v5308 = vpop.f32.mrf.mxu0
        %v5309 = vadd.f32 %v5260, %v5308
        %5310 = vmatmul.bf16.gmra.mxu0 %v2923
        %v5311 = vpop.f32.mrf.mxu0
        %v5312 = vadd.f32 %v5263, %v5311
        %v5313 = vpop.f32.mrf.mxu0
        %v5314 = vadd.f32 %v5265, %v5313
        %5315 = vmatmul.bf16.gmra.mxu0 %v2926
        %v5316 = vpop.f32.mrf.mxu0
        %v5317 = vadd.f32 %v5268, %v5316
        %v5318 = vpop.f32.mrf.mxu0
        %v5319 = vadd.f32 %v5270, %v5318
        %5320 = vmatmul.bf16.gmra.mxu0 %v2929
        %v5321 = vpop.f32.mrf.mxu0
        %v5322 = vadd.f32 %v5273, %v5321
        %v5323 = vpop.f32.mrf.mxu0
        %v5324 = vadd.f32 %v5275, %v5323
        %5325 = vmatmul.bf16.gmra.mxu0 %v2932
        %v5326 = vpop.f32.mrf.mxu0
        %v5327 = vadd.f32 %v5278, %v5326
        %v5328 = vpop.f32.mrf.mxu0
        %v5329 = vadd.f32 %v5280, %v5328
        %5330 = vmatmul.bf16.gmra.mxu0 %v2935
        %v5331 = vpop.f32.mrf.mxu0
        %v5332 = vadd.f32 %v5283, %v5331
        %v5333 = vpop.f32.mrf.mxu0
        %v5334 = vadd.f32 %v5285, %v5333
        %5335 = vmatmul.bf16.gmra.mxu0 %v2938
        %v5336 = vpop.f32.mrf.mxu0
        %v5337 = vadd.f32 %v5288, %v5336
        %v5338 = vpop.f32.mrf.mxu0
        %v5339 = vadd.f32 %v5290, %v5338
        %5340 = vdwg.mxu0
        %5341 = vmatpush.bf16.msra.mxu0 %v2194
        %5342 = vmatpush.bf16.msra.mxu0 %v2186
        %5343 = vmatpush.bf16.msra.mxu0 %v2178
        %5344 = vmatpush.bf16.msra.mxu0 %v2170
        %5345 = vmatpush.bf16.msra.mxu0 %v2162
        %5346 = vmatpush.bf16.msra.mxu0 %v2154
        %5347 = vmatpush.bf16.msra.mxu0 %v2146
        %5348 = vmatpush.bf16.msra.mxu0 %v2138
        %5349 = vmatmul.bf16.gmra.mxu0 %v507
        %v5350 = vpop.f32.mrf.mxu0
        %v5351 = vadd.f32 0.0, %v5350
        %v5352 = vpop.f32.mrf.mxu0
        %v5353 = vadd.f32 0.0, %v5352
        %5354 = vmatmul.bf16.gmra.mxu0 %v514
        %v5355 = vpop.f32.mrf.mxu0
        %v5356 = vadd.f32 0.0, %v5355
        %v5357 = vpop.f32.mrf.mxu0
        %v5358 = vadd.f32 0.0, %v5357
        %5359 = vmatmul.bf16.gmra.mxu0 %v521
        %v5360 = vpop.f32.mrf.mxu0
        %v5361 = vadd.f32 0.0, %v5360
        %v5362 = vpop.f32.mrf.mxu0
        %v5363 = vadd.f32 0.0, %v5362
        %5364 = vmatmul.bf16.gmra.mxu0 %v528
        %v5365 = vpop.f32.mrf.mxu0
        %v5366 = vadd.f32 0.0, %v5365
        %v5367 = vpop.f32.mrf.mxu0
        %v5368 = vadd.f32 0.0, %v5367
        %5369 = vmatmul.bf16.gmra.mxu0 %v535
        %v5370 = vpop.f32.mrf.mxu0
        %v5371 = vadd.f32 0.0, %v5370
        %v5372 = vpop.f32.mrf.mxu0
        %v5373 = vadd.f32 0.0, %v5372
        %5374 = vmatmul.bf16.gmra.mxu0 %v542
        %v5375 = vpop.f32.mrf.mxu0
        %v5376 = vadd.f32 0.0, %v5375
        %v5377 = vpop.f32.mrf.mxu0
        %v5378 = vadd.f32 0.0, %v5377
        %5379 = vmatmul.bf16.gmra.mxu0 %v549
        %v5380 = vpop.f32.mrf.mxu0
        %v5381 = vadd.f32 0.0, %v5380
        %v5382 = vpop.f32.mrf.mxu0
        %v5383 = vadd.f32 0.0, %v5382
        %5384 = vmatmul.bf16.gmra.mxu0 %v556
        %v5385 = vpop.f32.mrf.mxu0
        %v5386 = vadd.f32 0.0, %v5385
        %v5387 = vpop.f32.mrf.mxu0
        %v5388 = vadd.f32 0.0, %v5387
        %5389 = vdwg.mxu0
        %5390 = vmatpush.bf16.msra.mxu0 %v2258
        %5391 = vmatpush.bf16.msra.mxu0 %v2250
        %5392 = vmatpush.bf16.msra.mxu0 %v2242
        %5393 = vmatpush.bf16.msra.mxu0 %v2234
        %5394 = vmatpush.bf16.msra.mxu0 %v2226
        %5395 = vmatpush.bf16.msra.mxu0 %v2218
        %5396 = vmatpush.bf16.msra.mxu0 %v2210
        %5397 = vmatpush.bf16.msra.mxu0 %v2202
        %5398 = vmatmul.bf16.gmra.mxu0 %v508
        %v5399 = vpop.f32.mrf.mxu0
        %v5400 = vadd.f32 %v5351, %v5399
        %v5401 = vpop.f32.mrf.mxu0
        %v5402 = vadd.f32 %v5353, %v5401
        %5403 = vmatmul.bf16.gmra.mxu0 %v515
        %v5404 = vpop.f32.mrf.mxu0
        %v5405 = vadd.f32 %v5356, %v5404
        %v5406 = vpop.f32.mrf.mxu0
        %v5407 = vadd.f32 %v5358, %v5406
        %5408 = vmatmul.bf16.gmra.mxu0 %v522
        %v5409 = vpop.f32.mrf.mxu0
        %v5410 = vadd.f32 %v5361, %v5409
        %v5411 = vpop.f32.mrf.mxu0
        %v5412 = vadd.f32 %v5363, %v5411
        %5413 = vmatmul.bf16.gmra.mxu0 %v529
        %v5414 = vpop.f32.mrf.mxu0
        %v5415 = vadd.f32 %v5366, %v5414
        %v5416 = vpop.f32.mrf.mxu0
        %v5417 = vadd.f32 %v5368, %v5416
        %5418 = vmatmul.bf16.gmra.mxu0 %v536
        %v5419 = vpop.f32.mrf.mxu0
        %v5420 = vadd.f32 %v5371, %v5419
        %v5421 = vpop.f32.mrf.mxu0
        %v5422 = vadd.f32 %v5373, %v5421
        %5423 = vmatmul.bf16.gmra.mxu0 %v543
        %v5424 = vpop.f32.mrf.mxu0
        %v5425 = vadd.f32 %v5376, %v5424
        %v5426 = vpop.f32.mrf.mxu0
        %v5427 = vadd.f32 %v5378, %v5426
        %5428 = vmatmul.bf16.gmra.mxu0 %v550
        %v5429 = vpop.f32.mrf.mxu0
        %v5430 = vadd.f32 %v5381, %v5429
        %v5431 = vpop.f32.mrf.mxu0
        %v5432 = vadd.f32 %v5383, %v5431
        %5433 = vmatmul.bf16.gmra.mxu0 %v557
        %v5434 = vpop.f32.mrf.mxu0
        %v5435 = vadd.f32 %v5386, %v5434
        %v5436 = vpop.f32.mrf.mxu0
        %v5437 = vadd.f32 %v5388, %v5436
        %5438 = vdwg.mxu0
        %5439 = vmatpush.bf16.msra.mxu0 %v2322
        %5440 = vmatpush.bf16.msra.mxu0 %v2314
        %5441 = vmatpush.bf16.msra.mxu0 %v2306
        %5442 = vmatpush.bf16.msra.mxu0 %v2298
        %5443 = vmatpush.bf16.msra.mxu0 %v2290
        %5444 = vmatpush.bf16.msra.mxu0 %v2282
        %5445 = vmatpush.bf16.msra.mxu0 %v2274
        %5446 = vmatpush.bf16.msra.mxu0 %v2266
        %5447 = vmatmul.bf16.gmra.mxu0 %v509
        %v5448 = vpop.f32.mrf.mxu0
        %v5449 = vadd.f32 %v5400, %v5448
        %v5450 = vpop.f32.mrf.mxu0
        %v5451 = vadd.f32 %v5402, %v5450
        %5452 = vmatmul.bf16.gmra.mxu0 %v516
        %v5453 = vpop.f32.mrf.mxu0
        %v5454 = vadd.f32 %v5405, %v5453
        %v5455 = vpop.f32.mrf.mxu0
        %v5456 = vadd.f32 %v5407, %v5455
        %5457 = vmatmul.bf16.gmra.mxu0 %v523
        %v5458 = vpop.f32.mrf.mxu0
        %v5459 = vadd.f32 %v5410, %v5458
        %v5460 = vpop.f32.mrf.mxu0
        %v5461 = vadd.f32 %v5412, %v5460
        %5462 = vmatmul.bf16.gmra.mxu0 %v530
        %v5463 = vpop.f32.mrf.mxu0
        %v5464 = vadd.f32 %v5415, %v5463
        %v5465 = vpop.f32.mrf.mxu0
        %v5466 = vadd.f32 %v5417, %v5465
        %5467 = vmatmul.bf16.gmra.mxu0 %v537
        %v5468 = vpop.f32.mrf.mxu0
        %v5469 = vadd.f32 %v5420, %v5468
        %v5470 = vpop.f32.mrf.mxu0
        %v5471 = vadd.f32 %v5422, %v5470
        %5472 = vmatmul.bf16.gmra.mxu0 %v544
        %v5473 = vpop.f32.mrf.mxu0
        %v5474 = vadd.f32 %v5425, %v5473
        %v5475 = vpop.f32.mrf.mxu0
        %v5476 = vadd.f32 %v5427, %v5475
        %5477 = vmatmul.bf16.gmra.mxu0 %v551
        %v5478 = vpop.f32.mrf.mxu0
        %v5479 = vadd.f32 %v5430, %v5478
        %v5480 = vpop.f32.mrf.mxu0
        %v5481 = vadd.f32 %v5432, %v5480
        %5482 = vmatmul.bf16.gmra.mxu0 %v558
        %v5483 = vpop.f32.mrf.mxu0
        %v5484 = vadd.f32 %v5435, %v5483
        %v5485 = vpop.f32.mrf.mxu0
        %v5486 = vadd.f32 %v5437, %v5485
        %5487 = vdwg.mxu0
        %5488 = vmatpush.bf16.msra.mxu0 %v2386
        %5489 = vmatpush.bf16.msra.mxu0 %v2378
        %5490 = vmatpush.bf16.msra.mxu0 %v2370
        %5491 = vmatpush.bf16.msra.mxu0 %v2362
        %5492 = vmatpush.bf16.msra.mxu0 %v2354
        %5493 = vmatpush.bf16.msra.mxu0 %v2346
        %5494 = vmatpush.bf16.msra.mxu0 %v2338
        %5495 = vmatpush.bf16.msra.mxu0 %v2330
        %5496 = vmatmul.bf16.gmra.mxu0 %v510
        %v5497 = vpop.f32.mrf.mxu0
        %v5498 = vadd.f32 %v5449, %v5497
        %v5499 = vpop.f32.mrf.mxu0
        %v5500 = vadd.f32 %v5451, %v5499
        %5501 = vmatmul.bf16.gmra.mxu0 %v517
        %v5502 = vpop.f32.mrf.mxu0
        %v5503 = vadd.f32 %v5454, %v5502
        %v5504 = vpop.f32.mrf.mxu0
        %v5505 = vadd.f32 %v5456, %v5504
        %5506 = vmatmul.bf16.gmra.mxu0 %v524
        %v5507 = vpop.f32.mrf.mxu0
        %v5508 = vadd.f32 %v5459, %v5507
        %v5509 = vpop.f32.mrf.mxu0
        %v5510 = vadd.f32 %v5461, %v5509
        %5511 = vmatmul.bf16.gmra.mxu0 %v531
        %v5512 = vpop.f32.mrf.mxu0
        %v5513 = vadd.f32 %v5464, %v5512
        %v5514 = vpop.f32.mrf.mxu0
        %v5515 = vadd.f32 %v5466, %v5514
        %5516 = vmatmul.bf16.gmra.mxu0 %v538
        %v5517 = vpop.f32.mrf.mxu0
        %v5518 = vadd.f32 %v5469, %v5517
        %v5519 = vpop.f32.mrf.mxu0
        %v5520 = vadd.f32 %v5471, %v5519
        %5521 = vmatmul.bf16.gmra.mxu0 %v545
        %v5522 = vpop.f32.mrf.mxu0
        %v5523 = vadd.f32 %v5474, %v5522
        %v5524 = vpop.f32.mrf.mxu0
        %v5525 = vadd.f32 %v5476, %v5524
        %5526 = vmatmul.bf16.gmra.mxu0 %v552
        %v5527 = vpop.f32.mrf.mxu0
        %v5528 = vadd.f32 %v5479, %v5527
        %v5529 = vpop.f32.mrf.mxu0
        %v5530 = vadd.f32 %v5481, %v5529
        %5531 = vmatmul.bf16.gmra.mxu0 %v559
        %v5532 = vpop.f32.mrf.mxu0
        %v5533 = vadd.f32 %v5484, %v5532
        %v5534 = vpop.f32.mrf.mxu0
        %v5535 = vadd.f32 %v5486, %v5534
        %5536 = vdwg.mxu0
        %5537 = vmatpush.bf16.msra.mxu0 %v2450
        %5538 = vmatpush.bf16.msra.mxu0 %v2442
        %5539 = vmatpush.bf16.msra.mxu0 %v2434
        %5540 = vmatpush.bf16.msra.mxu0 %v2426
        %5541 = vmatpush.bf16.msra.mxu0 %v2418
        %5542 = vmatpush.bf16.msra.mxu0 %v2410
        %5543 = vmatpush.bf16.msra.mxu0 %v2402
        %5544 = vmatpush.bf16.msra.mxu0 %v2394
        %5545 = vmatmul.bf16.gmra.mxu0 %v511
        %v5546 = vpop.f32.mrf.mxu0
        %v5547 = vadd.f32 %v5498, %v5546
        %v5548 = vpop.f32.mrf.mxu0
        %v5549 = vadd.f32 %v5500, %v5548
        %5550 = vmatmul.bf16.gmra.mxu0 %v518
        %v5551 = vpop.f32.mrf.mxu0
        %v5552 = vadd.f32 %v5503, %v5551
        %v5553 = vpop.f32.mrf.mxu0
        %v5554 = vadd.f32 %v5505, %v5553
        %5555 = vmatmul.bf16.gmra.mxu0 %v525
        %v5556 = vpop.f32.mrf.mxu0
        %v5557 = vadd.f32 %v5508, %v5556
        %v5558 = vpop.f32.mrf.mxu0
        %v5559 = vadd.f32 %v5510, %v5558
        %5560 = vmatmul.bf16.gmra.mxu0 %v532
        %v5561 = vpop.f32.mrf.mxu0
        %v5562 = vadd.f32 %v5513, %v5561
        %v5563 = vpop.f32.mrf.mxu0
        %v5564 = vadd.f32 %v5515, %v5563
        %5565 = vmatmul.bf16.gmra.mxu0 %v539
        %v5566 = vpop.f32.mrf.mxu0
        %v5567 = vadd.f32 %v5518, %v5566
        %v5568 = vpop.f32.mrf.mxu0
        %v5569 = vadd.f32 %v5520, %v5568
        %5570 = vmatmul.bf16.gmra.mxu0 %v546
        %v5571 = vpop.f32.mrf.mxu0
        %v5572 = vadd.f32 %v5523, %v5571
        %v5573 = vpop.f32.mrf.mxu0
        %v5574 = vadd.f32 %v5525, %v5573
        %5575 = vmatmul.bf16.gmra.mxu0 %v553
        %v5576 = vpop.f32.mrf.mxu0
        %v5577 = vadd.f32 %v5528, %v5576
        %v5578 = vpop.f32.mrf.mxu0
        %v5579 = vadd.f32 %v5530, %v5578
        %5580 = vmatmul.bf16.gmra.mxu0 %v560
        %v5581 = vpop.f32.mrf.mxu0
        %v5582 = vadd.f32 %v5533, %v5581
        %v5583 = vpop.f32.mrf.mxu0
        %v5584 = vadd.f32 %v5535, %v5583
        %5585 = vdwg.mxu0
        %5586 = vmatpush.bf16.msra.mxu0 %v2514
        %5587 = vmatpush.bf16.msra.mxu0 %v2506
        %5588 = vmatpush.bf16.msra.mxu0 %v2498
        %5589 = vmatpush.bf16.msra.mxu0 %v2490
        %5590 = vmatpush.bf16.msra.mxu0 %v2482
        %5591 = vmatpush.bf16.msra.mxu0 %v2474
        %5592 = vmatpush.bf16.msra.mxu0 %v2466
        %5593 = vmatpush.bf16.msra.mxu0 %v2458
        %5594 = vmatmul.bf16.gmra.mxu0 %v512
        %v5595 = vpop.f32.mrf.mxu0
        %v5596 = vadd.f32 %v5547, %v5595
        %v5597 = vpop.f32.mrf.mxu0
        %v5598 = vadd.f32 %v5549, %v5597
        %5599 = vmatmul.bf16.gmra.mxu0 %v519
        %v5600 = vpop.f32.mrf.mxu0
        %v5601 = vadd.f32 %v5552, %v5600
        %v5602 = vpop.f32.mrf.mxu0
        %v5603 = vadd.f32 %v5554, %v5602
        %5604 = vmatmul.bf16.gmra.mxu0 %v526
        %v5605 = vpop.f32.mrf.mxu0
        %v5606 = vadd.f32 %v5557, %v5605
        %v5607 = vpop.f32.mrf.mxu0
        %v5608 = vadd.f32 %v5559, %v5607
        %5609 = vmatmul.bf16.gmra.mxu0 %v533
        %v5610 = vpop.f32.mrf.mxu0
        %v5611 = vadd.f32 %v5562, %v5610
        %v5612 = vpop.f32.mrf.mxu0
        %v5613 = vadd.f32 %v5564, %v5612
        %5614 = vmatmul.bf16.gmra.mxu0 %v540
        %v5615 = vpop.f32.mrf.mxu0
        %v5616 = vadd.f32 %v5567, %v5615
        %v5617 = vpop.f32.mrf.mxu0
        %v5618 = vadd.f32 %v5569, %v5617
        %5619 = vmatmul.bf16.gmra.mxu0 %v547
        %v5620 = vpop.f32.mrf.mxu0
        %v5621 = vadd.f32 %v5572, %v5620
        %v5622 = vpop.f32.mrf.mxu0
        %v5623 = vadd.f32 %v5574, %v5622
        %5624 = vmatmul.bf16.gmra.mxu0 %v554
        %v5625 = vpop.f32.mrf.mxu0
        %v5626 = vadd.f32 %v5577, %v5625
        %v5627 = vpop.f32.mrf.mxu0
        %v5628 = vadd.f32 %v5579, %v5627
        %5629 = vmatmul.bf16.gmra.mxu0 %v561
        %v5630 = vpop.f32.mrf.mxu0
        %v5631 = vadd.f32 %v5582, %v5630
        %v5632 = vpop.f32.mrf.mxu0
        %v5633 = vadd.f32 %v5584, %v5632
        %5634 = vdwg.mxu0
        %5635 = vmatpush.bf16.msra.mxu0 0
        %5636 = vmatpush.bf16.msra.mxu0 0
        %5637 = vmatpush.bf16.msra.mxu0 0
        %5638 = vmatpush.bf16.msra.mxu0 0
        %5639 = vmatpush.bf16.msra.mxu0 0
        %5640 = vmatpush.bf16.msra.mxu0 0
        %5641 = vmatpush.bf16.msra.mxu0 0
        %5642 = vmatpush.bf16.msra.mxu0 %v2522
        %5643 = vmatmul.bf16.gmra.mxu0 %v2917
        %v5644 = vpop.f32.mrf.mxu0
        %v5645 = vadd.f32 %v5596, %v5644
        %v5646 = vpop.f32.mrf.mxu0
        %v5647 = vadd.f32 %v5598, %v5646
        %5648 = vmatmul.bf16.gmra.mxu0 %v2920
        %v5649 = vpop.f32.mrf.mxu0
        %v5650 = vadd.f32 %v5601, %v5649
        %v5651 = vpop.f32.mrf.mxu0
        %v5652 = vadd.f32 %v5603, %v5651
        %5653 = vmatmul.bf16.gmra.mxu0 %v2923
        %v5654 = vpop.f32.mrf.mxu0
        %v5655 = vadd.f32 %v5606, %v5654
        %v5656 = vpop.f32.mrf.mxu0
        %v5657 = vadd.f32 %v5608, %v5656
        %5658 = vmatmul.bf16.gmra.mxu0 %v2926
        %v5659 = vpop.f32.mrf.mxu0
        %v5660 = vadd.f32 %v5611, %v5659
        %v5661 = vpop.f32.mrf.mxu0
        %v5662 = vadd.f32 %v5613, %v5661
        %5663 = vmatmul.bf16.gmra.mxu0 %v2929
        %v5664 = vpop.f32.mrf.mxu0
        %v5665 = vadd.f32 %v5616, %v5664
        %v5666 = vpop.f32.mrf.mxu0
        %v5667 = vadd.f32 %v5618, %v5666
        %5668 = vmatmul.bf16.gmra.mxu0 %v2932
        %v5669 = vpop.f32.mrf.mxu0
        %v5670 = vadd.f32 %v5621, %v5669
        %v5671 = vpop.f32.mrf.mxu0
        %v5672 = vadd.f32 %v5623, %v5671
        %5673 = vmatmul.bf16.gmra.mxu0 %v2935
        %v5674 = vpop.f32.mrf.mxu0
        %v5675 = vadd.f32 %v5626, %v5674
        %v5676 = vpop.f32.mrf.mxu0
        %v5677 = vadd.f32 %v5628, %v5676
        %5678 = vmatmul.bf16.gmra.mxu0 %v2938
        %v5679 = vpop.f32.mrf.mxu0
        %v5680 = vadd.f32 %v5631, %v5679
        %v5681 = vpop.f32.mrf.mxu0
        %v5682 = vadd.f32 %v5633, %v5681
        %5683 = vdwg.mxu0
        %v5684 = vpack.c.bf16 %v3587, %v3244
        %v5685 = vpack.c.bf16 %v4273, %v3930
        %v5686 = vpack.c.bf16 %v4959, %v4616
        %v5687 = vpack.c.bf16 %v5645, %v5302
        %v5688 = vpack.c.bf16 %v3589, %v3246
        %v5689 = vpack.c.bf16 %v4275, %v3932
        %v5690 = vpack.c.bf16 %v4961, %v4618
        %v5691 = vpack.c.bf16 %v5647, %v5304
        %v5692 = vpack.c.bf16 %v3592, %v3249
        %v5693 = vpack.c.bf16 %v4278, %v3935
        %v5694 = vpack.c.bf16 %v4964, %v4621
        %v5695 = vpack.c.bf16 %v5650, %v5307
        %v5696 = vpack.c.bf16 %v3594, %v3251
        %v5697 = vpack.c.bf16 %v4280, %v3937
        %v5698 = vpack.c.bf16 %v4966, %v4623
        %v5699 = vpack.c.bf16 %v5652, %v5309
        %v5700 = vpack.c.bf16 %v3597, %v3254
        %v5701 = vpack.c.bf16 %v4283, %v3940
        %v5702 = vpack.c.bf16 %v4969, %v4626
        %v5703 = vpack.c.bf16 %v5655, %v5312
        %v5704 = vpack.c.bf16 %v3599, %v3256
        %v5705 = vpack.c.bf16 %v4285, %v3942
        %v5706 = vpack.c.bf16 %v4971, %v4628
        %v5707 = vpack.c.bf16 %v5657, %v5314
        %v5708 = vpack.c.bf16 %v3602, %v3259
        %v5709 = vpack.c.bf16 %v4288, %v3945
        %v5710 = vpack.c.bf16 %v4974, %v4631
        %v5711 = vpack.c.bf16 %v5660, %v5317
        %v5712 = vpack.c.bf16 %v3604, %v3261
        %v5713 = vpack.c.bf16 %v4290, %v3947
        %v5714 = vpack.c.bf16 %v4976, %v4633
        %v5715 = vpack.c.bf16 %v5662, %v5319
        %v5716 = vpack.c.bf16 %v3607, %v3264
        %v5717 = vpack.c.bf16 %v4293, %v3950
        %v5718 = vpack.c.bf16 %v4979, %v4636
        %v5719 = vpack.c.bf16 %v5665, %v5322
        %v5720 = vpack.c.bf16 %v3609, %v3266
        %v5721 = vpack.c.bf16 %v4295, %v3952
        %v5722 = vpack.c.bf16 %v4981, %v4638
        %v5723 = vpack.c.bf16 %v5667, %v5324
        %v5724 = vpack.c.bf16 %v3612, %v3269
        %v5725 = vpack.c.bf16 %v4298, %v3955
        %v5726 = vpack.c.bf16 %v4984, %v4641
        %v5727 = vpack.c.bf16 %v5670, %v5327
        %v5728 = vpack.c.bf16 %v3614, %v3271
        %v5729 = vpack.c.bf16 %v4300, %v3957
        %v5730 = vpack.c.bf16 %v4986, %v4643
        %v5731 = vpack.c.bf16 %v5672, %v5329
        %v5732 = vpack.c.bf16 %v3617, %v3274
        %v5733 = vpack.c.bf16 %v4303, %v3960
        %v5734 = vpack.c.bf16 %v4989, %v4646
        %v5735 = vpack.c.bf16 %v5675, %v5332
        %v5736 = vpack.c.bf16 %v3619, %v3276
        %v5737 = vpack.c.bf16 %v4305, %v3962
        %v5738 = vpack.c.bf16 %v4991, %v4648
        %v5739 = vpack.c.bf16 %v5677, %v5334
        %v5740 = vpack.c.bf16 %v3622, %v3279
        %v5741 = vpack.c.bf16 %v4308, %v3965
        %v5742 = vpack.c.bf16 %v4994, %v4651
        %v5743 = vpack.c.bf16 %v5680, %v5337
        %v5744 = vpack.c.bf16 %v3624, %v3281
        %v5745 = vpack.c.bf16 %v4310, %v3967
        %v5746 = vpack.c.bf16 %v4996, %v4653
        %v5747 = vpack.c.bf16 %v5682, %v5339
        %v5748 = vld [vmem:[#allocation7] sm:$0xff]
        %5750 = vst [vmem:[#allocation1] ss:$9 sm:$0xff] %v5748
        %v5751 = vld [vmem:[#allocation1] sm:$0xff]
        %v5752 = vld [vmem:[#allocation1 + $0x9] sm:$0xff]
        %v5753 = vld [vmem:[#allocation1 + $0x12] sm:$0xff]
        %v5754 = vld [vmem:[#allocation1 + $0x1b] sm:$0xff]
        %v5755 = vld [vmem:[#allocation1 + $0x24] sm:$0xff]
        %v5756 = vld [vmem:[#allocation1 + $0x2d] sm:$0xff]
        %v5757 = vld [vmem:[#allocation1 + $0x36] sm:$0xff]
        %v5758 = vld [vmem:[#allocation1 + $0x3f] sm:$0xff]
        %v5759 = vpack.i.b16 %v5751, %v5751
        %v5761 = vperm.slane %v5759, 0
        %v5762 = vpack.i.b16 %v5752, %v5752
        %v5764 = vperm.slane %v5762, 0
        %v5765 = vpack.i.b16 %v5753, %v5753
        %v5767 = vperm.slane %v5765, 0
        %v5768 = vpack.i.b16 %v5754, %v5754
        %v5770 = vperm.slane %v5768, 0
        %v5771 = vpack.i.b16 %v5755, %v5755
        %v5773 = vperm.slane %v5771, 0
        %v5774 = vpack.i.b16 %v5756, %v5756
        %v5776 = vperm.slane %v5774, 0
        %v5777 = vpack.i.b16 %v5757, %v5757
        %v5779 = vperm.slane %v5777, 0
        %v5780 = vpack.i.b16 %v5758, %v5758
        %v5782 = vperm.slane %v5780, 0
        %v5783 = vunpack.c.l.bf16 %v5684
        %v5784 = vunpack.c.h.bf16 %v5684
        %v5785 = vunpack.c.l.bf16 %v5685
        %v5786 = vunpack.c.h.bf16 %v5685
        %v5787 = vunpack.c.l.bf16 %v5686
        %v5788 = vunpack.c.h.bf16 %v5686
        %v5789 = vunpack.c.l.bf16 %v5687
        %v5790 = vunpack.c.h.bf16 %v5687
        %v5791 = vunpack.c.l.bf16 %v5688
        %v5792 = vunpack.c.h.bf16 %v5688
        %v5793 = vunpack.c.l.bf16 %v5689
        %v5794 = vunpack.c.h.bf16 %v5689
        %v5795 = vunpack.c.l.bf16 %v5690
        %v5796 = vunpack.c.h.bf16 %v5690
        %v5797 = vunpack.c.l.bf16 %v5691
        %v5798 = vunpack.c.h.bf16 %v5691
        %v5799 = vunpack.c.l.bf16 %v5692
        %v5800 = vunpack.c.h.bf16 %v5692
        %v5801 = vunpack.c.l.bf16 %v5693
        %v5802 = vunpack.c.h.bf16 %v5693
        %v5803 = vunpack.c.l.bf16 %v5694
        %v5804 = vunpack.c.h.bf16 %v5694
        %v5805 = vunpack.c.l.bf16 %v5695
        %v5806 = vunpack.c.h.bf16 %v5695
        %v5807 = vunpack.c.l.bf16 %v5696
        %v5808 = vunpack.c.h.bf16 %v5696
        %v5809 = vunpack.c.l.bf16 %v5697
        %v5810 = vunpack.c.h.bf16 %v5697
        %v5811 = vunpack.c.l.bf16 %v5698
        %v5812 = vunpack.c.h.bf16 %v5698
        %v5813 = vunpack.c.l.bf16 %v5699
        %v5814 = vunpack.c.h.bf16 %v5699
        %v5815 = vunpack.c.l.bf16 %v5700
        %v5816 = vunpack.c.h.bf16 %v5700
        %v5817 = vunpack.c.l.bf16 %v5701
        %v5818 = vunpack.c.h.bf16 %v5701
        %v5819 = vunpack.c.l.bf16 %v5702
        %v5820 = vunpack.c.h.bf16 %v5702
        %v5821 = vunpack.c.l.bf16 %v5703
        %v5822 = vunpack.c.h.bf16 %v5703
        %v5823 = vunpack.c.l.bf16 %v5704
        %v5824 = vunpack.c.h.bf16 %v5704
        %v5825 = vunpack.c.l.bf16 %v5705
        %v5826 = vunpack.c.h.bf16 %v5705
        %v5827 = vunpack.c.l.bf16 %v5706
        %v5828 = vunpack.c.h.bf16 %v5706
        %v5829 = vunpack.c.l.bf16 %v5707
        %v5830 = vunpack.c.h.bf16 %v5707
        %v5831 = vunpack.c.l.bf16 %v5708
        %v5832 = vunpack.c.h.bf16 %v5708
        %v5833 = vunpack.c.l.bf16 %v5709
        %v5834 = vunpack.c.h.bf16 %v5709
        %v5835 = vunpack.c.l.bf16 %v5710
        %v5836 = vunpack.c.h.bf16 %v5710
        %v5837 = vunpack.c.l.bf16 %v5711
        %v5838 = vunpack.c.h.bf16 %v5711
        %v5839 = vunpack.c.l.bf16 %v5712
        %v5840 = vunpack.c.h.bf16 %v5712
        %v5841 = vunpack.c.l.bf16 %v5713
        %v5842 = vunpack.c.h.bf16 %v5713
        %v5843 = vunpack.c.l.bf16 %v5714
        %v5844 = vunpack.c.h.bf16 %v5714
        %v5845 = vunpack.c.l.bf16 %v5715
        %v5846 = vunpack.c.h.bf16 %v5715
        %v5847 = vunpack.c.l.bf16 %v5716
        %v5848 = vunpack.c.h.bf16 %v5716
        %v5849 = vunpack.c.l.bf16 %v5717
        %v5850 = vunpack.c.h.bf16 %v5717
        %v5851 = vunpack.c.l.bf16 %v5718
        %v5852 = vunpack.c.h.bf16 %v5718
        %v5853 = vunpack.c.l.bf16 %v5719
        %v5854 = vunpack.c.h.bf16 %v5719
        %v5855 = vunpack.c.l.bf16 %v5720
        %v5856 = vunpack.c.h.bf16 %v5720
        %v5857 = vunpack.c.l.bf16 %v5721
        %v5858 = vunpack.c.h.bf16 %v5721
        %v5859 = vunpack.c.l.bf16 %v5722
        %v5860 = vunpack.c.h.bf16 %v5722
        %v5861 = vunpack.c.l.bf16 %v5723
        %v5862 = vunpack.c.h.bf16 %v5723
        %v5863 = vunpack.c.l.bf16 %v5724
        %v5864 = vunpack.c.h.bf16 %v5724
        %v5865 = vunpack.c.l.bf16 %v5725
        %v5866 = vunpack.c.h.bf16 %v5725
        %v5867 = vunpack.c.l.bf16 %v5726
        %v5868 = vunpack.c.h.bf16 %v5726
        %v5869 = vunpack.c.l.bf16 %v5727
        %v5870 = vunpack.c.h.bf16 %v5727
        %v5871 = vunpack.c.l.bf16 %v5728
        %v5872 = vunpack.c.h.bf16 %v5728
        %v5873 = vunpack.c.l.bf16 %v5729
        %v5874 = vunpack.c.h.bf16 %v5729
        %v5875 = vunpack.c.l.bf16 %v5730
        %v5876 = vunpack.c.h.bf16 %v5730
        %v5877 = vunpack.c.l.bf16 %v5731
        %v5878 = vunpack.c.h.bf16 %v5731
        %v5879 = vunpack.c.l.bf16 %v5732
        %v5880 = vunpack.c.h.bf16 %v5732
        %v5881 = vunpack.c.l.bf16 %v5733
        %v5882 = vunpack.c.h.bf16 %v5733
        %v5883 = vunpack.c.l.bf16 %v5734
        %v5884 = vunpack.c.h.bf16 %v5734
        %v5885 = vunpack.c.l.bf16 %v5735
        %v5886 = vunpack.c.h.bf16 %v5735
        %v5887 = vunpack.c.l.bf16 %v5736
        %v5888 = vunpack.c.h.bf16 %v5736
        %v5889 = vunpack.c.l.bf16 %v5737
        %v5890 = vunpack.c.h.bf16 %v5737
        %v5891 = vunpack.c.l.bf16 %v5738
        %v5892 = vunpack.c.h.bf16 %v5738
        %v5893 = vunpack.c.l.bf16 %v5739
        %v5894 = vunpack.c.h.bf16 %v5739
        %v5895 = vunpack.c.l.bf16 %v5740
        %v5896 = vunpack.c.h.bf16 %v5740
        %v5897 = vunpack.c.l.bf16 %v5741
        %v5898 = vunpack.c.h.bf16 %v5741
        %v5899 = vunpack.c.l.bf16 %v5742
        %v5900 = vunpack.c.h.bf16 %v5742
        %v5901 = vunpack.c.l.bf16 %v5743
        %v5902 = vunpack.c.h.bf16 %v5743
        %v5903 = vunpack.c.l.bf16 %v5744
        %v5904 = vunpack.c.h.bf16 %v5744
        %v5905 = vunpack.c.l.bf16 %v5745
        %v5906 = vunpack.c.h.bf16 %v5745
        %v5907 = vunpack.c.l.bf16 %v5746
        %v5908 = vunpack.c.h.bf16 %v5746
        %v5909 = vunpack.c.l.bf16 %v5747
        %v5910 = vunpack.c.h.bf16 %v5747
        %v5911 = vunpack.c.l.bf16 %v5761
        %v5912 = vunpack.c.l.bf16 %v5764
        %v5913 = vunpack.c.l.bf16 %v5767
        %v5914 = vunpack.c.l.bf16 %v5770
        %v5915 = vunpack.c.l.bf16 %v5773
        %v5916 = vunpack.c.l.bf16 %v5776
        %v5917 = vunpack.c.l.bf16 %v5779
        %v5918 = vunpack.c.l.bf16 %v5782
        %v5919 = vadd.f32 %v5783, %v5911
        %v5920 = vadd.f32 %v5784, %v5912
        %v5921 = vadd.f32 %v5785, %v5913
        %v5922 = vadd.f32 %v5786, %v5914
        %v5923 = vadd.f32 %v5787, %v5915
        %v5924 = vadd.f32 %v5788, %v5916
        %v5925 = vadd.f32 %v5789, %v5917
        %v5926 = vadd.f32 %v5790, %v5918
        %v5927 = vadd.f32 %v5791, %v5911
        %v5928 = vadd.f32 %v5792, %v5912
        %v5929 = vadd.f32 %v5793, %v5913
        %v5930 = vadd.f32 %v5794, %v5914
        %v5931 = vadd.f32 %v5795, %v5915
        %v5932 = vadd.f32 %v5796, %v5916
        %v5933 = vadd.f32 %v5797, %v5917
        %v5934 = vadd.f32 %v5798, %v5918
        %v5935 = vadd.f32 %v5799, %v5911
        %v5936 = vadd.f32 %v5800, %v5912
        %v5937 = vadd.f32 %v5801, %v5913
        %v5938 = vadd.f32 %v5802, %v5914
        %v5939 = vadd.f32 %v5803, %v5915
        %v5940 = vadd.f32 %v5804, %v5916
        %v5941 = vadd.f32 %v5805, %v5917
        %v5942 = vadd.f32 %v5806, %v5918
        %v5943 = vadd.f32 %v5807, %v5911
        %v5944 = vadd.f32 %v5808, %v5912
        %v5945 = vadd.f32 %v5809, %v5913
        %v5946 = vadd.f32 %v5810, %v5914
        %v5947 = vadd.f32 %v5811, %v5915
        %v5948 = vadd.f32 %v5812, %v5916
        %v5949 = vadd.f32 %v5813, %v5917
        %v5950 = vadd.f32 %v5814, %v5918
        %v5951 = vadd.f32 %v5815, %v5911
        %v5952 = vadd.f32 %v5816, %v5912
        %v5953 = vadd.f32 %v5817, %v5913
        %v5954 = vadd.f32 %v5818, %v5914
        %v5955 = vadd.f32 %v5819, %v5915
        %v5956 = vadd.f32 %v5820, %v5916
        %v5957 = vadd.f32 %v5821, %v5917
        %v5958 = vadd.f32 %v5822, %v5918
        %v5959 = vadd.f32 %v5823, %v5911
        %v5960 = vadd.f32 %v5824, %v5912
        %v5961 = vadd.f32 %v5825, %v5913
        %v5962 = vadd.f32 %v5826, %v5914
        %v5963 = vadd.f32 %v5827, %v5915
        %v5964 = vadd.f32 %v5828, %v5916
        %v5965 = vadd.f32 %v5829, %v5917
        %v5966 = vadd.f32 %v5830, %v5918
        %v5967 = vadd.f32 %v5831, %v5911
        %v5968 = vadd.f32 %v5832, %v5912
        %v5969 = vadd.f32 %v5833, %v5913
        %v5970 = vadd.f32 %v5834, %v5914
        %v5971 = vadd.f32 %v5835, %v5915
        %v5972 = vadd.f32 %v5836, %v5916
        %v5973 = vadd.f32 %v5837, %v5917
        %v5974 = vadd.f32 %v5838, %v5918
        %v5975 = vadd.f32 %v5839, %v5911
        %v5976 = vadd.f32 %v5840, %v5912
        %v5977 = vadd.f32 %v5841, %v5913
        %v5978 = vadd.f32 %v5842, %v5914
        %v5979 = vadd.f32 %v5843, %v5915
        %v5980 = vadd.f32 %v5844, %v5916
        %v5981 = vadd.f32 %v5845, %v5917
        %v5982 = vadd.f32 %v5846, %v5918
        %v5983 = vadd.f32 %v5847, %v5911
        %v5984 = vadd.f32 %v5848, %v5912
        %v5985 = vadd.f32 %v5849, %v5913
        %v5986 = vadd.f32 %v5850, %v5914
        %v5987 = vadd.f32 %v5851, %v5915
        %v5988 = vadd.f32 %v5852, %v5916
        %v5989 = vadd.f32 %v5853, %v5917
        %v5990 = vadd.f32 %v5854, %v5918
        %v5991 = vadd.f32 %v5855, %v5911
        %v5992 = vadd.f32 %v5856, %v5912
        %v5993 = vadd.f32 %v5857, %v5913
        %v5994 = vadd.f32 %v5858, %v5914
        %v5995 = vadd.f32 %v5859, %v5915
        %v5996 = vadd.f32 %v5860, %v5916
        %v5997 = vadd.f32 %v5861, %v5917
        %v5998 = vadd.f32 %v5862, %v5918
        %v5999 = vadd.f32 %v5863, %v5911
        %v6000 = vadd.f32 %v5864, %v5912
        %v6001 = vadd.f32 %v5865, %v5913
        %v6002 = vadd.f32 %v5866, %v5914
        %v6003 = vadd.f32 %v5867, %v5915
        %v6004 = vadd.f32 %v5868, %v5916
        %v6005 = vadd.f32 %v5869, %v5917
        %v6006 = vadd.f32 %v5870, %v5918
        %v6007 = vadd.f32 %v5871, %v5911
        %v6008 = vadd.f32 %v5872, %v5912
        %v6009 = vadd.f32 %v5873, %v5913
        %v6010 = vadd.f32 %v5874, %v5914
        %v6011 = vadd.f32 %v5875, %v5915
        %v6012 = vadd.f32 %v5876, %v5916
        %v6013 = vadd.f32 %v5877, %v5917
        %v6014 = vadd.f32 %v5878, %v5918
        %v6015 = vadd.f32 %v5879, %v5911
        %v6016 = vadd.f32 %v5880, %v5912
        %v6017 = vadd.f32 %v5881, %v5913
        %v6018 = vadd.f32 %v5882, %v5914
        %v6019 = vadd.f32 %v5883, %v5915
        %v6020 = vadd.f32 %v5884, %v5916
        %v6021 = vadd.f32 %v5885, %v5917
        %v6022 = vadd.f32 %v5886, %v5918
        %v6023 = vadd.f32 %v5887, %v5911
        %v6024 = vadd.f32 %v5888, %v5912
        %v6025 = vadd.f32 %v5889, %v5913
        %v6026 = vadd.f32 %v5890, %v5914
        %v6027 = vadd.f32 %v5891, %v5915
        %v6028 = vadd.f32 %v5892, %v5916
        %v6029 = vadd.f32 %v5893, %v5917
        %v6030 = vadd.f32 %v5894, %v5918
        %v6031 = vadd.f32 %v5895, %v5911
        %v6032 = vadd.f32 %v5896, %v5912
        %v6033 = vadd.f32 %v5897, %v5913
        %v6034 = vadd.f32 %v5898, %v5914
        %v6035 = vadd.f32 %v5899, %v5915
        %v6036 = vadd.f32 %v5900, %v5916
        %v6037 = vadd.f32 %v5901, %v5917
        %v6038 = vadd.f32 %v5902, %v5918
        %v6039 = vadd.f32 %v5903, %v5911
        %v6040 = vadd.f32 %v5904, %v5912
        %v6041 = vadd.f32 %v5905, %v5913
        %v6042 = vadd.f32 %v5906, %v5914
        %v6043 = vadd.f32 %v5907, %v5915
        %v6044 = vadd.f32 %v5908, %v5916
        %v6045 = vadd.f32 %v5909, %v5917
        %v6046 = vadd.f32 %v5910, %v5918
        %v6047 = vpack.c.bf16 %v5920, %v5919
        %v6048 = vpack.c.bf16 %v5922, %v5921
        %v6049 = vpack.c.bf16 %v5924, %v5923
        %v6050 = vpack.c.bf16 %v5926, %v5925
        %v6051 = vpack.c.bf16 %v5928, %v5927
        %v6052 = vpack.c.bf16 %v5930, %v5929
        %v6053 = vpack.c.bf16 %v5932, %v5931
        %v6054 = vpack.c.bf16 %v5934, %v5933
        %v6055 = vpack.c.bf16 %v5936, %v5935
        %v6056 = vpack.c.bf16 %v5938, %v5937
        %v6057 = vpack.c.bf16 %v5940, %v5939
        %v6058 = vpack.c.bf16 %v5942, %v5941
        %v6059 = vpack.c.bf16 %v5944, %v5943
        %v6060 = vpack.c.bf16 %v5946, %v5945
        %v6061 = vpack.c.bf16 %v5948, %v5947
        %v6062 = vpack.c.bf16 %v5950, %v5949
        %v6063 = vpack.c.bf16 %v5952, %v5951
        %v6064 = vpack.c.bf16 %v5954, %v5953
        %v6065 = vpack.c.bf16 %v5956, %v5955
        %v6066 = vpack.c.bf16 %v5958, %v5957
        %v6067 = vpack.c.bf16 %v5960, %v5959
        %v6068 = vpack.c.bf16 %v5962, %v5961
        %v6069 = vpack.c.bf16 %v5964, %v5963
        %v6070 = vpack.c.bf16 %v5966, %v5965
        %v6071 = vpack.c.bf16 %v5968, %v5967
        %v6072 = vpack.c.bf16 %v5970, %v5969
        %v6073 = vpack.c.bf16 %v5972, %v5971
        %v6074 = vpack.c.bf16 %v5974, %v5973
        %v6075 = vpack.c.bf16 %v5976, %v5975
        %v6076 = vpack.c.bf16 %v5978, %v5977
        %v6077 = vpack.c.bf16 %v5980, %v5979
        %v6078 = vpack.c.bf16 %v5982, %v5981
        %v6079 = vpack.c.bf16 %v5984, %v5983
        %v6080 = vpack.c.bf16 %v5986, %v5985
        %v6081 = vpack.c.bf16 %v5988, %v5987
        %v6082 = vpack.c.bf16 %v5990, %v5989
        %v6083 = vpack.c.bf16 %v5992, %v5991
        %v6084 = vpack.c.bf16 %v5994, %v5993
        %v6085 = vpack.c.bf16 %v5996, %v5995
        %v6086 = vpack.c.bf16 %v5998, %v5997
        %v6087 = vpack.c.bf16 %v6000, %v5999
        %v6088 = vpack.c.bf16 %v6002, %v6001
        %v6089 = vpack.c.bf16 %v6004, %v6003
        %v6090 = vpack.c.bf16 %v6006, %v6005
        %v6091 = vpack.c.bf16 %v6008, %v6007
        %v6092 = vpack.c.bf16 %v6010, %v6009
        %v6093 = vpack.c.bf16 %v6012, %v6011
        %v6094 = vpack.c.bf16 %v6014, %v6013
        %v6095 = vpack.c.bf16 %v6016, %v6015
        %v6096 = vpack.c.bf16 %v6018, %v6017
        %v6097 = vpack.c.bf16 %v6020, %v6019
        %v6098 = vpack.c.bf16 %v6022, %v6021
        %v6099 = vpack.c.bf16 %v6024, %v6023
        %v6100 = vpack.c.bf16 %v6026, %v6025
        %v6101 = vpack.c.bf16 %v6028, %v6027
        %v6102 = vpack.c.bf16 %v6030, %v6029
        %v6103 = vpack.c.bf16 %v6032, %v6031
        %v6104 = vpack.c.bf16 %v6034, %v6033
        %v6105 = vpack.c.bf16 %v6036, %v6035
        %v6106 = vpack.c.bf16 %v6038, %v6037
        %v6107 = vpack.c.bf16 %v6040, %v6039
        %v6108 = vpack.c.bf16 %v6042, %v6041
        %v6109 = vpack.c.bf16 %v6044, %v6043
        %v6110 = vpack.c.bf16 %v6046, %v6045
        %v6111 = vunpack.c.l.bf16 %v6047
        %v6112 = vunpack.c.h.bf16 %v6047
        %v6113 = vunpack.c.l.bf16 %v6048
        %v6114 = vunpack.c.h.bf16 %v6048
        %v6115 = vunpack.c.l.bf16 %v6049
        %v6116 = vunpack.c.h.bf16 %v6049
        %v6117 = vunpack.c.l.bf16 %v6050
        %v6118 = vunpack.c.h.bf16 %v6050
        %v6119 = vunpack.c.l.bf16 %v6051
        %v6120 = vunpack.c.h.bf16 %v6051
        %v6121 = vunpack.c.l.bf16 %v6052
        %v6122 = vunpack.c.h.bf16 %v6052
        %v6123 = vunpack.c.l.bf16 %v6053
        %v6124 = vunpack.c.h.bf16 %v6053
        %v6125 = vunpack.c.l.bf16 %v6054
        %v6126 = vunpack.c.h.bf16 %v6054
        %v6127 = vunpack.c.l.bf16 %v6055
        %v6128 = vunpack.c.h.bf16 %v6055
        %v6129 = vunpack.c.l.bf16 %v6056
        %v6130 = vunpack.c.h.bf16 %v6056
        %v6131 = vunpack.c.l.bf16 %v6057
        %v6132 = vunpack.c.h.bf16 %v6057
        %v6133 = vunpack.c.l.bf16 %v6058
        %v6134 = vunpack.c.h.bf16 %v6058
        %v6135 = vunpack.c.l.bf16 %v6059
        %v6136 = vunpack.c.h.bf16 %v6059
        %v6137 = vunpack.c.l.bf16 %v6060
        %v6138 = vunpack.c.h.bf16 %v6060
        %v6139 = vunpack.c.l.bf16 %v6061
        %v6140 = vunpack.c.h.bf16 %v6061
        %v6141 = vunpack.c.l.bf16 %v6062
        %v6142 = vunpack.c.h.bf16 %v6062
        %v6143 = vunpack.c.l.bf16 %v6063
        %v6144 = vunpack.c.h.bf16 %v6063
        %v6145 = vunpack.c.l.bf16 %v6064
        %v6146 = vunpack.c.h.bf16 %v6064
        %v6147 = vunpack.c.l.bf16 %v6065
        %v6148 = vunpack.c.h.bf16 %v6065
        %v6149 = vunpack.c.l.bf16 %v6066
        %v6150 = vunpack.c.h.bf16 %v6066
        %v6151 = vunpack.c.l.bf16 %v6067
        %v6152 = vunpack.c.h.bf16 %v6067
        %v6153 = vunpack.c.l.bf16 %v6068
        %v6154 = vunpack.c.h.bf16 %v6068
        %v6155 = vunpack.c.l.bf16 %v6069
        %v6156 = vunpack.c.h.bf16 %v6069
        %v6157 = vunpack.c.l.bf16 %v6070
        %v6158 = vunpack.c.h.bf16 %v6070
        %v6159 = vunpack.c.l.bf16 %v6071
        %v6160 = vunpack.c.h.bf16 %v6071
        %v6161 = vunpack.c.l.bf16 %v6072
        %v6162 = vunpack.c.h.bf16 %v6072
        %v6163 = vunpack.c.l.bf16 %v6073
        %v6164 = vunpack.c.h.bf16 %v6073
        %v6165 = vunpack.c.l.bf16 %v6074
        %v6166 = vunpack.c.h.bf16 %v6074
        %v6167 = vunpack.c.l.bf16 %v6075
        %v6168 = vunpack.c.h.bf16 %v6075
        %v6169 = vunpack.c.l.bf16 %v6076
        %v6170 = vunpack.c.h.bf16 %v6076
        %v6171 = vunpack.c.l.bf16 %v6077
        %v6172 = vunpack.c.h.bf16 %v6077
        %v6173 = vunpack.c.l.bf16 %v6078
        %v6174 = vunpack.c.h.bf16 %v6078
        %v6175 = vunpack.c.l.bf16 %v6079
        %v6176 = vunpack.c.h.bf16 %v6079
        %v6177 = vunpack.c.l.bf16 %v6080
        %v6178 = vunpack.c.h.bf16 %v6080
        %v6179 = vunpack.c.l.bf16 %v6081
        %v6180 = vunpack.c.h.bf16 %v6081
        %v6181 = vunpack.c.l.bf16 %v6082
        %v6182 = vunpack.c.h.bf16 %v6082
        %v6183 = vunpack.c.l.bf16 %v6083
        %v6184 = vunpack.c.h.bf16 %v6083
        %v6185 = vunpack.c.l.bf16 %v6084
        %v6186 = vunpack.c.h.bf16 %v6084
        %v6187 = vunpack.c.l.bf16 %v6085
        %v6188 = vunpack.c.h.bf16 %v6085
        %v6189 = vunpack.c.l.bf16 %v6086
        %v6190 = vunpack.c.h.bf16 %v6086
        %v6191 = vunpack.c.l.bf16 %v6087
        %v6192 = vunpack.c.h.bf16 %v6087
        %v6193 = vunpack.c.l.bf16 %v6088
        %v6194 = vunpack.c.h.bf16 %v6088
        %v6195 = vunpack.c.l.bf16 %v6089
        %v6196 = vunpack.c.h.bf16 %v6089
        %v6197 = vunpack.c.l.bf16 %v6090
        %v6198 = vunpack.c.h.bf16 %v6090
        %v6199 = vunpack.c.l.bf16 %v6091
        %v6200 = vunpack.c.h.bf16 %v6091
        %v6201 = vunpack.c.l.bf16 %v6092
        %v6202 = vunpack.c.h.bf16 %v6092
        %v6203 = vunpack.c.l.bf16 %v6093
        %v6204 = vunpack.c.h.bf16 %v6093
        %v6205 = vunpack.c.l.bf16 %v6094
        %v6206 = vunpack.c.h.bf16 %v6094
        %v6207 = vunpack.c.l.bf16 %v6095
        %v6208 = vunpack.c.h.bf16 %v6095
        %v6209 = vunpack.c.l.bf16 %v6096
        %v6210 = vunpack.c.h.bf16 %v6096
        %v6211 = vunpack.c.l.bf16 %v6097
        %v6212 = vunpack.c.h.bf16 %v6097
        %v6213 = vunpack.c.l.bf16 %v6098
        %v6214 = vunpack.c.h.bf16 %v6098
        %v6215 = vunpack.c.l.bf16 %v6099
        %v6216 = vunpack.c.h.bf16 %v6099
        %v6217 = vunpack.c.l.bf16 %v6100
        %v6218 = vunpack.c.h.bf16 %v6100
        %v6219 = vunpack.c.l.bf16 %v6101
        %v6220 = vunpack.c.h.bf16 %v6101
        %v6221 = vunpack.c.l.bf16 %v6102
        %v6222 = vunpack.c.h.bf16 %v6102
        %v6223 = vunpack.c.l.bf16 %v6103
        %v6224 = vunpack.c.h.bf16 %v6103
        %v6225 = vunpack.c.l.bf16 %v6104
        %v6226 = vunpack.c.h.bf16 %v6104
        %v6227 = vunpack.c.l.bf16 %v6105
        %v6228 = vunpack.c.h.bf16 %v6105
        %v6229 = vunpack.c.l.bf16 %v6106
        %v6230 = vunpack.c.h.bf16 %v6106
        %v6231 = vunpack.c.l.bf16 %v6107
        %v6232 = vunpack.c.h.bf16 %v6107
        %v6233 = vunpack.c.l.bf16 %v6108
        %v6234 = vunpack.c.h.bf16 %v6108
        %v6235 = vunpack.c.l.bf16 %v6109
        %v6236 = vunpack.c.h.bf16 %v6109
        %v6237 = vunpack.c.l.bf16 %v6110
        %v6238 = vunpack.c.h.bf16 %v6110
        %vm6239 = vcmp.gt.f32.partialorder %v6111, 0.0
        %vm6240 = vcmp.gt.f32.partialorder %v6112, 0.0
        %vm6241 = vcmp.gt.f32.partialorder %v6113, 0.0
        %vm6242 = vcmp.gt.f32.partialorder %v6114, 0.0
        %vm6243 = vcmp.gt.f32.partialorder %v6115, 0.0
        %vm6244 = vcmp.gt.f32.partialorder %v6116, 0.0
        %vm6245 = vcmp.gt.f32.partialorder %v6117, 0.0
        %vm6246 = vcmp.gt.f32.partialorder %v6118, 0.0
        %vm6247 = vcmp.gt.f32.partialorder %v6119, 0.0
        %vm6248 = vcmp.gt.f32.partialorder %v6120, 0.0
        %vm6249 = vcmp.gt.f32.partialorder %v6121, 0.0
        %vm6250 = vcmp.gt.f32.partialorder %v6122, 0.0
        %vm6251 = vcmp.gt.f32.partialorder %v6123, 0.0
        %vm6252 = vcmp.gt.f32.partialorder %v6124, 0.0
        %vm6253 = vcmp.gt.f32.partialorder %v6125, 0.0
        %vm6254 = vcmp.gt.f32.partialorder %v6126, 0.0
        %vm6255 = vcmp.gt.f32.partialorder %v6127, 0.0
        %vm6256 = vcmp.gt.f32.partialorder %v6128, 0.0
        %vm6257 = vcmp.gt.f32.partialorder %v6129, 0.0
        %vm6258 = vcmp.gt.f32.partialorder %v6130, 0.0
        %vm6259 = vcmp.gt.f32.partialorder %v6131, 0.0
        %vm6260 = vcmp.gt.f32.partialorder %v6132, 0.0
        %vm6261 = vcmp.gt.f32.partialorder %v6133, 0.0
        %vm6262 = vcmp.gt.f32.partialorder %v6134, 0.0
        %vm6263 = vcmp.gt.f32.partialorder %v6135, 0.0
        %vm6264 = vcmp.gt.f32.partialorder %v6136, 0.0
        %vm6265 = vcmp.gt.f32.partialorder %v6137, 0.0
        %vm6266 = vcmp.gt.f32.partialorder %v6138, 0.0
        %vm6267 = vcmp.gt.f32.partialorder %v6139, 0.0
        %vm6268 = vcmp.gt.f32.partialorder %v6140, 0.0
        %vm6269 = vcmp.gt.f32.partialorder %v6141, 0.0
        %vm6270 = vcmp.gt.f32.partialorder %v6142, 0.0
        %vm6271 = vcmp.gt.f32.partialorder %v6143, 0.0
        %vm6272 = vcmp.gt.f32.partialorder %v6144, 0.0
        %vm6273 = vcmp.gt.f32.partialorder %v6145, 0.0
        %vm6274 = vcmp.gt.f32.partialorder %v6146, 0.0
        %vm6275 = vcmp.gt.f32.partialorder %v6147, 0.0
        %vm6276 = vcmp.gt.f32.partialorder %v6148, 0.0
        %vm6277 = vcmp.gt.f32.partialorder %v6149, 0.0
        %vm6278 = vcmp.gt.f32.partialorder %v6150, 0.0
        %vm6279 = vcmp.gt.f32.partialorder %v6151, 0.0
        %vm6280 = vcmp.gt.f32.partialorder %v6152, 0.0
        %vm6281 = vcmp.gt.f32.partialorder %v6153, 0.0
        %vm6282 = vcmp.gt.f32.partialorder %v6154, 0.0
        %vm6283 = vcmp.gt.f32.partialorder %v6155, 0.0
        %vm6284 = vcmp.gt.f32.partialorder %v6156, 0.0
        %vm6285 = vcmp.gt.f32.partialorder %v6157, 0.0
        %vm6286 = vcmp.gt.f32.partialorder %v6158, 0.0
        %vm6287 = vcmp.gt.f32.partialorder %v6159, 0.0
        %vm6288 = vcmp.gt.f32.partialorder %v6160, 0.0
        %vm6289 = vcmp.gt.f32.partialorder %v6161, 0.0
        %vm6290 = vcmp.gt.f32.partialorder %v6162, 0.0
        %vm6291 = vcmp.gt.f32.partialorder %v6163, 0.0
        %vm6292 = vcmp.gt.f32.partialorder %v6164, 0.0
        %vm6293 = vcmp.gt.f32.partialorder %v6165, 0.0
        %vm6294 = vcmp.gt.f32.partialorder %v6166, 0.0
        %vm6295 = vcmp.gt.f32.partialorder %v6167, 0.0
        %vm6296 = vcmp.gt.f32.partialorder %v6168, 0.0
        %vm6297 = vcmp.gt.f32.partialorder %v6169, 0.0
        %vm6298 = vcmp.gt.f32.partialorder %v6170, 0.0
        %vm6299 = vcmp.gt.f32.partialorder %v6171, 0.0
        %vm6300 = vcmp.gt.f32.partialorder %v6172, 0.0
        %vm6301 = vcmp.gt.f32.partialorder %v6173, 0.0
        %vm6302 = vcmp.gt.f32.partialorder %v6174, 0.0
        %vm6303 = vcmp.gt.f32.partialorder %v6175, 0.0
        %vm6304 = vcmp.gt.f32.partialorder %v6176, 0.0
        %vm6305 = vcmp.gt.f32.partialorder %v6177, 0.0
        %vm6306 = vcmp.gt.f32.partialorder %v6178, 0.0
        %vm6307 = vcmp.gt.f32.partialorder %v6179, 0.0
        %vm6308 = vcmp.gt.f32.partialorder %v6180, 0.0
        %vm6309 = vcmp.gt.f32.partialorder %v6181, 0.0
        %vm6310 = vcmp.gt.f32.partialorder %v6182, 0.0
        %vm6311 = vcmp.gt.f32.partialorder %v6183, 0.0
        %vm6312 = vcmp.gt.f32.partialorder %v6184, 0.0
        %vm6313 = vcmp.gt.f32.partialorder %v6185, 0.0
        %vm6314 = vcmp.gt.f32.partialorder %v6186, 0.0
        %vm6315 = vcmp.gt.f32.partialorder %v6187, 0.0
        %vm6316 = vcmp.gt.f32.partialorder %v6188, 0.0
        %vm6317 = vcmp.gt.f32.partialorder %v6189, 0.0
        %vm6318 = vcmp.gt.f32.partialorder %v6190, 0.0
        %vm6319 = vcmp.gt.f32.partialorder %v6191, 0.0
        %vm6320 = vcmp.gt.f32.partialorder %v6192, 0.0
        %vm6321 = vcmp.gt.f32.partialorder %v6193, 0.0
        %vm6322 = vcmp.gt.f32.partialorder %v6194, 0.0
        %vm6323 = vcmp.gt.f32.partialorder %v6195, 0.0
        %vm6324 = vcmp.gt.f32.partialorder %v6196, 0.0
        %vm6325 = vcmp.gt.f32.partialorder %v6197, 0.0
        %vm6326 = vcmp.gt.f32.partialorder %v6198, 0.0
        %vm6327 = vcmp.gt.f32.partialorder %v6199, 0.0
        %vm6328 = vcmp.gt.f32.partialorder %v6200, 0.0
        %vm6329 = vcmp.gt.f32.partialorder %v6201, 0.0
        %vm6330 = vcmp.gt.f32.partialorder %v6202, 0.0
        %vm6331 = vcmp.gt.f32.partialorder %v6203, 0.0
        %vm6332 = vcmp.gt.f32.partialorder %v6204, 0.0
        %vm6333 = vcmp.gt.f32.partialorder %v6205, 0.0
        %vm6334 = vcmp.gt.f32.partialorder %v6206, 0.0
        %vm6335 = vcmp.gt.f32.partialorder %v6207, 0.0
        %vm6336 = vcmp.gt.f32.partialorder %v6208, 0.0
        %vm6337 = vcmp.gt.f32.partialorder %v6209, 0.0
        %vm6338 = vcmp.gt.f32.partialorder %v6210, 0.0
        %vm6339 = vcmp.gt.f32.partialorder %v6211, 0.0
        %vm6340 = vcmp.gt.f32.partialorder %v6212, 0.0
        %vm6341 = vcmp.gt.f32.partialorder %v6213, 0.0
        %vm6342 = vcmp.gt.f32.partialorder %v6214, 0.0
        %vm6343 = vcmp.gt.f32.partialorder %v6215, 0.0
        %vm6344 = vcmp.gt.f32.partialorder %v6216, 0.0
        %vm6345 = vcmp.gt.f32.partialorder %v6217, 0.0
        %vm6346 = vcmp.gt.f32.partialorder %v6218, 0.0
        %vm6347 = vcmp.gt.f32.partialorder %v6219, 0.0
        %vm6348 = vcmp.gt.f32.partialorder %v6220, 0.0
        %vm6349 = vcmp.gt.f32.partialorder %v6221, 0.0
        %vm6350 = vcmp.gt.f32.partialorder %v6222, 0.0
        %vm6351 = vcmp.gt.f32.partialorder %v6223, 0.0
        %vm6352 = vcmp.gt.f32.partialorder %v6224, 0.0
        %vm6353 = vcmp.gt.f32.partialorder %v6225, 0.0
        %vm6354 = vcmp.gt.f32.partialorder %v6226, 0.0
        %vm6355 = vcmp.gt.f32.partialorder %v6227, 0.0
        %vm6356 = vcmp.gt.f32.partialorder %v6228, 0.0
        %vm6357 = vcmp.gt.f32.partialorder %v6229, 0.0
        %vm6358 = vcmp.gt.f32.partialorder %v6230, 0.0
        %vm6359 = vcmp.gt.f32.partialorder %v6231, 0.0
        %vm6360 = vcmp.gt.f32.partialorder %v6232, 0.0
        %vm6361 = vcmp.gt.f32.partialorder %v6233, 0.0
        %vm6362 = vcmp.gt.f32.partialorder %v6234, 0.0
        %vm6363 = vcmp.gt.f32.partialorder %v6235, 0.0
        %vm6364 = vcmp.gt.f32.partialorder %v6236, 0.0
        %vm6365 = vcmp.gt.f32.partialorder %v6237, 0.0
        %vm6366 = vcmp.gt.f32.partialorder %v6238, 0.0
        %v6367 = vmul.f32 %v6111, 0.20019531
        %v6368 = vmul.f32 %v6112, 0.20019531
        %v6369 = vmul.f32 %v6113, 0.20019531
        %v6370 = vmul.f32 %v6114, 0.20019531
        %v6371 = vmul.f32 %v6115, 0.20019531
        %v6372 = vmul.f32 %v6116, 0.20019531
        %v6373 = vmul.f32 %v6117, 0.20019531
        %v6374 = vmul.f32 %v6118, 0.20019531
        %v6375 = vmul.f32 %v6119, 0.20019531
        %v6376 = vmul.f32 %v6120, 0.20019531
        %v6377 = vmul.f32 %v6121, 0.20019531
        %v6378 = vmul.f32 %v6122, 0.20019531
        %v6379 = vmul.f32 %v6123, 0.20019531
        %v6380 = vmul.f32 %v6124, 0.20019531
        %v6381 = vmul.f32 %v6125, 0.20019531
        %v6382 = vmul.f32 %v6126, 0.20019531
        %v6383 = vmul.f32 %v6127, 0.20019531
        %v6384 = vmul.f32 %v6128, 0.20019531
        %v6385 = vmul.f32 %v6129, 0.20019531
        %v6386 = vmul.f32 %v6130, 0.20019531
        %v6387 = vmul.f32 %v6131, 0.20019531
        %v6388 = vmul.f32 %v6132, 0.20019531
        %v6389 = vmul.f32 %v6133, 0.20019531
        %v6390 = vmul.f32 %v6134, 0.20019531
        %v6391 = vmul.f32 %v6135, 0.20019531
        %v6392 = vmul.f32 %v6136, 0.20019531
        %v6393 = vmul.f32 %v6137, 0.20019531
        %v6394 = vmul.f32 %v6138, 0.20019531
        %v6395 = vmul.f32 %v6139, 0.20019531
        %v6396 = vmul.f32 %v6140, 0.20019531
        %v6397 = vmul.f32 %v6141, 0.20019531
        %v6398 = vmul.f32 %v6142, 0.20019531
        %v6399 = vmul.f32 %v6143, 0.20019531
        %v6400 = vmul.f32 %v6144, 0.20019531
        %v6401 = vmul.f32 %v6145, 0.20019531
        %v6402 = vmul.f32 %v6146, 0.20019531
        %v6403 = vmul.f32 %v6147, 0.20019531
        %v6404 = vmul.f32 %v6148, 0.20019531
        %v6405 = vmul.f32 %v6149, 0.20019531
        %v6406 = vmul.f32 %v6150, 0.20019531
        %v6407 = vmul.f32 %v6151, 0.20019531
        %v6408 = vmul.f32 %v6152, 0.20019531
        %v6409 = vmul.f32 %v6153, 0.20019531
        %v6410 = vmul.f32 %v6154, 0.20019531
        %v6411 = vmul.f32 %v6155, 0.20019531
        %v6412 = vmul.f32 %v6156, 0.20019531
        %v6413 = vmul.f32 %v6157, 0.20019531
        %v6414 = vmul.f32 %v6158, 0.20019531
        %v6415 = vmul.f32 %v6159, 0.20019531
        %v6416 = vmul.f32 %v6160, 0.20019531
        %v6417 = vmul.f32 %v6161, 0.20019531
        %v6418 = vmul.f32 %v6162, 0.20019531
        %v6419 = vmul.f32 %v6163, 0.20019531
        %v6420 = vmul.f32 %v6164, 0.20019531
        %v6421 = vmul.f32 %v6165, 0.20019531
        %v6422 = vmul.f32 %v6166, 0.20019531
        %v6423 = vmul.f32 %v6167, 0.20019531
        %v6424 = vmul.f32 %v6168, 0.20019531
        %v6425 = vmul.f32 %v6169, 0.20019531
        %v6426 = vmul.f32 %v6170, 0.20019531
        %v6427 = vmul.f32 %v6171, 0.20019531
        %v6428 = vmul.f32 %v6172, 0.20019531
        %v6429 = vmul.f32 %v6173, 0.20019531
        %v6430 = vmul.f32 %v6174, 0.20019531
        %v6431 = vmul.f32 %v6175, 0.20019531
        %v6432 = vmul.f32 %v6176, 0.20019531
        %v6433 = vmul.f32 %v6177, 0.20019531
        %v6434 = vmul.f32 %v6178, 0.20019531
        %v6435 = vmul.f32 %v6179, 0.20019531
        %v6436 = vmul.f32 %v6180, 0.20019531
        %v6437 = vmul.f32 %v6181, 0.20019531
        %v6438 = vmul.f32 %v6182, 0.20019531
        %v6439 = vmul.f32 %v6183, 0.20019531
        %v6440 = vmul.f32 %v6184, 0.20019531
        %v6441 = vmul.f32 %v6185, 0.20019531
        %v6442 = vmul.f32 %v6186, 0.20019531
        %v6443 = vmul.f32 %v6187, 0.20019531
        %v6444 = vmul.f32 %v6188, 0.20019531
        %v6445 = vmul.f32 %v6189, 0.20019531
        %v6446 = vmul.f32 %v6190, 0.20019531
        %v6447 = vmul.f32 %v6191, 0.20019531
        %v6448 = vmul.f32 %v6192, 0.20019531
        %v6449 = vmul.f32 %v6193, 0.20019531
        %v6450 = vmul.f32 %v6194, 0.20019531
        %v6451 = vmul.f32 %v6195, 0.20019531
        %v6452 = vmul.f32 %v6196, 0.20019531
        %v6453 = vmul.f32 %v6197, 0.20019531
        %v6454 = vmul.f32 %v6198, 0.20019531
        %v6455 = vmul.f32 %v6199, 0.20019531
        %v6456 = vmul.f32 %v6200, 0.20019531
        %v6457 = vmul.f32 %v6201, 0.20019531
        %v6458 = vmul.f32 %v6202, 0.20019531
        %v6459 = vmul.f32 %v6203, 0.20019531
        %v6460 = vmul.f32 %v6204, 0.20019531
        %v6461 = vmul.f32 %v6205, 0.20019531
        %v6462 = vmul.f32 %v6206, 0.20019531
        %v6463 = vmul.f32 %v6207, 0.20019531
        %v6464 = vmul.f32 %v6208, 0.20019531
        %v6465 = vmul.f32 %v6209, 0.20019531
        %v6466 = vmul.f32 %v6210, 0.20019531
        %v6467 = vmul.f32 %v6211, 0.20019531
        %v6468 = vmul.f32 %v6212, 0.20019531
        %v6469 = vmul.f32 %v6213, 0.20019531
        %v6470 = vmul.f32 %v6214, 0.20019531
        %v6471 = vmul.f32 %v6215, 0.20019531
        %v6472 = vmul.f32 %v6216, 0.20019531
        %v6473 = vmul.f32 %v6217, 0.20019531
        %v6474 = vmul.f32 %v6218, 0.20019531
        %v6475 = vmul.f32 %v6219, 0.20019531
        %v6476 = vmul.f32 %v6220, 0.20019531
        %v6477 = vmul.f32 %v6221, 0.20019531
        %v6478 = vmul.f32 %v6222, 0.20019531
        %v6479 = vmul.f32 %v6223, 0.20019531
        %v6480 = vmul.f32 %v6224, 0.20019531
        %v6481 = vmul.f32 %v6225, 0.20019531
        %v6482 = vmul.f32 %v6226, 0.20019531
        %v6483 = vmul.f32 %v6227, 0.20019531
        %v6484 = vmul.f32 %v6228, 0.20019531
        %v6485 = vmul.f32 %v6229, 0.20019531
        %v6486 = vmul.f32 %v6230, 0.20019531
        %v6487 = vmul.f32 %v6231, 0.20019531
        %v6488 = vmul.f32 %v6232, 0.20019531
        %v6489 = vmul.f32 %v6233, 0.20019531
        %v6490 = vmul.f32 %v6234, 0.20019531
        %v6491 = vmul.f32 %v6235, 0.20019531
        %v6492 = vmul.f32 %v6236, 0.20019531
        %v6493 = vmul.f32 %v6237, 0.20019531
        %v6494 = vmul.f32 %v6238, 0.20019531
        %v6495 = vpack.c.bf16 %v6368, %v6367
        %v6496 = vpack.c.bf16 %v6370, %v6369
        %v6497 = vpack.c.bf16 %v6372, %v6371
        %v6498 = vpack.c.bf16 %v6374, %v6373
        %v6499 = vpack.c.bf16 %v6376, %v6375
        %v6500 = vpack.c.bf16 %v6378, %v6377
        %v6501 = vpack.c.bf16 %v6380, %v6379
        %v6502 = vpack.c.bf16 %v6382, %v6381
        %v6503 = vpack.c.bf16 %v6384, %v6383
        %v6504 = vpack.c.bf16 %v6386, %v6385
        %v6505 = vpack.c.bf16 %v6388, %v6387
        %v6506 = vpack.c.bf16 %v6390, %v6389
        %v6507 = vpack.c.bf16 %v6392, %v6391
        %v6508 = vpack.c.bf16 %v6394, %v6393
        %v6509 = vpack.c.bf16 %v6396, %v6395
        %v6510 = vpack.c.bf16 %v6398, %v6397
        %v6511 = vpack.c.bf16 %v6400, %v6399
        %v6512 = vpack.c.bf16 %v6402, %v6401
        %v6513 = vpack.c.bf16 %v6404, %v6403
        %v6514 = vpack.c.bf16 %v6406, %v6405
        %v6515 = vpack.c.bf16 %v6408, %v6407
        %v6516 = vpack.c.bf16 %v6410, %v6409
        %v6517 = vpack.c.bf16 %v6412, %v6411
        %v6518 = vpack.c.bf16 %v6414, %v6413
        %v6519 = vpack.c.bf16 %v6416, %v6415
        %v6520 = vpack.c.bf16 %v6418, %v6417
        %v6521 = vpack.c.bf16 %v6420, %v6419
        %v6522 = vpack.c.bf16 %v6422, %v6421
        %v6523 = vpack.c.bf16 %v6424, %v6423
        %v6524 = vpack.c.bf16 %v6426, %v6425
        %v6525 = vpack.c.bf16 %v6428, %v6427
        %v6526 = vpack.c.bf16 %v6430, %v6429
        %v6527 = vpack.c.bf16 %v6432, %v6431
        %v6528 = vpack.c.bf16 %v6434, %v6433
        %v6529 = vpack.c.bf16 %v6436, %v6435
        %v6530 = vpack.c.bf16 %v6438, %v6437
        %v6531 = vpack.c.bf16 %v6440, %v6439
        %v6532 = vpack.c.bf16 %v6442, %v6441
        %v6533 = vpack.c.bf16 %v6444, %v6443
        %v6534 = vpack.c.bf16 %v6446, %v6445
        %v6535 = vpack.c.bf16 %v6448, %v6447
        %v6536 = vpack.c.bf16 %v6450, %v6449
        %v6537 = vpack.c.bf16 %v6452, %v6451
        %v6538 = vpack.c.bf16 %v6454, %v6453
        %v6539 = vpack.c.bf16 %v6456, %v6455
        %v6540 = vpack.c.bf16 %v6458, %v6457
        %v6541 = vpack.c.bf16 %v6460, %v6459
        %v6542 = vpack.c.bf16 %v6462, %v6461
        %v6543 = vpack.c.bf16 %v6464, %v6463
        %v6544 = vpack.c.bf16 %v6466, %v6465
        %v6545 = vpack.c.bf16 %v6468, %v6467
        %v6546 = vpack.c.bf16 %v6470, %v6469
        %v6547 = vpack.c.bf16 %v6472, %v6471
        %v6548 = vpack.c.bf16 %v6474, %v6473
        %v6549 = vpack.c.bf16 %v6476, %v6475
        %v6550 = vpack.c.bf16 %v6478, %v6477
        %v6551 = vpack.c.bf16 %v6480, %v6479
        %v6552 = vpack.c.bf16 %v6482, %v6481
        %v6553 = vpack.c.bf16 %v6484, %v6483
        %v6554 = vpack.c.bf16 %v6486, %v6485
        %v6555 = vpack.c.bf16 %v6488, %v6487
        %v6556 = vpack.c.bf16 %v6490, %v6489
        %v6557 = vpack.c.bf16 %v6492, %v6491
        %v6558 = vpack.c.bf16 %v6494, %v6493
        %vm6559 = vmpackc.low %vm6240, %vm6239
        %vm6560 = vmpackc.low %vm6242, %vm6241
        %vm6561 = vmpackc.low %vm6244, %vm6243
        %vm6562 = vmpackc.low %vm6246, %vm6245
        %vm6563 = vmpackc.low %vm6248, %vm6247
        %vm6564 = vmpackc.low %vm6250, %vm6249
        %vm6565 = vmpackc.low %vm6252, %vm6251
        %vm6566 = vmpackc.low %vm6254, %vm6253
        %vm6567 = vmpackc.low %vm6256, %vm6255
        %vm6568 = vmpackc.low %vm6258, %vm6257
        %vm6569 = vmpackc.low %vm6260, %vm6259
        %vm6570 = vmpackc.low %vm6262, %vm6261
        %vm6571 = vmpackc.low %vm6264, %vm6263
        %vm6572 = vmpackc.low %vm6266, %vm6265
        %vm6573 = vmpackc.low %vm6268, %vm6267
        %vm6574 = vmpackc.low %vm6270, %vm6269
        %vm6575 = vmpackc.low %vm6272, %vm6271
        %vm6576 = vmpackc.low %vm6274, %vm6273
        %vm6577 = vmpackc.low %vm6276, %vm6275
        %vm6578 = vmpackc.low %vm6278, %vm6277
        %vm6579 = vmpackc.low %vm6280, %vm6279
        %vm6580 = vmpackc.low %vm6282, %vm6281
        %vm6581 = vmpackc.low %vm6284, %vm6283
        %vm6582 = vmpackc.low %vm6286, %vm6285
        %vm6583 = vmpackc.low %vm6288, %vm6287
        %vm6584 = vmpackc.low %vm6290, %vm6289
        %vm6585 = vmpackc.low %vm6292, %vm6291
        %vm6586 = vmpackc.low %vm6294, %vm6293
        %vm6587 = vmpackc.low %vm6296, %vm6295
        %vm6588 = vmpackc.low %vm6298, %vm6297
        %vm6589 = vmpackc.low %vm6300, %vm6299
        %vm6590 = vmpackc.low %vm6302, %vm6301
        %vm6591 = vmpackc.low %vm6304, %vm6303
        %vm6592 = vmpackc.low %vm6306, %vm6305
        %vm6593 = vmpackc.low %vm6308, %vm6307
        %vm6594 = vmpackc.low %vm6310, %vm6309
        %vm6595 = vmpackc.low %vm6312, %vm6311
        %vm6596 = vmpackc.low %vm6314, %vm6313
        %vm6597 = vmpackc.low %vm6316, %vm6315
        %vm6598 = vmpackc.low %vm6318, %vm6317
        %vm6599 = vmpackc.low %vm6320, %vm6319
        %vm6600 = vmpackc.low %vm6322, %vm6321
        %vm6601 = vmpackc.low %vm6324, %vm6323
        %vm6602 = vmpackc.low %vm6326, %vm6325
        %vm6603 = vmpackc.low %vm6328, %vm6327
        %vm6604 = vmpackc.low %vm6330, %vm6329
        %vm6605 = vmpackc.low %vm6332, %vm6331
        %vm6606 = vmpackc.low %vm6334, %vm6333
        %vm6607 = vmpackc.low %vm6336, %vm6335
        %vm6608 = vmpackc.low %vm6338, %vm6337
        %vm6609 = vmpackc.low %vm6340, %vm6339
        %vm6610 = vmpackc.low %vm6342, %vm6341
        %vm6611 = vmpackc.low %vm6344, %vm6343
        %vm6612 = vmpackc.low %vm6346, %vm6345
        %vm6613 = vmpackc.low %vm6348, %vm6347
        %vm6614 = vmpackc.low %vm6350, %vm6349
        %vm6615 = vmpackc.low %vm6352, %vm6351
        %vm6616 = vmpackc.low %vm6354, %vm6353
        %vm6617 = vmpackc.low %vm6356, %vm6355
        %vm6618 = vmpackc.low %vm6358, %vm6357
        %vm6619 = vmpackc.low %vm6360, %vm6359
        %vm6620 = vmpackc.low %vm6362, %vm6361
        %vm6621 = vmpackc.low %vm6364, %vm6363
        %vm6622 = vmpackc.low %vm6366, %vm6365
        %v6623 = vsel %vm6559, %v6047, %v6495
        %v6624 = vsel %vm6560, %v6048, %v6496
        %v6625 = vsel %vm6561, %v6049, %v6497
        %v6626 = vsel %vm6562, %v6050, %v6498
        %v6627 = vsel %vm6563, %v6051, %v6499
        %v6628 = vsel %vm6564, %v6052, %v6500
        %v6629 = vsel %vm6565, %v6053, %v6501
        %v6630 = vsel %vm6566, %v6054, %v6502
        %v6631 = vsel %vm6567, %v6055, %v6503
        %v6632 = vsel %vm6568, %v6056, %v6504
        %v6633 = vsel %vm6569, %v6057, %v6505
        %v6634 = vsel %vm6570, %v6058, %v6506
        %v6635 = vsel %vm6571, %v6059, %v6507
        %v6636 = vsel %vm6572, %v6060, %v6508
        %v6637 = vsel %vm6573, %v6061, %v6509
        %v6638 = vsel %vm6574, %v6062, %v6510
        %v6639 = vsel %vm6575, %v6063, %v6511
        %v6640 = vsel %vm6576, %v6064, %v6512
        %v6641 = vsel %vm6577, %v6065, %v6513
        %v6642 = vsel %vm6578, %v6066, %v6514
        %v6643 = vsel %vm6579, %v6067, %v6515
        %v6644 = vsel %vm6580, %v6068, %v6516
        %v6645 = vsel %vm6581, %v6069, %v6517
        %v6646 = vsel %vm6582, %v6070, %v6518
        %v6647 = vsel %vm6583, %v6071, %v6519
        %v6648 = vsel %vm6584, %v6072, %v6520
        %v6649 = vsel %vm6585, %v6073, %v6521
        %v6650 = vsel %vm6586, %v6074, %v6522
        %v6651 = vsel %vm6587, %v6075, %v6523
        %v6652 = vsel %vm6588, %v6076, %v6524
        %v6653 = vsel %vm6589, %v6077, %v6525
        %v6654 = vsel %vm6590, %v6078, %v6526
        %v6655 = vsel %vm6591, %v6079, %v6527
        %v6656 = vsel %vm6592, %v6080, %v6528
        %v6657 = vsel %vm6593, %v6081, %v6529
        %v6658 = vsel %vm6594, %v6082, %v6530
        %v6659 = vsel %vm6595, %v6083, %v6531
        %v6660 = vsel %vm6596, %v6084, %v6532
        %v6661 = vsel %vm6597, %v6085, %v6533
        %v6662 = vsel %vm6598, %v6086, %v6534
        %v6663 = vsel %vm6599, %v6087, %v6535
        %v6664 = vsel %vm6600, %v6088, %v6536
        %v6665 = vsel %vm6601, %v6089, %v6537
        %v6666 = vsel %vm6602, %v6090, %v6538
        %v6667 = vsel %vm6603, %v6091, %v6539
        %v6668 = vsel %vm6604, %v6092, %v6540
        %v6669 = vsel %vm6605, %v6093, %v6541
        %v6670 = vsel %vm6606, %v6094, %v6542
        %v6671 = vsel %vm6607, %v6095, %v6543
        %v6672 = vsel %vm6608, %v6096, %v6544
        %v6673 = vsel %vm6609, %v6097, %v6545
        %v6674 = vsel %vm6610, %v6098, %v6546
        %v6675 = vsel %vm6611, %v6099, %v6547
        %v6676 = vsel %vm6612, %v6100, %v6548
        %v6677 = vsel %vm6613, %v6101, %v6549
        %v6678 = vsel %vm6614, %v6102, %v6550
        %v6679 = vsel %vm6615, %v6103, %v6551
        %v6680 = vsel %vm6616, %v6104, %v6552
        %v6681 = vsel %vm6617, %v6105, %v6553
        %v6682 = vsel %vm6618, %v6106, %v6554
        %v6683 = vsel %vm6619, %v6107, %v6555
        %v6684 = vsel %vm6620, %v6108, %v6556
        %v6685 = vsel %vm6621, %v6109, %v6557
        %v6686 = vsel %vm6622, %v6110, %v6558
        %v6687 = vld [vmem:[#allocation8] sm:$0xff]
        %v6688 = vld [vmem:[#allocation8 + $0x8] sm:$0xff]
        %v6689 = vld [vmem:[#allocation8 + $0x10] sm:$0xff]
        %v6690 = vld [vmem:[#allocation8 + $0x18] sm:$0xff]
        %v6691 = vld [vmem:[#allocation8 + $0x20] sm:$0xff]
        %v6692 = vld [vmem:[#allocation8 + $0x28] sm:$0xff]
        %v6693 = vld [vmem:[#allocation8 + $0x30] sm:$0xff]
        %v6694 = vld [vmem:[#allocation8 + $0x38] sm:$0xff]
        %v6695 = vld [vmem:[#allocation8 + $0x40] sm:$0xff]
        %v6696 = vld [vmem:[#allocation8 + $0x48] sm:$0xff]
        %v6697 = vld [vmem:[#allocation8 + $0x50] sm:$0xff]
        %v6698 = vld [vmem:[#allocation8 + $0x58] sm:$0xff]
        %v6699 = vld [vmem:[#allocation8 + $0x60] sm:$0xff]
        %v6700 = vld [vmem:[#allocation8 + $0x68] sm:$0xff]
        %v6701 = vld [vmem:[#allocation8 + $0x70] sm:$0xff]
        %v6702 = vld [vmem:[#allocation8 + $0x78] sm:$0xff]
        %v6703 = vld [vmem:[#allocation8 + $0x80] sm:$0xff]
        %v6704 = vld [vmem:[#allocation8 + $0x88] sm:$0xff]
        %v6705 = vld [vmem:[#allocation8 + $0x90] sm:$0xff]
        %v6706 = vld [vmem:[#allocation8 + $0x98] sm:$0xff]
        %v6707 = vld [vmem:[#allocation8 + $0xa0] sm:$0xff]
        %v6708 = vld [vmem:[#allocation8 + $0xa8] sm:$0xff]
        %v6709 = vld [vmem:[#allocation8 + $0xb0] sm:$0xff]
        %v6710 = vld [vmem:[#allocation8 + $0xb8] sm:$0xff]
        %v6711 = vld [vmem:[#allocation8 + $0xc0] sm:$0xff]
        %v6712 = vld [vmem:[#allocation8 + $0xc8] sm:$0xff]
        %v6713 = vld [vmem:[#allocation8 + $0xd0] sm:$0xff]
        %v6714 = vld [vmem:[#allocation8 + $0xd8] sm:$0xff]
        %v6715 = vld [vmem:[#allocation8 + $0xe0] sm:$0xff]
        %v6716 = vld [vmem:[#allocation8 + $0xe8] sm:$0xff]
        %v6717 = vld [vmem:[#allocation8 + $0xf0] sm:$0xff]
        %v6718 = vld [vmem:[#allocation8 + $0xf8] sm:$0xff]
        %v6719 = vld [vmem:[#allocation8 + $0x100] sm:$0xff]
        %v6720 = vld [vmem:[#allocation8 + $0x108] sm:$0xff]
        %v6721 = vld [vmem:[#allocation8 + $0x110] sm:$0xff]
        %v6722 = vld [vmem:[#allocation8 + $0x118] sm:$0xff]
        %v6723 = vld [vmem:[#allocation8 + $0x120] sm:$0xff]
        %v6724 = vld [vmem:[#allocation8 + $0x128] sm:$0xff]
        %v6725 = vld [vmem:[#allocation8 + $0x130] sm:$0xff]
        %v6726 = vld [vmem:[#allocation8 + $0x138] sm:$0xff]
        %v6727 = vld [vmem:[#allocation8 + $0x140] sm:$0xff]
        %v6728 = vld [vmem:[#allocation8 + $0x148] sm:$0xff]
        %v6729 = vld [vmem:[#allocation8 + $0x150] sm:$0xff]
        %v6730 = vld [vmem:[#allocation8 + $0x158] sm:$0xff]
        %v6731 = vld [vmem:[#allocation8 + $0x160] sm:$0xff]
        %v6732 = vld [vmem:[#allocation8 + $0x168] sm:$0xff]
        %v6733 = vld [vmem:[#allocation8 + $0x170] sm:$0xff]
        %v6734 = vld [vmem:[#allocation8 + $0x178] sm:$0xff]
        %v6735 = vld [vmem:[#allocation8 + $0x180] sm:$0xff]
        %v6736 = vld [vmem:[#allocation8 + $0x188] sm:$0xff]
        %v6737 = vld [vmem:[#allocation8 + $0x190] sm:$0xff]
        %v6738 = vld [vmem:[#allocation8 + $0x198] sm:$0xff]
        %v6739 = vld [vmem:[#allocation8 + $0x1a0] sm:$0xff]
        %v6740 = vld [vmem:[#allocation8 + $0x1a8] sm:$0xff]
        %v6741 = vld [vmem:[#allocation8 + $0x1b0] sm:$0xff]
        %v6742 = vld [vmem:[#allocation8 + $0x1b8] sm:$0xff]
        %v6743 = vld [vmem:[#allocation8 + $0x1c0] sm:$0xff]
        %v6744 = vld [vmem:[#allocation8 + $0x1c8] sm:$0xff]
        %v6745 = vld [vmem:[#allocation8 + $0x1d0] sm:$0xff]
        %v6746 = vld [vmem:[#allocation8 + $0x1d8] sm:$0xff]
        %v6747 = vld [vmem:[#allocation8 + $0x1e0] sm:$0xff]
        %v6748 = vld [vmem:[#allocation8 + $0x1e8] sm:$0xff]
        %v6749 = vld [vmem:[#allocation8 + $0x1f0] sm:$0xff]
        %v6750 = vld [vmem:[#allocation8 + $0x1f8] sm:$0xff]
        %v6751 = vld [vmem:[#allocation8 + $0x200] sm:$0xff]
        %v6752 = vld [vmem:[#allocation8 + $0x208] sm:$0xff]
        %v6753 = vld [vmem:[#allocation8 + $0x210] sm:$0xff]
        %v6754 = vld [vmem:[#allocation8 + $0x218] sm:$0xff]
        %v6755 = vld [vmem:[#allocation8 + $0x220] sm:$0xff]
        %v6756 = vld [vmem:[#allocation8 + $0x228] sm:$0xff]
        %v6757 = vld [vmem:[#allocation8 + $0x230] sm:$0xff]
        %v6758 = vld [vmem:[#allocation8 + $0x238] sm:$0xff]
        %v6759 = vld [vmem:[#allocation8 + $0x240] sm:$0xff]
        %v6760 = vld [vmem:[#allocation8 + $0x248] sm:$0xff]
        %v6761 = vld [vmem:[#allocation8 + $0x250] sm:$0xff]
        %v6762 = vld [vmem:[#allocation8 + $0x258] sm:$0xff]
        %v6763 = vld [vmem:[#allocation8 + $0x260] sm:$0xff]
        %v6764 = vld [vmem:[#allocation8 + $0x268] sm:$0xff]
        %v6765 = vld [vmem:[#allocation8 + $0x270] sm:$0xff]
        %v6766 = vld [vmem:[#allocation8 + $0x278] sm:$0xff]
        %v6767 = vld [vmem:[#allocation8 + $0x280] sm:$0xff]
        %v6768 = vld [vmem:[#allocation8 + $0x288] sm:$0xff]
        %v6769 = vld [vmem:[#allocation8 + $0x290] sm:$0xff]
        %v6770 = vld [vmem:[#allocation8 + $0x298] sm:$0xff]
        %v6771 = vld [vmem:[#allocation8 + $0x2a0] sm:$0xff]
        %v6772 = vld [vmem:[#allocation8 + $0x2a8] sm:$0xff]
        %v6773 = vld [vmem:[#allocation8 + $0x2b0] sm:$0xff]
        %v6774 = vld [vmem:[#allocation8 + $0x2b8] sm:$0xff]
        %v6775 = vld [vmem:[#allocation8 + $0x2c0] sm:$0xff]
        %v6776 = vld [vmem:[#allocation8 + $0x2c8] sm:$0xff]
        %v6777 = vld [vmem:[#allocation8 + $0x2d0] sm:$0xff]
        %v6778 = vld [vmem:[#allocation8 + $0x2d8] sm:$0xff]
        %v6779 = vld [vmem:[#allocation8 + $0x2e0] sm:$0xff]
        %v6780 = vld [vmem:[#allocation8 + $0x2e8] sm:$0xff]
        %v6781 = vld [vmem:[#allocation8 + $0x2f0] sm:$0xff]
        %v6782 = vld [vmem:[#allocation8 + $0x2f8] sm:$0xff]
        %v6783 = vld [vmem:[#allocation8 + $0x300] sm:$0xff]
        %v6784 = vld [vmem:[#allocation8 + $0x308] sm:$0xff]
        %v6785 = vld [vmem:[#allocation8 + $0x310] sm:$0xff]
        %v6786 = vld [vmem:[#allocation8 + $0x318] sm:$0xff]
        %v6787 = vld [vmem:[#allocation8 + $0x320] sm:$0xff]
        %v6788 = vld [vmem:[#allocation8 + $0x328] sm:$0xff]
        %v6789 = vld [vmem:[#allocation8 + $0x330] sm:$0xff]
        %v6790 = vld [vmem:[#allocation8 + $0x338] sm:$0xff]
        %v6791 = vld [vmem:[#allocation8 + $0x340] sm:$0xff]
        %v6792 = vld [vmem:[#allocation8 + $0x348] sm:$0xff]
        %v6793 = vld [vmem:[#allocation8 + $0x350] sm:$0xff]
        %v6794 = vld [vmem:[#allocation8 + $0x358] sm:$0xff]
        %v6795 = vld [vmem:[#allocation8 + $0x360] sm:$0xff]
        %v6796 = vld [vmem:[#allocation8 + $0x368] sm:$0xff]
        %v6797 = vld [vmem:[#allocation8 + $0x370] sm:$0xff]
        %v6798 = vld [vmem:[#allocation8 + $0x378] sm:$0xff]
        %v6799 = vld [vmem:[#allocation8 + $0x380] sm:$0xff]
        %v6800 = vld [vmem:[#allocation8 + $0x388] sm:$0xff]
        %v6801 = vld [vmem:[#allocation8 + $0x390] sm:$0xff]
        %v6802 = vld [vmem:[#allocation8 + $0x398] sm:$0xff]
        %v6803 = vld [vmem:[#allocation8 + $0x3a0] sm:$0xff]
        %v6804 = vld [vmem:[#allocation8 + $0x3a8] sm:$0xff]
        %v6805 = vld [vmem:[#allocation8 + $0x3b0] sm:$0xff]
        %v6806 = vld [vmem:[#allocation8 + $0x3b8] sm:$0xff]
        %v6807 = vld [vmem:[#allocation8 + $0x3c0] sm:$0xff]
        %v6808 = vld [vmem:[#allocation8 + $0x3c8] sm:$0xff]
        %v6809 = vld [vmem:[#allocation8 + $0x3d0] sm:$0xff]
        %v6810 = vld [vmem:[#allocation8 + $0x3d8] sm:$0xff]
        %v6811 = vld [vmem:[#allocation8 + $0x3e0] sm:$0xff]
        %v6812 = vld [vmem:[#allocation8 + $0x3e8] sm:$0xff]
        %v6813 = vld [vmem:[#allocation8 + $0x3f0] sm:$0xff]
        %v6814 = vld [vmem:[#allocation8 + $0x3f8] sm:$0xff]
        %v6815 = vld [vmem:[#allocation10] sm:$0x3]
        %v6817 = vperm.slane %v6815, 0
        %v6818 = vperm.slane %v6815, 1
        %v6885 = vunpack.c.l.b16 %v6623
        %v6886 = vunpack.c.h.b16 %v6623
        %v6887 = vunpack.c.l.b16 %v6624
        %v6888 = vunpack.c.h.b16 %v6624
        %v6889 = vunpack.c.l.b16 %v6625
        %v6890 = vunpack.c.h.b16 %v6625
        %v6891 = vunpack.c.l.b16 %v6626
        %v6892 = vunpack.c.h.b16 %v6626
        %v6893 = vunpack.c.l.b16 %v6627
        %v6894 = vunpack.c.h.b16 %v6627
        %v6895 = vunpack.c.l.b16 %v6628
        %v6896 = vunpack.c.h.b16 %v6628
        %v6897 = vunpack.c.l.b16 %v6629
        %v6898 = vunpack.c.h.b16 %v6629
        %v6899 = vunpack.c.l.b16 %v6630
        %v6900 = vunpack.c.h.b16 %v6630
        %v6901 = vunpack.c.l.b16 %v6631
        %v6902 = vunpack.c.h.b16 %v6631
        %v6903 = vunpack.c.l.b16 %v6632
        %v6904 = vunpack.c.h.b16 %v6632
        %v6905 = vunpack.c.l.b16 %v6633
        %v6906 = vunpack.c.h.b16 %v6633
        %v6907 = vunpack.c.l.b16 %v6634
        %v6908 = vunpack.c.h.b16 %v6634
        %v6909 = vunpack.c.l.b16 %v6635
        %v6910 = vunpack.c.h.b16 %v6635
        %v6911 = vunpack.c.l.b16 %v6636
        %v6912 = vunpack.c.h.b16 %v6636
        %v6913 = vunpack.c.l.b16 %v6637
        %v6914 = vunpack.c.h.b16 %v6637
        %v6915 = vunpack.c.l.b16 %v6638
        %v6916 = vunpack.c.h.b16 %v6638
        %v6917 = vunpack.c.l.b16 %v6639
        %v6918 = vunpack.c.h.b16 %v6639
        %v6919 = vunpack.c.l.b16 %v6640
        %v6920 = vunpack.c.h.b16 %v6640
        %v6921 = vunpack.c.l.b16 %v6641
        %v6922 = vunpack.c.h.b16 %v6641
        %v6923 = vunpack.c.l.b16 %v6642
        %v6924 = vunpack.c.h.b16 %v6642
        %v6925 = vunpack.c.l.b16 %v6643
        %v6926 = vunpack.c.h.b16 %v6643
        %v6927 = vunpack.c.l.b16 %v6644
        %v6928 = vunpack.c.h.b16 %v6644
        %v6929 = vunpack.c.l.b16 %v6645
        %v6930 = vunpack.c.h.b16 %v6645
        %v6931 = vunpack.c.l.b16 %v6646
        %v6932 = vunpack.c.h.b16 %v6646
        %v6933 = vunpack.c.l.b16 %v6647
        %v6934 = vunpack.c.h.b16 %v6647
        %v6935 = vunpack.c.l.b16 %v6648
        %v6936 = vunpack.c.h.b16 %v6648
        %v6937 = vunpack.c.l.b16 %v6649
        %v6938 = vunpack.c.h.b16 %v6649
        %v6939 = vunpack.c.l.b16 %v6650
        %v6940 = vunpack.c.h.b16 %v6650
        %v6941 = vunpack.c.l.b16 %v6651
        %v6942 = vunpack.c.h.b16 %v6651
        %v6943 = vunpack.c.l.b16 %v6652
        %v6944 = vunpack.c.h.b16 %v6652
        %v6945 = vunpack.c.l.b16 %v6653
        %v6946 = vunpack.c.h.b16 %v6653
        %v6947 = vunpack.c.l.b16 %v6654
        %v6948 = vunpack.c.h.b16 %v6654
        %v6949 = vunpack.c.l.b16 %v6655
        %v6950 = vunpack.c.h.b16 %v6655
        %v6951 = vunpack.c.l.b16 %v6656
        %v6952 = vunpack.c.h.b16 %v6656
        %v6953 = vunpack.c.l.b16 %v6657
        %v6954 = vunpack.c.h.b16 %v6657
        %v6955 = vunpack.c.l.b16 %v6658
        %v6956 = vunpack.c.h.b16 %v6658
        %v6957 = vunpack.c.l.b16 %v6659
        %v6958 = vunpack.c.h.b16 %v6659
        %v6959 = vunpack.c.l.b16 %v6660
        %v6960 = vunpack.c.h.b16 %v6660
        %v6961 = vunpack.c.l.b16 %v6661
        %v6962 = vunpack.c.h.b16 %v6661
        %v6963 = vunpack.c.l.b16 %v6662
        %v6964 = vunpack.c.h.b16 %v6662
        %v6965 = vunpack.c.l.b16 %v6663
        %v6966 = vunpack.c.h.b16 %v6663
        %v6967 = vunpack.c.l.b16 %v6664
        %v6968 = vunpack.c.h.b16 %v6664
        %v6969 = vunpack.c.l.b16 %v6665
        %v6970 = vunpack.c.h.b16 %v6665
        %v6971 = vunpack.c.l.b16 %v6666
        %v6972 = vunpack.c.h.b16 %v6666
        %v6973 = vunpack.c.l.b16 %v6667
        %v6974 = vunpack.c.h.b16 %v6667
        %v6975 = vunpack.c.l.b16 %v6668
        %v6976 = vunpack.c.h.b16 %v6668
        %v6977 = vunpack.c.l.b16 %v6669
        %v6978 = vunpack.c.h.b16 %v6669
        %v6979 = vunpack.c.l.b16 %v6670
        %v6980 = vunpack.c.h.b16 %v6670
        %v6981 = vunpack.c.l.b16 %v6671
        %v6982 = vunpack.c.h.b16 %v6671
        %v6983 = vunpack.c.l.b16 %v6672
        %v6984 = vunpack.c.h.b16 %v6672
        %v6985 = vunpack.c.l.b16 %v6673
        %v6986 = vunpack.c.h.b16 %v6673
        %v6987 = vunpack.c.l.b16 %v6674
        %v6988 = vunpack.c.h.b16 %v6674
        %v6989 = vunpack.c.l.b16 %v6675
        %v6990 = vunpack.c.h.b16 %v6675
        %v6991 = vunpack.c.l.b16 %v6676
        %v6992 = vunpack.c.h.b16 %v6676
        %v6993 = vunpack.c.l.b16 %v6677
        %v6994 = vunpack.c.h.b16 %v6677
        %v6995 = vunpack.c.l.b16 %v6678
        %v6996 = vunpack.c.h.b16 %v6678
        %v6997 = vunpack.c.l.b16 %v6679
        %v6998 = vunpack.c.h.b16 %v6679
        %v6999 = vunpack.c.l.b16 %v6680
        %v7000 = vunpack.c.h.b16 %v6680
        %v7001 = vunpack.c.l.b16 %v6681
        %v7002 = vunpack.c.h.b16 %v6681
        %v7003 = vunpack.c.l.b16 %v6682
        %v7004 = vunpack.c.h.b16 %v6682
        %v7005 = vunpack.c.l.b16 %v6683
        %v7006 = vunpack.c.h.b16 %v6683
        %v7007 = vunpack.c.l.b16 %v6684
        %v7008 = vunpack.c.h.b16 %v6684
        %v7009 = vunpack.c.l.b16 %v6685
        %v7010 = vunpack.c.h.b16 %v6685
        %v7011 = vunpack.c.l.b16 %v6686
        %v7012 = vunpack.c.h.b16 %v6686
        %v7013 = vpack.c.b16 %v6893, %v6885
        %v7014 = vpack.c.b16 %v6894, %v6886
        %v7015 = vpack.c.b16 %v6895, %v6887
        %v7016 = vpack.c.b16 %v6896, %v6888
        %v7017 = vpack.c.b16 %v6897, %v6889
        %v7018 = vpack.c.b16 %v6898, %v6890
        %v7019 = vpack.c.b16 %v6899, %v6891
        %v7020 = vpack.c.b16 %v6900, %v6892
        %v7021 = vpack.c.b16 %v6909, %v6901
        %v7022 = vpack.c.b16 %v6910, %v6902
        %v7023 = vpack.c.b16 %v6911, %v6903
        %v7024 = vpack.c.b16 %v6912, %v6904
        %v7025 = vpack.c.b16 %v6913, %v6905
        %v7026 = vpack.c.b16 %v6914, %v6906
        %v7027 = vpack.c.b16 %v6915, %v6907
        %v7028 = vpack.c.b16 %v6916, %v6908
        %v7029 = vpack.c.b16 %v6925, %v6917
        %v7030 = vpack.c.b16 %v6926, %v6918
        %v7031 = vpack.c.b16 %v6927, %v6919
        %v7032 = vpack.c.b16 %v6928, %v6920
        %v7033 = vpack.c.b16 %v6929, %v6921
        %v7034 = vpack.c.b16 %v6930, %v6922
        %v7035 = vpack.c.b16 %v6931, %v6923
        %v7036 = vpack.c.b16 %v6932, %v6924
        %v7037 = vpack.c.b16 %v6941, %v6933
        %v7038 = vpack.c.b16 %v6942, %v6934
        %v7039 = vpack.c.b16 %v6943, %v6935
        %v7040 = vpack.c.b16 %v6944, %v6936
        %v7041 = vpack.c.b16 %v6945, %v6937
        %v7042 = vpack.c.b16 %v6946, %v6938
        %v7043 = vpack.c.b16 %v6947, %v6939
        %v7044 = vpack.c.b16 %v6948, %v6940
        %v7045 = vpack.c.b16 %v6957, %v6949
        %v7046 = vpack.c.b16 %v6958, %v6950
        %v7047 = vpack.c.b16 %v6959, %v6951
        %v7048 = vpack.c.b16 %v6960, %v6952
        %v7049 = vpack.c.b16 %v6961, %v6953
        %v7050 = vpack.c.b16 %v6962, %v6954
        %v7051 = vpack.c.b16 %v6963, %v6955
        %v7052 = vpack.c.b16 %v6964, %v6956
        %v7053 = vpack.c.b16 %v6973, %v6965
        %v7054 = vpack.c.b16 %v6974, %v6966
        %v7055 = vpack.c.b16 %v6975, %v6967
        %v7056 = vpack.c.b16 %v6976, %v6968
        %v7057 = vpack.c.b16 %v6977, %v6969
        %v7058 = vpack.c.b16 %v6978, %v6970
        %v7059 = vpack.c.b16 %v6979, %v6971
        %v7060 = vpack.c.b16 %v6980, %v6972
        %v7061 = vpack.c.b16 %v6989, %v6981
        %v7062 = vpack.c.b16 %v6990, %v6982
        %v7063 = vpack.c.b16 %v6991, %v6983
        %v7064 = vpack.c.b16 %v6992, %v6984
        %v7065 = vpack.c.b16 %v6993, %v6985
        %v7066 = vpack.c.b16 %v6994, %v6986
        %v7067 = vpack.c.b16 %v6995, %v6987
        %v7068 = vpack.c.b16 %v6996, %v6988
        %v7069 = vpack.c.b16 %v7005, %v6997
        %v7070 = vpack.c.b16 %v7006, %v6998
        %v7071 = vpack.c.b16 %v7007, %v6999
        %v7072 = vpack.c.b16 %v7008, %v7000
        %v7073 = vpack.c.b16 %v7009, %v7001
        %v7074 = vpack.c.b16 %v7010, %v7002
        %v7075 = vpack.c.b16 %v7011, %v7003
        %v7076 = vpack.c.b16 %v7012, %v7004
        %v7269 = vunpack.c.l.b16 %v6687
        %v7270 = vunpack.c.h.b16 %v6687
        %v7271 = vunpack.c.l.b16 %v6688
        %v7272 = vunpack.c.h.b16 %v6688
        %v7273 = vunpack.c.l.b16 %v6689
        %v7274 = vunpack.c.h.b16 %v6689
        %v7275 = vunpack.c.l.b16 %v6690
        %v7276 = vunpack.c.h.b16 %v6690
        %v7277 = vunpack.c.l.b16 %v6691
        %v7278 = vunpack.c.h.b16 %v6691
        %v7279 = vunpack.c.l.b16 %v6692
        %v7280 = vunpack.c.h.b16 %v6692
        %v7281 = vunpack.c.l.b16 %v6693
        %v7282 = vunpack.c.h.b16 %v6693
        %v7283 = vunpack.c.l.b16 %v6694
        %v7284 = vunpack.c.h.b16 %v6694
        %v7285 = vunpack.c.l.b16 %v6695
        %v7286 = vunpack.c.h.b16 %v6695
        %v7287 = vunpack.c.l.b16 %v6696
        %v7288 = vunpack.c.h.b16 %v6696
        %v7289 = vunpack.c.l.b16 %v6697
        %v7290 = vunpack.c.h.b16 %v6697
        %v7291 = vunpack.c.l.b16 %v6698
        %v7292 = vunpack.c.h.b16 %v6698
        %v7293 = vunpack.c.l.b16 %v6699
        %v7294 = vunpack.c.h.b16 %v6699
        %v7295 = vunpack.c.l.b16 %v6700
        %v7296 = vunpack.c.h.b16 %v6700
        %v7297 = vunpack.c.l.b16 %v6701
        %v7298 = vunpack.c.h.b16 %v6701
        %v7299 = vunpack.c.l.b16 %v6702
        %v7300 = vunpack.c.h.b16 %v6702
        %v7301 = vunpack.c.l.b16 %v6703
        %v7302 = vunpack.c.h.b16 %v6703
        %v7303 = vunpack.c.l.b16 %v6704
        %v7304 = vunpack.c.h.b16 %v6704
        %v7305 = vunpack.c.l.b16 %v6705
        %v7306 = vunpack.c.h.b16 %v6705
        %v7307 = vunpack.c.l.b16 %v6706
        %v7308 = vunpack.c.h.b16 %v6706
        %v7309 = vunpack.c.l.b16 %v6707
        %v7310 = vunpack.c.h.b16 %v6707
        %v7311 = vunpack.c.l.b16 %v6708
        %v7312 = vunpack.c.h.b16 %v6708
        %v7313 = vunpack.c.l.b16 %v6709
        %v7314 = vunpack.c.h.b16 %v6709
        %v7315 = vunpack.c.l.b16 %v6710
        %v7316 = vunpack.c.h.b16 %v6710
        %v7317 = vunpack.c.l.b16 %v6711
        %v7318 = vunpack.c.h.b16 %v6711
        %v7319 = vunpack.c.l.b16 %v6712
        %v7320 = vunpack.c.h.b16 %v6712
        %v7321 = vunpack.c.l.b16 %v6713
        %v7322 = vunpack.c.h.b16 %v6713
        %v7323 = vunpack.c.l.b16 %v6714
        %v7324 = vunpack.c.h.b16 %v6714
        %v7325 = vunpack.c.l.b16 %v6715
        %v7326 = vunpack.c.h.b16 %v6715
        %v7327 = vunpack.c.l.b16 %v6716
        %v7328 = vunpack.c.h.b16 %v6716
        %v7329 = vunpack.c.l.b16 %v6717
        %v7330 = vunpack.c.h.b16 %v6717
        %v7331 = vunpack.c.l.b16 %v6718
        %v7332 = vunpack.c.h.b16 %v6718
        %v7333 = vunpack.c.l.b16 %v6719
        %v7334 = vunpack.c.h.b16 %v6719
        %v7335 = vunpack.c.l.b16 %v6720
        %v7336 = vunpack.c.h.b16 %v6720
        %v7337 = vunpack.c.l.b16 %v6721
        %v7338 = vunpack.c.h.b16 %v6721
        %v7339 = vunpack.c.l.b16 %v6722
        %v7340 = vunpack.c.h.b16 %v6722
        %v7341 = vunpack.c.l.b16 %v6723
        %v7342 = vunpack.c.h.b16 %v6723
        %v7343 = vunpack.c.l.b16 %v6724
        %v7344 = vunpack.c.h.b16 %v6724
        %v7345 = vunpack.c.l.b16 %v6725
        %v7346 = vunpack.c.h.b16 %v6725
        %v7347 = vunpack.c.l.b16 %v6726
        %v7348 = vunpack.c.h.b16 %v6726
        %v7349 = vunpack.c.l.b16 %v6727
        %v7350 = vunpack.c.h.b16 %v6727
        %v7351 = vunpack.c.l.b16 %v6728
        %v7352 = vunpack.c.h.b16 %v6728
        %v7353 = vunpack.c.l.b16 %v6729
        %v7354 = vunpack.c.h.b16 %v6729
        %v7355 = vunpack.c.l.b16 %v6730
        %v7356 = vunpack.c.h.b16 %v6730
        %v7357 = vunpack.c.l.b16 %v6731
        %v7358 = vunpack.c.h.b16 %v6731
        %v7359 = vunpack.c.l.b16 %v6732
        %v7360 = vunpack.c.h.b16 %v6732
        %v7361 = vunpack.c.l.b16 %v6733
        %v7362 = vunpack.c.h.b16 %v6733
        %v7363 = vunpack.c.l.b16 %v6734
        %v7364 = vunpack.c.h.b16 %v6734
        %v7365 = vunpack.c.l.b16 %v6735
        %v7366 = vunpack.c.h.b16 %v6735
        %v7367 = vunpack.c.l.b16 %v6736
        %v7368 = vunpack.c.h.b16 %v6736
        %v7369 = vunpack.c.l.b16 %v6737
        %v7370 = vunpack.c.h.b16 %v6737
        %v7371 = vunpack.c.l.b16 %v6738
        %v7372 = vunpack.c.h.b16 %v6738
        %v7373 = vunpack.c.l.b16 %v6739
        %v7374 = vunpack.c.h.b16 %v6739
        %v7375 = vunpack.c.l.b16 %v6740
        %v7376 = vunpack.c.h.b16 %v6740
        %v7377 = vunpack.c.l.b16 %v6741
        %v7378 = vunpack.c.h.b16 %v6741
        %v7379 = vunpack.c.l.b16 %v6742
        %v7380 = vunpack.c.h.b16 %v6742
        %v7381 = vunpack.c.l.b16 %v6743
        %v7382 = vunpack.c.h.b16 %v6743
        %v7383 = vunpack.c.l.b16 %v6744
        %v7384 = vunpack.c.h.b16 %v6744
        %v7385 = vunpack.c.l.b16 %v6745
        %v7386 = vunpack.c.h.b16 %v6745
        %v7387 = vunpack.c.l.b16 %v6746
        %v7388 = vunpack.c.h.b16 %v6746
        %v7389 = vunpack.c.l.b16 %v6747
        %v7390 = vunpack.c.h.b16 %v6747
        %v7391 = vunpack.c.l.b16 %v6748
        %v7392 = vunpack.c.h.b16 %v6748
        %v7393 = vunpack.c.l.b16 %v6749
        %v7394 = vunpack.c.h.b16 %v6749
        %v7395 = vunpack.c.l.b16 %v6750
        %v7396 = vunpack.c.h.b16 %v6750
        %v7397 = vunpack.c.l.b16 %v6751
        %v7398 = vunpack.c.h.b16 %v6751
        %v7399 = vunpack.c.l.b16 %v6752
        %v7400 = vunpack.c.h.b16 %v6752
        %v7401 = vunpack.c.l.b16 %v6753
        %v7402 = vunpack.c.h.b16 %v6753
        %v7403 = vunpack.c.l.b16 %v6754
        %v7404 = vunpack.c.h.b16 %v6754
        %v7405 = vunpack.c.l.b16 %v6755
        %v7406 = vunpack.c.h.b16 %v6755
        %v7407 = vunpack.c.l.b16 %v6756
        %v7408 = vunpack.c.h.b16 %v6756
        %v7409 = vunpack.c.l.b16 %v6757
        %v7410 = vunpack.c.h.b16 %v6757
        %v7411 = vunpack.c.l.b16 %v6758
        %v7412 = vunpack.c.h.b16 %v6758
        %v7413 = vunpack.c.l.b16 %v6759
        %v7414 = vunpack.c.h.b16 %v6759
        %v7415 = vunpack.c.l.b16 %v6760
        %v7416 = vunpack.c.h.b16 %v6760
        %v7417 = vunpack.c.l.b16 %v6761
        %v7418 = vunpack.c.h.b16 %v6761
        %v7419 = vunpack.c.l.b16 %v6762
        %v7420 = vunpack.c.h.b16 %v6762
        %v7421 = vunpack.c.l.b16 %v6763
        %v7422 = vunpack.c.h.b16 %v6763
        %v7423 = vunpack.c.l.b16 %v6764
        %v7424 = vunpack.c.h.b16 %v6764
        %v7425 = vunpack.c.l.b16 %v6765
        %v7426 = vunpack.c.h.b16 %v6765
        %v7427 = vunpack.c.l.b16 %v6766
        %v7428 = vunpack.c.h.b16 %v6766
        %v7429 = vunpack.c.l.b16 %v6767
        %v7430 = vunpack.c.h.b16 %v6767
        %v7431 = vunpack.c.l.b16 %v6768
        %v7432 = vunpack.c.h.b16 %v6768
        %v7433 = vunpack.c.l.b16 %v6769
        %v7434 = vunpack.c.h.b16 %v6769
        %v7435 = vunpack.c.l.b16 %v6770
        %v7436 = vunpack.c.h.b16 %v6770
        %v7437 = vunpack.c.l.b16 %v6771
        %v7438 = vunpack.c.h.b16 %v6771
        %v7439 = vunpack.c.l.b16 %v6772
        %v7440 = vunpack.c.h.b16 %v6772
        %v7441 = vunpack.c.l.b16 %v6773
        %v7442 = vunpack.c.h.b16 %v6773
        %v7443 = vunpack.c.l.b16 %v6774
        %v7444 = vunpack.c.h.b16 %v6774
        %v7445 = vunpack.c.l.b16 %v6775
        %v7446 = vunpack.c.h.b16 %v6775
        %v7447 = vunpack.c.l.b16 %v6776
        %v7448 = vunpack.c.h.b16 %v6776
        %v7449 = vunpack.c.l.b16 %v6777
        %v7450 = vunpack.c.h.b16 %v6777
        %v7451 = vunpack.c.l.b16 %v6778
        %v7452 = vunpack.c.h.b16 %v6778
        %v7453 = vunpack.c.l.b16 %v6779
        %v7454 = vunpack.c.h.b16 %v6779
        %v7455 = vunpack.c.l.b16 %v6780
        %v7456 = vunpack.c.h.b16 %v6780
        %v7457 = vunpack.c.l.b16 %v6781
        %v7458 = vunpack.c.h.b16 %v6781
        %v7459 = vunpack.c.l.b16 %v6782
        %v7460 = vunpack.c.h.b16 %v6782
        %v7461 = vunpack.c.l.b16 %v6783
        %v7462 = vunpack.c.h.b16 %v6783
        %v7463 = vunpack.c.l.b16 %v6784
        %v7464 = vunpack.c.h.b16 %v6784
        %v7465 = vunpack.c.l.b16 %v6785
        %v7466 = vunpack.c.h.b16 %v6785
        %v7467 = vunpack.c.l.b16 %v6786
        %v7468 = vunpack.c.h.b16 %v6786
        %v7469 = vunpack.c.l.b16 %v6787
        %v7470 = vunpack.c.h.b16 %v6787
        %v7471 = vunpack.c.l.b16 %v6788
        %v7472 = vunpack.c.h.b16 %v6788
        %v7473 = vunpack.c.l.b16 %v6789
        %v7474 = vunpack.c.h.b16 %v6789
        %v7475 = vunpack.c.l.b16 %v6790
        %v7476 = vunpack.c.h.b16 %v6790
        %v7477 = vunpack.c.l.b16 %v6791
        %v7478 = vunpack.c.h.b16 %v6791
        %v7479 = vunpack.c.l.b16 %v6792
        %v7480 = vunpack.c.h.b16 %v6792
        %v7481 = vunpack.c.l.b16 %v6793
        %v7482 = vunpack.c.h.b16 %v6793
        %v7483 = vunpack.c.l.b16 %v6794
        %v7484 = vunpack.c.h.b16 %v6794
        %v7485 = vunpack.c.l.b16 %v6795
        %v7486 = vunpack.c.h.b16 %v6795
        %v7487 = vunpack.c.l.b16 %v6796
        %v7488 = vunpack.c.h.b16 %v6796
        %v7489 = vunpack.c.l.b16 %v6797
        %v7490 = vunpack.c.h.b16 %v6797
        %v7491 = vunpack.c.l.b16 %v6798
        %v7492 = vunpack.c.h.b16 %v6798
        %v7493 = vunpack.c.l.b16 %v6799
        %v7494 = vunpack.c.h.b16 %v6799
        %v7495 = vunpack.c.l.b16 %v6800
        %v7496 = vunpack.c.h.b16 %v6800
        %v7497 = vunpack.c.l.b16 %v6801
        %v7498 = vunpack.c.h.b16 %v6801
        %v7499 = vunpack.c.l.b16 %v6802
        %v7500 = vunpack.c.h.b16 %v6802
        %v7501 = vunpack.c.l.b16 %v6803
        %v7502 = vunpack.c.h.b16 %v6803
        %v7503 = vunpack.c.l.b16 %v6804
        %v7504 = vunpack.c.h.b16 %v6804
        %v7505 = vunpack.c.l.b16 %v6805
        %v7506 = vunpack.c.h.b16 %v6805
        %v7507 = vunpack.c.l.b16 %v6806
        %v7508 = vunpack.c.h.b16 %v6806
        %v7509 = vunpack.c.l.b16 %v6807
        %v7510 = vunpack.c.h.b16 %v6807
        %v7511 = vunpack.c.l.b16 %v6808
        %v7512 = vunpack.c.h.b16 %v6808
        %v7513 = vunpack.c.l.b16 %v6809
        %v7514 = vunpack.c.h.b16 %v6809
        %v7515 = vunpack.c.l.b16 %v6810
        %v7516 = vunpack.c.h.b16 %v6810
        %v7517 = vunpack.c.l.b16 %v6811
        %v7518 = vunpack.c.h.b16 %v6811
        %v7519 = vunpack.c.l.b16 %v6812
        %v7520 = vunpack.c.h.b16 %v6812
        %v7521 = vunpack.c.l.b16 %v6813
        %v7522 = vunpack.c.h.b16 %v6813
        %v7523 = vunpack.c.l.b16 %v6814
        %v7524 = vunpack.c.h.b16 %v6814
        %v7525 = vpack.c.b16 %v7271, %v7269
        %v7526 = vpack.c.b16 %v7272, %v7270
        %v7527 = vpack.c.b16 %v7275, %v7273
        %v7528 = vpack.c.b16 %v7276, %v7274
        %v7529 = vpack.c.b16 %v7279, %v7277
        %v7530 = vpack.c.b16 %v7280, %v7278
        %v7531 = vpack.c.b16 %v7283, %v7281
        %v7532 = vpack.c.b16 %v7284, %v7282
        %v7533 = vpack.c.b16 %v7287, %v7285
        %v7534 = vpack.c.b16 %v7288, %v7286
        %v7535 = vpack.c.b16 %v7291, %v7289
        %v7536 = vpack.c.b16 %v7292, %v7290
        %v7537 = vpack.c.b16 %v7295, %v7293
        %v7538 = vpack.c.b16 %v7296, %v7294
        %v7539 = vpack.c.b16 %v7299, %v7297
        %v7540 = vpack.c.b16 %v7300, %v7298
        %v7541 = vpack.c.b16 %v7303, %v7301
        %v7542 = vpack.c.b16 %v7304, %v7302
        %v7543 = vpack.c.b16 %v7307, %v7305
        %v7544 = vpack.c.b16 %v7308, %v7306
        %v7545 = vpack.c.b16 %v7311, %v7309
        %v7546 = vpack.c.b16 %v7312, %v7310
        %v7547 = vpack.c.b16 %v7315, %v7313
        %v7548 = vpack.c.b16 %v7316, %v7314
        %v7549 = vpack.c.b16 %v7319, %v7317
        %v7550 = vpack.c.b16 %v7320, %v7318
        %v7551 = vpack.c.b16 %v7323, %v7321
        %v7552 = vpack.c.b16 %v7324, %v7322
        %v7553 = vpack.c.b16 %v7327, %v7325
        %v7554 = vpack.c.b16 %v7328, %v7326
        %v7555 = vpack.c.b16 %v7331, %v7329
        %v7556 = vpack.c.b16 %v7332, %v7330
        %v7557 = vpack.c.b16 %v7335, %v7333
        %v7558 = vpack.c.b16 %v7336, %v7334
        %v7559 = vpack.c.b16 %v7339, %v7337
        %v7560 = vpack.c.b16 %v7340, %v7338
        %v7561 = vpack.c.b16 %v7343, %v7341
        %v7562 = vpack.c.b16 %v7344, %v7342
        %v7563 = vpack.c.b16 %v7347, %v7345
        %v7564 = vpack.c.b16 %v7348, %v7346
        %v7565 = vpack.c.b16 %v7351, %v7349
        %v7566 = vpack.c.b16 %v7352, %v7350
        %v7567 = vpack.c.b16 %v7355, %v7353
        %v7568 = vpack.c.b16 %v7356, %v7354
        %v7569 = vpack.c.b16 %v7359, %v7357
        %v7570 = vpack.c.b16 %v7360, %v7358
        %v7571 = vpack.c.b16 %v7363, %v7361
        %v7572 = vpack.c.b16 %v7364, %v7362
        %v7573 = vpack.c.b16 %v7367, %v7365
        %v7574 = vpack.c.b16 %v7368, %v7366
        %v7575 = vpack.c.b16 %v7371, %v7369
        %v7576 = vpack.c.b16 %v7372, %v7370
        %v7577 = vpack.c.b16 %v7375, %v7373
        %v7578 = vpack.c.b16 %v7376, %v7374
        %v7579 = vpack.c.b16 %v7379, %v7377
        %v7580 = vpack.c.b16 %v7380, %v7378
        %v7581 = vpack.c.b16 %v7383, %v7381
        %v7582 = vpack.c.b16 %v7384, %v7382
        %v7583 = vpack.c.b16 %v7387, %v7385
        %v7584 = vpack.c.b16 %v7388, %v7386
        %v7585 = vpack.c.b16 %v7391, %v7389
        %v7586 = vpack.c.b16 %v7392, %v7390
        %v7587 = vpack.c.b16 %v7395, %v7393
        %v7588 = vpack.c.b16 %v7396, %v7394
        %v7589 = vpack.c.b16 %v7399, %v7397
        %v7590 = vpack.c.b16 %v7400, %v7398
        %v7591 = vpack.c.b16 %v7403, %v7401
        %v7592 = vpack.c.b16 %v7404, %v7402
        %v7593 = vpack.c.b16 %v7407, %v7405
        %v7594 = vpack.c.b16 %v7408, %v7406
        %v7595 = vpack.c.b16 %v7411, %v7409
        %v7596 = vpack.c.b16 %v7412, %v7410
        %v7597 = vpack.c.b16 %v7415, %v7413
        %v7598 = vpack.c.b16 %v7416, %v7414
        %v7599 = vpack.c.b16 %v7419, %v7417
        %v7600 = vpack.c.b16 %v7420, %v7418
        %v7601 = vpack.c.b16 %v7423, %v7421
        %v7602 = vpack.c.b16 %v7424, %v7422
        %v7603 = vpack.c.b16 %v7427, %v7425
        %v7604 = vpack.c.b16 %v7428, %v7426
        %v7605 = vpack.c.b16 %v7431, %v7429
        %v7606 = vpack.c.b16 %v7432, %v7430
        %v7607 = vpack.c.b16 %v7435, %v7433
        %v7608 = vpack.c.b16 %v7436, %v7434
        %v7609 = vpack.c.b16 %v7439, %v7437
        %v7610 = vpack.c.b16 %v7440, %v7438
        %v7611 = vpack.c.b16 %v7443, %v7441
        %v7612 = vpack.c.b16 %v7444, %v7442
        %v7613 = vpack.c.b16 %v7447, %v7445
        %v7614 = vpack.c.b16 %v7448, %v7446
        %v7615 = vpack.c.b16 %v7451, %v7449
        %v7616 = vpack.c.b16 %v7452, %v7450
        %v7617 = vpack.c.b16 %v7455, %v7453
        %v7618 = vpack.c.b16 %v7456, %v7454
        %v7619 = vpack.c.b16 %v7459, %v7457
        %v7620 = vpack.c.b16 %v7460, %v7458
        %v7621 = vpack.c.b16 %v7463, %v7461
        %v7622 = vpack.c.b16 %v7464, %v7462
        %v7623 = vpack.c.b16 %v7467, %v7465
        %v7624 = vpack.c.b16 %v7468, %v7466
        %v7625 = vpack.c.b16 %v7471, %v7469
        %v7626 = vpack.c.b16 %v7472, %v7470
        %v7627 = vpack.c.b16 %v7475, %v7473
        %v7628 = vpack.c.b16 %v7476, %v7474
        %v7629 = vpack.c.b16 %v7479, %v7477
        %v7630 = vpack.c.b16 %v7480, %v7478
        %v7631 = vpack.c.b16 %v7483, %v7481
        %v7632 = vpack.c.b16 %v7484, %v7482
        %v7633 = vpack.c.b16 %v7487, %v7485
        %v7634 = vpack.c.b16 %v7488, %v7486
        %v7635 = vpack.c.b16 %v7491, %v7489
        %v7636 = vpack.c.b16 %v7492, %v7490
        %v7637 = vpack.c.b16 %v7495, %v7493
        %v7638 = vpack.c.b16 %v7496, %v7494
        %v7639 = vpack.c.b16 %v7499, %v7497
        %v7640 = vpack.c.b16 %v7500, %v7498
        %v7641 = vpack.c.b16 %v7503, %v7501
        %v7642 = vpack.c.b16 %v7504, %v7502
        %v7643 = vpack.c.b16 %v7507, %v7505
        %v7644 = vpack.c.b16 %v7508, %v7506
        %v7645 = vpack.c.b16 %v7511, %v7509
        %v7646 = vpack.c.b16 %v7512, %v7510
        %v7647 = vpack.c.b16 %v7515, %v7513
        %v7648 = vpack.c.b16 %v7516, %v7514
        %v7649 = vpack.c.b16 %v7519, %v7517
        %v7650 = vpack.c.b16 %v7520, %v7518
        %v7651 = vpack.c.b16 %v7523, %v7521
        %v7652 = vpack.c.b16 %v7524, %v7522
        %7781 = vmatpush.bf16.msra.mxu0 %v7539
        %7782 = vmatpush.bf16.msra.mxu0 %v7537
        %7783 = vmatpush.bf16.msra.mxu0 %v7535
        %7784 = vmatpush.bf16.msra.mxu0 %v7533
        %7785 = vmatpush.bf16.msra.mxu0 %v7531
        %7786 = vmatpush.bf16.msra.mxu0 %v7529
        %7787 = vmatpush.bf16.msra.mxu0 %v7527
        %7788 = vmatpush.bf16.msra.mxu0 %v7525
        %7789 = vmatmul.bf16.gmra.mxu0 %v7013
        %v7790 = vpop.f32.mrf.mxu0
        %v7791 = vadd.f32 %v6817, %v7790
        %v7792 = vpop.f32.mrf.mxu0
        %v7793 = vadd.f32 %v6817, %v7792
        %7794 = vmatmul.bf16.gmra.mxu0 %v7021
        %v7795 = vpop.f32.mrf.mxu0
        %v7796 = vadd.f32 %v6817, %v7795
        %v7797 = vpop.f32.mrf.mxu0
        %v7798 = vadd.f32 %v6817, %v7797
        %7799 = vmatmul.bf16.gmra.mxu0 %v7029
        %v7800 = vpop.f32.mrf.mxu0
        %v7801 = vadd.f32 %v6817, %v7800
        %v7802 = vpop.f32.mrf.mxu0
        %v7803 = vadd.f32 %v6817, %v7802
        %7804 = vmatmul.bf16.gmra.mxu0 %v7037
        %v7805 = vpop.f32.mrf.mxu0
        %v7806 = vadd.f32 %v6817, %v7805
        %v7807 = vpop.f32.mrf.mxu0
        %v7808 = vadd.f32 %v6817, %v7807
        %7809 = vmatmul.bf16.gmra.mxu0 %v7045
        %v7810 = vpop.f32.mrf.mxu0
        %v7811 = vadd.f32 %v6817, %v7810
        %v7812 = vpop.f32.mrf.mxu0
        %v7813 = vadd.f32 %v6817, %v7812
        %7814 = vmatmul.bf16.gmra.mxu0 %v7053
        %v7815 = vpop.f32.mrf.mxu0
        %v7816 = vadd.f32 %v6817, %v7815
        %v7817 = vpop.f32.mrf.mxu0
        %v7818 = vadd.f32 %v6817, %v7817
        %7819 = vmatmul.bf16.gmra.mxu0 %v7061
        %v7820 = vpop.f32.mrf.mxu0
        %v7821 = vadd.f32 %v6817, %v7820
        %v7822 = vpop.f32.mrf.mxu0
        %v7823 = vadd.f32 %v6817, %v7822
        %7824 = vmatmul.bf16.gmra.mxu0 %v7069
        %v7825 = vpop.f32.mrf.mxu0
        %v7826 = vadd.f32 %v6817, %v7825
        %v7827 = vpop.f32.mrf.mxu0
        %v7828 = vadd.f32 %v6817, %v7827
        %7829 = vdwg.mxu0
        %7830 = vmatpush.bf16.msra.mxu0 %v7555
        %7831 = vmatpush.bf16.msra.mxu0 %v7553
        %7832 = vmatpush.bf16.msra.mxu0 %v7551
        %7833 = vmatpush.bf16.msra.mxu0 %v7549
        %7834 = vmatpush.bf16.msra.mxu0 %v7547
        %7835 = vmatpush.bf16.msra.mxu0 %v7545
        %7836 = vmatpush.bf16.msra.mxu0 %v7543
        %7837 = vmatpush.bf16.msra.mxu0 %v7541
        %7838 = vmatmul.bf16.gmra.mxu0 %v7014
        %v7839 = vpop.f32.mrf.mxu0
        %v7840 = vadd.f32 %v7791, %v7839
        %v7841 = vpop.f32.mrf.mxu0
        %v7842 = vadd.f32 %v7793, %v7841
        %7843 = vmatmul.bf16.gmra.mxu0 %v7022
        %v7844 = vpop.f32.mrf.mxu0
        %v7845 = vadd.f32 %v7796, %v7844
        %v7846 = vpop.f32.mrf.mxu0
        %v7847 = vadd.f32 %v7798, %v7846
        %7848 = vmatmul.bf16.gmra.mxu0 %v7030
        %v7849 = vpop.f32.mrf.mxu0
        %v7850 = vadd.f32 %v7801, %v7849
        %v7851 = vpop.f32.mrf.mxu0
        %v7852 = vadd.f32 %v7803, %v7851
        %7853 = vmatmul.bf16.gmra.mxu0 %v7038
        %v7854 = vpop.f32.mrf.mxu0
        %v7855 = vadd.f32 %v7806, %v7854
        %v7856 = vpop.f32.mrf.mxu0
        %v7857 = vadd.f32 %v7808, %v7856
        %7858 = vmatmul.bf16.gmra.mxu0 %v7046
        %v7859 = vpop.f32.mrf.mxu0
        %v7860 = vadd.f32 %v7811, %v7859
        %v7861 = vpop.f32.mrf.mxu0
        %v7862 = vadd.f32 %v7813, %v7861
        %7863 = vmatmul.bf16.gmra.mxu0 %v7054
        %v7864 = vpop.f32.mrf.mxu0
        %v7865 = vadd.f32 %v7816, %v7864
        %v7866 = vpop.f32.mrf.mxu0
        %v7867 = vadd.f32 %v7818, %v7866
        %7868 = vmatmul.bf16.gmra.mxu0 %v7062
        %v7869 = vpop.f32.mrf.mxu0
        %v7870 = vadd.f32 %v7821, %v7869
        %v7871 = vpop.f32.mrf.mxu0
        %v7872 = vadd.f32 %v7823, %v7871
        %7873 = vmatmul.bf16.gmra.mxu0 %v7070
        %v7874 = vpop.f32.mrf.mxu0
        %v7875 = vadd.f32 %v7826, %v7874
        %v7876 = vpop.f32.mrf.mxu0
        %v7877 = vadd.f32 %v7828, %v7876
        %7878 = vdwg.mxu0
        %7879 = vmatpush.bf16.msra.mxu0 %v7571
        %7880 = vmatpush.bf16.msra.mxu0 %v7569
        %7881 = vmatpush.bf16.msra.mxu0 %v7567
        %7882 = vmatpush.bf16.msra.mxu0 %v7565
        %7883 = vmatpush.bf16.msra.mxu0 %v7563
        %7884 = vmatpush.bf16.msra.mxu0 %v7561
        %7885 = vmatpush.bf16.msra.mxu0 %v7559
        %7886 = vmatpush.bf16.msra.mxu0 %v7557
        %7887 = vmatmul.bf16.gmra.mxu0 %v7015
        %v7888 = vpop.f32.mrf.mxu0
        %v7889 = vadd.f32 %v7840, %v7888
        %v7890 = vpop.f32.mrf.mxu0
        %v7891 = vadd.f32 %v7842, %v7890
        %7892 = vmatmul.bf16.gmra.mxu0 %v7023
        %v7893 = vpop.f32.mrf.mxu0
        %v7894 = vadd.f32 %v7845, %v7893
        %v7895 = vpop.f32.mrf.mxu0
        %v7896 = vadd.f32 %v7847, %v7895
        %7897 = vmatmul.bf16.gmra.mxu0 %v7031
        %v7898 = vpop.f32.mrf.mxu0
        %v7899 = vadd.f32 %v7850, %v7898
        %v7900 = vpop.f32.mrf.mxu0
        %v7901 = vadd.f32 %v7852, %v7900
        %7902 = vmatmul.bf16.gmra.mxu0 %v7039
        %v7903 = vpop.f32.mrf.mxu0
        %v7904 = vadd.f32 %v7855, %v7903
        %v7905 = vpop.f32.mrf.mxu0
        %v7906 = vadd.f32 %v7857, %v7905
        %7907 = vmatmul.bf16.gmra.mxu0 %v7047
        %v7908 = vpop.f32.mrf.mxu0
        %v7909 = vadd.f32 %v7860, %v7908
        %v7910 = vpop.f32.mrf.mxu0
        %v7911 = vadd.f32 %v7862, %v7910
        %7912 = vmatmul.bf16.gmra.mxu0 %v7055
        %v7913 = vpop.f32.mrf.mxu0
        %v7914 = vadd.f32 %v7865, %v7913
        %v7915 = vpop.f32.mrf.mxu0
        %v7916 = vadd.f32 %v7867, %v7915
        %7917 = vmatmul.bf16.gmra.mxu0 %v7063
        %v7918 = vpop.f32.mrf.mxu0
        %v7919 = vadd.f32 %v7870, %v7918
        %v7920 = vpop.f32.mrf.mxu0
        %v7921 = vadd.f32 %v7872, %v7920
        %7922 = vmatmul.bf16.gmra.mxu0 %v7071
        %v7923 = vpop.f32.mrf.mxu0
        %v7924 = vadd.f32 %v7875, %v7923
        %v7925 = vpop.f32.mrf.mxu0
        %v7926 = vadd.f32 %v7877, %v7925
        %7927 = vdwg.mxu0
        %7928 = vmatpush.bf16.msra.mxu0 %v7587
        %7929 = vmatpush.bf16.msra.mxu0 %v7585
        %7930 = vmatpush.bf16.msra.mxu0 %v7583
        %7931 = vmatpush.bf16.msra.mxu0 %v7581
        %7932 = vmatpush.bf16.msra.mxu0 %v7579
        %7933 = vmatpush.bf16.msra.mxu0 %v7577
        %7934 = vmatpush.bf16.msra.mxu0 %v7575
        %7935 = vmatpush.bf16.msra.mxu0 %v7573
        %7936 = vmatmul.bf16.gmra.mxu0 %v7016
        %v7937 = vpop.f32.mrf.mxu0
        %v7938 = vadd.f32 %v7889, %v7937
        %v7939 = vpop.f32.mrf.mxu0
        %v7940 = vadd.f32 %v7891, %v7939
        %7941 = vmatmul.bf16.gmra.mxu0 %v7024
        %v7942 = vpop.f32.mrf.mxu0
        %v7943 = vadd.f32 %v7894, %v7942
        %v7944 = vpop.f32.mrf.mxu0
        %v7945 = vadd.f32 %v7896, %v7944
        %7946 = vmatmul.bf16.gmra.mxu0 %v7032
        %v7947 = vpop.f32.mrf.mxu0
        %v7948 = vadd.f32 %v7899, %v7947
        %v7949 = vpop.f32.mrf.mxu0
        %v7950 = vadd.f32 %v7901, %v7949
        %7951 = vmatmul.bf16.gmra.mxu0 %v7040
        %v7952 = vpop.f32.mrf.mxu0
        %v7953 = vadd.f32 %v7904, %v7952
        %v7954 = vpop.f32.mrf.mxu0
        %v7955 = vadd.f32 %v7906, %v7954
        %7956 = vmatmul.bf16.gmra.mxu0 %v7048
        %v7957 = vpop.f32.mrf.mxu0
        %v7958 = vadd.f32 %v7909, %v7957
        %v7959 = vpop.f32.mrf.mxu0
        %v7960 = vadd.f32 %v7911, %v7959
        %7961 = vmatmul.bf16.gmra.mxu0 %v7056
        %v7962 = vpop.f32.mrf.mxu0
        %v7963 = vadd.f32 %v7914, %v7962
        %v7964 = vpop.f32.mrf.mxu0
        %v7965 = vadd.f32 %v7916, %v7964
        %7966 = vmatmul.bf16.gmra.mxu0 %v7064
        %v7967 = vpop.f32.mrf.mxu0
        %v7968 = vadd.f32 %v7919, %v7967
        %v7969 = vpop.f32.mrf.mxu0
        %v7970 = vadd.f32 %v7921, %v7969
        %7971 = vmatmul.bf16.gmra.mxu0 %v7072
        %v7972 = vpop.f32.mrf.mxu0
        %v7973 = vadd.f32 %v7924, %v7972
        %v7974 = vpop.f32.mrf.mxu0
        %v7975 = vadd.f32 %v7926, %v7974
        %7976 = vdwg.mxu0
        %7977 = vmatpush.bf16.msra.mxu0 %v7603
        %7978 = vmatpush.bf16.msra.mxu0 %v7601
        %7979 = vmatpush.bf16.msra.mxu0 %v7599
        %7980 = vmatpush.bf16.msra.mxu0 %v7597
        %7981 = vmatpush.bf16.msra.mxu0 %v7595
        %7982 = vmatpush.bf16.msra.mxu0 %v7593
        %7983 = vmatpush.bf16.msra.mxu0 %v7591
        %7984 = vmatpush.bf16.msra.mxu0 %v7589
        %7985 = vmatmul.bf16.gmra.mxu0 %v7017
        %v7986 = vpop.f32.mrf.mxu0
        %v7987 = vadd.f32 %v7938, %v7986
        %v7988 = vpop.f32.mrf.mxu0
        %v7989 = vadd.f32 %v7940, %v7988
        %7990 = vmatmul.bf16.gmra.mxu0 %v7025
        %v7991 = vpop.f32.mrf.mxu0
        %v7992 = vadd.f32 %v7943, %v7991
        %v7993 = vpop.f32.mrf.mxu0
        %v7994 = vadd.f32 %v7945, %v7993
        %7995 = vmatmul.bf16.gmra.mxu0 %v7033
        %v7996 = vpop.f32.mrf.mxu0
        %v7997 = vadd.f32 %v7948, %v7996
        %v7998 = vpop.f32.mrf.mxu0
        %v7999 = vadd.f32 %v7950, %v7998
        %8000 = vmatmul.bf16.gmra.mxu0 %v7041
        %v8001 = vpop.f32.mrf.mxu0
        %v8002 = vadd.f32 %v7953, %v8001
        %v8003 = vpop.f32.mrf.mxu0
        %v8004 = vadd.f32 %v7955, %v8003
        %8005 = vmatmul.bf16.gmra.mxu0 %v7049
        %v8006 = vpop.f32.mrf.mxu0
        %v8007 = vadd.f32 %v7958, %v8006
        %v8008 = vpop.f32.mrf.mxu0
        %v8009 = vadd.f32 %v7960, %v8008
        %8010 = vmatmul.bf16.gmra.mxu0 %v7057
        %v8011 = vpop.f32.mrf.mxu0
        %v8012 = vadd.f32 %v7963, %v8011
        %v8013 = vpop.f32.mrf.mxu0
        %v8014 = vadd.f32 %v7965, %v8013
        %8015 = vmatmul.bf16.gmra.mxu0 %v7065
        %v8016 = vpop.f32.mrf.mxu0
        %v8017 = vadd.f32 %v7968, %v8016
        %v8018 = vpop.f32.mrf.mxu0
        %v8019 = vadd.f32 %v7970, %v8018
        %8020 = vmatmul.bf16.gmra.mxu0 %v7073
        %v8021 = vpop.f32.mrf.mxu0
        %v8022 = vadd.f32 %v7973, %v8021
        %v8023 = vpop.f32.mrf.mxu0
        %v8024 = vadd.f32 %v7975, %v8023
        %8025 = vdwg.mxu0
        %8026 = vmatpush.bf16.msra.mxu0 %v7619
        %8027 = vmatpush.bf16.msra.mxu0 %v7617
        %8028 = vmatpush.bf16.msra.mxu0 %v7615
        %8029 = vmatpush.bf16.msra.mxu0 %v7613
        %8030 = vmatpush.bf16.msra.mxu0 %v7611
        %8031 = vmatpush.bf16.msra.mxu0 %v7609
        %8032 = vmatpush.bf16.msra.mxu0 %v7607
        %8033 = vmatpush.bf16.msra.mxu0 %v7605
        %8034 = vmatmul.bf16.gmra.mxu0 %v7018
        %v8035 = vpop.f32.mrf.mxu0
        %v8036 = vadd.f32 %v7987, %v8035
        %v8037 = vpop.f32.mrf.mxu0
        %v8038 = vadd.f32 %v7989, %v8037
        %8039 = vmatmul.bf16.gmra.mxu0 %v7026
        %v8040 = vpop.f32.mrf.mxu0
        %v8041 = vadd.f32 %v7992, %v8040
        %v8042 = vpop.f32.mrf.mxu0
        %v8043 = vadd.f32 %v7994, %v8042
        %8044 = vmatmul.bf16.gmra.mxu0 %v7034
        %v8045 = vpop.f32.mrf.mxu0
        %v8046 = vadd.f32 %v7997, %v8045
        %v8047 = vpop.f32.mrf.mxu0
        %v8048 = vadd.f32 %v7999, %v8047
        %8049 = vmatmul.bf16.gmra.mxu0 %v7042
        %v8050 = vpop.f32.mrf.mxu0
        %v8051 = vadd.f32 %v8002, %v8050
        %v8052 = vpop.f32.mrf.mxu0
        %v8053 = vadd.f32 %v8004, %v8052
        %8054 = vmatmul.bf16.gmra.mxu0 %v7050
        %v8055 = vpop.f32.mrf.mxu0
        %v8056 = vadd.f32 %v8007, %v8055
        %v8057 = vpop.f32.mrf.mxu0
        %v8058 = vadd.f32 %v8009, %v8057
        %8059 = vmatmul.bf16.gmra.mxu0 %v7058
        %v8060 = vpop.f32.mrf.mxu0
        %v8061 = vadd.f32 %v8012, %v8060
        %v8062 = vpop.f32.mrf.mxu0
        %v8063 = vadd.f32 %v8014, %v8062
        %8064 = vmatmul.bf16.gmra.mxu0 %v7066
        %v8065 = vpop.f32.mrf.mxu0
        %v8066 = vadd.f32 %v8017, %v8065
        %v8067 = vpop.f32.mrf.mxu0
        %v8068 = vadd.f32 %v8019, %v8067
        %8069 = vmatmul.bf16.gmra.mxu0 %v7074
        %v8070 = vpop.f32.mrf.mxu0
        %v8071 = vadd.f32 %v8022, %v8070
        %v8072 = vpop.f32.mrf.mxu0
        %v8073 = vadd.f32 %v8024, %v8072
        %8074 = vdwg.mxu0
        %8075 = vmatpush.bf16.msra.mxu0 %v7635
        %8076 = vmatpush.bf16.msra.mxu0 %v7633
        %8077 = vmatpush.bf16.msra.mxu0 %v7631
        %8078 = vmatpush.bf16.msra.mxu0 %v7629
        %8079 = vmatpush.bf16.msra.mxu0 %v7627
        %8080 = vmatpush.bf16.msra.mxu0 %v7625
        %8081 = vmatpush.bf16.msra.mxu0 %v7623
        %8082 = vmatpush.bf16.msra.mxu0 %v7621
        %8083 = vmatmul.bf16.gmra.mxu0 %v7019
        %v8084 = vpop.f32.mrf.mxu0
        %v8085 = vadd.f32 %v8036, %v8084
        %v8086 = vpop.f32.mrf.mxu0
        %v8087 = vadd.f32 %v8038, %v8086
        %8088 = vmatmul.bf16.gmra.mxu0 %v7027
        %v8089 = vpop.f32.mrf.mxu0
        %v8090 = vadd.f32 %v8041, %v8089
        %v8091 = vpop.f32.mrf.mxu0
        %v8092 = vadd.f32 %v8043, %v8091
        %8093 = vmatmul.bf16.gmra.mxu0 %v7035
        %v8094 = vpop.f32.mrf.mxu0
        %v8095 = vadd.f32 %v8046, %v8094
        %v8096 = vpop.f32.mrf.mxu0
        %v8097 = vadd.f32 %v8048, %v8096
        %8098 = vmatmul.bf16.gmra.mxu0 %v7043
        %v8099 = vpop.f32.mrf.mxu0
        %v8100 = vadd.f32 %v8051, %v8099
        %v8101 = vpop.f32.mrf.mxu0
        %v8102 = vadd.f32 %v8053, %v8101
        %8103 = vmatmul.bf16.gmra.mxu0 %v7051
        %v8104 = vpop.f32.mrf.mxu0
        %v8105 = vadd.f32 %v8056, %v8104
        %v8106 = vpop.f32.mrf.mxu0
        %v8107 = vadd.f32 %v8058, %v8106
        %8108 = vmatmul.bf16.gmra.mxu0 %v7059
        %v8109 = vpop.f32.mrf.mxu0
        %v8110 = vadd.f32 %v8061, %v8109
        %v8111 = vpop.f32.mrf.mxu0
        %v8112 = vadd.f32 %v8063, %v8111
        %8113 = vmatmul.bf16.gmra.mxu0 %v7067
        %v8114 = vpop.f32.mrf.mxu0
        %v8115 = vadd.f32 %v8066, %v8114
        %v8116 = vpop.f32.mrf.mxu0
        %v8117 = vadd.f32 %v8068, %v8116
        %8118 = vmatmul.bf16.gmra.mxu0 %v7075
        %v8119 = vpop.f32.mrf.mxu0
        %v8120 = vadd.f32 %v8071, %v8119
        %v8121 = vpop.f32.mrf.mxu0
        %v8122 = vadd.f32 %v8073, %v8121
        %8123 = vdwg.mxu0
        %8124 = vmatpush.bf16.msra.mxu0 %v7651
        %8125 = vmatpush.bf16.msra.mxu0 %v7649
        %8126 = vmatpush.bf16.msra.mxu0 %v7647
        %8127 = vmatpush.bf16.msra.mxu0 %v7645
        %8128 = vmatpush.bf16.msra.mxu0 %v7643
        %8129 = vmatpush.bf16.msra.mxu0 %v7641
        %8130 = vmatpush.bf16.msra.mxu0 %v7639
        %8131 = vmatpush.bf16.msra.mxu0 %v7637
        %8132 = vmatmul.bf16.gmra.mxu0 %v7020
        %v8133 = vpop.f32.mrf.mxu0
        %v8134 = vadd.f32 %v8085, %v8133
        %v8135 = vpop.f32.mrf.mxu0
        %v8136 = vadd.f32 %v8087, %v8135
        %8137 = vmatmul.bf16.gmra.mxu0 %v7028
        %v8138 = vpop.f32.mrf.mxu0
        %v8139 = vadd.f32 %v8090, %v8138
        %v8140 = vpop.f32.mrf.mxu0
        %v8141 = vadd.f32 %v8092, %v8140
        %8142 = vmatmul.bf16.gmra.mxu0 %v7036
        %v8143 = vpop.f32.mrf.mxu0
        %v8144 = vadd.f32 %v8095, %v8143
        %v8145 = vpop.f32.mrf.mxu0
        %v8146 = vadd.f32 %v8097, %v8145
        %8147 = vmatmul.bf16.gmra.mxu0 %v7044
        %v8148 = vpop.f32.mrf.mxu0
        %v8149 = vadd.f32 %v8100, %v8148
        %v8150 = vpop.f32.mrf.mxu0
        %v8151 = vadd.f32 %v8102, %v8150
        %8152 = vmatmul.bf16.gmra.mxu0 %v7052
        %v8153 = vpop.f32.mrf.mxu0
        %v8154 = vadd.f32 %v8105, %v8153
        %v8155 = vpop.f32.mrf.mxu0
        %v8156 = vadd.f32 %v8107, %v8155
        %8157 = vmatmul.bf16.gmra.mxu0 %v7060
        %v8158 = vpop.f32.mrf.mxu0
        %v8159 = vadd.f32 %v8110, %v8158
        %v8160 = vpop.f32.mrf.mxu0
        %v8161 = vadd.f32 %v8112, %v8160
        %8162 = vmatmul.bf16.gmra.mxu0 %v7068
        %v8163 = vpop.f32.mrf.mxu0
        %v8164 = vadd.f32 %v8115, %v8163
        %v8165 = vpop.f32.mrf.mxu0
        %v8166 = vadd.f32 %v8117, %v8165
        %8167 = vmatmul.bf16.gmra.mxu0 %v7076
        %v8168 = vpop.f32.mrf.mxu0
        %v8169 = vadd.f32 %v8120, %v8168
        %v8170 = vpop.f32.mrf.mxu0
        %v8171 = vadd.f32 %v8122, %v8170
        %8172 = vdwg.mxu0
        %8173 = vmatpush.bf16.msra.mxu0 %v7540
        %8174 = vmatpush.bf16.msra.mxu0 %v7538
        %8175 = vmatpush.bf16.msra.mxu0 %v7536
        %8176 = vmatpush.bf16.msra.mxu0 %v7534
        %8177 = vmatpush.bf16.msra.mxu0 %v7532
        %8178 = vmatpush.bf16.msra.mxu0 %v7530
        %8179 = vmatpush.bf16.msra.mxu0 %v7528
        %8180 = vmatpush.bf16.msra.mxu0 %v7526
        %8181 = vmatmul.bf16.gmra.mxu0 %v7013
        %v8182 = vpop.f32.mrf.mxu0
        %v8183 = vadd.f32 %v6818, %v8182
        %v8184 = vpop.f32.mrf.mxu0
        %v8185 = vadd.f32 %v6818, %v8184
        %8186 = vmatmul.bf16.gmra.mxu0 %v7021
        %v8187 = vpop.f32.mrf.mxu0
        %v8188 = vadd.f32 %v6818, %v8187
        %v8189 = vpop.f32.mrf.mxu0
        %v8190 = vadd.f32 %v6818, %v8189
        %8191 = vmatmul.bf16.gmra.mxu0 %v7029
        %v8192 = vpop.f32.mrf.mxu0
        %v8193 = vadd.f32 %v6818, %v8192
        %v8194 = vpop.f32.mrf.mxu0
        %v8195 = vadd.f32 %v6818, %v8194
        %8196 = vmatmul.bf16.gmra.mxu0 %v7037
        %v8197 = vpop.f32.mrf.mxu0
        %v8198 = vadd.f32 %v6818, %v8197
        %v8199 = vpop.f32.mrf.mxu0
        %v8200 = vadd.f32 %v6818, %v8199
        %8201 = vmatmul.bf16.gmra.mxu0 %v7045
        %v8202 = vpop.f32.mrf.mxu0
        %v8203 = vadd.f32 %v6818, %v8202
        %v8204 = vpop.f32.mrf.mxu0
        %v8205 = vadd.f32 %v6818, %v8204
        %8206 = vmatmul.bf16.gmra.mxu0 %v7053
        %v8207 = vpop.f32.mrf.mxu0
        %v8208 = vadd.f32 %v6818, %v8207
        %v8209 = vpop.f32.mrf.mxu0
        %v8210 = vadd.f32 %v6818, %v8209
        %8211 = vmatmul.bf16.gmra.mxu0 %v7061
        %v8212 = vpop.f32.mrf.mxu0
        %v8213 = vadd.f32 %v6818, %v8212
        %v8214 = vpop.f32.mrf.mxu0
        %v8215 = vadd.f32 %v6818, %v8214
        %8216 = vmatmul.bf16.gmra.mxu0 %v7069
        %v8217 = vpop.f32.mrf.mxu0
        %v8218 = vadd.f32 %v6818, %v8217
        %v8219 = vpop.f32.mrf.mxu0
        %v8220 = vadd.f32 %v6818, %v8219
        %8221 = vdwg.mxu0
        %8222 = vmatpush.bf16.msra.mxu0 %v7556
        %8223 = vmatpush.bf16.msra.mxu0 %v7554
        %8224 = vmatpush.bf16.msra.mxu0 %v7552
        %8225 = vmatpush.bf16.msra.mxu0 %v7550
        %8226 = vmatpush.bf16.msra.mxu0 %v7548
        %8227 = vmatpush.bf16.msra.mxu0 %v7546
        %8228 = vmatpush.bf16.msra.mxu0 %v7544
        %8229 = vmatpush.bf16.msra.mxu0 %v7542
        %8230 = vmatmul.bf16.gmra.mxu0 %v7014
        %v8231 = vpop.f32.mrf.mxu0
        %v8232 = vadd.f32 %v8183, %v8231
        %v8233 = vpop.f32.mrf.mxu0
        %v8234 = vadd.f32 %v8185, %v8233
        %8235 = vmatmul.bf16.gmra.mxu0 %v7022
        %v8236 = vpop.f32.mrf.mxu0
        %v8237 = vadd.f32 %v8188, %v8236
        %v8238 = vpop.f32.mrf.mxu0
        %v8239 = vadd.f32 %v8190, %v8238
        %8240 = vmatmul.bf16.gmra.mxu0 %v7030
        %v8241 = vpop.f32.mrf.mxu0
        %v8242 = vadd.f32 %v8193, %v8241
        %v8243 = vpop.f32.mrf.mxu0
        %v8244 = vadd.f32 %v8195, %v8243
        %8245 = vmatmul.bf16.gmra.mxu0 %v7038
        %v8246 = vpop.f32.mrf.mxu0
        %v8247 = vadd.f32 %v8198, %v8246
        %v8248 = vpop.f32.mrf.mxu0
        %v8249 = vadd.f32 %v8200, %v8248
        %8250 = vmatmul.bf16.gmra.mxu0 %v7046
        %v8251 = vpop.f32.mrf.mxu0
        %v8252 = vadd.f32 %v8203, %v8251
        %v8253 = vpop.f32.mrf.mxu0
        %v8254 = vadd.f32 %v8205, %v8253
        %8255 = vmatmul.bf16.gmra.mxu0 %v7054
        %v8256 = vpop.f32.mrf.mxu0
        %v8257 = vadd.f32 %v8208, %v8256
        %v8258 = vpop.f32.mrf.mxu0
        %v8259 = vadd.f32 %v8210, %v8258
        %8260 = vmatmul.bf16.gmra.mxu0 %v7062
        %v8261 = vpop.f32.mrf.mxu0
        %v8262 = vadd.f32 %v8213, %v8261
        %v8263 = vpop.f32.mrf.mxu0
        %v8264 = vadd.f32 %v8215, %v8263
        %8265 = vmatmul.bf16.gmra.mxu0 %v7070
        %v8266 = vpop.f32.mrf.mxu0
        %v8267 = vadd.f32 %v8218, %v8266
        %v8268 = vpop.f32.mrf.mxu0
        %v8269 = vadd.f32 %v8220, %v8268
        %8270 = vdwg.mxu0
        %8271 = vmatpush.bf16.msra.mxu0 %v7572
        %8272 = vmatpush.bf16.msra.mxu0 %v7570
        %8273 = vmatpush.bf16.msra.mxu0 %v7568
        %8274 = vmatpush.bf16.msra.mxu0 %v7566
        %8275 = vmatpush.bf16.msra.mxu0 %v7564
        %8276 = vmatpush.bf16.msra.mxu0 %v7562
        %8277 = vmatpush.bf16.msra.mxu0 %v7560
        %8278 = vmatpush.bf16.msra.mxu0 %v7558
        %8279 = vmatmul.bf16.gmra.mxu0 %v7015
        %v8280 = vpop.f32.mrf.mxu0
        %v8281 = vadd.f32 %v8232, %v8280
        %v8282 = vpop.f32.mrf.mxu0
        %v8283 = vadd.f32 %v8234, %v8282
        %8284 = vmatmul.bf16.gmra.mxu0 %v7023
        %v8285 = vpop.f32.mrf.mxu0
        %v8286 = vadd.f32 %v8237, %v8285
        %v8287 = vpop.f32.mrf.mxu0
        %v8288 = vadd.f32 %v8239, %v8287
        %8289 = vmatmul.bf16.gmra.mxu0 %v7031
        %v8290 = vpop.f32.mrf.mxu0
        %v8291 = vadd.f32 %v8242, %v8290
        %v8292 = vpop.f32.mrf.mxu0
        %v8293 = vadd.f32 %v8244, %v8292
        %8294 = vmatmul.bf16.gmra.mxu0 %v7039
        %v8295 = vpop.f32.mrf.mxu0
        %v8296 = vadd.f32 %v8247, %v8295
        %v8297 = vpop.f32.mrf.mxu0
        %v8298 = vadd.f32 %v8249, %v8297
        %8299 = vmatmul.bf16.gmra.mxu0 %v7047
        %v8300 = vpop.f32.mrf.mxu0
        %v8301 = vadd.f32 %v8252, %v8300
        %v8302 = vpop.f32.mrf.mxu0
        %v8303 = vadd.f32 %v8254, %v8302
        %8304 = vmatmul.bf16.gmra.mxu0 %v7055
        %v8305 = vpop.f32.mrf.mxu0
        %v8306 = vadd.f32 %v8257, %v8305
        %v8307 = vpop.f32.mrf.mxu0
        %v8308 = vadd.f32 %v8259, %v8307
        %8309 = vmatmul.bf16.gmra.mxu0 %v7063
        %v8310 = vpop.f32.mrf.mxu0
        %v8311 = vadd.f32 %v8262, %v8310
        %v8312 = vpop.f32.mrf.mxu0
        %v8313 = vadd.f32 %v8264, %v8312
        %8314 = vmatmul.bf16.gmra.mxu0 %v7071
        %v8315 = vpop.f32.mrf.mxu0
        %v8316 = vadd.f32 %v8267, %v8315
        %v8317 = vpop.f32.mrf.mxu0
        %v8318 = vadd.f32 %v8269, %v8317
        %8319 = vdwg.mxu0
        %8320 = vmatpush.bf16.msra.mxu0 %v7588
        %8321 = vmatpush.bf16.msra.mxu0 %v7586
        %8322 = vmatpush.bf16.msra.mxu0 %v7584
        %8323 = vmatpush.bf16.msra.mxu0 %v7582
        %8324 = vmatpush.bf16.msra.mxu0 %v7580
        %8325 = vmatpush.bf16.msra.mxu0 %v7578
        %8326 = vmatpush.bf16.msra.mxu0 %v7576
        %8327 = vmatpush.bf16.msra.mxu0 %v7574
        %8328 = vmatmul.bf16.gmra.mxu0 %v7016
        %v8329 = vpop.f32.mrf.mxu0
        %v8330 = vadd.f32 %v8281, %v8329
        %v8331 = vpop.f32.mrf.mxu0
        %v8332 = vadd.f32 %v8283, %v8331
        %8333 = vmatmul.bf16.gmra.mxu0 %v7024
        %v8334 = vpop.f32.mrf.mxu0
        %v8335 = vadd.f32 %v8286, %v8334
        %v8336 = vpop.f32.mrf.mxu0
        %v8337 = vadd.f32 %v8288, %v8336
        %8338 = vmatmul.bf16.gmra.mxu0 %v7032
        %v8339 = vpop.f32.mrf.mxu0
        %v8340 = vadd.f32 %v8291, %v8339
        %v8341 = vpop.f32.mrf.mxu0
        %v8342 = vadd.f32 %v8293, %v8341
        %8343 = vmatmul.bf16.gmra.mxu0 %v7040
        %v8344 = vpop.f32.mrf.mxu0
        %v8345 = vadd.f32 %v8296, %v8344
        %v8346 = vpop.f32.mrf.mxu0
        %v8347 = vadd.f32 %v8298, %v8346
        %8348 = vmatmul.bf16.gmra.mxu0 %v7048
        %v8349 = vpop.f32.mrf.mxu0
        %v8350 = vadd.f32 %v8301, %v8349
        %v8351 = vpop.f32.mrf.mxu0
        %v8352 = vadd.f32 %v8303, %v8351
        %8353 = vmatmul.bf16.gmra.mxu0 %v7056
        %v8354 = vpop.f32.mrf.mxu0
        %v8355 = vadd.f32 %v8306, %v8354
        %v8356 = vpop.f32.mrf.mxu0
        %v8357 = vadd.f32 %v8308, %v8356
        %8358 = vmatmul.bf16.gmra.mxu0 %v7064
        %v8359 = vpop.f32.mrf.mxu0
        %v8360 = vadd.f32 %v8311, %v8359
        %v8361 = vpop.f32.mrf.mxu0
        %v8362 = vadd.f32 %v8313, %v8361
        %8363 = vmatmul.bf16.gmra.mxu0 %v7072
        %v8364 = vpop.f32.mrf.mxu0
        %v8365 = vadd.f32 %v8316, %v8364
        %v8366 = vpop.f32.mrf.mxu0
        %v8367 = vadd.f32 %v8318, %v8366
        %8368 = vdwg.mxu0
        %8369 = vmatpush.bf16.msra.mxu0 %v7604
        %8370 = vmatpush.bf16.msra.mxu0 %v7602
        %8371 = vmatpush.bf16.msra.mxu0 %v7600
        %8372 = vmatpush.bf16.msra.mxu0 %v7598
        %8373 = vmatpush.bf16.msra.mxu0 %v7596
        %8374 = vmatpush.bf16.msra.mxu0 %v7594
        %8375 = vmatpush.bf16.msra.mxu0 %v7592
        %8376 = vmatpush.bf16.msra.mxu0 %v7590
        %8377 = vmatmul.bf16.gmra.mxu0 %v7017
        %v8378 = vpop.f32.mrf.mxu0
        %v8379 = vadd.f32 %v8330, %v8378
        %v8380 = vpop.f32.mrf.mxu0
        %v8381 = vadd.f32 %v8332, %v8380
        %8382 = vmatmul.bf16.gmra.mxu0 %v7025
        %v8383 = vpop.f32.mrf.mxu0
        %v8384 = vadd.f32 %v8335, %v8383
        %v8385 = vpop.f32.mrf.mxu0
        %v8386 = vadd.f32 %v8337, %v8385
        %8387 = vmatmul.bf16.gmra.mxu0 %v7033
        %v8388 = vpop.f32.mrf.mxu0
        %v8389 = vadd.f32 %v8340, %v8388
        %v8390 = vpop.f32.mrf.mxu0
        %v8391 = vadd.f32 %v8342, %v8390
        %8392 = vmatmul.bf16.gmra.mxu0 %v7041
        %v8393 = vpop.f32.mrf.mxu0
        %v8394 = vadd.f32 %v8345, %v8393
        %v8395 = vpop.f32.mrf.mxu0
        %v8396 = vadd.f32 %v8347, %v8395
        %8397 = vmatmul.bf16.gmra.mxu0 %v7049
        %v8398 = vpop.f32.mrf.mxu0
        %v8399 = vadd.f32 %v8350, %v8398
        %v8400 = vpop.f32.mrf.mxu0
        %v8401 = vadd.f32 %v8352, %v8400
        %8402 = vmatmul.bf16.gmra.mxu0 %v7057
        %v8403 = vpop.f32.mrf.mxu0
        %v8404 = vadd.f32 %v8355, %v8403
        %v8405 = vpop.f32.mrf.mxu0
        %v8406 = vadd.f32 %v8357, %v8405
        %8407 = vmatmul.bf16.gmra.mxu0 %v7065
        %v8408 = vpop.f32.mrf.mxu0
        %v8409 = vadd.f32 %v8360, %v8408
        %v8410 = vpop.f32.mrf.mxu0
        %v8411 = vadd.f32 %v8362, %v8410
        %8412 = vmatmul.bf16.gmra.mxu0 %v7073
        %v8413 = vpop.f32.mrf.mxu0
        %v8414 = vadd.f32 %v8365, %v8413
        %v8415 = vpop.f32.mrf.mxu0
        %v8416 = vadd.f32 %v8367, %v8415
        %8417 = vdwg.mxu0
        %8418 = vmatpush.bf16.msra.mxu0 %v7620
        %8419 = vmatpush.bf16.msra.mxu0 %v7618
        %8420 = vmatpush.bf16.msra.mxu0 %v7616
        %8421 = vmatpush.bf16.msra.mxu0 %v7614
        %8422 = vmatpush.bf16.msra.mxu0 %v7612
        %8423 = vmatpush.bf16.msra.mxu0 %v7610
        %8424 = vmatpush.bf16.msra.mxu0 %v7608
        %8425 = vmatpush.bf16.msra.mxu0 %v7606
        %8426 = vmatmul.bf16.gmra.mxu0 %v7018
        %v8427 = vpop.f32.mrf.mxu0
        %v8428 = vadd.f32 %v8379, %v8427
        %v8429 = vpop.f32.mrf.mxu0
        %v8430 = vadd.f32 %v8381, %v8429
        %8431 = vmatmul.bf16.gmra.mxu0 %v7026
        %v8432 = vpop.f32.mrf.mxu0
        %v8433 = vadd.f32 %v8384, %v8432
        %v8434 = vpop.f32.mrf.mxu0
        %v8435 = vadd.f32 %v8386, %v8434
        %8436 = vmatmul.bf16.gmra.mxu0 %v7034
        %v8437 = vpop.f32.mrf.mxu0
        %v8438 = vadd.f32 %v8389, %v8437
        %v8439 = vpop.f32.mrf.mxu0
        %v8440 = vadd.f32 %v8391, %v8439
        %8441 = vmatmul.bf16.gmra.mxu0 %v7042
        %v8442 = vpop.f32.mrf.mxu0
        %v8443 = vadd.f32 %v8394, %v8442
        %v8444 = vpop.f32.mrf.mxu0
        %v8445 = vadd.f32 %v8396, %v8444
        %8446 = vmatmul.bf16.gmra.mxu0 %v7050
        %v8447 = vpop.f32.mrf.mxu0
        %v8448 = vadd.f32 %v8399, %v8447
        %v8449 = vpop.f32.mrf.mxu0
        %v8450 = vadd.f32 %v8401, %v8449
        %8451 = vmatmul.bf16.gmra.mxu0 %v7058
        %v8452 = vpop.f32.mrf.mxu0
        %v8453 = vadd.f32 %v8404, %v8452
        %v8454 = vpop.f32.mrf.mxu0
        %v8455 = vadd.f32 %v8406, %v8454
        %8456 = vmatmul.bf16.gmra.mxu0 %v7066
        %v8457 = vpop.f32.mrf.mxu0
        %v8458 = vadd.f32 %v8409, %v8457
        %v8459 = vpop.f32.mrf.mxu0
        %v8460 = vadd.f32 %v8411, %v8459
        %8461 = vmatmul.bf16.gmra.mxu0 %v7074
        %v8462 = vpop.f32.mrf.mxu0
        %v8463 = vadd.f32 %v8414, %v8462
        %v8464 = vpop.f32.mrf.mxu0
        %v8465 = vadd.f32 %v8416, %v8464
        %8466 = vdwg.mxu0
        %8467 = vmatpush.bf16.msra.mxu0 %v7636
        %8468 = vmatpush.bf16.msra.mxu0 %v7634
        %8469 = vmatpush.bf16.msra.mxu0 %v7632
        %8470 = vmatpush.bf16.msra.mxu0 %v7630
        %8471 = vmatpush.bf16.msra.mxu0 %v7628
        %8472 = vmatpush.bf16.msra.mxu0 %v7626
        %8473 = vmatpush.bf16.msra.mxu0 %v7624
        %8474 = vmatpush.bf16.msra.mxu0 %v7622
        %8475 = vmatmul.bf16.gmra.mxu0 %v7019
        %v8476 = vpop.f32.mrf.mxu0
        %v8477 = vadd.f32 %v8428, %v8476
        %v8478 = vpop.f32.mrf.mxu0
        %v8479 = vadd.f32 %v8430, %v8478
        %8480 = vmatmul.bf16.gmra.mxu0 %v7027
        %v8481 = vpop.f32.mrf.mxu0
        %v8482 = vadd.f32 %v8433, %v8481
        %v8483 = vpop.f32.mrf.mxu0
        %v8484 = vadd.f32 %v8435, %v8483
        %8485 = vmatmul.bf16.gmra.mxu0 %v7035
        %v8486 = vpop.f32.mrf.mxu0
        %v8487 = vadd.f32 %v8438, %v8486
        %v8488 = vpop.f32.mrf.mxu0
        %v8489 = vadd.f32 %v8440, %v8488
        %8490 = vmatmul.bf16.gmra.mxu0 %v7043
        %v8491 = vpop.f32.mrf.mxu0
        %v8492 = vadd.f32 %v8443, %v8491
        %v8493 = vpop.f32.mrf.mxu0
        %v8494 = vadd.f32 %v8445, %v8493
        %8495 = vmatmul.bf16.gmra.mxu0 %v7051
        %v8496 = vpop.f32.mrf.mxu0
        %v8497 = vadd.f32 %v8448, %v8496
        %v8498 = vpop.f32.mrf.mxu0
        %v8499 = vadd.f32 %v8450, %v8498
        %8500 = vmatmul.bf16.gmra.mxu0 %v7059
        %v8501 = vpop.f32.mrf.mxu0
        %v8502 = vadd.f32 %v8453, %v8501
        %v8503 = vpop.f32.mrf.mxu0
        %v8504 = vadd.f32 %v8455, %v8503
        %8505 = vmatmul.bf16.gmra.mxu0 %v7067
        %v8506 = vpop.f32.mrf.mxu0
        %v8507 = vadd.f32 %v8458, %v8506
        %v8508 = vpop.f32.mrf.mxu0
        %v8509 = vadd.f32 %v8460, %v8508
        %8510 = vmatmul.bf16.gmra.mxu0 %v7075
        %v8511 = vpop.f32.mrf.mxu0
        %v8512 = vadd.f32 %v8463, %v8511
        %v8513 = vpop.f32.mrf.mxu0
        %v8514 = vadd.f32 %v8465, %v8513
        %8515 = vdwg.mxu0
        %8516 = vmatpush.bf16.msra.mxu0 %v7652
        %8517 = vmatpush.bf16.msra.mxu0 %v7650
        %8518 = vmatpush.bf16.msra.mxu0 %v7648
        %8519 = vmatpush.bf16.msra.mxu0 %v7646
        %8520 = vmatpush.bf16.msra.mxu0 %v7644
        %8521 = vmatpush.bf16.msra.mxu0 %v7642
        %8522 = vmatpush.bf16.msra.mxu0 %v7640
        %8523 = vmatpush.bf16.msra.mxu0 %v7638
        %8524 = vmatmul.bf16.gmra.mxu0 %v7020
        %v8525 = vpop.f32.mrf.mxu0
        %v8526 = vadd.f32 %v8477, %v8525
        %v8527 = vpop.f32.mrf.mxu0
        %v8528 = vadd.f32 %v8479, %v8527
        %8529 = vmatmul.bf16.gmra.mxu0 %v7028
        %v8530 = vpop.f32.mrf.mxu0
        %v8531 = vadd.f32 %v8482, %v8530
        %v8532 = vpop.f32.mrf.mxu0
        %v8533 = vadd.f32 %v8484, %v8532
        %8534 = vmatmul.bf16.gmra.mxu0 %v7036
        %v8535 = vpop.f32.mrf.mxu0
        %v8536 = vadd.f32 %v8487, %v8535
        %v8537 = vpop.f32.mrf.mxu0
        %v8538 = vadd.f32 %v8489, %v8537
        %8539 = vmatmul.bf16.gmra.mxu0 %v7044
        %v8540 = vpop.f32.mrf.mxu0
        %v8541 = vadd.f32 %v8492, %v8540
        %v8542 = vpop.f32.mrf.mxu0
        %v8543 = vadd.f32 %v8494, %v8542
        %8544 = vmatmul.bf16.gmra.mxu0 %v7052
        %v8545 = vpop.f32.mrf.mxu0
        %v8546 = vadd.f32 %v8497, %v8545
        %v8547 = vpop.f32.mrf.mxu0
        %v8548 = vadd.f32 %v8499, %v8547
        %8549 = vmatmul.bf16.gmra.mxu0 %v7060
        %v8550 = vpop.f32.mrf.mxu0
        %v8551 = vadd.f32 %v8502, %v8550
        %v8552 = vpop.f32.mrf.mxu0
        %v8553 = vadd.f32 %v8504, %v8552
        %8554 = vmatmul.bf16.gmra.mxu0 %v7068
        %v8555 = vpop.f32.mrf.mxu0
        %v8556 = vadd.f32 %v8507, %v8555
        %v8557 = vpop.f32.mrf.mxu0
        %v8558 = vadd.f32 %v8509, %v8557
        %8559 = vmatmul.bf16.gmra.mxu0 %v7076
        %v8560 = vpop.f32.mrf.mxu0
        %v8561 = vadd.f32 %v8512, %v8560
        %v8562 = vpop.f32.mrf.mxu0
        %v8563 = vadd.f32 %v8514, %v8562
        %8564 = vdwg.mxu0
        %vm8565 = vcmp.gt.f32.partialorder %v8134, 0.0
        %vm8566 = vcmp.gt.f32.partialorder %v8526, 0.0
        %vm8567 = vcmp.gt.f32.partialorder %v8136, 0.0
        %vm8568 = vcmp.gt.f32.partialorder %v8528, 0.0
        %vm8569 = vcmp.gt.f32.partialorder %v8139, 0.0
        %vm8570 = vcmp.gt.f32.partialorder %v8531, 0.0
        %vm8571 = vcmp.gt.f32.partialorder %v8141, 0.0
        %vm8572 = vcmp.gt.f32.partialorder %v8533, 0.0
        %vm8573 = vcmp.gt.f32.partialorder %v8144, 0.0
        %vm8574 = vcmp.gt.f32.partialorder %v8536, 0.0
        %vm8575 = vcmp.gt.f32.partialorder %v8146, 0.0
        %vm8576 = vcmp.gt.f32.partialorder %v8538, 0.0
        %vm8577 = vcmp.gt.f32.partialorder %v8149, 0.0
        %vm8578 = vcmp.gt.f32.partialorder %v8541, 0.0
        %vm8579 = vcmp.gt.f32.partialorder %v8151, 0.0
        %vm8580 = vcmp.gt.f32.partialorder %v8543, 0.0
        %vm8581 = vcmp.gt.f32.partialorder %v8154, 0.0
        %vm8582 = vcmp.gt.f32.partialorder %v8546, 0.0
        %vm8583 = vcmp.gt.f32.partialorder %v8156, 0.0
        %vm8584 = vcmp.gt.f32.partialorder %v8548, 0.0
        %vm8585 = vcmp.gt.f32.partialorder %v8159, 0.0
        %vm8586 = vcmp.gt.f32.partialorder %v8551, 0.0
        %vm8587 = vcmp.gt.f32.partialorder %v8161, 0.0
        %vm8588 = vcmp.gt.f32.partialorder %v8553, 0.0
        %vm8589 = vcmp.gt.f32.partialorder %v8164, 0.0
        %vm8590 = vcmp.gt.f32.partialorder %v8556, 0.0
        %vm8591 = vcmp.gt.f32.partialorder %v8166, 0.0
        %vm8592 = vcmp.gt.f32.partialorder %v8558, 0.0
        %vm8593 = vcmp.gt.f32.partialorder %v8169, 0.0
        %vm8594 = vcmp.gt.f32.partialorder %v8561, 0.0
        %vm8595 = vcmp.gt.f32.partialorder %v8171, 0.0
        %vm8596 = vcmp.gt.f32.partialorder %v8563, 0.0
        %v8597 = vmul.f32 %v8134, 0.2
        %v8598 = vmul.f32 %v8526, 0.2
        %v8599 = vmul.f32 %v8136, 0.2
        %v8600 = vmul.f32 %v8528, 0.2
        %v8601 = vmul.f32 %v8139, 0.2
        %v8602 = vmul.f32 %v8531, 0.2
        %v8603 = vmul.f32 %v8141, 0.2
        %v8604 = vmul.f32 %v8533, 0.2
        %v8605 = vmul.f32 %v8144, 0.2
        %v8606 = vmul.f32 %v8536, 0.2
        %v8607 = vmul.f32 %v8146, 0.2
        %v8608 = vmul.f32 %v8538, 0.2
        %v8609 = vmul.f32 %v8149, 0.2
        %v8610 = vmul.f32 %v8541, 0.2
        %v8611 = vmul.f32 %v8151, 0.2
        %v8612 = vmul.f32 %v8543, 0.2
        %v8613 = vmul.f32 %v8154, 0.2
        %v8614 = vmul.f32 %v8546, 0.2
        %v8615 = vmul.f32 %v8156, 0.2
        %v8616 = vmul.f32 %v8548, 0.2
        %v8617 = vmul.f32 %v8159, 0.2
        %v8618 = vmul.f32 %v8551, 0.2
        %v8619 = vmul.f32 %v8161, 0.2
        %v8620 = vmul.f32 %v8553, 0.2
        %v8621 = vmul.f32 %v8164, 0.2
        %v8622 = vmul.f32 %v8556, 0.2
        %v8623 = vmul.f32 %v8166, 0.2
        %v8624 = vmul.f32 %v8558, 0.2
        %v8625 = vmul.f32 %v8169, 0.2
        %v8626 = vmul.f32 %v8561, 0.2
        %v8627 = vmul.f32 %v8171, 0.2
        %v8628 = vmul.f32 %v8563, 0.2
        %v8629 = vsel %vm8565, %v8134, %v8597
        %v8630 = vsel %vm8566, %v8526, %v8598
        %v8631 = vsel %vm8567, %v8136, %v8599
        %v8632 = vsel %vm8568, %v8528, %v8600
        %v8633 = vsel %vm8569, %v8139, %v8601
        %v8634 = vsel %vm8570, %v8531, %v8602
        %v8635 = vsel %vm8571, %v8141, %v8603
        %v8636 = vsel %vm8572, %v8533, %v8604
        %v8637 = vsel %vm8573, %v8144, %v8605
        %v8638 = vsel %vm8574, %v8536, %v8606
        %v8639 = vsel %vm8575, %v8146, %v8607
        %v8640 = vsel %vm8576, %v8538, %v8608
        %v8641 = vsel %vm8577, %v8149, %v8609
        %v8642 = vsel %vm8578, %v8541, %v8610
        %v8643 = vsel %vm8579, %v8151, %v8611
        %v8644 = vsel %vm8580, %v8543, %v8612
        %v8645 = vsel %vm8581, %v8154, %v8613
        %v8646 = vsel %vm8582, %v8546, %v8614
        %v8647 = vsel %vm8583, %v8156, %v8615
        %v8648 = vsel %vm8584, %v8548, %v8616
        %v8649 = vsel %vm8585, %v8159, %v8617
        %v8650 = vsel %vm8586, %v8551, %v8618
        %v8651 = vsel %vm8587, %v8161, %v8619
        %v8652 = vsel %vm8588, %v8553, %v8620
        %v8653 = vsel %vm8589, %v8164, %v8621
        %v8654 = vsel %vm8590, %v8556, %v8622
        %v8655 = vsel %vm8591, %v8166, %v8623
        %v8656 = vsel %vm8592, %v8558, %v8624
        %v8657 = vsel %vm8593, %v8169, %v8625
        %v8658 = vsel %vm8594, %v8561, %v8626
        %v8659 = vsel %vm8595, %v8171, %v8627
        %v8660 = vsel %vm8596, %v8563, %v8628
        %v8661 = vld [vmem:[#allocation11] sm:$0x3]
        %v8663 = vperm.slane %v8661, 0
        %v8664 = vperm.slane %v8661, 1
        %v8667 = vmul.f32 %v8629, %v8663
        %v8668 = vmul.f32 %v8630, %v8664
        %v8669 = vmul.f32 %v8631, %v8663
        %v8670 = vmul.f32 %v8632, %v8664
        %v8671 = vmul.f32 %v8633, %v8663
        %v8672 = vmul.f32 %v8634, %v8664
        %v8673 = vmul.f32 %v8635, %v8663
        %v8674 = vmul.f32 %v8636, %v8664
        %v8675 = vmul.f32 %v8637, %v8663
        %v8676 = vmul.f32 %v8638, %v8664
        %v8677 = vmul.f32 %v8639, %v8663
        %v8678 = vmul.f32 %v8640, %v8664
        %v8679 = vmul.f32 %v8641, %v8663
        %v8680 = vmul.f32 %v8642, %v8664
        %v8681 = vmul.f32 %v8643, %v8663
        %v8682 = vmul.f32 %v8644, %v8664
        %v8683 = vmul.f32 %v8645, %v8663
        %v8684 = vmul.f32 %v8646, %v8664
        %v8685 = vmul.f32 %v8647, %v8663
        %v8686 = vmul.f32 %v8648, %v8664
        %v8687 = vmul.f32 %v8649, %v8663
        %v8688 = vmul.f32 %v8650, %v8664
        %v8689 = vmul.f32 %v8651, %v8663
        %v8690 = vmul.f32 %v8652, %v8664
        %v8691 = vmul.f32 %v8653, %v8663
        %v8692 = vmul.f32 %v8654, %v8664
        %v8693 = vmul.f32 %v8655, %v8663
        %v8694 = vmul.f32 %v8656, %v8664
        %v8695 = vmul.f32 %v8657, %v8663
        %v8696 = vmul.f32 %v8658, %v8664
        %v8697 = vmul.f32 %v8659, %v8663
        %v8698 = vmul.f32 %v8660, %v8664
        %v8699 = vadd.f32 %v8667, %v8668
        %8700 = vadd.xlane.f32.xlu0 %v8699
        %v8701 = vpop.xlane.xlu0 %8700
        %v8702 = vadd.f32 %v8669, %v8670
        %8703 = vadd.xlane.f32.xlu0 %v8702
        %v8704 = vpop.xlane.xlu0 %8703
        %v8705 = vadd.f32 %v8671, %v8672
        %8706 = vadd.xlane.f32.xlu0 %v8705
        %v8707 = vpop.xlane.xlu0 %8706
        %v8708 = vadd.f32 %v8673, %v8674
        %8709 = vadd.xlane.f32.xlu0 %v8708
        %v8710 = vpop.xlane.xlu0 %8709
        %v8711 = vadd.f32 %v8675, %v8676
        %8712 = vadd.xlane.f32.xlu0 %v8711
        %v8713 = vpop.xlane.xlu0 %8712
        %v8714 = vadd.f32 %v8677, %v8678
        %8715 = vadd.xlane.f32.xlu0 %v8714
        %v8716 = vpop.xlane.xlu0 %8715
        %v8717 = vadd.f32 %v8679, %v8680
        %8718 = vadd.xlane.f32.xlu0 %v8717
        %v8719 = vpop.xlane.xlu0 %8718
        %v8720 = vadd.f32 %v8681, %v8682
        %8721 = vadd.xlane.f32.xlu0 %v8720
        %v8722 = vpop.xlane.xlu0 %8721
        %v8723 = vadd.f32 %v8683, %v8684
        %8724 = vadd.xlane.f32.xlu0 %v8723
        %v8725 = vpop.xlane.xlu0 %8724
        %v8726 = vadd.f32 %v8685, %v8686
        %8727 = vadd.xlane.f32.xlu0 %v8726
        %v8728 = vpop.xlane.xlu0 %8727
        %v8729 = vadd.f32 %v8687, %v8688
        %8730 = vadd.xlane.f32.xlu0 %v8729
        %v8731 = vpop.xlane.xlu0 %8730
        %v8732 = vadd.f32 %v8689, %v8690
        %8733 = vadd.xlane.f32.xlu0 %v8732
        %v8734 = vpop.xlane.xlu0 %8733
        %v8735 = vadd.f32 %v8691, %v8692
        %8736 = vadd.xlane.f32.xlu0 %v8735
        %v8737 = vpop.xlane.xlu0 %8736
        %v8738 = vadd.f32 %v8693, %v8694
        %8739 = vadd.xlane.f32.xlu0 %v8738
        %v8740 = vpop.xlane.xlu0 %8739
        %v8741 = vadd.f32 %v8695, %v8696
        %8742 = vadd.xlane.f32.xlu0 %v8741
        %v8743 = vpop.xlane.xlu0 %8742
        %v8744 = vadd.f32 %v8697, %v8698
        %8745 = vadd.xlane.f32.xlu0 %v8744
        %v8746 = vpop.xlane.xlu0 %8745
        %v8747 = vld [vmem:[#allocation2] sm:$0x1]
        %v8749 = vperm.slane %v8747, 0
        %v8751 = vadd.f32 %v8701, %v8749
        %v8752 = vadd.f32 %v8704, %v8749
        %v8753 = vadd.f32 %v8707, %v8749
        %v8754 = vadd.f32 %v8710, %v8749
        %v8755 = vadd.f32 %v8713, %v8749
        %v8756 = vadd.f32 %v8716, %v8749
        %v8757 = vadd.f32 %v8719, %v8749
        %v8758 = vadd.f32 %v8722, %v8749
        %v8759 = vadd.f32 %v8725, %v8749
        %v8760 = vadd.f32 %v8728, %v8749
        %v8761 = vadd.f32 %v8731, %v8749
        %v8762 = vadd.f32 %v8734, %v8749
        %v8763 = vadd.f32 %v8737, %v8749
        %v8764 = vadd.f32 %v8740, %v8749
        %v8765 = vadd.f32 %v8743, %v8749
        %v8766 = vadd.f32 %v8746, %v8749
        %v8767 = vxor.u32 %v8751, 2147483648
        %v8768 = vxor.u32 %v8752, 2147483648
        %v8769 = vxor.u32 %v8753, 2147483648
        %v8770 = vxor.u32 %v8754, 2147483648
        %v8771 = vxor.u32 %v8755, 2147483648
        %v8772 = vxor.u32 %v8756, 2147483648
        %v8773 = vxor.u32 %v8757, 2147483648
        %v8774 = vxor.u32 %v8758, 2147483648
        %v8775 = vxor.u32 %v8759, 2147483648
        %v8776 = vxor.u32 %v8760, 2147483648
        %v8777 = vxor.u32 %v8761, 2147483648
        %v8778 = vxor.u32 %v8762, 2147483648
        %v8779 = vxor.u32 %v8763, 2147483648
        %v8780 = vxor.u32 %v8764, 2147483648
        %v8781 = vxor.u32 %v8765, 2147483648
        %v8782 = vxor.u32 %v8766, 2147483648
        %v8783 = vmul.f32 %v8767, 1.442695
        %v8784 = vpow.pop %v8783
        %v8785 = vmul.f32 %v8768, 1.442695
        %v8786 = vpow.pop %v8785
        %v8787 = vmul.f32 %v8769, 1.442695
        %v8788 = vpow.pop %v8787
        %v8789 = vmul.f32 %v8770, 1.442695
        %v8790 = vpow.pop %v8789
        %v8791 = vmul.f32 %v8771, 1.442695
        %v8792 = vpow.pop %v8791
        %v8793 = vmul.f32 %v8772, 1.442695
        %v8794 = vpow.pop %v8793
        %v8795 = vmul.f32 %v8773, 1.442695
        %v8796 = vpow.pop %v8795
        %v8797 = vmul.f32 %v8774, 1.442695
        %v8798 = vpow.pop %v8797
        %v8799 = vmul.f32 %v8775, 1.442695
        %v8800 = vpow.pop %v8799
        %v8801 = vmul.f32 %v8776, 1.442695
        %v8802 = vpow.pop %v8801
        %v8803 = vmul.f32 %v8777, 1.442695
        %v8804 = vpow.pop %v8803
        %v8805 = vmul.f32 %v8778, 1.442695
        %v8806 = vpow.pop %v8805
        %v8807 = vmul.f32 %v8779, 1.442695
        %v8808 = vpow.pop %v8807
        %v8809 = vmul.f32 %v8780, 1.442695
        %v8810 = vpow.pop %v8809
        %v8811 = vmul.f32 %v8781, 1.442695
        %v8812 = vpow.pop %v8811
        %v8813 = vmul.f32 %v8782, 1.442695
        %v8814 = vpow.pop %v8813
        %v8815 = vadd.f32 %v8784, 1.0
        %v8816 = vadd.f32 %v8786, 1.0
        %v8817 = vadd.f32 %v8788, 1.0
        %v8818 = vadd.f32 %v8790, 1.0
        %v8819 = vadd.f32 %v8792, 1.0
        %v8820 = vadd.f32 %v8794, 1.0
        %v8821 = vadd.f32 %v8796, 1.0
        %v8822 = vadd.f32 %v8798, 1.0
        %v8823 = vadd.f32 %v8800, 1.0
        %v8824 = vadd.f32 %v8802, 1.0
        %v8825 = vadd.f32 %v8804, 1.0
        %v8826 = vadd.f32 %v8806, 1.0
        %v8827 = vadd.f32 %v8808, 1.0
        %v8828 = vadd.f32 %v8810, 1.0
        %v8829 = vadd.f32 %v8812, 1.0
        %v8830 = vadd.f32 %v8814, 1.0
        %v8831 = vrcp.pop %v8815
        %v8832 = vmul.f32 %v8815, %v8831
        %v8833 = vsub.f32 1.0, %v8832
        %v8834 = vmul.f32 %v8831, %v8833
        %v8835 = vadd.f32 %v8831, %v8834
        %vm8836 = vweird.f32 %v8815
        %vm8837 = vweird.f32 %v8831
        %vm8838 = vmor %vm8836, %vm8837
        %v8839 = vsel %vm8838, %v8831, %v8835
        %v8840 = vand.u32 2147483647, %v8815
        %vm8841 = vcmp.eq.f32.partialorder %v8840, 8.507059e+37
        %v8842 = vand.u32 %v8815, 2147483648
        %v8843 = vor.u32 1.1754944e-38, %v8842
        %v8844 = vsel %vm8841, %v8843, %v8839
        %v8845 = vmul.f32 1.0, %v8844
        %v8846 = vrcp.pop %v8816
        %v8847 = vmul.f32 %v8816, %v8846
        %v8848 = vsub.f32 1.0, %v8847
        %v8849 = vmul.f32 %v8846, %v8848
        %v8850 = vadd.f32 %v8846, %v8849
        %vm8851 = vweird.f32 %v8816
        %vm8852 = vweird.f32 %v8846
        %vm8853 = vmor %vm8851, %vm8852
        %v8854 = vsel %vm8853, %v8846, %v8850
        %v8855 = vand.u32 2147483647, %v8816
        %vm8856 = vcmp.eq.f32.partialorder %v8855, 8.507059e+37
        %v8857 = vand.u32 %v8816, 2147483648
        %v8858 = vor.u32 1.1754944e-38, %v8857
        %v8859 = vsel %vm8856, %v8858, %v8854
        %v8860 = vmul.f32 1.0, %v8859
        %v8861 = vrcp.pop %v8817
        %v8862 = vmul.f32 %v8817, %v8861
        %v8863 = vsub.f32 1.0, %v8862
        %v8864 = vmul.f32 %v8861, %v8863
        %v8865 = vadd.f32 %v8861, %v8864
        %vm8866 = vweird.f32 %v8817
        %vm8867 = vweird.f32 %v8861
        %vm8868 = vmor %vm8866, %vm8867
        %v8869 = vsel %vm8868, %v8861, %v8865
        %v8870 = vand.u32 2147483647, %v8817
        %vm8871 = vcmp.eq.f32.partialorder %v8870, 8.507059e+37
        %v8872 = vand.u32 %v8817, 2147483648
        %v8873 = vor.u32 1.1754944e-38, %v8872
        %v8874 = vsel %vm8871, %v8873, %v8869
        %v8875 = vmul.f32 1.0, %v8874
        %v8876 = vrcp.pop %v8818
        %v8877 = vmul.f32 %v8818, %v8876
        %v8878 = vsub.f32 1.0, %v8877
        %v8879 = vmul.f32 %v8876, %v8878
        %v8880 = vadd.f32 %v8876, %v8879
        %vm8881 = vweird.f32 %v8818
        %vm8882 = vweird.f32 %v8876
        %vm8883 = vmor %vm8881, %vm8882
        %v8884 = vsel %vm8883, %v8876, %v8880
        %v8885 = vand.u32 2147483647, %v8818
        %vm8886 = vcmp.eq.f32.partialorder %v8885, 8.507059e+37
        %v8887 = vand.u32 %v8818, 2147483648
        %v8888 = vor.u32 1.1754944e-38, %v8887
        %v8889 = vsel %vm8886, %v8888, %v8884
        %v8890 = vmul.f32 1.0, %v8889
        %v8891 = vrcp.pop %v8819
        %v8892 = vmul.f32 %v8819, %v8891
        %v8893 = vsub.f32 1.0, %v8892
        %v8894 = vmul.f32 %v8891, %v8893
        %v8895 = vadd.f32 %v8891, %v8894
        %vm8896 = vweird.f32 %v8819
        %vm8897 = vweird.f32 %v8891
        %vm8898 = vmor %vm8896, %vm8897
        %v8899 = vsel %vm8898, %v8891, %v8895
        %v8900 = vand.u32 2147483647, %v8819
        %vm8901 = vcmp.eq.f32.partialorder %v8900, 8.507059e+37
        %v8902 = vand.u32 %v8819, 2147483648
        %v8903 = vor.u32 1.1754944e-38, %v8902
        %v8904 = vsel %vm8901, %v8903, %v8899
        %v8905 = vmul.f32 1.0, %v8904
        %v8906 = vrcp.pop %v8820
        %v8907 = vmul.f32 %v8820, %v8906
        %v8908 = vsub.f32 1.0, %v8907
        %v8909 = vmul.f32 %v8906, %v8908
        %v8910 = vadd.f32 %v8906, %v8909
        %vm8911 = vweird.f32 %v8820
        %vm8912 = vweird.f32 %v8906
        %vm8913 = vmor %vm8911, %vm8912
        %v8914 = vsel %vm8913, %v8906, %v8910
        %v8915 = vand.u32 2147483647, %v8820
        %vm8916 = vcmp.eq.f32.partialorder %v8915, 8.507059e+37
        %v8917 = vand.u32 %v8820, 2147483648
        %v8918 = vor.u32 1.1754944e-38, %v8917
        %v8919 = vsel %vm8916, %v8918, %v8914
        %v8920 = vmul.f32 1.0, %v8919
        %v8921 = vrcp.pop %v8821
        %v8922 = vmul.f32 %v8821, %v8921
        %v8923 = vsub.f32 1.0, %v8922
        %v8924 = vmul.f32 %v8921, %v8923
        %v8925 = vadd.f32 %v8921, %v8924
        %vm8926 = vweird.f32 %v8821
        %vm8927 = vweird.f32 %v8921
        %vm8928 = vmor %vm8926, %vm8927
        %v8929 = vsel %vm8928, %v8921, %v8925
        %v8930 = vand.u32 2147483647, %v8821
        %vm8931 = vcmp.eq.f32.partialorder %v8930, 8.507059e+37
        %v8932 = vand.u32 %v8821, 2147483648
        %v8933 = vor.u32 1.1754944e-38, %v8932
        %v8934 = vsel %vm8931, %v8933, %v8929
        %v8935 = vmul.f32 1.0, %v8934
        %v8936 = vrcp.pop %v8822
        %v8937 = vmul.f32 %v8822, %v8936
        %v8938 = vsub.f32 1.0, %v8937
        %v8939 = vmul.f32 %v8936, %v8938
        %v8940 = vadd.f32 %v8936, %v8939
        %vm8941 = vweird.f32 %v8822
        %vm8942 = vweird.f32 %v8936
        %vm8943 = vmor %vm8941, %vm8942
        %v8944 = vsel %vm8943, %v8936, %v8940
        %v8945 = vand.u32 2147483647, %v8822
        %vm8946 = vcmp.eq.f32.partialorder %v8945, 8.507059e+37
        %v8947 = vand.u32 %v8822, 2147483648
        %v8948 = vor.u32 1.1754944e-38, %v8947
        %v8949 = vsel %vm8946, %v8948, %v8944
        %v8950 = vmul.f32 1.0, %v8949
        %v8951 = vrcp.pop %v8823
        %v8952 = vmul.f32 %v8823, %v8951
        %v8953 = vsub.f32 1.0, %v8952
        %v8954 = vmul.f32 %v8951, %v8953
        %v8955 = vadd.f32 %v8951, %v8954
        %vm8956 = vweird.f32 %v8823
        %vm8957 = vweird.f32 %v8951
        %vm8958 = vmor %vm8956, %vm8957
        %v8959 = vsel %vm8958, %v8951, %v8955
        %v8960 = vand.u32 2147483647, %v8823
        %vm8961 = vcmp.eq.f32.partialorder %v8960, 8.507059e+37
        %v8962 = vand.u32 %v8823, 2147483648
        %v8963 = vor.u32 1.1754944e-38, %v8962
        %v8964 = vsel %vm8961, %v8963, %v8959
        %v8965 = vmul.f32 1.0, %v8964
        %v8966 = vrcp.pop %v8824
        %v8967 = vmul.f32 %v8824, %v8966
        %v8968 = vsub.f32 1.0, %v8967
        %v8969 = vmul.f32 %v8966, %v8968
        %v8970 = vadd.f32 %v8966, %v8969
        %vm8971 = vweird.f32 %v8824
        %vm8972 = vweird.f32 %v8966
        %vm8973 = vmor %vm8971, %vm8972
        %v8974 = vsel %vm8973, %v8966, %v8970
        %v8975 = vand.u32 2147483647, %v8824
        %vm8976 = vcmp.eq.f32.partialorder %v8975, 8.507059e+37
        %v8977 = vand.u32 %v8824, 2147483648
        %v8978 = vor.u32 1.1754944e-38, %v8977
        %v8979 = vsel %vm8976, %v8978, %v8974
        %v8980 = vmul.f32 1.0, %v8979
        %v8981 = vrcp.pop %v8825
        %v8982 = vmul.f32 %v8825, %v8981
        %v8983 = vsub.f32 1.0, %v8982
        %v8984 = vmul.f32 %v8981, %v8983
        %v8985 = vadd.f32 %v8981, %v8984
        %vm8986 = vweird.f32 %v8825
        %vm8987 = vweird.f32 %v8981
        %vm8988 = vmor %vm8986, %vm8987
        %v8989 = vsel %vm8988, %v8981, %v8985
        %v8990 = vand.u32 2147483647, %v8825
        %vm8991 = vcmp.eq.f32.partialorder %v8990, 8.507059e+37
        %v8992 = vand.u32 %v8825, 2147483648
        %v8993 = vor.u32 1.1754944e-38, %v8992
        %v8994 = vsel %vm8991, %v8993, %v8989
        %v8995 = vmul.f32 1.0, %v8994
        %v8996 = vrcp.pop %v8826
        %v8997 = vmul.f32 %v8826, %v8996
        %v8998 = vsub.f32 1.0, %v8997
        %v8999 = vmul.f32 %v8996, %v8998
        %v9000 = vadd.f32 %v8996, %v8999
        %vm9001 = vweird.f32 %v8826
        %vm9002 = vweird.f32 %v8996
        %vm9003 = vmor %vm9001, %vm9002
        %v9004 = vsel %vm9003, %v8996, %v9000
        %v9005 = vand.u32 2147483647, %v8826
        %vm9006 = vcmp.eq.f32.partialorder %v9005, 8.507059e+37
        %v9007 = vand.u32 %v8826, 2147483648
        %v9008 = vor.u32 1.1754944e-38, %v9007
        %v9009 = vsel %vm9006, %v9008, %v9004
        %v9010 = vmul.f32 1.0, %v9009
        %v9011 = vrcp.pop %v8827
        %v9012 = vmul.f32 %v8827, %v9011
        %v9013 = vsub.f32 1.0, %v9012
        %v9014 = vmul.f32 %v9011, %v9013
        %v9015 = vadd.f32 %v9011, %v9014
        %vm9016 = vweird.f32 %v8827
        %vm9017 = vweird.f32 %v9011
        %vm9018 = vmor %vm9016, %vm9017
        %v9019 = vsel %vm9018, %v9011, %v9015
        %v9020 = vand.u32 2147483647, %v8827
        %vm9021 = vcmp.eq.f32.partialorder %v9020, 8.507059e+37
        %v9022 = vand.u32 %v8827, 2147483648
        %v9023 = vor.u32 1.1754944e-38, %v9022
        %v9024 = vsel %vm9021, %v9023, %v9019
        %v9025 = vmul.f32 1.0, %v9024
        %v9026 = vrcp.pop %v8828
        %v9027 = vmul.f32 %v8828, %v9026
        %v9028 = vsub.f32 1.0, %v9027
        %v9029 = vmul.f32 %v9026, %v9028
        %v9030 = vadd.f32 %v9026, %v9029
        %vm9031 = vweird.f32 %v8828
        %vm9032 = vweird.f32 %v9026
        %vm9033 = vmor %vm9031, %vm9032
        %v9034 = vsel %vm9033, %v9026, %v9030
        %v9035 = vand.u32 2147483647, %v8828
        %vm9036 = vcmp.eq.f32.partialorder %v9035, 8.507059e+37
        %v9037 = vand.u32 %v8828, 2147483648
        %v9038 = vor.u32 1.1754944e-38, %v9037
        %v9039 = vsel %vm9036, %v9038, %v9034
        %v9040 = vmul.f32 1.0, %v9039
        %v9041 = vrcp.pop %v8829
        %v9042 = vmul.f32 %v8829, %v9041
        %v9043 = vsub.f32 1.0, %v9042
        %v9044 = vmul.f32 %v9041, %v9043
        %v9045 = vadd.f32 %v9041, %v9044
        %vm9046 = vweird.f32 %v8829
        %vm9047 = vweird.f32 %v9041
        %vm9048 = vmor %vm9046, %vm9047
        %v9049 = vsel %vm9048, %v9041, %v9045
        %v9050 = vand.u32 2147483647, %v8829
        %vm9051 = vcmp.eq.f32.partialorder %v9050, 8.507059e+37
        %v9052 = vand.u32 %v8829, 2147483648
        %v9053 = vor.u32 1.1754944e-38, %v9052
        %v9054 = vsel %vm9051, %v9053, %v9049
        %v9055 = vmul.f32 1.0, %v9054
        %v9056 = vrcp.pop %v8830
        %v9057 = vmul.f32 %v8830, %v9056
        %v9058 = vsub.f32 1.0, %v9057
        %v9059 = vmul.f32 %v9056, %v9058
        %v9060 = vadd.f32 %v9056, %v9059
        %vm9061 = vweird.f32 %v8830
        %vm9062 = vweird.f32 %v9056
        %vm9063 = vmor %vm9061, %vm9062
        %v9064 = vsel %vm9063, %v9056, %v9060
        %v9065 = vand.u32 2147483647, %v8830
        %vm9066 = vcmp.eq.f32.partialorder %v9065, 8.507059e+37
        %v9067 = vand.u32 %v8830, 2147483648
        %v9068 = vor.u32 1.1754944e-38, %v9067
        %v9069 = vsel %vm9066, %v9068, %v9064
        %v9070 = vmul.f32 1.0, %v9069
        %vm9071 = vcmask 7168
        %9072 = vst.msk [vmem:[%s382] sm:$0xff] %vm9071, %v8845
        %9073 = vst.msk [vmem:[%s382 + $0x8] sm:$0xff] %vm9071, %v8860
        %9074 = vst.msk [vmem:[%s382 + $0x10] sm:$0xff] %vm9071, %v8875
        %9075 = vst.msk [vmem:[%s382 + $0x18] sm:$0xff] %vm9071, %v8890
        %9076 = vst.msk [vmem:[%s382 + $0x20] sm:$0xff] %vm9071, %v8905
        %9077 = vst.msk [vmem:[%s382 + $0x28] sm:$0xff] %vm9071, %v8920
        %9078 = vst.msk [vmem:[%s382 + $0x30] sm:$0xff] %vm9071, %v8935
        %9079 = vst.msk [vmem:[%s382 + $0x38] sm:$0xff] %vm9071, %v8950
        %9080 = vst.msk [vmem:[%s382 + $0x40] sm:$0xff] %vm9071, %v8965
        %9081 = vst.msk [vmem:[%s382 + $0x48] sm:$0xff] %vm9071, %v8980
        %9082 = vst.msk [vmem:[%s382 + $0x50] sm:$0xff] %vm9071, %v8995
        %9083 = vst.msk [vmem:[%s382 + $0x58] sm:$0xff] %vm9071, %v9010
        %9084 = vst.msk [vmem:[%s382 + $0x60] sm:$0xff] %vm9071, %v9025
        %9085 = vst.msk [vmem:[%s382 + $0x68] sm:$0xff] %vm9071, %v9040
        %9086 = vst.msk [vmem:[%s382 + $0x70] sm:$0xff] %vm9071, %v9055
        %9087 = vst.msk [vmem:[%s382 + $0x78] sm:$0xff] %vm9071, %v9070
        %s9088 = sand.u32 %s186, 1
        %s9089 = sand.u32 %s186, 1
        %s9090 = smul.addr %s9089, 128
        %s9091 = scalar_lea.vmem [#allocation13], %s9090
        // Predicated region
        $region73: #{discriminator_forward.1} parent=47 // pred_check
          %p9092 = pneg %p196
        $region74: #{discriminator_forward.1} parent=47 // pred_check_branch
          %9094 = sbr.rel (%p9092) target = $region76
        $region75: #{discriminator_forward.1} parent=47 // pred_region
          %s9095 = smul.u32 16, %s26
          %s9096 = ssub.s32 25, %s9095
          %p9097 = scmp.lt.s32.totalorder %s9096, 16
          %s9098 = scalar_select %p9097, %s9096, 16
          %s9099 = smul.u32 8, %s9098
          %p9100 = scmp.ne.s32.totalorder 0, %s9099
          %s9101 = smul.addr %s9095, 8
          %s9102 = scalar_lea.vmem %s7, %s9101
          // Predicated region
          $region77: #{discriminator_forward.1} parent=75 // pred_check
            %p9103 = pneg %p9100
          $region78: #{discriminator_forward.1} parent=75 // pred_check_branch
            %9105 = sbr.rel (%p9103) target = $region80
          $region79: #{discriminator_forward.1} parent=75 // pred_region
            // Predicated region
            $region81: #{discriminator_forward.1} parent=79 // pred_check
              _
            $region82: #{discriminator_forward.1} parent=79 // pred_check_branch
              %9107 = sbr.rel (0) target = $region84
            $region83: #{discriminator_forward.1} parent=79 // pred_region
              // Predicated region
              $region103: #{discriminator_forward.1} parent=83 // pred_check
                _
              $region104: #{discriminator_forward.1} parent=83 // pred_check_branch
                %9187 = sbr.rel (0) target = $region106
              $region105: #{discriminator_forward.1} parent=83 // pred_region
                %s9188 = sshrl.u32 %s9098, 4
                // While loop
                $region107: #{discriminator_forward.1} parent=105 // loop_pre_header
                  _
                $region108: #{discriminator_forward.1} parent=105 // loop_header
                  %s9190 = sphi 0, %s9192
                  %p9191 = scmp.ge.s32.totalorder %s9190, %s9188
                  %s9195 = sphi 0, %s9232
                  %s9196 = sphi %s9091, %s9235
                  %s9197 = sphi %s9102, %s9236
                $region109: #{discriminator_forward.1} parent=105 // loop_header_branch
                  %9194 = sbr.rel (%p9191) target = $region113
                $region110: #{discriminator_forward.1} parent=105 // loop_body
                  %v9198 = vld [vmem:[%s9196] sm:$0xff]
                  %9199 = vst [vmem:[%s9197] sm:$0xff] %v9198
                  %v9200 = vld [vmem:[%s9196 + $0x8] sm:$0xff]
                  %9201 = vst [vmem:[%s9197 + $0x8] sm:$0xff] %v9200
                  %v9202 = vld [vmem:[%s9196 + $0x10] sm:$0xff]
                  %9203 = vst [vmem:[%s9197 + $0x10] sm:$0xff] %v9202
                  %v9204 = vld [vmem:[%s9196 + $0x18] sm:$0xff]
                  %9205 = vst [vmem:[%s9197 + $0x18] sm:$0xff] %v9204
                  %v9206 = vld [vmem:[%s9196 + $0x20] sm:$0xff]
                  %9207 = vst [vmem:[%s9197 + $0x20] sm:$0xff] %v9206
                  %v9208 = vld [vmem:[%s9196 + $0x28] sm:$0xff]
                  %9209 = vst [vmem:[%s9197 + $0x28] sm:$0xff] %v9208
                  %v9210 = vld [vmem:[%s9196 + $0x30] sm:$0xff]
                  %9211 = vst [vmem:[%s9197 + $0x30] sm:$0xff] %v9210
                  %v9212 = vld [vmem:[%s9196 + $0x38] sm:$0xff]
                  %9213 = vst [vmem:[%s9197 + $0x38] sm:$0xff] %v9212
                  %v9214 = vld [vmem:[%s9196 + $0x40] sm:$0xff]
                  %9215 = vst [vmem:[%s9197 + $0x40] sm:$0xff] %v9214
                  %v9216 = vld [vmem:[%s9196 + $0x48] sm:$0xff]
                  %9217 = vst [vmem:[%s9197 + $0x48] sm:$0xff] %v9216
                  %v9218 = vld [vmem:[%s9196 + $0x50] sm:$0xff]
                  %9219 = vst [vmem:[%s9197 + $0x50] sm:$0xff] %v9218
                  %v9220 = vld [vmem:[%s9196 + $0x58] sm:$0xff]
                  %9221 = vst [vmem:[%s9197 + $0x58] sm:$0xff] %v9220
                  %v9222 = vld [vmem:[%s9196 + $0x60] sm:$0xff]
                  %9223 = vst [vmem:[%s9197 + $0x60] sm:$0xff] %v9222
                  %v9224 = vld [vmem:[%s9196 + $0x68] sm:$0xff]
                  %9225 = vst [vmem:[%s9197 + $0x68] sm:$0xff] %v9224
                  %v9226 = vld [vmem:[%s9196 + $0x70] sm:$0xff]
                  %9227 = vst [vmem:[%s9197 + $0x70] sm:$0xff] %v9226
                  %v9228 = vld [vmem:[%s9196 + $0x78] sm:$0xff]
                  %9229 = vst [vmem:[%s9197 + $0x78] sm:$0xff] %v9228
                  %s9230 = sadd.s32 1, %s9195
                  %p9231 = scmp.ge.s32.totalorder %s9230, %s9188
                  %s9232 = scalar_select %p9231, 0, %s9230
                  %s9233 = smul.u32 %s9232, 128
                  %s9234 = smul.u32 %s9232, 128
                  %s9235 = scalar_lea.vmem %s9091, %s9233 [#allocation13]
                  %s9236 = scalar_lea.vmem %s9102, %s9234
                $region111: #{discriminator_forward.1} parent=105 // loop_footer
                  %s9192 = sadd.s32 %s9190, 1
                $region112: #{discriminator_forward.1} parent=105 // loop_footer_branch
                  %9189 = sbr.rel target = $region108
                $region113: #{discriminator_forward.1} parent=105 // loop_exit
                  _
                %s9237 = sshrl.u32 %s9098, 4
                %s9238 = sand.u32 %s9098, 15
                %s9239 = smul.u32 %s9237, 16
                %s9240 = smul.u32 8, %s9239
                %s9241 = scalar_lea.vmem %s9091, %s9240 [#allocation13]
                %s9242 = smul.u32 8, %s9239
                %s9243 = scalar_lea.vmem %s9102, %s9242
                // While loop
                $region114: #{discriminator_forward.1} parent=105 // loop_pre_header
                  _
                $region115: #{discriminator_forward.1} parent=105 // loop_header
                  %s9245 = sphi 0, %s9247
                  %p9246 = scmp.ge.s32.totalorder %s9245, %s9238
                  %s9250 = sphi 0, %s9257
                  %s9251 = sphi %s9241, %s9260
                  %s9252 = sphi %s9243, %s9261
                $region116: #{discriminator_forward.1} parent=105 // loop_header_branch
                  %9249 = sbr.rel (%p9246) target = $region120
                $region117: #{discriminator_forward.1} parent=105 // loop_body
                  %v9253 = vld [vmem:[%s9251] sm:$0xff]
                  %9254 = vst [vmem:[%s9252] sm:$0xff] %v9253
                  %s9255 = sadd.s32 1, %s9250
                  %p9256 = scmp.ge.s32.totalorder %s9255, %s9238
                  %s9257 = scalar_select %p9256, 0, %s9255
                  %s9258 = smul.u32 %s9257, 8
                  %s9259 = smul.u32 %s9257, 8
                  %s9260 = scalar_lea.vmem %s9241, %s9258 [#allocation13]
                  %s9261 = scalar_lea.vmem %s9243, %s9259
                $region118: #{discriminator_forward.1} parent=105 // loop_footer
                  %s9247 = sadd.s32 %s9245, 1
                $region119: #{discriminator_forward.1} parent=105 // loop_footer_branch
                  %9244 = sbr.rel target = $region115
                $region120: #{discriminator_forward.1} parent=105 // loop_exit
                  _
              $region106: #{discriminator_forward.1} parent=83 // pred_fallthru
                _
              // Predicated region
              $region121: #{discriminator_forward.1} parent=83 // pred_check
                _
              $region122: #{discriminator_forward.1} parent=83 // pred_check_branch
                %9263 = sbr.rel target = $region124
              $region123: #{discriminator_forward.1} parent=83 // pred_region
                _
              $region124: #{discriminator_forward.1} parent=83 // pred_fallthru
                _
            $region84: #{discriminator_forward.1} parent=79 // pred_fallthru
              _
            // Predicated region
            $region85: #{discriminator_forward.1} parent=79 // pred_check
              _
            $region86: #{discriminator_forward.1} parent=79 // pred_check_branch
              %9109 = sbr.rel target = $region88
            $region87: #{discriminator_forward.1} parent=79 // pred_region
              %s9111 = ssub.s32 256, 1
              %s9112 = sshrl.u32 %s9098, 4
              // While loop
              $region89: #{discriminator_forward.1} parent=87 // loop_pre_header
                _
              $region90: #{discriminator_forward.1} parent=87 // loop_header
                %s9114 = sphi 0, %s9116
                %p9115 = scmp.ge.s32.totalorder %s9114, %s9112
                %s9119 = sphi 0, %s9156
                %s9120 = sphi %s9091, %s9159
                %s9121 = sphi %s9102, %s9160
              $region91: #{discriminator_forward.1} parent=87 // loop_header_branch
                %9118 = sbr.rel (%p9115) target = $region95
              $region92: #{discriminator_forward.1} parent=87 // loop_body
                %v9122 = vld [vmem:[%s9120] sm:%s9111]
                %9123 = vst [vmem:[%s9121] sm:%s9111] %v9122
                %v9124 = vld [vmem:[%s9120 + $0x8] sm:%s9111]
                %9125 = vst [vmem:[%s9121 + $0x8] sm:%s9111] %v9124
                %v9126 = vld [vmem:[%s9120 + $0x10] sm:%s9111]
                %9127 = vst [vmem:[%s9121 + $0x10] sm:%s9111] %v9126
                %v9128 = vld [vmem:[%s9120 + $0x18] sm:%s9111]
                %9129 = vst [vmem:[%s9121 + $0x18] sm:%s9111] %v9128
                %v9130 = vld [vmem:[%s9120 + $0x20] sm:%s9111]
                %9131 = vst [vmem:[%s9121 + $0x20] sm:%s9111] %v9130
                %v9132 = vld [vmem:[%s9120 + $0x28] sm:%s9111]
                %9133 = vst [vmem:[%s9121 + $0x28] sm:%s9111] %v9132
                %v9134 = vld [vmem:[%s9120 + $0x30] sm:%s9111]
                %9135 = vst [vmem:[%s9121 + $0x30] sm:%s9111] %v9134
                %v9136 = vld [vmem:[%s9120 + $0x38] sm:%s9111]
                %9137 = vst [vmem:[%s9121 + $0x38] sm:%s9111] %v9136
                %v9138 = vld [vmem:[%s9120 + $0x40] sm:%s9111]
                %9139 = vst [vmem:[%s9121 + $0x40] sm:%s9111] %v9138
                %v9140 = vld [vmem:[%s9120 + $0x48] sm:%s9111]
                %9141 = vst [vmem:[%s9121 + $0x48] sm:%s9111] %v9140
                %v9142 = vld [vmem:[%s9120 + $0x50] sm:%s9111]
                %9143 = vst [vmem:[%s9121 + $0x50] sm:%s9111] %v9142
                %v9144 = vld [vmem:[%s9120 + $0x58] sm:%s9111]
                %9145 = vst [vmem:[%s9121 + $0x58] sm:%s9111] %v9144
                %v9146 = vld [vmem:[%s9120 + $0x60] sm:%s9111]
                %9147 = vst [vmem:[%s9121 + $0x60] sm:%s9111] %v9146
                %v9148 = vld [vmem:[%s9120 + $0x68] sm:%s9111]
                %9149 = vst [vmem:[%s9121 + $0x68] sm:%s9111] %v9148
                %v9150 = vld [vmem:[%s9120 + $0x70] sm:%s9111]
                %9151 = vst [vmem:[%s9121 + $0x70] sm:%s9111] %v9150
                %v9152 = vld [vmem:[%s9120 + $0x78] sm:%s9111]
                %9153 = vst [vmem:[%s9121 + $0x78] sm:%s9111] %v9152
                %s9154 = sadd.s32 1, %s9119
                %p9155 = scmp.ge.s32.totalorder %s9154, %s9112
                %s9156 = scalar_select %p9155, 0, %s9154
                %s9157 = smul.u32 %s9156, 128
                %s9158 = smul.u32 %s9156, 128
                %s9159 = scalar_lea.vmem %s9091, %s9157 [#allocation13]
                %s9160 = scalar_lea.vmem %s9102, %s9158
              $region93: #{discriminator_forward.1} parent=87 // loop_footer
                %s9116 = sadd.s32 %s9114, 1
              $region94: #{discriminator_forward.1} parent=87 // loop_footer_branch
                %9113 = sbr.rel target = $region90
              $region95: #{discriminator_forward.1} parent=87 // loop_exit
                _
              %s9161 = sshrl.u32 %s9098, 4
              %s9162 = sand.u32 %s9098, 15
              %s9163 = smul.u32 %s9161, 16
              %s9164 = smul.u32 8, %s9163
              %s9165 = scalar_lea.vmem %s9091, %s9164 [#allocation13]
              %s9166 = smul.u32 8, %s9163
              %s9167 = scalar_lea.vmem %s9102, %s9166
              // While loop
              $region96: #{discriminator_forward.1} parent=87 // loop_pre_header
                _
              $region97: #{discriminator_forward.1} parent=87 // loop_header
                %s9169 = sphi 0, %s9171
                %p9170 = scmp.ge.s32.totalorder %s9169, %s9162
                %s9174 = sphi 0, %s9181
                %s9175 = sphi %s9165, %s9184
                %s9176 = sphi %s9167, %s9185
              $region98: #{discriminator_forward.1} parent=87 // loop_header_branch
                %9173 = sbr.rel (%p9170) target = $region102
              $region99: #{discriminator_forward.1} parent=87 // loop_body
                %v9177 = vld [vmem:[%s9175] sm:%s9111]
                %9178 = vst [vmem:[%s9176] sm:%s9111] %v9177
                %s9179 = sadd.s32 1, %s9174
                %p9180 = scmp.ge.s32.totalorder %s9179, %s9162
                %s9181 = scalar_select %p9180, 0, %s9179
                %s9182 = smul.u32 %s9181, 8
                %s9183 = smul.u32 %s9181, 8
                %s9184 = scalar_lea.vmem %s9165, %s9182 [#allocation13]
                %s9185 = scalar_lea.vmem %s9167, %s9183
              $region100: #{discriminator_forward.1} parent=87 // loop_footer
                %s9171 = sadd.s32 %s9169, 1
              $region101: #{discriminator_forward.1} parent=87 // loop_footer_branch
                %9168 = sbr.rel target = $region97
              $region102: #{discriminator_forward.1} parent=87 // loop_exit
                _
            $region88: #{discriminator_forward.1} parent=79 // pred_fallthru
              _
          $region80: #{discriminator_forward.1} parent=75 // pred_fallthru
            _
          %9264 = vnop
        $region76: #{discriminator_forward.1} parent=47 // pred_fallthru
          _
      $region48: #{discriminator_forward.1} parent=5 // pred_fallthru
        _
      %p9265 = scmp.le.s32.totalorder 2, %s21
      // Predicated region
      $region125: #{discriminator_forward.1} parent=5 // pred_check
        %p9266 = pneg %p9265
      $region126: #{discriminator_forward.1} parent=5 // pred_check_branch
        %9268 = sbr.rel (%p9266) target = $region128
      $region127: #{discriminator_forward.1} parent=5 // pred_region
        %s9269 = ssub.s32 %s21, 2
        // Predicated region
        $region129: #{discriminator_forward.1} parent=127 // pred_check
          %p9270 = pneg %p202
        $region130: #{discriminator_forward.1} parent=127 // pred_check_branch
          %9272 = sbr.rel (%p9270) target = $region132
        $region131: #{discriminator_forward.1} parent=127 // pred_region
          %s9273 = sand.u32 %s187, 1
          %s9274 = sand.u32 %s187, 1
          %s9275 = smul.addr %s9274, 128
          %s9276 = scalar_lea.vmem [#allocation13], %s9275
        $region132: #{discriminator_forward.1} parent=127 // pred_fallthru
          _
      $region128: #{discriminator_forward.1} parent=5 // pred_fallthru
        _
    $region6: #{discriminator_forward.1} parent=1 // loop_footer
      %s25 = sadd.s32 1, %s21
    $region7: #{discriminator_forward.1} parent=1 // loop_footer_branch
      %20 = sbr.rel target = $region3
    $region8: #{discriminator_forward.1} parent=1 // loop_exit
      _
    %9277 = vsyncpa [#allocation4], 1
    %s9278 = scalar_lea.sflag [#allocation4], 1
    %9279 = vsyncpa %s9278, 1
    %9280 = vsyncpa [#allocation6], 1
    %9281 = vsyncpa [#allocation9], 1
    %9282 = vsyncpa [#allocation12], 1

</llo_original>
